<compile_context>
chip_gen: v6e
topology: v6e:2x2x1
jax: 0.10.0
libtpu: 0.0.40
codegen_flags: <defaults>
</compile_context>

<pallas_src>
import jax
import jax.numpy as jnp
import numpy as np
from jax import lax
from jax.experimental import pallas as pl
from jax.experimental.pallas import tpu as pltpu


def _basic_block_kernel(x_ref, w1_ref, s1_ref, b1_ref, w2_ref, s2_ref, b2_ref,
                        o_ref, col_scr):
    # x_ref   : (1, H, W, Cp)       bf16 input block (also the residual identity)
    # w*_ref  : (3, 3*Cp, Cp)       bf16 conv weights; w[dy, dx*Cp+ci, co]
    # s*_ref, b*_ref : (1, Cp)      f32 folded BN scale / bias
    # o_ref   : (1, H, W, Cp)       bf16 output block
    # col_scr : VMEM (H+2, W, 3*Cp) bf16 persistent 3-tap column-shift slab
    H = x_ref.shape[1]
    W = x_ref.shape[2]
    Cp = x_ref.shape[3]
    HW = H * W
    cdt = col_scr.dtype

    def fill_slab(img):
        # img: (H, W, Cp) value in compute dtype.
        # Lane block [Cp:2Cp]  = center tap (dx=1)  -- aligned store.
        # Lane block [0:Cp]    = left   tap (dx=0)  -- image shifted right by 1.
        # Lane block [2Cp:3Cp] = right  tap (dx=2)  -- image shifted left  by 1.
        col_scr[1:H + 1, :, Cp:2 * Cp] = img
        col_scr[1:H + 1, 1:W, 0:Cp] = img[:, 0:W - 1, :]
        col_scr[1:H + 1, 0:W - 1, 2 * Cp:3 * Cp] = img[:, 1:W, :]
        # Halo rows (top/bottom) and edge columns of the shifted blocks must be
        # zero.  The scratch persists across grid steps, so re-zero them every
        # iteration (cheap; load-bearing for megacore "parallel" on v7x).
        col_scr[0, :, :] = jnp.zeros((W, 3 * Cp), cdt)
        col_scr[H + 1, :, :] = jnp.zeros((W, 3 * Cp), cdt)
        col_scr[:, 0:1, 0:Cp] = jnp.zeros((H + 2, 1, Cp), cdt)
        col_scr[:, W - 1:W, 2 * Cp:3 * Cp] = jnp.zeros((H + 2, 1, Cp), cdt)

    def conv3x3(w_ref):
        # Three accumulating MXU matmuls; the dy slice of the slab is a free
        # base-offset view along the leading (untiled) dim.
        acc = jnp.zeros((HW, Cp), jnp.float32)
        for dy in range(3):
            lhs = col_scr[dy:dy + H, :, :].reshape(HW, 3 * Cp)
            acc = acc + jnp.dot(lhs, w_ref[dy],
                                preferred_element_type=jnp.float32)
        return acc

    x_img = x_ref[0]                                   # (H, W, Cp) bf16

    # --- conv1 + bn1 (folded) + relu, f32 epilogue ---------------------------
    fill_slab(x_img)
    h1 = conv3x3(w1_ref)
    h1 = jnp.maximum(h1 * s1_ref[0] + b1_ref[0], 0.0)

    # --- conv2 + bn2 (folded) + residual add + relu --------------------------
    fill_slab(h1.reshape(H, W, Cp).astype(cdt))
    h2 = conv3x3(w2_ref)
    h2 = h2 * s2_ref[0] + b2_ref[0]
    ident = x_img.reshape(HW, Cp).astype(jnp.float32)
    out = jnp.maximum(h2 + ident, 0.0)
    o_ref[0] = out.reshape(H, W, Cp).astype(o_ref.dtype)


def basic_block_padded(xp, w1p, s1p, b1p, w2p, s2p, b2p,
                       *, compute_dtype=jnp.bfloat16):
    """Fused BasicBlock on the lane-padded bf16 layout.

    xp: (N, H, W, Cp) in compute_dtype (Cp a multiple of 128).
    Returns (N, H, W, Cp) in compute_dtype, so chained blocks never re-pad,
    re-cast or strip activations between kernels.
    """
    N, H, W, Cp = xp.shape

    # Explicit VMEM budget: double-buffered blocks (incl. invariant weights,
    # which default to 2 buffers), persistent slab, and the f32 intermediates
    # (acc / h1 / identity) that Mosaic materializes in VMEM.
    cbytes = jnp.dtype(compute_dtype).itemsize
    xblk = H * W * Cp * cbytes
    oblk = H * W * Cp * cbytes                       # bf16 output block
    wblk = 2 * 3 * (3 * Cp) * Cp * cbytes            # w1 + w2
    vblk = 4 * Cp * 4                                # s1, b1, s2, b2
    slab = (H + 2) * W * (3 * Cp) * cbytes           # column-shift scratch
    f32tmp = 3 * H * W * Cp * 4                      # acc / h1 / identity
    need = 2 * (xblk + oblk + wblk + vblk) + slab + f32tmp
    vmem_limit = int(min(max(need + (8 << 20), 32 << 20), 48 << 20))

    per_image = lambda n: (n, 0, 0, 0)
    invariant3 = lambda n: (0, 0, 0)
    invariant2 = lambda n: (0, 0)

    return pl.pallas_call(
        _basic_block_kernel,
        out_shape=jax.ShapeDtypeStruct((N, H, W, Cp), compute_dtype),
        grid_spec=pltpu.PrefetchScalarGridSpec(
            num_scalar_prefetch=0,
            grid=(N,),
            in_specs=[
                pl.BlockSpec((1, H, W, Cp), per_image),      # x (single copy)
                pl.BlockSpec((3, 3 * Cp, Cp), invariant3),   # w1 (grid-invariant)
                pl.BlockSpec((1, Cp), invariant2),           # s1
                pl.BlockSpec((1, Cp), invariant2),           # b1
                pl.BlockSpec((3, 3 * Cp, Cp), invariant3),   # w2
                pl.BlockSpec((1, Cp), invariant2),           # s2
                pl.BlockSpec((1, Cp), invariant2),           # b2
            ],
            out_specs=pl.BlockSpec((1, H, W, Cp), per_image),
            scratch_shapes=[
                pltpu.VMEM((H + 2, W, 3 * Cp), compute_dtype),  # 3-tap slab
            ],
        ),
        compiler_params=pltpu.CompilerParams(
            dimension_semantics=("parallel",),
            vmem_limit_bytes=vmem_limit,
        ),
    )(xp, w1p, s1p, b1p, w2p, s2p, b2p)


def prep_block_params(w1_hwio, s1, b1, w2_hwio, s2, b2, Cp,
                      *, compute_dtype=jnp.bfloat16):
    """Host-side, once-per-model prep: lane-pad channels and cast weights."""
    C = w1_hwio.shape[2]
    pc = Cp - C

    def prep_w(w_hwio):                              # (3,3,C,C) -> (3, 3*Cp, Cp)
        wpad = jnp.pad(w_hwio, ((0, 0), (0, 0), (0, pc), (0, pc)))
        return wpad.reshape(3, 3 * Cp, Cp).astype(compute_dtype)

    def prep_v(v):                                   # (C,) -> (1, Cp) f32
        return jnp.pad(v.astype(jnp.float32), ((0, pc),)).reshape(1, Cp)

    return (prep_w(w1_hwio), prep_v(s1), prep_v(b1),
            prep_w(w2_hwio), prep_v(s2), prep_v(b2))


def basic_block_pallas(x_nhwc, w1_hwio, s1, b1, w2_hwio, s2, b2,
                       *, compute_dtype=jnp.bfloat16):
    """Standalone convenience wrapper: f32 NHWC in, f32 NHWC out.

    In a chained ResNet use basic_block_padded directly so the pad/cast on
    entry and the strip on exit happen once per network, not once per block.
    """
    N, H, W, C = x_nhwc.shape
    LANE = 128
    Cp = ((C + LANE - 1) // LANE) * LANE
    pc = Cp - C

    xp = jnp.pad(x_nhwc, ((0, 0), (0, 0), (0, 0), (0, pc))).astype(compute_dtype)
    params = prep_block_params(w1_hwio, s1, b1, w2_hwio, s2, b2, Cp,
                               compute_dtype=compute_dtype)
    out = basic_block_padded(xp, *params, compute_dtype=compute_dtype)
    return out[..., :C].astype(jnp.float32)


def _fold_bn(gamma, beta, mean, var, eps=1e-5):
    scale = gamma / jnp.sqrt(var + eps)
    bias = beta - mean * scale
    return scale, bias


def _reference(x_nhwc, w1_hwio, s1, b1, w2_hwio, s2, b2,
               compute_dtype=jnp.bfloat16):
    """Pure-JAX reference with the same numerics (bf16 operands, f32 accum)."""
    dn = ("NHWC", "HWIO", "NHWC")
    xc = x_nhwc.astype(compute_dtype)
    h = lax.conv_general_dilated(xc, w1_hwio.astype(compute_dtype), (1, 1),
                                 "SAME", dimension_numbers=dn,
                                 preferred_element_type=jnp.float32)
    h = jnp.maximum(h * s1 + b1, 0.0)
    h = lax.conv_general_dilated(h.astype(compute_dtype),
                                 w2_hwio.astype(compute_dtype), (1, 1),
                                 "SAME", dimension_numbers=dn,
                                 preferred_element_type=jnp.float32)
    h = h * s2 + b2
    return jnp.maximum(h + xc.astype(jnp.float32), 0.0)


if __name__ == "__main__":
    # Small shapes: batch=2, channels=4, spatial=16 (stride-1 block,
    # in_channel == out_channel, downsample=None).  C=4 is for validation
    # only; the fused kernel is intended for the C >= 128 stages.
    N, C, H, W = 2, 4, 16, 16

    key = jax.random.PRNGKey(0)
    keys = jax.random.split(key, 11)

    # Input built in PyTorch's NCHW convention, then moved to NHWC.
    x_nchw = jax.random.normal(keys[0], (N, C, H, W), jnp.float32)
    x_nhwc = jnp.transpose(x_nchw, (0, 2, 3, 1))

    # Deterministic synthetic parameters (shapes per nn.Conv2d / nn.BatchNorm2d).
    w1_hwio = 0.1 * jax.random.normal(keys[1], (3, 3, C, C), jnp.float32)
    w2_hwio = 0.1 * jax.random.normal(keys[2], (3, 3, C, C), jnp.float32)
    g1 = 1.0 + 0.1 * jax.random.normal(keys[3], (C,), jnp.float32)
    be1 = 0.1 * jax.random.normal(keys[4], (C,), jnp.float32)
    m1 = 0.1 * jax.random.normal(keys[5], (C,), jnp.float32)
    v1 = jnp.abs(jax.random.normal(keys[6], (C,), jnp.float32)) + 0.5
    g2 = 1.0 + 0.1 * jax.random.normal(keys[7], (C,), jnp.float32)
    be2 = 0.1 * jax.random.normal(keys[8], (C,), jnp.float32)
    m2 = 0.1 * jax.random.normal(keys[9], (C,), jnp.float32)
    v2 = jnp.abs(jax.random.normal(keys[10], (C,), jnp.float32)) + 0.5

    s1, b1 = _fold_bn(g1, be1, m1, v1)
    s2, b2 = _fold_bn(g2, be2, m2, v2)

    out_nhwc = basic_block_pallas(x_nhwc, w1_hwio, s1, b1, w2_hwio, s2, b2)
    out_nhwc = jax.block_until_ready(out_nhwc)

    ref = _reference(x_nhwc, w1_hwio, s1, b1, w2_hwio, s2, b2)
    # Kernel emits bf16 activations (inter-block layout); compare with bf16
    # output tolerance against the f32-epilogue reference.
    np.testing.assert_allclose(np.asarray(out_nhwc), np.asarray(ref),
                               rtol=2e-2, atol=2e-2)

    # Back to NCHW to match the PyTorch module's output convention.
    out_nchw = jnp.transpose(out_nhwc, (0, 3, 1, 2))
    assert out_nchw.shape == (N, C, H, W)

    print("KERNEL_OK")
</pallas_src>

<mosaic_0001>
module attributes {stable_mosaic.version = 11 : i64} {
  func.func @_basic_block_kernel(%arg0: i32, %arg1: memref<1x16x16x128xbf16, #tpu.memory_space<vmem>>, %arg2: memref<3x384x128xbf16, #tpu.memory_space<vmem>>, %arg3: memref<1x128xf32, #tpu.memory_space<vmem>>, %arg4: memref<1x128xf32, #tpu.memory_space<vmem>>, %arg5: memref<3x384x128xbf16, #tpu.memory_space<vmem>>, %arg6: memref<1x128xf32, #tpu.memory_space<vmem>>, %arg7: memref<1x128xf32, #tpu.memory_space<vmem>>, %arg8: memref<1x16x16x128xbf16, #tpu.memory_space<vmem>>, %arg9: memref<18x16x384xbf16, #tpu.memory_space<vmem>>) attributes {dimension_semantics = [#tpu.dimension_semantics<parallel>], iteration_bounds = array<i64: 2>, scalar_prefetch = 0 : i64, scratch_operands = 1 : i64, tpu.core_type = #tpu.core_type<tc>, window_params = [{transform_indices = @transform_0, window_bounds = array<i64: 1, 16, 16, 128>}, {pipeline_mode = #tpu.pipeline_mode<synchronous>, transform_indices = @transform_1, window_bounds = array<i64: 3, 384, 128>}, {pipeline_mode = #tpu.pipeline_mode<synchronous>, transform_indices = @transform_2, window_bounds = array<i64: 1, 128>}, {pipeline_mode = #tpu.pipeline_mode<synchronous>, transform_indices = @transform_3, window_bounds = array<i64: 1, 128>}, {pipeline_mode = #tpu.pipeline_mode<synchronous>, transform_indices = @transform_4, window_bounds = array<i64: 3, 384, 128>}, {pipeline_mode = #tpu.pipeline_mode<synchronous>, transform_indices = @transform_5, window_bounds = array<i64: 1, 128>}, {pipeline_mode = #tpu.pipeline_mode<synchronous>, transform_indices = @transform_6, window_bounds = array<i64: 1, 128>}, {transform_indices = @transform_7, window_bounds = array<i64: 1, 16, 16, 128>}]} {
    %c0 = arith.constant 0 : index
    %c0_0 = arith.constant 0 : index
    %c0_1 = arith.constant 0 : index
    %c0_2 = arith.constant 0 : index
    %0 = vector.load %arg1[%c0, %c0_0, %c0_1, %c0_2] : memref<1x16x16x128xbf16, #tpu.memory_space<vmem>>, vector<1x16x16x128xbf16>
    %1 = vector.shape_cast %0 : vector<1x16x16x128xbf16> to vector<16x16x128xbf16>
    %c1 = arith.constant 1 : index
    %c0_3 = arith.constant 0 : index
    %c128 = arith.constant 128 : index
    %2 = vector.load %arg9[%c1, %c0_3, %c128] : memref<18x16x384xbf16, #tpu.memory_space<vmem>>, vector<16x16x128xbf16>
    tpu.vector_store %arg9[%c1, %c0_3, %c128], %1 {strides = array<i32>} : memref<18x16x384xbf16, #tpu.memory_space<vmem>>, vector<16x16x128xbf16>,
    %3 = vector.extract_strided_slice %1 {offsets = [0, 0, 0], sizes = [16, 15, 128], strides = [1, 1, 1]} : vector<16x16x128xbf16> to vector<16x15x128xbf16>
    %c1_4 = arith.constant 1 : index
    %c1_5 = arith.constant 1 : index
    %c0_6 = arith.constant 0 : index
    %4 = vector.load %arg9[%c1_4, %c1_5, %c0_6] : memref<18x16x384xbf16, #tpu.memory_space<vmem>>, vector<16x15x128xbf16>
    tpu.vector_store %arg9[%c1_4, %c1_5, %c0_6], %3 {strides = array<i32>} : memref<18x16x384xbf16, #tpu.memory_space<vmem>>, vector<16x15x128xbf16>,
    %5 = vector.extract_strided_slice %1 {offsets = [0, 1, 0], sizes = [16, 15, 128], strides = [1, 1, 1]} : vector<16x16x128xbf16> to vector<16x15x128xbf16>
    %c1_7 = arith.constant 1 : index
    %c0_8 = arith.constant 0 : index
    %c256 = arith.constant 256 : index
    %6 = vector.load %arg9[%c1_7, %c0_8, %c256] : memref<18x16x384xbf16, #tpu.memory_space<vmem>>, vector<16x15x128xbf16>
    tpu.vector_store %arg9[%c1_7, %c0_8, %c256], %5 {strides = array<i32>} : memref<18x16x384xbf16, #tpu.memory_space<vmem>>, vector<16x15x128xbf16>,
    %cst = arith.constant 0.000000e+00 : bf16
    %7 = vector.broadcast %cst : bf16 to vector<16x384xbf16>
    %c0_9 = arith.constant 0 : index
    %c0_10 = arith.constant 0 : index
    %c0_11 = arith.constant 0 : index
    %8 = vector.load %arg9[%c0_9, %c0_10, %c0_11] : memref<18x16x384xbf16, #tpu.memory_space<vmem>>, vector<1x16x384xbf16>
    %9 = vector.shape_cast %8 : vector<1x16x384xbf16> to vector<16x384xbf16>
    %10 = vector.shape_cast %7 : vector<16x384xbf16> to vector<1x16x384xbf16>
    tpu.vector_store %arg9[%c0_9, %c0_10, %c0_11], %10 {strides = array<i32>} : memref<18x16x384xbf16, #tpu.memory_space<vmem>>, vector<1x16x384xbf16>,
    %cst_12 = arith.constant 0.000000e+00 : bf16
    %11 = vector.broadcast %cst_12 : bf16 to vector<16x384xbf16>
    %c17 = arith.constant 17 : index
    %c0_13 = arith.constant 0 : index
    %c0_14 = arith.constant 0 : index
    %12 = vector.load %arg9[%c17, %c0_13, %c0_14] : memref<18x16x384xbf16, #tpu.memory_space<vmem>>, vector<1x16x384xbf16>
    %13 = vector.shape_cast %12 : vector<1x16x384xbf16> to vector<16x384xbf16>
    %14 = vector.shape_cast %11 : vector<16x384xbf16> to vector<1x16x384xbf16>
    tpu.vector_store %arg9[%c17, %c0_13, %c0_14], %14 {strides = array<i32>} : memref<18x16x384xbf16, #tpu.memory_space<vmem>>, vector<1x16x384xbf16>,
    %cst_15 = arith.constant 0.000000e+00 : bf16
    %15 = vector.broadcast %cst_15 : bf16 to vector<18x1x128xbf16>
    %c0_16 = arith.constant 0 : index
    %c0_17 = arith.constant 0 : index
    %c0_18 = arith.constant 0 : index
    %16 = vector.load %arg9[%c0_16, %c0_17, %c0_18] : memref<18x16x384xbf16, #tpu.memory_space<vmem>>, vector<18x1x128xbf16>
    tpu.vector_store %arg9[%c0_16, %c0_17, %c0_18], %15 {strides = array<i32>} : memref<18x16x384xbf16, #tpu.memory_space<vmem>>, vector<18x1x128xbf16>,
    %cst_19 = arith.constant 0.000000e+00 : bf16
    %17 = vector.broadcast %cst_19 : bf16 to vector<18x1x128xbf16>
    %c0_20 = arith.constant 0 : index
    %c15 = arith.constant 15 : index
    %c256_21 = arith.constant 256 : index
    %18 = vector.load %arg9[%c0_20, %c15, %c256_21] : memref<18x16x384xbf16, #tpu.memory_space<vmem>>, vector<18x1x128xbf16>
    tpu.vector_store %arg9[%c0_20, %c15, %c256_21], %17 {strides = array<i32>} : memref<18x16x384xbf16, #tpu.memory_space<vmem>>, vector<18x1x128xbf16>,
    %cst_22 = arith.constant 0.000000e+00 : f32
    %19 = vector.broadcast %cst_22 : f32 to vector<256x128xf32>
    %c0_23 = arith.constant 0 : index
    %c0_24 = arith.constant 0 : index
    %c0_25 = arith.constant 0 : index
    %20 = vector.load %arg9[%c0_23, %c0_24, %c0_25] : memref<18x16x384xbf16, #tpu.memory_space<vmem>>, vector<16x16x384xbf16>
    %21 = vector.shape_cast %20 : vector<16x16x384xbf16> to vector<256x384xbf16>
    %c0_26 = arith.constant 0 : index
    %c0_27 = arith.constant 0 : index
    %c0_28 = arith.constant 0 : index
    %22 = vector.load %arg2[%c0_26, %c0_27, %c0_28] : memref<3x384x128xbf16, #tpu.memory_space<vmem>>, vector<1x384x128xbf16>
    %23 = vector.shape_cast %22 : vector<1x384x128xbf16> to vector<384x128xbf16>
    %cst_29 = arith.constant dense<0.000000e+00> : vector<256x128xf32>
    %24 = tpu.matmul %21, %23, %cst_29 {dimension_numbers = #tpu.dot_dimension_numbers<[1], [0], [0], [1], [0, 0, 1, 1], [], []>} : vector<256x384xbf16>, vector<384x128xbf16>, vector<256x128xf32> -> vector<256x128xf32>
    %25 = arith.addf %19, %24 : vector<256x128xf32>
    %c1_30 = arith.constant 1 : index
    %c0_31 = arith.constant 0 : index
    %c0_32 = arith.constant 0 : index
    %26 = vector.load %arg9[%c1_30, %c0_31, %c0_32] : memref<18x16x384xbf16, #tpu.memory_space<vmem>>, vector<16x16x384xbf16>
    %27 = vector.shape_cast %26 : vector<16x16x384xbf16> to vector<256x384xbf16>
    %c1_33 = arith.constant 1 : index
    %c0_34 = arith.constant 0 : index
    %c0_35 = arith.constant 0 : index
    %28 = vector.load %arg2[%c1_33, %c0_34, %c0_35] : memref<3x384x128xbf16, #tpu.memory_space<vmem>>, vector<1x384x128xbf16>
    %29 = vector.shape_cast %28 : vector<1x384x128xbf16> to vector<384x128xbf16>
    %cst_36 = arith.constant dense<0.000000e+00> : vector<256x128xf32>
    %30 = tpu.matmul %27, %29, %cst_36 {dimension_numbers = #tpu.dot_dimension_numbers<[1], [0], [0], [1], [0, 0, 1, 1], [], []>} : vector<256x384xbf16>, vector<384x128xbf16>, vector<256x128xf32> -> vector<256x128xf32>
    %31 = arith.addf %25, %30 : vector<256x128xf32>
    %c2 = arith.constant 2 : index
    %c0_37 = arith.constant 0 : index
    %c0_38 = arith.constant 0 : index
    %32 = vector.load %arg9[%c2, %c0_37, %c0_38] : memref<18x16x384xbf16, #tpu.memory_space<vmem>>, vector<16x16x384xbf16>
    %33 = vector.shape_cast %32 : vector<16x16x384xbf16> to vector<256x384xbf16>
    %c2_39 = arith.constant 2 : index
    %c0_40 = arith.constant 0 : index
    %c0_41 = arith.constant 0 : index
    %34 = vector.load %arg2[%c2_39, %c0_40, %c0_41] : memref<3x384x128xbf16, #tpu.memory_space<vmem>>, vector<1x384x128xbf16>
    %35 = vector.shape_cast %34 : vector<1x384x128xbf16> to vector<384x128xbf16>
    %cst_42 = arith.constant dense<0.000000e+00> : vector<256x128xf32>
    %36 = tpu.matmul %33, %35, %cst_42 {dimension_numbers = #tpu.dot_dimension_numbers<[1], [0], [0], [1], [0, 0, 1, 1], [], []>} : vector<256x384xbf16>, vector<384x128xbf16>, vector<256x128xf32> -> vector<256x128xf32>
    %37 = arith.addf %31, %36 : vector<256x128xf32>
    %c0_43 = arith.constant 0 : index
    %c0_44 = arith.constant 0 : index
    %38 = vector.load %arg3[%c0_43, %c0_44] : memref<1x128xf32, #tpu.memory_space<vmem>>, vector<1x128xf32>
    %39 = vector.shape_cast %38 : vector<1x128xf32> to vector<128xf32>
    %40 = vector.shape_cast %39 : vector<128xf32> to vector<1x128xf32>
    %41 = vector.broadcast %40 : vector<1x128xf32> to vector<256x128xf32>
    %42 = arith.mulf %37, %41 : vector<256x128xf32>
    %c0_45 = arith.constant 0 : index
    %c0_46 = arith.constant 0 : index
    %43 = vector.load %arg4[%c0_45, %c0_46] : memref<1x128xf32, #tpu.memory_space<vmem>>, vector<1x128xf32>
    %44 = vector.shape_cast %43 : vector<1x128xf32> to vector<128xf32>
    %45 = vector.shape_cast %44 : vector<128xf32> to vector<1x128xf32>
    %46 = vector.broadcast %45 : vector<1x128xf32> to vector<256x128xf32>
    %47 = arith.addf %42, %46 : vector<256x128xf32>
    %cst_47 = arith.constant 0.000000e+00 : f32
    %48 = vector.broadcast %cst_47 : f32 to vector<256x128xf32>
    %49 = arith.maximumf %47, %48 : vector<256x128xf32>
    %50 = vector.shape_cast %49 : vector<256x128xf32> to vector<16x16x128xf32>
    %51 = arith.truncf %50 : vector<16x16x128xf32> to vector<16x16x128xbf16>
    %c1_48 = arith.constant 1 : index
    %c0_49 = arith.constant 0 : index
    %c128_50 = arith.constant 128 : index
    %52 = vector.load %arg9[%c1_48, %c0_49, %c128_50] : memref<18x16x384xbf16, #tpu.memory_space<vmem>>, vector<16x16x128xbf16>
    tpu.vector_store %arg9[%c1_48, %c0_49, %c128_50], %51 {strides = array<i32>} : memref<18x16x384xbf16, #tpu.memory_space<vmem>>, vector<16x16x128xbf16>,
    %53 = vector.extract_strided_slice %51 {offsets = [0, 0, 0], sizes = [16, 15, 128], strides = [1, 1, 1]} : vector<16x16x128xbf16> to vector<16x15x128xbf16>
    %c1_51 = arith.constant 1 : index
    %c1_52 = arith.constant 1 : index
    %c0_53 = arith.constant 0 : index
    %54 = vector.load %arg9[%c1_51, %c1_52, %c0_53] : memref<18x16x384xbf16, #tpu.memory_space<vmem>>, vector<16x15x128xbf16>
    tpu.vector_store %arg9[%c1_51, %c1_52, %c0_53], %53 {strides = array<i32>} : memref<18x16x384xbf16, #tpu.memory_space<vmem>>, vector<16x15x128xbf16>,
    %55 = vector.extract_strided_slice %51 {offsets = [0, 1, 0], sizes = [16, 15, 128], strides = [1, 1, 1]} : vector<16x16x128xbf16> to vector<16x15x128xbf16>
    %c1_54 = arith.constant 1 : index
    %c0_55 = arith.constant 0 : index
    %c256_56 = arith.constant 256 : index
    %56 = vector.load %arg9[%c1_54, %c0_55, %c256_56] : memref<18x16x384xbf16, #tpu.memory_space<vmem>>, vector<16x15x128xbf16>
    tpu.vector_store %arg9[%c1_54, %c0_55, %c256_56], %55 {strides = array<i32>} : memref<18x16x384xbf16, #tpu.memory_space<vmem>>, vector<16x15x128xbf16>,
    %cst_57 = arith.constant 0.000000e+00 : bf16
    %57 = vector.broadcast %cst_57 : bf16 to vector<16x384xbf16>
    %c0_58 = arith.constant 0 : index
    %c0_59 = arith.constant 0 : index
    %c0_60 = arith.constant 0 : index
    %58 = vector.load %arg9[%c0_58, %c0_59, %c0_60] : memref<18x16x384xbf16, #tpu.memory_space<vmem>>, vector<1x16x384xbf16>
    %59 = vector.shape_cast %58 : vector<1x16x384xbf16> to vector<16x384xbf16>
    %60 = vector.shape_cast %57 : vector<16x384xbf16> to vector<1x16x384xbf16>
    tpu.vector_store %arg9[%c0_58, %c0_59, %c0_60], %60 {strides = array<i32>} : memref<18x16x384xbf16, #tpu.memory_space<vmem>>, vector<1x16x384xbf16>,
    %cst_61 = arith.constant 0.000000e+00 : bf16
    %61 = vector.broadcast %cst_61 : bf16 to vector<16x384xbf16>
    %c17_62 = arith.constant 17 : index
    %c0_63 = arith.constant 0 : index
    %c0_64 = arith.constant 0 : index
    %62 = vector.load %arg9[%c17_62, %c0_63, %c0_64] : memref<18x16x384xbf16, #tpu.memory_space<vmem>>, vector<1x16x384xbf16>
    %63 = vector.shape_cast %62 : vector<1x16x384xbf16> to vector<16x384xbf16>
    %64 = vector.shape_cast %61 : vector<16x384xbf16> to vector<1x16x384xbf16>
    tpu.vector_store %arg9[%c17_62, %c0_63, %c0_64], %64 {strides = array<i32>} : memref<18x16x384xbf16, #tpu.memory_space<vmem>>, vector<1x16x384xbf16>,
    %cst_65 = arith.constant 0.000000e+00 : bf16
    %65 = vector.broadcast %cst_65 : bf16 to vector<18x1x128xbf16>
    %c0_66 = arith.constant 0 : index
    %c0_67 = arith.constant 0 : index
    %c0_68 = arith.constant 0 : index
    %66 = vector.load %arg9[%c0_66, %c0_67, %c0_68] : memref<18x16x384xbf16, #tpu.memory_space<vmem>>, vector<18x1x128xbf16>
    tpu.vector_store %arg9[%c0_66, %c0_67, %c0_68], %65 {strides = array<i32>} : memref<18x16x384xbf16, #tpu.memory_space<vmem>>, vector<18x1x128xbf16>,
    %cst_69 = arith.constant 0.000000e+00 : bf16
    %67 = vector.broadcast %cst_69 : bf16 to vector<18x1x128xbf16>
    %c0_70 = arith.constant 0 : index
    %c15_71 = arith.constant 15 : index
    %c256_72 = arith.constant 256 : index
    %68 = vector.load %arg9[%c0_70, %c15_71, %c256_72] : memref<18x16x384xbf16, #tpu.memory_space<vmem>>, vector<18x1x128xbf16>
    tpu.vector_store %arg9[%c0_70, %c15_71, %c256_72], %67 {strides = array<i32>} : memref<18x16x384xbf16, #tpu.memory_space<vmem>>, vector<18x1x128xbf16>,
    %cst_73 = arith.constant 0.000000e+00 : f32
    %69 = vector.broadcast %cst_73 : f32 to vector<256x128xf32>
    %c0_74 = arith.constant 0 : index
    %c0_75 = arith.constant 0 : index
    %c0_76 = arith.constant 0 : index
    %70 = vector.load %arg9[%c0_74, %c0_75, %c0_76] : memref<18x16x384xbf16, #tpu.memory_space<vmem>>, vector<16x16x384xbf16>
    %71 = vector.shape_cast %70 : vector<16x16x384xbf16> to vector<256x384xbf16>
    %c0_77 = arith.constant 0 : index
    %c0_78 = arith.constant 0 : index
    %c0_79 = arith.constant 0 : index
    %72 = vector.load %arg5[%c0_77, %c0_78, %c0_79] : memref<3x384x128xbf16, #tpu.memory_space<vmem>>, vector<1x384x128xbf16>
    %73 = vector.shape_cast %72 : vector<1x384x128xbf16> to vector<384x128xbf16>
    %cst_80 = arith.constant dense<0.000000e+00> : vector<256x128xf32>
    %74 = tpu.matmul %71, %73, %cst_80 {dimension_numbers = #tpu.dot_dimension_numbers<[1], [0], [0], [1], [0, 0, 1, 1], [], []>} : vector<256x384xbf16>, vector<384x128xbf16>, vector<256x128xf32> -> vector<256x128xf32>
    %75 = arith.addf %69, %74 : vector<256x128xf32>
    %c1_81 = arith.constant 1 : index
    %c0_82 = arith.constant 0 : index
    %c0_83 = arith.constant 0 : index
    %76 = vector.load %arg9[%c1_81, %c0_82, %c0_83] : memref<18x16x384xbf16, #tpu.memory_space<vmem>>, vector<16x16x384xbf16>
    %77 = vector.shape_cast %76 : vector<16x16x384xbf16> to vector<256x384xbf16>
    %c1_84 = arith.constant 1 : index
    %c0_85 = arith.constant 0 : index
    %c0_86 = arith.constant 0 : index
    %78 = vector.load %arg5[%c1_84, %c0_85, %c0_86] : memref<3x384x128xbf16, #tpu.memory_space<vmem>>, vector<1x384x128xbf16>
    %79 = vector.shape_cast %78 : vector<1x384x128xbf16> to vector<384x128xbf16>
    %cst_87 = arith.constant dense<0.000000e+00> : vector<256x128xf32>
    %80 = tpu.matmul %77, %79, %cst_87 {dimension_numbers = #tpu.dot_dimension_numbers<[1], [0], [0], [1], [0, 0, 1, 1], [], []>} : vector<256x384xbf16>, vector<384x128xbf16>, vector<256x128xf32> -> vector<256x128xf32>
    %81 = arith.addf %75, %80 : vector<256x128xf32>
    %c2_88 = arith.constant 2 : index
    %c0_89 = arith.constant 0 : index
    %c0_90 = arith.constant 0 : index
    %82 = vector.load %arg9[%c2_88, %c0_89, %c0_90] : memref<18x16x384xbf16, #tpu.memory_space<vmem>>, vector<16x16x384xbf16>
    %83 = vector.shape_cast %82 : vector<16x16x384xbf16> to vector<256x384xbf16>
    %c2_91 = arith.constant 2 : index
    %c0_92 = arith.constant 0 : index
    %c0_93 = arith.constant 0 : index
    %84 = vector.load %arg5[%c2_91, %c0_92, %c0_93] : memref<3x384x128xbf16, #tpu.memory_space<vmem>>, vector<1x384x128xbf16>
    %85 = vector.shape_cast %84 : vector<1x384x128xbf16> to vector<384x128xbf16>
    %cst_94 = arith.constant dense<0.000000e+00> : vector<256x128xf32>
    %86 = tpu.matmul %83, %85, %cst_94 {dimension_numbers = #tpu.dot_dimension_numbers<[1], [0], [0], [1], [0, 0, 1, 1], [], []>} : vector<256x384xbf16>, vector<384x128xbf16>, vector<256x128xf32> -> vector<256x128xf32>
    %87 = arith.addf %81, %86 : vector<256x128xf32>
    %c0_95 = arith.constant 0 : index
    %c0_96 = arith.constant 0 : index
    %88 = vector.load %arg6[%c0_95, %c0_96] : memref<1x128xf32, #tpu.memory_space<vmem>>, vector<1x128xf32>
    %89 = vector.shape_cast %88 : vector<1x128xf32> to vector<128xf32>
    %90 = vector.shape_cast %89 : vector<128xf32> to vector<1x128xf32>
    %91 = vector.broadcast %90 : vector<1x128xf32> to vector<256x128xf32>
    %92 = arith.mulf %87, %91 : vector<256x128xf32>
    %c0_97 = arith.constant 0 : index
    %c0_98 = arith.constant 0 : index
    %93 = vector.load %arg7[%c0_97, %c0_98] : memref<1x128xf32, #tpu.memory_space<vmem>>, vector<1x128xf32>
    %94 = vector.shape_cast %93 : vector<1x128xf32> to vector<128xf32>
    %95 = vector.shape_cast %94 : vector<128xf32> to vector<1x128xf32>
    %96 = vector.broadcast %95 : vector<1x128xf32> to vector<256x128xf32>
    %97 = arith.addf %92, %96 : vector<256x128xf32>
    %98 = vector.shape_cast %1 : vector<16x16x128xbf16> to vector<256x128xbf16>
    %99 = arith.extf %98 : vector<256x128xbf16> to vector<256x128xf32>
    %100 = arith.addf %97, %99 : vector<256x128xf32>
    %cst_99 = arith.constant 0.000000e+00 : f32
    %101 = vector.broadcast %cst_99 : f32 to vector<256x128xf32>
    %102 = arith.maximumf %100, %101 : vector<256x128xf32>
    %103 = vector.shape_cast %102 : vector<256x128xf32> to vector<16x16x128xf32>
    %104 = arith.truncf %103 : vector<16x16x128xf32> to vector<16x16x128xbf16>
    %c0_100 = arith.constant 0 : index
    %c0_101 = arith.constant 0 : index
    %c0_102 = arith.constant 0 : index
    %c0_103 = arith.constant 0 : index
    %105 = vector.load %arg8[%c0_100, %c0_101, %c0_102, %c0_103] : memref<1x16x16x128xbf16, #tpu.memory_space<vmem>>, vector<1x16x16x128xbf16>
    %106 = vector.shape_cast %105 : vector<1x16x16x128xbf16> to vector<16x16x128xbf16>
    %107 = vector.shape_cast %104 : vector<16x16x128xbf16> to vector<1x16x16x128xbf16>
    tpu.vector_store %arg8[%c0_100, %c0_101, %c0_102, %c0_103], %107 {strides = array<i32>} : memref<1x16x16x128xbf16, #tpu.memory_space<vmem>>, vector<1x16x16x128xbf16>,
    return
  }
  func.func @transform_0(%arg0: i32) -> (i32, i32, i32, i32) {
    %c0_i32 = arith.constant 0 : i32
    %c0_i32_0 = arith.constant 0 : i32
    %c0_i32_1 = arith.constant 0 : i32
    %c0_i32_2 = arith.constant 0 : i32
    return %arg0, %c0_i32, %c0_i32_0, %c0_i32_1 : i32, i32, i32, i32
  }
  func.func @transform_1(%arg0: i32) -> (i32, i32, i32) {
    %c0_i32 = arith.constant 0 : i32
    %c0_i32_0 = arith.constant 0 : i32
    %c0_i32_1 = arith.constant 0 : i32
    %c0_i32_2 = arith.constant 0 : i32
    return %c0_i32, %c0_i32_0, %c0_i32_1 : i32, i32, i32
  }
  func.func @transform_2(%arg0: i32) -> (i32, i32) {
    %c0_i32 = arith.constant 0 : i32
    %c0_i32_0 = arith.constant 0 : i32
    %c0_i32_1 = arith.constant 0 : i32
    return %c0_i32, %c0_i32_0 : i32, i32
  }
  func.func @transform_3(%arg0: i32) -> (i32, i32) {
    %c0_i32 = arith.constant 0 : i32
    %c0_i32_0 = arith.constant 0 : i32
    %c0_i32_1 = arith.constant 0 : i32
    return %c0_i32, %c0_i32_0 : i32, i32
  }
  func.func @transform_4(%arg0: i32) -> (i32, i32, i32) {
    %c0_i32 = arith.constant 0 : i32
    %c0_i32_0 = arith.constant 0 : i32
    %c0_i32_1 = arith.constant 0 : i32
    %c0_i32_2 = arith.constant 0 : i32
    return %c0_i32, %c0_i32_0, %c0_i32_1 : i32, i32, i32
  }
  func.func @transform_5(%arg0: i32) -> (i32, i32) {
    %c0_i32 = arith.constant 0 : i32
    %c0_i32_0 = arith.constant 0 : i32
    %c0_i32_1 = arith.constant 0 : i32
    return %c0_i32, %c0_i32_0 : i32, i32
  }
  func.func @transform_6(%arg0: i32) -> (i32, i32) {
    %c0_i32 = arith.constant 0 : i32
    %c0_i32_0 = arith.constant 0 : i32
    %c0_i32_1 = arith.constant 0 : i32
    return %c0_i32, %c0_i32_0 : i32, i32
  }
  func.func @transform_7(%arg0: i32) -> (i32, i32, i32, i32) {
    %c0_i32 = arith.constant 0 : i32
    %c0_i32_0 = arith.constant 0 : i32
    %c0_i32_1 = arith.constant 0 : i32
    %c0_i32_2 = arith.constant 0 : i32
    return %arg0, %c0_i32, %c0_i32_0, %c0_i32_1 : i32, i32, i32, i32
  }
}

</mosaic_0001>

<llo_original>
// kernel: tpu_custom_call.1
$region0: #{tpu_custom_call.1}
  #allocation0 [shape = 'u32[]', space=smem, size = 0x4, offset = 0x4, fixed_abs, tag = 'smem constant byte address 0x4 - core index']
  #allocation1 [shape = 'u32[144,128]{1,0:T(1,128)}', space=vmem, size = 0x12000, scoped, tag = 'internal scratch']
  #allocation2 [shape = 'bf16[18,16,384]{2,1,0:T(8,128)(2,1)}', space=vmem, size = 0x36000, scoped, tag = 'scratch operand']
  %s0 = inlined_call_operand.hbm [shape: bf16[2,16,16,128], index: 0, kind: input, shape index: {}]
  %s1 = inlined_call_operand.hbm [shape: bf16[3,384,128], index: 1, kind: input, shape index: {}]
  %s2 = inlined_call_operand.vmem [shape: f32[1,128], index: 2, kind: input, shape index: {}]
  %s3 = inlined_call_operand.vmem [shape: f32[1,128], index: 3, kind: input, shape index: {}]
  %s4 = inlined_call_operand.hbm [shape: bf16[3,384,128], index: 4, kind: input, shape index: {}]
  %s5 = inlined_call_operand.vmem [shape: f32[1,128], index: 5, kind: input, shape index: {}]
  %s6 = inlined_call_operand.vmem [shape: f32[1,128], index: 6, kind: input, shape index: {}]
  %s7 = inlined_call_operand.hbm [shape: bf16[2,16,16,128], index: 7, kind: output, shape index: {}]
  %s8 = sld [smem:[#allocation0]]
  $region73: #{tpu_custom_call.1} parent=0
    _
  %s10 = ssub.s32 1, %s8
  %s11 = scalar_select 0, %s10, %s8
  $region1: #{tpu_custom_call.1} parent=0
    #allocation3 [shape = 'u8[131072]{0}', space=vmem, size = 0x20000, scoped, tag = 'input window, operand 0']
    #allocation4 [shape = 's32[2]{0}', space=sflag, size = 0x8, scoped, tag = 'scoped memory for tpu_custom_call.1']
    #allocation5 [shape = 's32[2]{0}', space=sflag, size = 0x8, scoped, tag = 'scoped memory for tpu_custom_call.1']
    #allocation6 [shape = 'u8[294912]{0}', space=vmem, size = 0x48000, scoped, tag = 'input window, operand 1, single buffered']
    #allocation7 [shape = 's32[1]{0}', space=sflag, size = 0x4, scoped, tag = 'scoped memory for tpu_custom_call.1']
    #allocation8 [shape = 'u8[294912]{0}', space=vmem, size = 0x48000, scoped, tag = 'input window, operand 4, single buffered']
    #allocation9 [shape = 'u8[131072]{0}', space=vmem, size = 0x20000, scoped, tag = 'output window, operand 0']
    %12 = vsyncpa [#allocation4], 0
    %s13 = scalar_lea.sflag [#allocation4], 1
    %14 = vsyncpa %s13, 0
    %15 = vsyncpa [#allocation7], 0
    %16 = vsyncpa [#allocation5], 0
    %s17 = scalar_lea.sflag [#allocation5], 1
    %18 = vsyncpa %s17, 0
    loop: start=0, step=1, limit=4
    $region2: #{tpu_custom_call.1} parent=1 // loop_pre_header
      _
    $region3: #{tpu_custom_call.1} parent=1 // loop_header
      %s20 = sphi 0, %s24
      %p21 = scmp.ge.s32.totalorder %s20, 4
      %s30 = sphi 0, %s32
      %s33 = sphi 0, %s30
      %s34 = sphi 0, %s33
      %s50 = sphi 0, %s34
      %s54 = sphi 0, %s54
      %s56 = sphi 0, %s54
      %s57 = sphi 0, %s56
      %s71 = sphi 0, %s57
      %s75 = sphi 0, %s75
      %s77 = sphi 0, %s75
      %s78 = sphi 0, %s77
      %s92 = sphi 0, %s78
      %s96 = sphi 0, %s96
      %s98 = sphi 0, %s96
      %s99 = sphi 0, %s98
      %s113 = sphi 0, %s99
      %s117 = sphi 0, %s117
      %s119 = sphi 0, %s117
      %s120 = sphi 0, %s119
      %s134 = sphi 0, %s120
      %s138 = sphi 0, %s138
      %s140 = sphi 0, %s138
      %s141 = sphi 0, %s140
      %s155 = sphi 0, %s141
      %s159 = sphi 0, %s159
      %s161 = sphi 0, %s159
      %s162 = sphi 0, %s161
      %s176 = sphi 0, %s162
      %s182 = sphi 0, %s184
      %s185 = sphi 0, %s182
      %s186 = sphi 0, %s185
      %s202 = sphi 0, %s186
    $region4: #{tpu_custom_call.1} parent=1 // loop_header_branch
      %23 = sbr.rel (%p21) target = $region8
    $region5: #{tpu_custom_call.1} parent=1 // loop_body
      %s25 = ssub.s32 %s20, 1
      %s26 = ssub.s32 %s20, 2
      %s27 = sadd.s32 %s20, 1
      %s28 = ssub.s32 %s20, %s27
      %p29 = scmp.eq.s32.totalorder %s28, 0
      %s31 = sadd.s32 %s30, 1
      %s32 = scalar_select %p29, %s30, %s31
      %p35 = pneg %p29
      %p36 = scmp.eq.s32.totalorder %s20, 1
      %p37 = por %p35, %p36
      %p38 = scmp.ne.s32.totalorder %s30, %s33
      %p39 = scmp.eq.s32.totalorder %s20, 0
      %p40 = por %p38, %p39
      %p41 = scmp.ne.s32.totalorder %s30, %s33
      %p42 = scmp.eq.s32.totalorder %s25, 1
      %p43 = por %p41, %p42
      %p44 = scmp.ne.s32.totalorder %s33, %s34
      %p45 = scmp.eq.s32.totalorder %s25, 0
      %p46 = por %p44, %p45
      %p47 = scmp.ne.s32.totalorder %s33, %s34
      %p48 = scmp.eq.s32.totalorder %s26, 1
      %p49 = por %p47, %p48
      %p51 = scmp.ne.s32.totalorder %s34, %s50
      %p52 = scmp.eq.s32.totalorder %s26, 0
      %p53 = por %p51, %p52
      %s55 = sadd.s32 %s54, 1
      %p58 = scmp.eq.s32.totalorder %s20, 1
      %p59 = scmp.ne.s32.totalorder %s54, %s56
      %p60 = scmp.eq.s32.totalorder %s20, 0
      %p61 = por %p59, %p60
      %p62 = scmp.ne.s32.totalorder %s54, %s56
      %p63 = scmp.eq.s32.totalorder %s25, 1
      %p64 = por %p62, %p63
      %p65 = scmp.ne.s32.totalorder %s56, %s57
      %p66 = scmp.eq.s32.totalorder %s25, 0
      %p67 = por %p65, %p66
      %p68 = scmp.ne.s32.totalorder %s56, %s57
      %p69 = scmp.eq.s32.totalorder %s26, 1
      %p70 = por %p68, %p69
      %p72 = scmp.ne.s32.totalorder %s57, %s71
      %p73 = scmp.eq.s32.totalorder %s26, 0
      %p74 = por %p72, %p73
      %s76 = sadd.s32 %s75, 1
      %p79 = scmp.eq.s32.totalorder %s20, 1
      %p80 = scmp.ne.s32.totalorder %s75, %s77
      %p81 = scmp.eq.s32.totalorder %s20, 0
      %p82 = por %p80, %p81
      %p83 = scmp.ne.s32.totalorder %s75, %s77
      %p84 = scmp.eq.s32.totalorder %s25, 1
      %p85 = por %p83, %p84
      %p86 = scmp.ne.s32.totalorder %s77, %s78
      %p87 = scmp.eq.s32.totalorder %s25, 0
      %p88 = por %p86, %p87
      %p89 = scmp.ne.s32.totalorder %s77, %s78
      %p90 = scmp.eq.s32.totalorder %s26, 1
      %p91 = por %p89, %p90
      %p93 = scmp.ne.s32.totalorder %s78, %s92
      %p94 = scmp.eq.s32.totalorder %s26, 0
      %p95 = por %p93, %p94
      %s97 = sadd.s32 %s96, 1
      %p100 = scmp.eq.s32.totalorder %s20, 1
      %p101 = scmp.ne.s32.totalorder %s96, %s98
      %p102 = scmp.eq.s32.totalorder %s20, 0
      %p103 = por %p101, %p102
      %p104 = scmp.ne.s32.totalorder %s96, %s98
      %p105 = scmp.eq.s32.totalorder %s25, 1
      %p106 = por %p104, %p105
      %p107 = scmp.ne.s32.totalorder %s98, %s99
      %p108 = scmp.eq.s32.totalorder %s25, 0
      %p109 = por %p107, %p108
      %p110 = scmp.ne.s32.totalorder %s98, %s99
      %p111 = scmp.eq.s32.totalorder %s26, 1
      %p112 = por %p110, %p111
      %p114 = scmp.ne.s32.totalorder %s99, %s113
      %p115 = scmp.eq.s32.totalorder %s26, 0
      %p116 = por %p114, %p115
      %s118 = sadd.s32 %s117, 1
      %p121 = scmp.eq.s32.totalorder %s20, 1
      %p122 = scmp.ne.s32.totalorder %s117, %s119
      %p123 = scmp.eq.s32.totalorder %s20, 0
      %p124 = por %p122, %p123
      %p125 = scmp.ne.s32.totalorder %s117, %s119
      %p126 = scmp.eq.s32.totalorder %s25, 1
      %p127 = por %p125, %p126
      %p128 = scmp.ne.s32.totalorder %s119, %s120
      %p129 = scmp.eq.s32.totalorder %s25, 0
      %p130 = por %p128, %p129
      %p131 = scmp.ne.s32.totalorder %s119, %s120
      %p132 = scmp.eq.s32.totalorder %s26, 1
      %p133 = por %p131, %p132
      %p135 = scmp.ne.s32.totalorder %s120, %s134
      %p136 = scmp.eq.s32.totalorder %s26, 0
      %p137 = por %p135, %p136
      %s139 = sadd.s32 %s138, 1
      %p142 = scmp.eq.s32.totalorder %s20, 1
      %p143 = scmp.ne.s32.totalorder %s138, %s140
      %p144 = scmp.eq.s32.totalorder %s20, 0
      %p145 = por %p143, %p144
      %p146 = scmp.ne.s32.totalorder %s138, %s140
      %p147 = scmp.eq.s32.totalorder %s25, 1
      %p148 = por %p146, %p147
      %p149 = scmp.ne.s32.totalorder %s140, %s141
      %p150 = scmp.eq.s32.totalorder %s25, 0
      %p151 = por %p149, %p150
      %p152 = scmp.ne.s32.totalorder %s140, %s141
      %p153 = scmp.eq.s32.totalorder %s26, 1
      %p154 = por %p152, %p153
      %p156 = scmp.ne.s32.totalorder %s141, %s155
      %p157 = scmp.eq.s32.totalorder %s26, 0
      %p158 = por %p156, %p157
      %s160 = sadd.s32 %s159, 1
      %p163 = scmp.eq.s32.totalorder %s20, 1
      %p164 = scmp.ne.s32.totalorder %s159, %s161
      %p165 = scmp.eq.s32.totalorder %s20, 0
      %p166 = por %p164, %p165
      %p167 = scmp.ne.s32.totalorder %s159, %s161
      %p168 = scmp.eq.s32.totalorder %s25, 1
      %p169 = por %p167, %p168
      %p170 = scmp.ne.s32.totalorder %s161, %s162
      %p171 = scmp.eq.s32.totalorder %s25, 0
      %p172 = por %p170, %p171
      %p173 = scmp.ne.s32.totalorder %s161, %s162
      %p174 = scmp.eq.s32.totalorder %s26, 1
      %p175 = por %p173, %p174
      %p177 = scmp.ne.s32.totalorder %s162, %s176
      %p178 = scmp.eq.s32.totalorder %s26, 0
      %p179 = por %p177, %p178
      %s180 = ssub.s32 %s20, %s27
      %p181 = scmp.eq.s32.totalorder %s180, 0
      %s183 = sadd.s32 %s182, 1
      %s184 = scalar_select %p181, %s182, %s183
      %p187 = pneg %p181
      %p188 = scmp.eq.s32.totalorder %s20, 1
      %p189 = por %p187, %p188
      %p190 = scmp.ne.s32.totalorder %s182, %s185
      %p191 = scmp.eq.s32.totalorder %s20, 0
      %p192 = por %p190, %p191
      %p193 = scmp.ne.s32.totalorder %s182, %s185
      %p194 = scmp.eq.s32.totalorder %s25, 1
      %p195 = por %p193, %p194
      %p196 = scmp.ne.s32.totalorder %s185, %s186
      %p197 = scmp.eq.s32.totalorder %s25, 0
      %p198 = por %p196, %p197
      %p199 = scmp.ne.s32.totalorder %s185, %s186
      %p200 = scmp.eq.s32.totalorder %s26, 1
      %p201 = por %p199, %p200
      %p203 = scmp.ne.s32.totalorder %s186, %s202
      %p204 = scmp.eq.s32.totalorder %s26, 0
      %p205 = por %p203, %p204
      %p206 = scmp.le.s32.totalorder 1, %s20
      %p207 = scmp.lt.s32.totalorder %s20, 3
      %p208 = pnand %p206, %p207
      %p209 = pneg %p208
      // Predicated region
      $region9: #{tpu_custom_call.1} parent=5 // pred_check
        _
      $region10: #{tpu_custom_call.1} parent=5 // pred_check_branch
        %211 = sbr.rel (%p208) target = $region12
      $region11: #{tpu_custom_call.1} parent=5 // pred_region
        %s212 = ssub.s32 %s20, 1
        // Predicated region
        $region13: #{tpu_custom_call.1} parent=11 // pred_check
          %p213 = pneg %p67
        $region14: #{tpu_custom_call.1} parent=11 // pred_check_branch
          %215 = sbr.rel (%p213) target = $region16
        $region15: #{tpu_custom_call.1} parent=11 // pred_region
          %s217 = ssub.s32 9216, 9216
          %218 = vsyncadd [#allocation7], %s217
          %s219 = sshll.u32 [#allocation6], 4
          %s220 = int_to_ptr.vmem [resolvable:$true] %s219
          %225 = dma.hbm_to_vmem [thread:$0]  %s1, 9216, %s220, [#allocation7], 64, 64, 4
        $region16: #{tpu_custom_call.1} parent=11 // pred_fallthru
          _
        // Predicated region
        $region17: #{tpu_custom_call.1} parent=11 // pred_check
          %p226 = pneg %p88
        $region18: #{tpu_custom_call.1} parent=11 // pred_check_branch
          %228 = sbr.rel (%p226) target = $region20
        $region19: #{tpu_custom_call.1} parent=11 // pred_region
          _
        $region20: #{tpu_custom_call.1} parent=11 // pred_fallthru
          _
        // Predicated region
        $region21: #{tpu_custom_call.1} parent=11 // pred_check
          %p229 = pneg %p109
        $region22: #{tpu_custom_call.1} parent=11 // pred_check_branch
          %231 = sbr.rel (%p229) target = $region24
        $region23: #{tpu_custom_call.1} parent=11 // pred_region
          _
        $region24: #{tpu_custom_call.1} parent=11 // pred_fallthru
          _
        // Predicated region
        $region25: #{tpu_custom_call.1} parent=11 // pred_check
          %p232 = pneg %p130
        $region26: #{tpu_custom_call.1} parent=11 // pred_check_branch
          %234 = sbr.rel (%p232) target = $region28
        $region27: #{tpu_custom_call.1} parent=11 // pred_region
          %s236 = ssub.s32 9216, 9216
          %237 = vsyncadd [#allocation7], %s236
          %s238 = sshll.u32 [#allocation8], 4
          %s239 = int_to_ptr.vmem [resolvable:$true] %s238
          %244 = dma.hbm_to_vmem [thread:$0]  %s4, 9216, %s239, [#allocation7], 64, 64, 4
        $region28: #{tpu_custom_call.1} parent=11 // pred_fallthru
          _
        // Predicated region
        $region29: #{tpu_custom_call.1} parent=11 // pred_check
          %p245 = pneg %p151
        $region30: #{tpu_custom_call.1} parent=11 // pred_check_branch
          %247 = sbr.rel (%p245) target = $region32
        $region31: #{tpu_custom_call.1} parent=11 // pred_region
          _
        $region32: #{tpu_custom_call.1} parent=11 // pred_fallthru
          _
        // Predicated region
        $region33: #{tpu_custom_call.1} parent=11 // pred_check
          %p248 = pneg %p172
        $region34: #{tpu_custom_call.1} parent=11 // pred_check_branch
          %250 = sbr.rel (%p248) target = $region36
        $region35: #{tpu_custom_call.1} parent=11 // pred_region
          _
        $region36: #{tpu_custom_call.1} parent=11 // pred_fallthru
          _
      $region12: #{tpu_custom_call.1} parent=5 // pred_fallthru
        _
      %p251 = scmp.lt.s32.totalorder %s20, 2
      // Predicated region
      $region37: #{tpu_custom_call.1} parent=5 // pred_check
        %p252 = pneg %p251
      $region38: #{tpu_custom_call.1} parent=5 // pred_check_branch
        %254 = sbr.rel (%p252) target = $region40
      $region39: #{tpu_custom_call.1} parent=5 // pred_region
        // Predicated region
        $region41: #{tpu_custom_call.1} parent=39 // pred_check
          %p255 = pneg %p40
        $region42: #{tpu_custom_call.1} parent=39 // pred_check_branch
          %257 = sbr.rel (%p255) target = $region44
        $region43: #{tpu_custom_call.1} parent=39 // pred_region
          %s258 = sand.u32 %s30, 1
          %s259 = scalar_lea.sflag [#allocation4], %s258
          %s260 = sand.u32 %s30, 1
          %s261 = smul.addr %s260, 128
          %s262 = scalar_lea.vmem [#allocation3], %s261
          %s264 = ssub.s32 2048, 2048
          %265 = vsyncadd %s259, %s264
          %s266 = smul.addr %s20, 32
          %s267 = smul.addr %s266, 64
          %s268 = scalar_lea.hbm %s0, %s267
          %s269 = sshll.u32 %s262, 4
          %s270 = int_to_ptr.vmem [resolvable:$true] %s269
          %275 = dma.hbm_to_vmem [thread:$0]  %s268, 2048, %s270, %s259, 64, 64, 4
        $region44: #{tpu_custom_call.1} parent=39 // pred_fallthru
          _
      $region40: #{tpu_custom_call.1} parent=5 // pred_fallthru
        _
      %p276 = scmp.le.s32.totalorder 1, %s20
      %p277 = scmp.lt.s32.totalorder %s20, 3
      %p278 = pnand %p276, %p277
      %p279 = pneg %p278
      // Predicated region
      $region45: #{tpu_custom_call.1} parent=5 // pred_check
        _
      $region46: #{tpu_custom_call.1} parent=5 // pred_check_branch
        %281 = sbr.rel (%p278) target = $region48
      $region47: #{tpu_custom_call.1} parent=5 // pred_region
        %s282 = ssub.s32 %s20, 1
        %s283 = sand.u32 %s33, 1
        %s284 = scalar_lea.sflag [#allocation4], %s283
        %s285 = sand.u32 %s33, 1
        %s286 = smul.addr %s285, 128
        %s287 = scalar_lea.vmem [#allocation3], %s286
        // Predicated region
        $region49: #{tpu_custom_call.1} parent=47 // pred_check
          %p288 = pneg %p46
        $region50: #{tpu_custom_call.1} parent=47 // pred_check_branch
          %290 = sbr.rel (%p288) target = $region52
        $region51: #{tpu_custom_call.1} parent=47 // pred_region
          %291 = dma.done %s284, 2048
        $region52: #{tpu_custom_call.1} parent=47 // pred_fallthru
          _
        // Predicated region
        $region53: #{tpu_custom_call.1} parent=47 // pred_check
          %p292 = pneg %p67
        $region54: #{tpu_custom_call.1} parent=47 // pred_check_branch
          %294 = sbr.rel (%p292) target = $region56
        $region55: #{tpu_custom_call.1} parent=47 // pred_region
          %295 = dma.done [#allocation7], 9216
        $region56: #{tpu_custom_call.1} parent=47 // pred_fallthru
          _
        // Predicated region
        $region57: #{tpu_custom_call.1} parent=47 // pred_check
          %p296 = pneg %p130
        $region58: #{tpu_custom_call.1} parent=47 // pred_check_branch
          %298 = sbr.rel (%p296) target = $region60
        $region59: #{tpu_custom_call.1} parent=47 // pred_region
          %299 = dma.done [#allocation7], 9216
        $region60: #{tpu_custom_call.1} parent=47 // pred_fallthru
          _
        %s300 = sand.u32 %s33, 1
        %s301 = scalar_lea.sflag [#allocation4], %s300
        %s302 = sand.u32 %s33, 1
        %s303 = smul.addr %s302, 128
        %s304 = scalar_lea.vmem [#allocation3], %s303
        %p305 = pneg %p46
        %p306 = pneg %p43
        %p307 = pneg %p67
        %p308 = pneg %p64
        %p309 = pneg %p88
        %p310 = pneg %p85
        %p311 = pneg %p109
        %p312 = pneg %p106
        %p313 = pneg %p130
        %p314 = pneg %p127
        %p315 = pneg %p151
        %p316 = pneg %p148
        %p317 = pneg %p172
        %p318 = pneg %p169
        %p319 = pneg %p198
        %p320 = pneg %p195
        %s321 = sand.u32 %s185, 1
        %s322 = scalar_lea.sflag [#allocation5], %s321
        %s323 = sand.u32 %s185, 1
        %s324 = smul.addr %s323, 128
        %s325 = scalar_lea.vmem [#allocation9], %s324
        %v327 = vld [vmem:[%s287] sm:$0xf]
        %v328 = vld [vmem:[%s287 + $0x4] sm:$0xf]
        %v329 = vld [vmem:[%s287 + $0x8] sm:$0xf]
        %v330 = vld [vmem:[%s287 + $0xc] sm:$0xf]
        %v331 = vld [vmem:[%s287 + $0x10] sm:$0xf]
        %v332 = vld [vmem:[%s287 + $0x14] sm:$0xf]
        %v333 = vld [vmem:[%s287 + $0x18] sm:$0xf]
        %v334 = vld [vmem:[%s287 + $0x1c] sm:$0xf]
        %v335 = vld [vmem:[%s287 + $0x20] sm:$0xf]
        %v336 = vld [vmem:[%s287 + $0x24] sm:$0xf]
        %v337 = vld [vmem:[%s287 + $0x28] sm:$0xf]
        %v338 = vld [vmem:[%s287 + $0x2c] sm:$0xf]
        %v339 = vld [vmem:[%s287 + $0x30] sm:$0xf]
        %v340 = vld [vmem:[%s287 + $0x34] sm:$0xf]
        %v341 = vld [vmem:[%s287 + $0x38] sm:$0xf]
        %v342 = vld [vmem:[%s287 + $0x3c] sm:$0xf]
        %v343 = vld [vmem:[%s287 + $0x40] sm:$0xf]
        %v344 = vld [vmem:[%s287 + $0x44] sm:$0xf]
        %v345 = vld [vmem:[%s287 + $0x48] sm:$0xf]
        %v346 = vld [vmem:[%s287 + $0x4c] sm:$0xf]
        %v347 = vld [vmem:[%s287 + $0x50] sm:$0xf]
        %v348 = vld [vmem:[%s287 + $0x54] sm:$0xf]
        %v349 = vld [vmem:[%s287 + $0x58] sm:$0xf]
        %v350 = vld [vmem:[%s287 + $0x5c] sm:$0xf]
        %v351 = vld [vmem:[%s287 + $0x60] sm:$0xf]
        %v352 = vld [vmem:[%s287 + $0x64] sm:$0xf]
        %v353 = vld [vmem:[%s287 + $0x68] sm:$0xf]
        %v354 = vld [vmem:[%s287 + $0x6c] sm:$0xf]
        %v355 = vld [vmem:[%s287 + $0x70] sm:$0xf]
        %v356 = vld [vmem:[%s287 + $0x74] sm:$0xf]
        %v357 = vld [vmem:[%s287 + $0x78] sm:$0xf]
        %v358 = vld [vmem:[%s287 + $0x7c] sm:$0xf]
        %s359 = scalar_lea.vmem [#allocation2], 24
        %360 = vst [vmem:[%s359 + $0x4] sm:$0xf] %v327
        %361 = vst [vmem:[%s359 + $0x10] sm:$0xf] %v328
        %362 = vst [vmem:[%s359 + $0x1c] sm:$0xf] %v329
        %363 = vst [vmem:[%s359 + $0x28] sm:$0xf] %v330
        %364 = vst [vmem:[%s359 + $0x34] sm:$0xf] %v331
        %365 = vst [vmem:[%s359 + $0x40] sm:$0xf] %v332
        %366 = vst [vmem:[%s359 + $0x4c] sm:$0xf] %v333
        %367 = vst [vmem:[%s359 + $0x58] sm:$0xf] %v334
        %368 = vst [vmem:[%s359 + $0x64] sm:$0xf] %v335
        %369 = vst [vmem:[%s359 + $0x70] sm:$0xf] %v336
        %370 = vst [vmem:[%s359 + $0x7c] sm:$0xf] %v337
        %371 = vst [vmem:[%s359 + $0x88] sm:$0xf] %v338
        %372 = vst [vmem:[%s359 + $0x94] sm:$0xf] %v339
        %373 = vst [vmem:[%s359 + $0xa0] sm:$0xf] %v340
        %374 = vst [vmem:[%s359 + $0xac] sm:$0xf] %v341
        %375 = vst [vmem:[%s359 + $0xb8] sm:$0xf] %v342
        %376 = vst [vmem:[%s359 + $0xc4] sm:$0xf] %v343
        %377 = vst [vmem:[%s359 + $0xd0] sm:$0xf] %v344
        %378 = vst [vmem:[%s359 + $0xdc] sm:$0xf] %v345
        %379 = vst [vmem:[%s359 + $0xe8] sm:$0xf] %v346
        %380 = vst [vmem:[%s359 + $0xf4] sm:$0xf] %v347
        %381 = vst [vmem:[%s359 + $0x100] sm:$0xf] %v348
        %382 = vst [vmem:[%s359 + $0x10c] sm:$0xf] %v349
        %383 = vst [vmem:[%s359 + $0x118] sm:$0xf] %v350
        %384 = vst [vmem:[%s359 + $0x124] sm:$0xf] %v351
        %385 = vst [vmem:[%s359 + $0x130] sm:$0xf] %v352
        %386 = vst [vmem:[%s359 + $0x13c] sm:$0xf] %v353
        %387 = vst [vmem:[%s359 + $0x148] sm:$0xf] %v354
        %388 = vst [vmem:[%s359 + $0x154] sm:$0xf] %v355
        %389 = vst [vmem:[%s359 + $0x160] sm:$0xf] %v356
        %390 = vst [vmem:[%s359 + $0x16c] sm:$0xf] %v357
        %391 = vst [vmem:[%s359 + $0x178] sm:$0xf] %v358
        %vm392 = vsmask.f32 256
        %vm393 = vsmask.f32 4368
        %vm394 = vmor %vm392, %vm393
        %v396 = vshrl.u32 %v327, 16
        %v398 = vrot.slane %v396, 7
        %v399 = vshll.u32 %v327, 16
        %v401 = vor.u32 %v398, %v399
        %v402 = vrot.slane %v398, 4
        %v404 = vshrl.u32 %v328, 16
        %v406 = vrot.slane %v404, 7
        %v407 = vshll.u32 %v328, 16
        %v409 = vor.u32 %v406, %v407
        %v410 = vsel %vm394, %v402, %v409
        %v412 = vshrl.u32 %v329, 16
        %v414 = vrot.slane %v412, 7
        %v415 = vshll.u32 %v329, 16
        %v417 = vor.u32 %v414, %v415
        %v418 = vrot.slane %v414, 4
        %v420 = vshrl.u32 %v330, 16
        %v422 = vrot.slane %v420, 7
        %v423 = vshll.u32 %v330, 16
        %v425 = vor.u32 %v422, %v423
        %v426 = vsel %vm394, %v418, %v425
        %v428 = vshrl.u32 %v331, 16
        %v430 = vrot.slane %v428, 7
        %v431 = vshll.u32 %v331, 16
        %v433 = vor.u32 %v430, %v431
        %v434 = vrot.slane %v430, 4
        %v436 = vshrl.u32 %v332, 16
        %v438 = vrot.slane %v436, 7
        %v439 = vshll.u32 %v332, 16
        %v441 = vor.u32 %v438, %v439
        %v442 = vsel %vm394, %v434, %v441
        %v444 = vshrl.u32 %v333, 16
        %v446 = vrot.slane %v444, 7
        %v447 = vshll.u32 %v333, 16
        %v449 = vor.u32 %v446, %v447
        %v450 = vrot.slane %v446, 4
        %v452 = vshrl.u32 %v334, 16
        %v454 = vrot.slane %v452, 7
        %v455 = vshll.u32 %v334, 16
        %v457 = vor.u32 %v454, %v455
        %v458 = vsel %vm394, %v450, %v457
        %v460 = vshrl.u32 %v335, 16
        %v462 = vrot.slane %v460, 7
        %v463 = vshll.u32 %v335, 16
        %v465 = vor.u32 %v462, %v463
        %v466 = vrot.slane %v462, 4
        %v468 = vshrl.u32 %v336, 16
        %v470 = vrot.slane %v468, 7
        %v471 = vshll.u32 %v336, 16
        %v473 = vor.u32 %v470, %v471
        %v474 = vsel %vm394, %v466, %v473
        %v476 = vshrl.u32 %v337, 16
        %v478 = vrot.slane %v476, 7
        %v479 = vshll.u32 %v337, 16
        %v481 = vor.u32 %v478, %v479
        %v482 = vrot.slane %v478, 4
        %v484 = vshrl.u32 %v338, 16
        %v486 = vrot.slane %v484, 7
        %v487 = vshll.u32 %v338, 16
        %v489 = vor.u32 %v486, %v487
        %v490 = vsel %vm394, %v482, %v489
        %v492 = vshrl.u32 %v339, 16
        %v494 = vrot.slane %v492, 7
        %v495 = vshll.u32 %v339, 16
        %v497 = vor.u32 %v494, %v495
        %v498 = vrot.slane %v494, 4
        %v500 = vshrl.u32 %v340, 16
        %v502 = vrot.slane %v500, 7
        %v503 = vshll.u32 %v340, 16
        %v505 = vor.u32 %v502, %v503
        %v506 = vsel %vm394, %v498, %v505
        %v508 = vshrl.u32 %v341, 16
        %v510 = vrot.slane %v508, 7
        %v511 = vshll.u32 %v341, 16
        %v513 = vor.u32 %v510, %v511
        %v514 = vrot.slane %v510, 4
        %v516 = vshrl.u32 %v342, 16
        %v518 = vrot.slane %v516, 7
        %v519 = vshll.u32 %v342, 16
        %v521 = vor.u32 %v518, %v519
        %v522 = vsel %vm394, %v514, %v521
        %v524 = vshrl.u32 %v343, 16
        %v526 = vrot.slane %v524, 7
        %v527 = vshll.u32 %v343, 16
        %v529 = vor.u32 %v526, %v527
        %v530 = vrot.slane %v526, 4
        %v532 = vshrl.u32 %v344, 16
        %v534 = vrot.slane %v532, 7
        %v535 = vshll.u32 %v344, 16
        %v537 = vor.u32 %v534, %v535
        %v538 = vsel %vm394, %v530, %v537
        %v540 = vshrl.u32 %v345, 16
        %v542 = vrot.slane %v540, 7
        %v543 = vshll.u32 %v345, 16
        %v545 = vor.u32 %v542, %v543
        %v546 = vrot.slane %v542, 4
        %v548 = vshrl.u32 %v346, 16
        %v550 = vrot.slane %v548, 7
        %v551 = vshll.u32 %v346, 16
        %v553 = vor.u32 %v550, %v551
        %v554 = vsel %vm394, %v546, %v553
        %v556 = vshrl.u32 %v347, 16
        %v558 = vrot.slane %v556, 7
        %v559 = vshll.u32 %v347, 16
        %v561 = vor.u32 %v558, %v559
        %v562 = vrot.slane %v558, 4
        %v564 = vshrl.u32 %v348, 16
        %v566 = vrot.slane %v564, 7
        %v567 = vshll.u32 %v348, 16
        %v569 = vor.u32 %v566, %v567
        %v570 = vsel %vm394, %v562, %v569
        %v572 = vshrl.u32 %v349, 16
        %v574 = vrot.slane %v572, 7
        %v575 = vshll.u32 %v349, 16
        %v577 = vor.u32 %v574, %v575
        %v578 = vrot.slane %v574, 4
        %v580 = vshrl.u32 %v350, 16
        %v582 = vrot.slane %v580, 7
        %v583 = vshll.u32 %v350, 16
        %v585 = vor.u32 %v582, %v583
        %v586 = vsel %vm394, %v578, %v585
        %v588 = vshrl.u32 %v351, 16
        %v590 = vrot.slane %v588, 7
        %v591 = vshll.u32 %v351, 16
        %v593 = vor.u32 %v590, %v591
        %v594 = vrot.slane %v590, 4
        %v596 = vshrl.u32 %v352, 16
        %v598 = vrot.slane %v596, 7
        %v599 = vshll.u32 %v352, 16
        %v601 = vor.u32 %v598, %v599
        %v602 = vsel %vm394, %v594, %v601
        %v604 = vshrl.u32 %v353, 16
        %v606 = vrot.slane %v604, 7
        %v607 = vshll.u32 %v353, 16
        %v609 = vor.u32 %v606, %v607
        %v610 = vrot.slane %v606, 4
        %v612 = vshrl.u32 %v354, 16
        %v614 = vrot.slane %v612, 7
        %v615 = vshll.u32 %v354, 16
        %v617 = vor.u32 %v614, %v615
        %v618 = vsel %vm394, %v610, %v617
        %v620 = vshrl.u32 %v355, 16
        %v622 = vrot.slane %v620, 7
        %v623 = vshll.u32 %v355, 16
        %v625 = vor.u32 %v622, %v623
        %v626 = vrot.slane %v622, 4
        %v628 = vshrl.u32 %v356, 16
        %v630 = vrot.slane %v628, 7
        %v631 = vshll.u32 %v356, 16
        %v633 = vor.u32 %v630, %v631
        %v634 = vsel %vm394, %v626, %v633
        %v636 = vshrl.u32 %v357, 16
        %v638 = vrot.slane %v636, 7
        %v639 = vshll.u32 %v357, 16
        %v641 = vor.u32 %v638, %v639
        %v642 = vrot.slane %v638, 4
        %v644 = vshrl.u32 %v358, 16
        %v646 = vrot.slane %v644, 7
        %v647 = vshll.u32 %v358, 16
        %v649 = vor.u32 %v646, %v647
        %v650 = vsel %vm394, %v642, %v649
        %vm683 = vcmask 1043456
        %vm684 = vsmask.f32 7938
        %vm685 = vmand %vm683, %vm684
        %v686 = vld [vmem:[%s359] sm:$0xf]
        %v687 = vsel %vm685, %v401, %v686
        %688 = vst [vmem:[%s359] sm:$0xf] %v687
        %689 = vst [vmem:[%s359 + $0xc] sm:$0xf] %v410
        %v690 = vld [vmem:[%s359 + $0x18] sm:$0xf]
        %v691 = vsel %vm685, %v417, %v690
        %692 = vst [vmem:[%s359 + $0x18] sm:$0xf] %v691
        %693 = vst [vmem:[%s359 + $0x24] sm:$0xf] %v426
        %v694 = vld [vmem:[%s359 + $0x30] sm:$0xf]
        %v695 = vsel %vm685, %v433, %v694
        %696 = vst [vmem:[%s359 + $0x30] sm:$0xf] %v695
        %697 = vst [vmem:[%s359 + $0x3c] sm:$0xf] %v442
        %v698 = vld [vmem:[%s359 + $0x48] sm:$0xf]
        %v699 = vsel %vm685, %v449, %v698
        %700 = vst [vmem:[%s359 + $0x48] sm:$0xf] %v699
        %701 = vst [vmem:[%s359 + $0x54] sm:$0xf] %v458
        %v702 = vld [vmem:[%s359 + $0x60] sm:$0xf]
        %v703 = vsel %vm685, %v465, %v702
        %704 = vst [vmem:[%s359 + $0x60] sm:$0xf] %v703
        %705 = vst [vmem:[%s359 + $0x6c] sm:$0xf] %v474
        %v706 = vld [vmem:[%s359 + $0x78] sm:$0xf]
        %v707 = vsel %vm685, %v481, %v706
        %708 = vst [vmem:[%s359 + $0x78] sm:$0xf] %v707
        %709 = vst [vmem:[%s359 + $0x84] sm:$0xf] %v490
        %v710 = vld [vmem:[%s359 + $0x90] sm:$0xf]
        %v711 = vsel %vm685, %v497, %v710
        %712 = vst [vmem:[%s359 + $0x90] sm:$0xf] %v711
        %713 = vst [vmem:[%s359 + $0x9c] sm:$0xf] %v506
        %v714 = vld [vmem:[%s359 + $0xa8] sm:$0xf]
        %v715 = vsel %vm685, %v513, %v714
        %716 = vst [vmem:[%s359 + $0xa8] sm:$0xf] %v715
        %717 = vst [vmem:[%s359 + $0xb4] sm:$0xf] %v522
        %v718 = vld [vmem:[%s359 + $0xc0] sm:$0xf]
        %v719 = vsel %vm685, %v529, %v718
        %720 = vst [vmem:[%s359 + $0xc0] sm:$0xf] %v719
        %721 = vst [vmem:[%s359 + $0xcc] sm:$0xf] %v538
        %v722 = vld [vmem:[%s359 + $0xd8] sm:$0xf]
        %v723 = vsel %vm685, %v545, %v722
        %724 = vst [vmem:[%s359 + $0xd8] sm:$0xf] %v723
        %725 = vst [vmem:[%s359 + $0xe4] sm:$0xf] %v554
        %v726 = vld [vmem:[%s359 + $0xf0] sm:$0xf]
        %v727 = vsel %vm685, %v561, %v726
        %728 = vst [vmem:[%s359 + $0xf0] sm:$0xf] %v727
        %729 = vst [vmem:[%s359 + $0xfc] sm:$0xf] %v570
        %v730 = vld [vmem:[%s359 + $0x108] sm:$0xf]
        %v731 = vsel %vm685, %v577, %v730
        %732 = vst [vmem:[%s359 + $0x108] sm:$0xf] %v731
        %733 = vst [vmem:[%s359 + $0x114] sm:$0xf] %v586
        %v734 = vld [vmem:[%s359 + $0x120] sm:$0xf]
        %v735 = vsel %vm685, %v593, %v734
        %736 = vst [vmem:[%s359 + $0x120] sm:$0xf] %v735
        %737 = vst [vmem:[%s359 + $0x12c] sm:$0xf] %v602
        %v738 = vld [vmem:[%s359 + $0x138] sm:$0xf]
        %v739 = vsel %vm685, %v609, %v738
        %740 = vst [vmem:[%s359 + $0x138] sm:$0xf] %v739
        %741 = vst [vmem:[%s359 + $0x144] sm:$0xf] %v618
        %v742 = vld [vmem:[%s359 + $0x150] sm:$0xf]
        %v743 = vsel %vm685, %v625, %v742
        %744 = vst [vmem:[%s359 + $0x150] sm:$0xf] %v743
        %745 = vst [vmem:[%s359 + $0x15c] sm:$0xf] %v634
        %v746 = vld [vmem:[%s359 + $0x168] sm:$0xf]
        %v747 = vsel %vm685, %v641, %v746
        %748 = vst [vmem:[%s359 + $0x168] sm:$0xf] %v747
        %749 = vst [vmem:[%s359 + $0x174] sm:$0xf] %v650
        %vm750 = vsmask.f32 3328
        %vm751 = vsmask.f32 7440
        %vm752 = vmor %vm750, %vm751
        %v753 = vrot.slane %v396, 4
        %v754 = vrot.slane %v399, 5
        %v755 = vor.u32 %v753, %v754
        %v756 = vrot.slane %v755, 4
        %v757 = vrot.slane %v407, 5
        %v758 = vsel %vm752, %v756, %v757
        %v759 = vrot.slane %v404, 4
        %v760 = vor.u32 %v759, %v757
        %v761 = vrot.slane %v760, 4
        %v762 = vrot.slane %v412, 4
        %v763 = vrot.slane %v415, 5
        %v764 = vor.u32 %v762, %v763
        %v765 = vrot.slane %v764, 4
        %v766 = vrot.slane %v423, 5
        %v767 = vsel %vm752, %v765, %v766
        %v768 = vrot.slane %v420, 4
        %v769 = vor.u32 %v768, %v766
        %v770 = vrot.slane %v769, 4
        %v771 = vrot.slane %v428, 4
        %v772 = vrot.slane %v431, 5
        %v773 = vor.u32 %v771, %v772
        %v774 = vrot.slane %v773, 4
        %v775 = vrot.slane %v439, 5
        %v776 = vsel %vm752, %v774, %v775
        %v777 = vrot.slane %v436, 4
        %v778 = vor.u32 %v777, %v775
        %v779 = vrot.slane %v778, 4
        %v780 = vrot.slane %v444, 4
        %v781 = vrot.slane %v447, 5
        %v782 = vor.u32 %v780, %v781
        %v783 = vrot.slane %v782, 4
        %v784 = vrot.slane %v455, 5
        %v785 = vsel %vm752, %v783, %v784
        %v786 = vrot.slane %v452, 4
        %v787 = vor.u32 %v786, %v784
        %v788 = vrot.slane %v787, 4
        %v789 = vrot.slane %v460, 4
        %v790 = vrot.slane %v463, 5
        %v791 = vor.u32 %v789, %v790
        %v792 = vrot.slane %v791, 4
        %v793 = vrot.slane %v471, 5
        %v794 = vsel %vm752, %v792, %v793
        %v795 = vrot.slane %v468, 4
        %v796 = vor.u32 %v795, %v793
        %v797 = vrot.slane %v796, 4
        %v798 = vrot.slane %v476, 4
        %v799 = vrot.slane %v479, 5
        %v800 = vor.u32 %v798, %v799
        %v801 = vrot.slane %v800, 4
        %v802 = vrot.slane %v487, 5
        %v803 = vsel %vm752, %v801, %v802
        %v804 = vrot.slane %v484, 4
        %v805 = vor.u32 %v804, %v802
        %v806 = vrot.slane %v805, 4
        %v807 = vrot.slane %v492, 4
        %v808 = vrot.slane %v495, 5
        %v809 = vor.u32 %v807, %v808
        %v810 = vrot.slane %v809, 4
        %v811 = vrot.slane %v503, 5
        %v812 = vsel %vm752, %v810, %v811
        %v813 = vrot.slane %v500, 4
        %v814 = vor.u32 %v813, %v811
        %v815 = vrot.slane %v814, 4
        %v816 = vrot.slane %v508, 4
        %v817 = vrot.slane %v511, 5
        %v818 = vor.u32 %v816, %v817
        %v819 = vrot.slane %v818, 4
        %v820 = vrot.slane %v519, 5
        %v821 = vsel %vm752, %v819, %v820
        %v822 = vrot.slane %v516, 4
        %v823 = vor.u32 %v822, %v820
        %v824 = vrot.slane %v823, 4
        %v825 = vrot.slane %v524, 4
        %v826 = vrot.slane %v527, 5
        %v827 = vor.u32 %v825, %v826
        %v828 = vrot.slane %v827, 4
        %v829 = vrot.slane %v535, 5
        %v830 = vsel %vm752, %v828, %v829
        %v831 = vrot.slane %v532, 4
        %v832 = vor.u32 %v831, %v829
        %v833 = vrot.slane %v832, 4
        %v834 = vrot.slane %v540, 4
        %v835 = vrot.slane %v543, 5
        %v836 = vor.u32 %v834, %v835
        %v837 = vrot.slane %v836, 4
        %v838 = vrot.slane %v551, 5
        %v839 = vsel %vm752, %v837, %v838
        %v840 = vrot.slane %v548, 4
        %v841 = vor.u32 %v840, %v838
        %v842 = vrot.slane %v841, 4
        %v843 = vrot.slane %v556, 4
        %v844 = vrot.slane %v559, 5
        %v845 = vor.u32 %v843, %v844
        %v846 = vrot.slane %v845, 4
        %v847 = vrot.slane %v567, 5
        %v848 = vsel %vm752, %v846, %v847
        %v849 = vrot.slane %v564, 4
        %v850 = vor.u32 %v849, %v847
        %v851 = vrot.slane %v850, 4
        %v852 = vrot.slane %v572, 4
        %v853 = vrot.slane %v575, 5
        %v854 = vor.u32 %v852, %v853
        %v855 = vrot.slane %v854, 4
        %v856 = vrot.slane %v583, 5
        %v857 = vsel %vm752, %v855, %v856
        %v858 = vrot.slane %v580, 4
        %v859 = vor.u32 %v858, %v856
        %v860 = vrot.slane %v859, 4
        %v861 = vrot.slane %v588, 4
        %v862 = vrot.slane %v591, 5
        %v863 = vor.u32 %v861, %v862
        %v864 = vrot.slane %v863, 4
        %v865 = vrot.slane %v599, 5
        %v866 = vsel %vm752, %v864, %v865
        %v867 = vrot.slane %v596, 4
        %v868 = vor.u32 %v867, %v865
        %v869 = vrot.slane %v868, 4
        %v870 = vrot.slane %v604, 4
        %v871 = vrot.slane %v607, 5
        %v872 = vor.u32 %v870, %v871
        %v873 = vrot.slane %v872, 4
        %v874 = vrot.slane %v615, 5
        %v875 = vsel %vm752, %v873, %v874
        %v876 = vrot.slane %v612, 4
        %v877 = vor.u32 %v876, %v874
        %v878 = vrot.slane %v877, 4
        %v879 = vrot.slane %v620, 4
        %v880 = vrot.slane %v623, 5
        %v881 = vor.u32 %v879, %v880
        %v882 = vrot.slane %v881, 4
        %v883 = vrot.slane %v631, 5
        %v884 = vsel %vm752, %v882, %v883
        %v885 = vrot.slane %v628, 4
        %v886 = vor.u32 %v885, %v883
        %v887 = vrot.slane %v886, 4
        %v888 = vrot.slane %v636, 4
        %v889 = vrot.slane %v639, 5
        %v890 = vor.u32 %v888, %v889
        %v891 = vrot.slane %v890, 4
        %v892 = vrot.slane %v647, 5
        %v893 = vsel %vm752, %v891, %v892
        %v894 = vrot.slane %v644, 4
        %v895 = vor.u32 %v894, %v892
        %v896 = vrot.slane %v895, 4
        %929 = vst [vmem:[%s359 + $0x8] sm:$0xf] %v758
        %vm930 = vmand %vm683, %vm750
        %v931 = vld [vmem:[%s359 + $0x14] sm:$0xf]
        %v932 = vsel %vm930, %v761, %v931
        %933 = vst [vmem:[%s359 + $0x14] sm:$0xf] %v932
        %934 = vst [vmem:[%s359 + $0x20] sm:$0xf] %v767
        %v935 = vld [vmem:[%s359 + $0x2c] sm:$0xf]
        %v936 = vsel %vm930, %v770, %v935
        %937 = vst [vmem:[%s359 + $0x2c] sm:$0xf] %v936
        %938 = vst [vmem:[%s359 + $0x38] sm:$0xf] %v776
        %v939 = vld [vmem:[%s359 + $0x44] sm:$0xf]
        %v940 = vsel %vm930, %v779, %v939
        %941 = vst [vmem:[%s359 + $0x44] sm:$0xf] %v940
        %942 = vst [vmem:[%s359 + $0x50] sm:$0xf] %v785
        %v943 = vld [vmem:[%s359 + $0x5c] sm:$0xf]
        %v944 = vsel %vm930, %v788, %v943
        %945 = vst [vmem:[%s359 + $0x5c] sm:$0xf] %v944
        %946 = vst [vmem:[%s359 + $0x68] sm:$0xf] %v794
        %v947 = vld [vmem:[%s359 + $0x74] sm:$0xf]
        %v948 = vsel %vm930, %v797, %v947
        %949 = vst [vmem:[%s359 + $0x74] sm:$0xf] %v948
        %950 = vst [vmem:[%s359 + $0x80] sm:$0xf] %v803
        %v951 = vld [vmem:[%s359 + $0x8c] sm:$0xf]
        %v952 = vsel %vm930, %v806, %v951
        %953 = vst [vmem:[%s359 + $0x8c] sm:$0xf] %v952
        %954 = vst [vmem:[%s359 + $0x98] sm:$0xf] %v812
        %v955 = vld [vmem:[%s359 + $0xa4] sm:$0xf]
        %v956 = vsel %vm930, %v815, %v955
        %957 = vst [vmem:[%s359 + $0xa4] sm:$0xf] %v956
        %958 = vst [vmem:[%s359 + $0xb0] sm:$0xf] %v821
        %v959 = vld [vmem:[%s359 + $0xbc] sm:$0xf]
        %v960 = vsel %vm930, %v824, %v959
        %961 = vst [vmem:[%s359 + $0xbc] sm:$0xf] %v960
        %962 = vst [vmem:[%s359 + $0xc8] sm:$0xf] %v830
        %v963 = vld [vmem:[%s359 + $0xd4] sm:$0xf]
        %v964 = vsel %vm930, %v833, %v963
        %965 = vst [vmem:[%s359 + $0xd4] sm:$0xf] %v964
        %966 = vst [vmem:[%s359 + $0xe0] sm:$0xf] %v839
        %v967 = vld [vmem:[%s359 + $0xec] sm:$0xf]
        %v968 = vsel %vm930, %v842, %v967
        %969 = vst [vmem:[%s359 + $0xec] sm:$0xf] %v968
        %970 = vst [vmem:[%s359 + $0xf8] sm:$0xf] %v848
        %v971 = vld [vmem:[%s359 + $0x104] sm:$0xf]
        %v972 = vsel %vm930, %v851, %v971
        %973 = vst [vmem:[%s359 + $0x104] sm:$0xf] %v972
        %974 = vst [vmem:[%s359 + $0x110] sm:$0xf] %v857
        %v975 = vld [vmem:[%s359 + $0x11c] sm:$0xf]
        %v976 = vsel %vm930, %v860, %v975
        %977 = vst [vmem:[%s359 + $0x11c] sm:$0xf] %v976
        %978 = vst [vmem:[%s359 + $0x128] sm:$0xf] %v866
        %v979 = vld [vmem:[%s359 + $0x134] sm:$0xf]
        %v980 = vsel %vm930, %v869, %v979
        %981 = vst [vmem:[%s359 + $0x134] sm:$0xf] %v980
        %982 = vst [vmem:[%s359 + $0x140] sm:$0xf] %v875
        %v983 = vld [vmem:[%s359 + $0x14c] sm:$0xf]
        %v984 = vsel %vm930, %v878, %v983
        %985 = vst [vmem:[%s359 + $0x14c] sm:$0xf] %v984
        %986 = vst [vmem:[%s359 + $0x158] sm:$0xf] %v884
        %v987 = vld [vmem:[%s359 + $0x164] sm:$0xf]
        %v988 = vsel %vm930, %v887, %v987
        %989 = vst [vmem:[%s359 + $0x164] sm:$0xf] %v988
        %990 = vst [vmem:[%s359 + $0x170] sm:$0xf] %v893
        %v991 = vld [vmem:[%s359 + $0x17c] sm:$0xf]
        %v992 = vsel %vm930, %v896, %v991
        %993 = vst [vmem:[%s359 + $0x17c] sm:$0xf] %v992
        %994 = vst [vmem:[#allocation2] sm:$0xff] 0
        %995 = vst [vmem:[#allocation2 + $0x8] sm:$0xf] 0
        %996 = vst [vmem:[#allocation2 + $0xc] sm:$0xff] 0
        %997 = vst [vmem:[#allocation2 + $0x14] sm:$0xf] 0
        %s998 = scalar_lea.vmem [#allocation2], 408
        %999 = vst [vmem:[%s998] sm:$0xff] 0
        %1000 = vst [vmem:[%s998 + $0x8] sm:$0xf] 0
        %1001 = vst [vmem:[%s998 + $0xc] sm:$0xff] 0
        %1002 = vst [vmem:[%s998 + $0x14] sm:$0xf] 0
        %vm1003 = vcmask 1040384
        %vm1004 = vmand %vm1003, %vm392
        %v1005 = vld [vmem:[#allocation2] sm:$0x1]
        %v1006 = vsel %vm1004, 0, %v1005
        %1007 = vst [vmem:[#allocation2] sm:$0x1] %v1006
        %v1008 = vld [vmem:[#allocation2 + $0x18] sm:$0x1]
        %v1009 = vsel %vm1004, 0, %v1008
        %1010 = vst [vmem:[#allocation2 + $0x18] sm:$0x1] %v1009
        %v1011 = vld [vmem:[#allocation2 + $0x30] sm:$0x1]
        %v1012 = vsel %vm1004, 0, %v1011
        %1013 = vst [vmem:[#allocation2 + $0x30] sm:$0x1] %v1012
        %v1014 = vld [vmem:[#allocation2 + $0x48] sm:$0x1]
        %v1015 = vsel %vm1004, 0, %v1014
        %1016 = vst [vmem:[#allocation2 + $0x48] sm:$0x1] %v1015
        %v1017 = vld [vmem:[#allocation2 + $0x60] sm:$0x1]
        %v1018 = vsel %vm1004, 0, %v1017
        %1019 = vst [vmem:[#allocation2 + $0x60] sm:$0x1] %v1018
        %v1020 = vld [vmem:[#allocation2 + $0x78] sm:$0x1]
        %v1021 = vsel %vm1004, 0, %v1020
        %1022 = vst [vmem:[#allocation2 + $0x78] sm:$0x1] %v1021
        %v1023 = vld [vmem:[#allocation2 + $0x90] sm:$0x1]
        %v1024 = vsel %vm1004, 0, %v1023
        %1025 = vst [vmem:[#allocation2 + $0x90] sm:$0x1] %v1024
        %v1026 = vld [vmem:[#allocation2 + $0xa8] sm:$0x1]
        %v1027 = vsel %vm1004, 0, %v1026
        %1028 = vst [vmem:[#allocation2 + $0xa8] sm:$0x1] %v1027
        %v1029 = vld [vmem:[#allocation2 + $0xc0] sm:$0x1]
        %v1030 = vsel %vm1004, 0, %v1029
        %1031 = vst [vmem:[#allocation2 + $0xc0] sm:$0x1] %v1030
        %v1032 = vld [vmem:[#allocation2 + $0xd8] sm:$0x1]
        %v1033 = vsel %vm1004, 0, %v1032
        %1034 = vst [vmem:[#allocation2 + $0xd8] sm:$0x1] %v1033
        %v1035 = vld [vmem:[#allocation2 + $0xf0] sm:$0x1]
        %v1036 = vsel %vm1004, 0, %v1035
        %1037 = vst [vmem:[#allocation2 + $0xf0] sm:$0x1] %v1036
        %v1038 = vld [vmem:[#allocation2 + $0x108] sm:$0x1]
        %v1039 = vsel %vm1004, 0, %v1038
        %1040 = vst [vmem:[#allocation2 + $0x108] sm:$0x1] %v1039
        %v1041 = vld [vmem:[#allocation2 + $0x120] sm:$0x1]
        %v1042 = vsel %vm1004, 0, %v1041
        %1043 = vst [vmem:[#allocation2 + $0x120] sm:$0x1] %v1042
        %v1044 = vld [vmem:[#allocation2 + $0x138] sm:$0x1]
        %v1045 = vsel %vm1004, 0, %v1044
        %1046 = vst [vmem:[#allocation2 + $0x138] sm:$0x1] %v1045
        %v1047 = vld [vmem:[#allocation2 + $0x150] sm:$0x1]
        %v1048 = vsel %vm1004, 0, %v1047
        %1049 = vst [vmem:[#allocation2 + $0x150] sm:$0x1] %v1048
        %v1050 = vld [vmem:[#allocation2 + $0x168] sm:$0x1]
        %v1051 = vsel %vm1004, 0, %v1050
        %1052 = vst [vmem:[#allocation2 + $0x168] sm:$0x1] %v1051
        %v1053 = vld [vmem:[#allocation2 + $0x180] sm:$0x1]
        %v1054 = vsel %vm1004, 0, %v1053
        %1055 = vst [vmem:[#allocation2 + $0x180] sm:$0x1] %v1054
        %v1056 = vld [vmem:[#allocation2 + $0x198] sm:$0x1]
        %v1057 = vsel %vm1004, 0, %v1056
        %1058 = vst [vmem:[#allocation2 + $0x198] sm:$0x1] %v1057
        %vm1059 = vcmask 1043459
        %vm1060 = vsmask.f32 7950
        %vm1061 = vmand %vm1059, %vm1060
        %v1062 = vld [vmem:[#allocation2 + $0x14] sm:$0x8]
        %v1063 = vsel %vm1061, 0, %v1062
        %1064 = vst [vmem:[#allocation2 + $0x14] sm:$0x8] %v1063
        %v1065 = vld [vmem:[#allocation2 + $0x2c] sm:$0x8]
        %v1066 = vsel %vm1061, 0, %v1065
        %1067 = vst [vmem:[#allocation2 + $0x2c] sm:$0x8] %v1066
        %v1068 = vld [vmem:[#allocation2 + $0x44] sm:$0x8]
        %v1069 = vsel %vm1061, 0, %v1068
        %1070 = vst [vmem:[#allocation2 + $0x44] sm:$0x8] %v1069
        %v1071 = vld [vmem:[#allocation2 + $0x5c] sm:$0x8]
        %v1072 = vsel %vm1061, 0, %v1071
        %1073 = vst [vmem:[#allocation2 + $0x5c] sm:$0x8] %v1072
        %v1074 = vld [vmem:[#allocation2 + $0x74] sm:$0x8]
        %v1075 = vsel %vm1061, 0, %v1074
        %1076 = vst [vmem:[#allocation2 + $0x74] sm:$0x8] %v1075
        %v1077 = vld [vmem:[#allocation2 + $0x8c] sm:$0x8]
        %v1078 = vsel %vm1061, 0, %v1077
        %1079 = vst [vmem:[#allocation2 + $0x8c] sm:$0x8] %v1078
        %v1080 = vld [vmem:[#allocation2 + $0xa4] sm:$0x8]
        %v1081 = vsel %vm1061, 0, %v1080
        %1082 = vst [vmem:[#allocation2 + $0xa4] sm:$0x8] %v1081
        %v1083 = vld [vmem:[#allocation2 + $0xbc] sm:$0x8]
        %v1084 = vsel %vm1061, 0, %v1083
        %1085 = vst [vmem:[#allocation2 + $0xbc] sm:$0x8] %v1084
        %v1086 = vld [vmem:[#allocation2 + $0xd4] sm:$0x8]
        %v1087 = vsel %vm1061, 0, %v1086
        %1088 = vst [vmem:[#allocation2 + $0xd4] sm:$0x8] %v1087
        %v1089 = vld [vmem:[#allocation2 + $0xec] sm:$0x8]
        %v1090 = vsel %vm1061, 0, %v1089
        %1091 = vst [vmem:[#allocation2 + $0xec] sm:$0x8] %v1090
        %v1092 = vld [vmem:[#allocation2 + $0x104] sm:$0x8]
        %v1093 = vsel %vm1061, 0, %v1092
        %1094 = vst [vmem:[#allocation2 + $0x104] sm:$0x8] %v1093
        %v1095 = vld [vmem:[#allocation2 + $0x11c] sm:$0x8]
        %v1096 = vsel %vm1061, 0, %v1095
        %1097 = vst [vmem:[#allocation2 + $0x11c] sm:$0x8] %v1096
        %v1098 = vld [vmem:[#allocation2 + $0x134] sm:$0x8]
        %v1099 = vsel %vm1061, 0, %v1098
        %1100 = vst [vmem:[#allocation2 + $0x134] sm:$0x8] %v1099
        %v1101 = vld [vmem:[#allocation2 + $0x14c] sm:$0x8]
        %v1102 = vsel %vm1061, 0, %v1101
        %1103 = vst [vmem:[#allocation2 + $0x14c] sm:$0x8] %v1102
        %v1104 = vld [vmem:[#allocation2 + $0x164] sm:$0x8]
        %v1105 = vsel %vm1061, 0, %v1104
        %1106 = vst [vmem:[#allocation2 + $0x164] sm:$0x8] %v1105
        %v1107 = vld [vmem:[#allocation2 + $0x17c] sm:$0x8]
        %v1108 = vsel %vm1061, 0, %v1107
        %1109 = vst [vmem:[#allocation2 + $0x17c] sm:$0x8] %v1108
        %v1110 = vld [vmem:[#allocation2 + $0x194] sm:$0x8]
        %v1111 = vsel %vm1061, 0, %v1110
        %1112 = vst [vmem:[#allocation2 + $0x194] sm:$0x8] %v1111
        %v1113 = vld [vmem:[#allocation2 + $0x1ac] sm:$0x8]
        %v1114 = vsel %vm1061, 0, %v1113
        %1115 = vst [vmem:[#allocation2 + $0x1ac] sm:$0x8] %v1114
        %v1116 = vld [vmem:[#allocation2] sm:$0xff]
        %v1117 = vld [vmem:[#allocation2 + $0x8] sm:$0xf]
        %v1118 = vld [vmem:[#allocation2 + $0xc] sm:$0xff]
        %v1119 = vld [vmem:[#allocation2 + $0x14] sm:$0xf]
        %v1120 = vld [vmem:[#allocation2 + $0x18] sm:$0xff]
        %v1121 = vld [vmem:[#allocation2 + $0x20] sm:$0xf]
        %v1122 = vld [vmem:[#allocation2 + $0x24] sm:$0xff]
        %v1123 = vld [vmem:[#allocation2 + $0x2c] sm:$0xf]
        %v1124 = vld [vmem:[#allocation2 + $0x30] sm:$0xff]
        %v1125 = vld [vmem:[#allocation2 + $0x38] sm:$0xf]
        %v1126 = vld [vmem:[#allocation2 + $0x3c] sm:$0xff]
        %v1127 = vld [vmem:[#allocation2 + $0x44] sm:$0xf]
        %v1128 = vld [vmem:[#allocation2 + $0x48] sm:$0xff]
        %v1129 = vld [vmem:[#allocation2 + $0x50] sm:$0xf]
        %v1130 = vld [vmem:[#allocation2 + $0x54] sm:$0xff]
        %v1131 = vld [vmem:[#allocation2 + $0x5c] sm:$0xf]
        %v1132 = vld [vmem:[#allocation2 + $0x60] sm:$0xff]
        %v1133 = vld [vmem:[#allocation2 + $0x68] sm:$0xf]
        %v1134 = vld [vmem:[#allocation2 + $0x6c] sm:$0xff]
        %v1135 = vld [vmem:[#allocation2 + $0x74] sm:$0xf]
        %v1136 = vld [vmem:[#allocation2 + $0x78] sm:$0xff]
        %v1137 = vld [vmem:[#allocation2 + $0x80] sm:$0xf]
        %v1138 = vld [vmem:[#allocation2 + $0x84] sm:$0xff]
        %v1139 = vld [vmem:[#allocation2 + $0x8c] sm:$0xf]
        %v1140 = vld [vmem:[#allocation2 + $0x90] sm:$0xff]
        %v1141 = vld [vmem:[#allocation2 + $0x98] sm:$0xf]
        %v1142 = vld [vmem:[#allocation2 + $0x9c] sm:$0xff]
        %v1143 = vld [vmem:[#allocation2 + $0xa4] sm:$0xf]
        %v1144 = vld [vmem:[#allocation2 + $0xa8] sm:$0xff]
        %v1145 = vld [vmem:[#allocation2 + $0xb0] sm:$0xf]
        %v1146 = vld [vmem:[#allocation2 + $0xb4] sm:$0xff]
        %v1147 = vld [vmem:[#allocation2 + $0xbc] sm:$0xf]
        %v1148 = vld [vmem:[#allocation2 + $0xc0] sm:$0xff]
        %v1149 = vld [vmem:[#allocation2 + $0xc8] sm:$0xf]
        %v1150 = vld [vmem:[#allocation2 + $0xcc] sm:$0xff]
        %v1151 = vld [vmem:[#allocation2 + $0xd4] sm:$0xf]
        %v1152 = vld [vmem:[#allocation2 + $0xd8] sm:$0xff]
        %v1153 = vld [vmem:[#allocation2 + $0xe0] sm:$0xf]
        %v1154 = vld [vmem:[#allocation2 + $0xe4] sm:$0xff]
        %v1155 = vld [vmem:[#allocation2 + $0xec] sm:$0xf]
        %v1156 = vld [vmem:[#allocation2 + $0xf0] sm:$0xff]
        %v1157 = vld [vmem:[#allocation2 + $0xf8] sm:$0xf]
        %v1158 = vld [vmem:[#allocation2 + $0xfc] sm:$0xff]
        %v1159 = vld [vmem:[#allocation2 + $0x104] sm:$0xf]
        %v1160 = vld [vmem:[#allocation2 + $0x108] sm:$0xff]
        %v1161 = vld [vmem:[#allocation2 + $0x110] sm:$0xf]
        %v1162 = vld [vmem:[#allocation2 + $0x114] sm:$0xff]
        %v1163 = vld [vmem:[#allocation2 + $0x11c] sm:$0xf]
        %v1164 = vld [vmem:[#allocation2 + $0x120] sm:$0xff]
        %v1165 = vld [vmem:[#allocation2 + $0x128] sm:$0xf]
        %v1166 = vld [vmem:[#allocation2 + $0x12c] sm:$0xff]
        %v1167 = vld [vmem:[#allocation2 + $0x134] sm:$0xf]
        %v1168 = vld [vmem:[#allocation2 + $0x138] sm:$0xff]
        %v1169 = vld [vmem:[#allocation2 + $0x140] sm:$0xf]
        %v1170 = vld [vmem:[#allocation2 + $0x144] sm:$0xff]
        %v1171 = vld [vmem:[#allocation2 + $0x14c] sm:$0xf]
        %v1172 = vld [vmem:[#allocation2 + $0x150] sm:$0xff]
        %v1173 = vld [vmem:[#allocation2 + $0x158] sm:$0xf]
        %v1174 = vld [vmem:[#allocation2 + $0x15c] sm:$0xff]
        %v1175 = vld [vmem:[#allocation2 + $0x164] sm:$0xf]
        %v1176 = vld [vmem:[#allocation2 + $0x168] sm:$0xff]
        %v1177 = vld [vmem:[#allocation2 + $0x170] sm:$0xf]
        %v1178 = vld [vmem:[#allocation2 + $0x174] sm:$0xff]
        %v1179 = vld [vmem:[#allocation2 + $0x17c] sm:$0xf]
        %v1180 = vld [vmem:[#allocation6] sm:$0xf]
        %v1181 = vld [vmem:[#allocation6 + $0x4] sm:$0xf]
        %v1182 = vld [vmem:[#allocation6 + $0x8] sm:$0xf]
        %v1183 = vld [vmem:[#allocation6 + $0xc] sm:$0xf]
        %v1184 = vld [vmem:[#allocation6 + $0x10] sm:$0xf]
        %v1185 = vld [vmem:[#allocation6 + $0x14] sm:$0xf]
        %v1186 = vld [vmem:[#allocation6 + $0x18] sm:$0xf]
        %v1187 = vld [vmem:[#allocation6 + $0x1c] sm:$0xf]
        %v1188 = vld [vmem:[#allocation6 + $0x20] sm:$0xf]
        %v1189 = vld [vmem:[#allocation6 + $0x24] sm:$0xf]
        %v1190 = vld [vmem:[#allocation6 + $0x28] sm:$0xf]
        %v1191 = vld [vmem:[#allocation6 + $0x2c] sm:$0xf]
        %v1192 = vld [vmem:[#allocation6 + $0x30] sm:$0xf]
        %v1193 = vld [vmem:[#allocation6 + $0x34] sm:$0xf]
        %v1194 = vld [vmem:[#allocation6 + $0x38] sm:$0xf]
        %v1195 = vld [vmem:[#allocation6 + $0x3c] sm:$0xf]
        %v1196 = vld [vmem:[#allocation6 + $0x40] sm:$0xf]
        %v1197 = vld [vmem:[#allocation6 + $0x44] sm:$0xf]
        %v1198 = vld [vmem:[#allocation6 + $0x48] sm:$0xf]
        %v1199 = vld [vmem:[#allocation6 + $0x4c] sm:$0xf]
        %v1200 = vld [vmem:[#allocation6 + $0x50] sm:$0xf]
        %v1201 = vld [vmem:[#allocation6 + $0x54] sm:$0xf]
        %v1202 = vld [vmem:[#allocation6 + $0x58] sm:$0xf]
        %v1203 = vld [vmem:[#allocation6 + $0x5c] sm:$0xf]
        %v1204 = vld [vmem:[#allocation6 + $0x60] sm:$0xf]
        %v1205 = vld [vmem:[#allocation6 + $0x64] sm:$0xf]
        %v1206 = vld [vmem:[#allocation6 + $0x68] sm:$0xf]
        %v1207 = vld [vmem:[#allocation6 + $0x6c] sm:$0xf]
        %v1208 = vld [vmem:[#allocation6 + $0x70] sm:$0xf]
        %v1209 = vld [vmem:[#allocation6 + $0x74] sm:$0xf]
        %v1210 = vld [vmem:[#allocation6 + $0x78] sm:$0xf]
        %v1211 = vld [vmem:[#allocation6 + $0x7c] sm:$0xf]
        %v1212 = vld [vmem:[#allocation6 + $0x80] sm:$0xf]
        %v1213 = vld [vmem:[#allocation6 + $0x84] sm:$0xf]
        %v1214 = vld [vmem:[#allocation6 + $0x88] sm:$0xf]
        %v1215 = vld [vmem:[#allocation6 + $0x8c] sm:$0xf]
        %v1216 = vld [vmem:[#allocation6 + $0x90] sm:$0xf]
        %v1217 = vld [vmem:[#allocation6 + $0x94] sm:$0xf]
        %v1218 = vld [vmem:[#allocation6 + $0x98] sm:$0xf]
        %v1219 = vld [vmem:[#allocation6 + $0x9c] sm:$0xf]
        %v1220 = vld [vmem:[#allocation6 + $0xa0] sm:$0xf]
        %v1221 = vld [vmem:[#allocation6 + $0xa4] sm:$0xf]
        %v1222 = vld [vmem:[#allocation6 + $0xa8] sm:$0xf]
        %v1223 = vld [vmem:[#allocation6 + $0xac] sm:$0xf]
        %v1224 = vld [vmem:[#allocation6 + $0xb0] sm:$0xf]
        %v1225 = vld [vmem:[#allocation6 + $0xb4] sm:$0xf]
        %v1226 = vld [vmem:[#allocation6 + $0xb8] sm:$0xf]
        %v1227 = vld [vmem:[#allocation6 + $0xbc] sm:$0xf]
        %v1228 = vld [vmem:[%s359] sm:$0xff]
        %v1229 = vld [vmem:[%s359 + $0x8] sm:$0xf]
        %v1230 = vld [vmem:[%s359 + $0xc] sm:$0xff]
        %v1231 = vld [vmem:[%s359 + $0x14] sm:$0xf]
        %v1232 = vld [vmem:[%s359 + $0x18] sm:$0xff]
        %v1233 = vld [vmem:[%s359 + $0x20] sm:$0xf]
        %v1234 = vld [vmem:[%s359 + $0x24] sm:$0xff]
        %v1235 = vld [vmem:[%s359 + $0x2c] sm:$0xf]
        %v1236 = vld [vmem:[%s359 + $0x30] sm:$0xff]
        %v1237 = vld [vmem:[%s359 + $0x38] sm:$0xf]
        %v1238 = vld [vmem:[%s359 + $0x3c] sm:$0xff]
        %v1239 = vld [vmem:[%s359 + $0x44] sm:$0xf]
        %v1240 = vld [vmem:[%s359 + $0x48] sm:$0xff]
        %v1241 = vld [vmem:[%s359 + $0x50] sm:$0xf]
        %v1242 = vld [vmem:[%s359 + $0x54] sm:$0xff]
        %v1243 = vld [vmem:[%s359 + $0x5c] sm:$0xf]
        %v1244 = vld [vmem:[%s359 + $0x60] sm:$0xff]
        %v1245 = vld [vmem:[%s359 + $0x68] sm:$0xf]
        %v1246 = vld [vmem:[%s359 + $0x6c] sm:$0xff]
        %v1247 = vld [vmem:[%s359 + $0x74] sm:$0xf]
        %v1248 = vld [vmem:[%s359 + $0x78] sm:$0xff]
        %v1249 = vld [vmem:[%s359 + $0x80] sm:$0xf]
        %v1250 = vld [vmem:[%s359 + $0x84] sm:$0xff]
        %v1251 = vld [vmem:[%s359 + $0x8c] sm:$0xf]
        %v1252 = vld [vmem:[%s359 + $0x90] sm:$0xff]
        %v1253 = vld [vmem:[%s359 + $0x98] sm:$0xf]
        %v1254 = vld [vmem:[%s359 + $0x9c] sm:$0xff]
        %v1255 = vld [vmem:[%s359 + $0xa4] sm:$0xf]
        %v1256 = vld [vmem:[%s359 + $0xa8] sm:$0xff]
        %v1257 = vld [vmem:[%s359 + $0xb0] sm:$0xf]
        %v1258 = vld [vmem:[%s359 + $0xb4] sm:$0xff]
        %v1259 = vld [vmem:[%s359 + $0xbc] sm:$0xf]
        %v1260 = vld [vmem:[%s359 + $0xc0] sm:$0xff]
        %v1261 = vld [vmem:[%s359 + $0xc8] sm:$0xf]
        %v1262 = vld [vmem:[%s359 + $0xcc] sm:$0xff]
        %v1263 = vld [vmem:[%s359 + $0xd4] sm:$0xf]
        %v1264 = vld [vmem:[%s359 + $0xd8] sm:$0xff]
        %v1265 = vld [vmem:[%s359 + $0xe0] sm:$0xf]
        %v1266 = vld [vmem:[%s359 + $0xe4] sm:$0xff]
        %v1267 = vld [vmem:[%s359 + $0xec] sm:$0xf]
        %v1268 = vld [vmem:[%s359 + $0xf0] sm:$0xff]
        %v1269 = vld [vmem:[%s359 + $0xf8] sm:$0xf]
        %v1270 = vld [vmem:[%s359 + $0xfc] sm:$0xff]
        %v1271 = vld [vmem:[%s359 + $0x104] sm:$0xf]
        %v1272 = vld [vmem:[%s359 + $0x108] sm:$0xff]
        %v1273 = vld [vmem:[%s359 + $0x110] sm:$0xf]
        %v1274 = vld [vmem:[%s359 + $0x114] sm:$0xff]
        %v1275 = vld [vmem:[%s359 + $0x11c] sm:$0xf]
        %v1276 = vld [vmem:[%s359 + $0x120] sm:$0xff]
        %v1277 = vld [vmem:[%s359 + $0x128] sm:$0xf]
        %v1278 = vld [vmem:[%s359 + $0x12c] sm:$0xff]
        %v1279 = vld [vmem:[%s359 + $0x134] sm:$0xf]
        %v1280 = vld [vmem:[%s359 + $0x138] sm:$0xff]
        %v1281 = vld [vmem:[%s359 + $0x140] sm:$0xf]
        %v1282 = vld [vmem:[%s359 + $0x144] sm:$0xff]
        %v1283 = vld [vmem:[%s359 + $0x14c] sm:$0xf]
        %v1284 = vld [vmem:[%s359 + $0x150] sm:$0xff]
        %v1285 = vld [vmem:[%s359 + $0x158] sm:$0xf]
        %v1286 = vld [vmem:[%s359 + $0x15c] sm:$0xff]
        %v1287 = vld [vmem:[%s359 + $0x164] sm:$0xf]
        %v1288 = vld [vmem:[%s359 + $0x168] sm:$0xff]
        %v1289 = vld [vmem:[%s359 + $0x170] sm:$0xf]
        %v1290 = vld [vmem:[%s359 + $0x174] sm:$0xff]
        %v1291 = vld [vmem:[%s359 + $0x17c] sm:$0xf]
        %s1292 = scalar_lea.vmem [#allocation6], 192
        %v1293 = vld [vmem:[%s1292] sm:$0xf]
        %v1294 = vld [vmem:[%s1292 + $0x4] sm:$0xf]
        %v1295 = vld [vmem:[%s1292 + $0x8] sm:$0xf]
        %v1296 = vld [vmem:[%s1292 + $0xc] sm:$0xf]
        %v1297 = vld [vmem:[%s1292 + $0x10] sm:$0xf]
        %v1298 = vld [vmem:[%s1292 + $0x14] sm:$0xf]
        %v1299 = vld [vmem:[%s1292 + $0x18] sm:$0xf]
        %v1300 = vld [vmem:[%s1292 + $0x1c] sm:$0xf]
        %v1301 = vld [vmem:[%s1292 + $0x20] sm:$0xf]
        %v1302 = vld [vmem:[%s1292 + $0x24] sm:$0xf]
        %v1303 = vld [vmem:[%s1292 + $0x28] sm:$0xf]
        %v1304 = vld [vmem:[%s1292 + $0x2c] sm:$0xf]
        %v1305 = vld [vmem:[%s1292 + $0x30] sm:$0xf]
        %v1306 = vld [vmem:[%s1292 + $0x34] sm:$0xf]
        %v1307 = vld [vmem:[%s1292 + $0x38] sm:$0xf]
        %v1308 = vld [vmem:[%s1292 + $0x3c] sm:$0xf]
        %v1309 = vld [vmem:[%s1292 + $0x40] sm:$0xf]
        %v1310 = vld [vmem:[%s1292 + $0x44] sm:$0xf]
        %v1311 = vld [vmem:[%s1292 + $0x48] sm:$0xf]
        %v1312 = vld [vmem:[%s1292 + $0x4c] sm:$0xf]
        %v1313 = vld [vmem:[%s1292 + $0x50] sm:$0xf]
        %v1314 = vld [vmem:[%s1292 + $0x54] sm:$0xf]
        %v1315 = vld [vmem:[%s1292 + $0x58] sm:$0xf]
        %v1316 = vld [vmem:[%s1292 + $0x5c] sm:$0xf]
        %v1317 = vld [vmem:[%s1292 + $0x60] sm:$0xf]
        %v1318 = vld [vmem:[%s1292 + $0x64] sm:$0xf]
        %v1319 = vld [vmem:[%s1292 + $0x68] sm:$0xf]
        %v1320 = vld [vmem:[%s1292 + $0x6c] sm:$0xf]
        %v1321 = vld [vmem:[%s1292 + $0x70] sm:$0xf]
        %v1322 = vld [vmem:[%s1292 + $0x74] sm:$0xf]
        %v1323 = vld [vmem:[%s1292 + $0x78] sm:$0xf]
        %v1324 = vld [vmem:[%s1292 + $0x7c] sm:$0xf]
        %v1325 = vld [vmem:[%s1292 + $0x80] sm:$0xf]
        %v1326 = vld [vmem:[%s1292 + $0x84] sm:$0xf]
        %v1327 = vld [vmem:[%s1292 + $0x88] sm:$0xf]
        %v1328 = vld [vmem:[%s1292 + $0x8c] sm:$0xf]
        %v1329 = vld [vmem:[%s1292 + $0x90] sm:$0xf]
        %v1330 = vld [vmem:[%s1292 + $0x94] sm:$0xf]
        %v1331 = vld [vmem:[%s1292 + $0x98] sm:$0xf]
        %v1332 = vld [vmem:[%s1292 + $0x9c] sm:$0xf]
        %v1333 = vld [vmem:[%s1292 + $0xa0] sm:$0xf]
        %v1334 = vld [vmem:[%s1292 + $0xa4] sm:$0xf]
        %v1335 = vld [vmem:[%s1292 + $0xa8] sm:$0xf]
        %v1336 = vld [vmem:[%s1292 + $0xac] sm:$0xf]
        %v1337 = vld [vmem:[%s1292 + $0xb0] sm:$0xf]
        %v1338 = vld [vmem:[%s1292 + $0xb4] sm:$0xf]
        %v1339 = vld [vmem:[%s1292 + $0xb8] sm:$0xf]
        %v1340 = vld [vmem:[%s1292 + $0xbc] sm:$0xf]
        %v1405 = vunpack.c.l.b16 %v1228
        %v1406 = vunpack.c.h.b16 %v1228
        %v1407 = vunpack.c.l.b16 %v1229
        %v1408 = vunpack.c.l.b16 %v1230
        %v1409 = vunpack.c.h.b16 %v1230
        %v1410 = vunpack.c.l.b16 %v1231
        %v1411 = vunpack.c.l.b16 %v1232
        %v1412 = vunpack.c.h.b16 %v1232
        %v1413 = vunpack.c.l.b16 %v1233
        %v1414 = vunpack.c.l.b16 %v1234
        %v1415 = vunpack.c.h.b16 %v1234
        %v1416 = vunpack.c.l.b16 %v1235
        %v1417 = vunpack.c.l.b16 %v1236
        %v1418 = vunpack.c.h.b16 %v1236
        %v1419 = vunpack.c.l.b16 %v1237
        %v1420 = vunpack.c.l.b16 %v1238
        %v1421 = vunpack.c.h.b16 %v1238
        %v1422 = vunpack.c.l.b16 %v1239
        %v1423 = vunpack.c.l.b16 %v1240
        %v1424 = vunpack.c.h.b16 %v1240
        %v1425 = vunpack.c.l.b16 %v1241
        %v1426 = vunpack.c.l.b16 %v1242
        %v1427 = vunpack.c.h.b16 %v1242
        %v1428 = vunpack.c.l.b16 %v1243
        %v1429 = vunpack.c.l.b16 %v1244
        %v1430 = vunpack.c.h.b16 %v1244
        %v1431 = vunpack.c.l.b16 %v1245
        %v1432 = vunpack.c.l.b16 %v1246
        %v1433 = vunpack.c.h.b16 %v1246
        %v1434 = vunpack.c.l.b16 %v1247
        %v1435 = vunpack.c.l.b16 %v1248
        %v1436 = vunpack.c.h.b16 %v1248
        %v1437 = vunpack.c.l.b16 %v1249
        %v1438 = vunpack.c.l.b16 %v1250
        %v1439 = vunpack.c.h.b16 %v1250
        %v1440 = vunpack.c.l.b16 %v1251
        %v1441 = vunpack.c.l.b16 %v1252
        %v1442 = vunpack.c.h.b16 %v1252
        %v1443 = vunpack.c.l.b16 %v1253
        %v1444 = vunpack.c.l.b16 %v1254
        %v1445 = vunpack.c.h.b16 %v1254
        %v1446 = vunpack.c.l.b16 %v1255
        %v1447 = vunpack.c.l.b16 %v1256
        %v1448 = vunpack.c.h.b16 %v1256
        %v1449 = vunpack.c.l.b16 %v1257
        %v1450 = vunpack.c.l.b16 %v1258
        %v1451 = vunpack.c.h.b16 %v1258
        %v1452 = vunpack.c.l.b16 %v1259
        %v1453 = vunpack.c.l.b16 %v1260
        %v1454 = vunpack.c.h.b16 %v1260
        %v1455 = vunpack.c.l.b16 %v1261
        %v1456 = vunpack.c.l.b16 %v1262
        %v1457 = vunpack.c.h.b16 %v1262
        %v1458 = vunpack.c.l.b16 %v1263
        %v1459 = vunpack.c.l.b16 %v1264
        %v1460 = vunpack.c.h.b16 %v1264
        %v1461 = vunpack.c.l.b16 %v1265
        %v1462 = vunpack.c.l.b16 %v1266
        %v1463 = vunpack.c.h.b16 %v1266
        %v1464 = vunpack.c.l.b16 %v1267
        %v1465 = vunpack.c.l.b16 %v1268
        %v1466 = vunpack.c.h.b16 %v1268
        %v1467 = vunpack.c.l.b16 %v1269
        %v1468 = vunpack.c.l.b16 %v1270
        %v1469 = vunpack.c.h.b16 %v1270
        %v1470 = vunpack.c.l.b16 %v1271
        %v1471 = vunpack.c.l.b16 %v1272
        %v1472 = vunpack.c.h.b16 %v1272
        %v1473 = vunpack.c.l.b16 %v1273
        %v1474 = vunpack.c.l.b16 %v1274
        %v1475 = vunpack.c.h.b16 %v1274
        %v1476 = vunpack.c.l.b16 %v1275
        %v1477 = vunpack.c.l.b16 %v1276
        %v1478 = vunpack.c.h.b16 %v1276
        %v1479 = vunpack.c.l.b16 %v1277
        %v1480 = vunpack.c.l.b16 %v1278
        %v1481 = vunpack.c.h.b16 %v1278
        %v1482 = vunpack.c.l.b16 %v1279
        %v1483 = vunpack.c.l.b16 %v1280
        %v1484 = vunpack.c.h.b16 %v1280
        %v1485 = vunpack.c.l.b16 %v1281
        %v1486 = vunpack.c.l.b16 %v1282
        %v1487 = vunpack.c.h.b16 %v1282
        %v1488 = vunpack.c.l.b16 %v1283
        %v1489 = vunpack.c.l.b16 %v1284
        %v1490 = vunpack.c.h.b16 %v1284
        %v1491 = vunpack.c.l.b16 %v1285
        %v1492 = vunpack.c.l.b16 %v1286
        %v1493 = vunpack.c.h.b16 %v1286
        %v1494 = vunpack.c.l.b16 %v1287
        %v1495 = vunpack.c.l.b16 %v1288
        %v1496 = vunpack.c.h.b16 %v1288
        %v1497 = vunpack.c.l.b16 %v1289
        %v1498 = vunpack.c.l.b16 %v1290
        %v1499 = vunpack.c.h.b16 %v1290
        %v1500 = vunpack.c.l.b16 %v1291
        %v1501 = vpack.c.b16 %v1408, %v1405
        %v1502 = vpack.c.b16 %v1409, %v1406
        %v1503 = vpack.c.b16 %v1410, %v1407
        %v1504 = vpack.c.b16 %v1414, %v1411
        %v1505 = vpack.c.b16 %v1415, %v1412
        %v1506 = vpack.c.b16 %v1416, %v1413
        %v1507 = vpack.c.b16 %v1420, %v1417
        %v1508 = vpack.c.b16 %v1421, %v1418
        %v1509 = vpack.c.b16 %v1422, %v1419
        %v1510 = vpack.c.b16 %v1426, %v1423
        %v1511 = vpack.c.b16 %v1427, %v1424
        %v1512 = vpack.c.b16 %v1428, %v1425
        %v1513 = vpack.c.b16 %v1432, %v1429
        %v1514 = vpack.c.b16 %v1433, %v1430
        %v1515 = vpack.c.b16 %v1434, %v1431
        %v1516 = vpack.c.b16 %v1438, %v1435
        %v1517 = vpack.c.b16 %v1439, %v1436
        %v1518 = vpack.c.b16 %v1440, %v1437
        %v1519 = vpack.c.b16 %v1444, %v1441
        %v1520 = vpack.c.b16 %v1445, %v1442
        %v1521 = vpack.c.b16 %v1446, %v1443
        %v1522 = vpack.c.b16 %v1450, %v1447
        %v1523 = vpack.c.b16 %v1451, %v1448
        %v1524 = vpack.c.b16 %v1452, %v1449
        %v1525 = vpack.c.b16 %v1456, %v1453
        %v1526 = vpack.c.b16 %v1457, %v1454
        %v1527 = vpack.c.b16 %v1458, %v1455
        %v1528 = vpack.c.b16 %v1462, %v1459
        %v1529 = vpack.c.b16 %v1463, %v1460
        %v1530 = vpack.c.b16 %v1464, %v1461
        %v1531 = vpack.c.b16 %v1468, %v1465
        %v1532 = vpack.c.b16 %v1469, %v1466
        %v1533 = vpack.c.b16 %v1470, %v1467
        %v1534 = vpack.c.b16 %v1474, %v1471
        %v1535 = vpack.c.b16 %v1475, %v1472
        %v1536 = vpack.c.b16 %v1476, %v1473
        %v1537 = vpack.c.b16 %v1480, %v1477
        %v1538 = vpack.c.b16 %v1481, %v1478
        %v1539 = vpack.c.b16 %v1482, %v1479
        %v1540 = vpack.c.b16 %v1486, %v1483
        %v1541 = vpack.c.b16 %v1487, %v1484
        %v1542 = vpack.c.b16 %v1488, %v1485
        %v1543 = vpack.c.b16 %v1492, %v1489
        %v1544 = vpack.c.b16 %v1493, %v1490
        %v1545 = vpack.c.b16 %v1494, %v1491
        %v1546 = vpack.c.b16 %v1498, %v1495
        %v1547 = vpack.c.b16 %v1499, %v1496
        %v1548 = vpack.c.b16 %v1500, %v1497
        %v1645 = vunpack.c.l.b16 %v1293
        %v1646 = vunpack.c.l.b16 %v1294
        %v1647 = vunpack.c.l.b16 %v1295
        %v1648 = vunpack.c.l.b16 %v1296
        %v1649 = vunpack.c.l.b16 %v1297
        %v1650 = vunpack.c.l.b16 %v1298
        %v1651 = vunpack.c.l.b16 %v1299
        %v1652 = vunpack.c.l.b16 %v1300
        %v1653 = vunpack.c.l.b16 %v1301
        %v1654 = vunpack.c.l.b16 %v1302
        %v1655 = vunpack.c.l.b16 %v1303
        %v1656 = vunpack.c.l.b16 %v1304
        %v1657 = vunpack.c.l.b16 %v1305
        %v1658 = vunpack.c.l.b16 %v1306
        %v1659 = vunpack.c.l.b16 %v1307
        %v1660 = vunpack.c.l.b16 %v1308
        %v1661 = vunpack.c.l.b16 %v1309
        %v1662 = vunpack.c.l.b16 %v1310
        %v1663 = vunpack.c.l.b16 %v1311
        %v1664 = vunpack.c.l.b16 %v1312
        %v1665 = vunpack.c.l.b16 %v1313
        %v1666 = vunpack.c.l.b16 %v1314
        %v1667 = vunpack.c.l.b16 %v1315
        %v1668 = vunpack.c.l.b16 %v1316
        %v1669 = vunpack.c.l.b16 %v1317
        %v1670 = vunpack.c.l.b16 %v1318
        %v1671 = vunpack.c.l.b16 %v1319
        %v1672 = vunpack.c.l.b16 %v1320
        %v1673 = vunpack.c.l.b16 %v1321
        %v1674 = vunpack.c.l.b16 %v1322
        %v1675 = vunpack.c.l.b16 %v1323
        %v1676 = vunpack.c.l.b16 %v1324
        %v1677 = vunpack.c.l.b16 %v1325
        %v1678 = vunpack.c.l.b16 %v1326
        %v1679 = vunpack.c.l.b16 %v1327
        %v1680 = vunpack.c.l.b16 %v1328
        %v1681 = vunpack.c.l.b16 %v1329
        %v1682 = vunpack.c.l.b16 %v1330
        %v1683 = vunpack.c.l.b16 %v1331
        %v1684 = vunpack.c.l.b16 %v1332
        %v1685 = vunpack.c.l.b16 %v1333
        %v1686 = vunpack.c.l.b16 %v1334
        %v1687 = vunpack.c.l.b16 %v1335
        %v1688 = vunpack.c.l.b16 %v1336
        %v1689 = vunpack.c.l.b16 %v1337
        %v1690 = vunpack.c.l.b16 %v1338
        %v1691 = vunpack.c.l.b16 %v1339
        %v1692 = vunpack.c.l.b16 %v1340
        %v1693 = vpack.c.b16 %v1646, %v1645
        %v1694 = vpack.c.b16 %v1648, %v1647
        %v1695 = vpack.c.b16 %v1650, %v1649
        %v1696 = vpack.c.b16 %v1652, %v1651
        %v1697 = vpack.c.b16 %v1654, %v1653
        %v1698 = vpack.c.b16 %v1656, %v1655
        %v1699 = vpack.c.b16 %v1658, %v1657
        %v1700 = vpack.c.b16 %v1660, %v1659
        %v1701 = vpack.c.b16 %v1662, %v1661
        %v1702 = vpack.c.b16 %v1664, %v1663
        %v1703 = vpack.c.b16 %v1666, %v1665
        %v1704 = vpack.c.b16 %v1668, %v1667
        %v1705 = vpack.c.b16 %v1670, %v1669
        %v1706 = vpack.c.b16 %v1672, %v1671
        %v1707 = vpack.c.b16 %v1674, %v1673
        %v1708 = vpack.c.b16 %v1676, %v1675
        %v1709 = vpack.c.b16 %v1678, %v1677
        %v1710 = vpack.c.b16 %v1680, %v1679
        %v1711 = vpack.c.b16 %v1682, %v1681
        %v1712 = vpack.c.b16 %v1684, %v1683
        %v1713 = vpack.c.b16 %v1686, %v1685
        %v1714 = vpack.c.b16 %v1688, %v1687
        %v1715 = vpack.c.b16 %v1690, %v1689
        %v1716 = vpack.c.b16 %v1692, %v1691
        %1741 = vmatprep.subr.bf16.mxu0 0
        %1742 = vmatpush1.bf16.msra.mxu0 %v1700
        %1743 = vmatprep.subr.bf16.mxu0 0
        %1744 = vmatpush1.bf16.msra.mxu0 %v1699
        %1745 = vmatprep.subr.bf16.mxu0 0
        %1746 = vmatpush1.bf16.msra.mxu0 %v1698
        %1747 = vmatprep.subr.bf16.mxu0 0
        %1748 = vmatpush1.bf16.msra.mxu0 %v1697
        %1749 = vmatprep.subr.bf16.mxu0 0
        %1750 = vmatpush1.bf16.msra.mxu0 %v1696
        %1751 = vmatprep.subr.bf16.mxu0 0
        %1752 = vmatpush1.bf16.msra.mxu0 %v1695
        %1753 = vmatprep.subr.bf16.mxu0 0
        %1754 = vmatpush1.bf16.msra.mxu0 %v1694
        %1755 = vmatprep.subr.bf16.mxu0 0
        %1756 = vmatpush1.bf16.msra.mxu0 %v1693
        %1757 = vmatprep.subr.bf16.mxu0 0
        %1758 = vmatpush2.bf16.msra.mxu0 %v1708
        %1759 = vmatprep.subr.bf16.mxu0 0
        %1760 = vmatpush2.bf16.msra.mxu0 %v1707
        %1761 = vmatprep.subr.bf16.mxu0 0
        %1762 = vmatpush2.bf16.msra.mxu0 %v1706
        %1763 = vmatprep.subr.bf16.mxu0 0
        %1764 = vmatpush2.bf16.msra.mxu0 %v1705
        %1765 = vmatprep.subr.bf16.mxu0 0
        %1766 = vmatpush2.bf16.msra.mxu0 %v1704
        %1767 = vmatprep.subr.bf16.mxu0 0
        %1768 = vmatpush2.bf16.msra.mxu0 %v1703
        %1769 = vmatprep.subr.bf16.mxu0 0
        %1770 = vmatpush2.bf16.msra.mxu0 %v1702
        %1771 = vmatprep.subr.bf16.mxu0 0
        %1772 = vmatpush2.bf16.msra.mxu0 %v1701
        %1773 = vmatprep.mubr.bf16.mxu0 %v1502
        %1774 = vmatmul.mubr.bf16.gmra.mxu0 %v1501
        %v1775 = vpop.f32.mrf.mxu0
        %v1776 = vadd.f32 0.0, %v1775
        %v1777 = vpop.f32.mrf.mxu0
        %v1778 = vpop.f32.mrf.mxu0
        %v1779 = vadd.f32 0.0, %v1778
        %v1780 = vpop.f32.mrf.mxu0
        %1781 = vmatprep.mubr.bf16.mxu0 %v1505
        %1782 = vmatmul.mubr.bf16.gmra.mxu0 %v1504
        %v1783 = vpop.f32.mrf.mxu0
        %v1784 = vadd.f32 0.0, %v1783
        %v1785 = vpop.f32.mrf.mxu0
        %v1786 = vpop.f32.mrf.mxu0
        %v1787 = vadd.f32 0.0, %v1786
        %v1788 = vpop.f32.mrf.mxu0
        %1789 = vmatprep.mubr.bf16.mxu0 %v1508
        %1790 = vmatmul.mubr.bf16.gmra.mxu0 %v1507
        %v1791 = vpop.f32.mrf.mxu0
        %v1792 = vadd.f32 0.0, %v1791
        %v1793 = vpop.f32.mrf.mxu0
        %v1794 = vpop.f32.mrf.mxu0
        %v1795 = vadd.f32 0.0, %v1794
        %v1796 = vpop.f32.mrf.mxu0
        %1797 = vmatprep.mubr.bf16.mxu0 %v1511
        %1798 = vmatmul.mubr.bf16.gmra.mxu0 %v1510
        %v1799 = vpop.f32.mrf.mxu0
        %v1800 = vadd.f32 0.0, %v1799
        %v1801 = vpop.f32.mrf.mxu0
        %v1802 = vpop.f32.mrf.mxu0
        %v1803 = vadd.f32 0.0, %v1802
        %v1804 = vpop.f32.mrf.mxu0
        %1805 = vmatprep.mubr.bf16.mxu0 %v1514
        %1806 = vmatmul.mubr.bf16.gmra.mxu0 %v1513
        %v1807 = vpop.f32.mrf.mxu0
        %v1808 = vadd.f32 0.0, %v1807
        %v1809 = vpop.f32.mrf.mxu0
        %v1810 = vpop.f32.mrf.mxu0
        %v1811 = vadd.f32 0.0, %v1810
        %v1812 = vpop.f32.mrf.mxu0
        %1813 = vmatprep.mubr.bf16.mxu0 %v1517
        %1814 = vmatmul.mubr.bf16.gmra.mxu0 %v1516
        %v1815 = vpop.f32.mrf.mxu0
        %v1816 = vadd.f32 0.0, %v1815
        %v1817 = vpop.f32.mrf.mxu0
        %v1818 = vpop.f32.mrf.mxu0
        %v1819 = vadd.f32 0.0, %v1818
        %v1820 = vpop.f32.mrf.mxu0
        %1821 = vmatprep.mubr.bf16.mxu0 %v1520
        %1822 = vmatmul.mubr.bf16.gmra.mxu0 %v1519
        %v1823 = vpop.f32.mrf.mxu0
        %v1824 = vadd.f32 0.0, %v1823
        %v1825 = vpop.f32.mrf.mxu0
        %v1826 = vpop.f32.mrf.mxu0
        %v1827 = vadd.f32 0.0, %v1826
        %v1828 = vpop.f32.mrf.mxu0
        %1829 = vmatprep.mubr.bf16.mxu0 %v1523
        %1830 = vmatmul.mubr.bf16.gmra.mxu0 %v1522
        %v1831 = vpop.f32.mrf.mxu0
        %v1832 = vadd.f32 0.0, %v1831
        %v1833 = vpop.f32.mrf.mxu0
        %v1834 = vpop.f32.mrf.mxu0
        %v1835 = vadd.f32 0.0, %v1834
        %v1836 = vpop.f32.mrf.mxu0
        %1837 = vmatprep.mubr.bf16.mxu0 %v1526
        %1838 = vmatmul.mubr.bf16.gmra.mxu0 %v1525
        %v1839 = vpop.f32.mrf.mxu0
        %v1840 = vadd.f32 0.0, %v1839
        %v1841 = vpop.f32.mrf.mxu0
        %v1842 = vpop.f32.mrf.mxu0
        %v1843 = vadd.f32 0.0, %v1842
        %v1844 = vpop.f32.mrf.mxu0
        %1845 = vmatprep.mubr.bf16.mxu0 %v1529
        %1846 = vmatmul.mubr.bf16.gmra.mxu0 %v1528
        %v1847 = vpop.f32.mrf.mxu0
        %v1848 = vadd.f32 0.0, %v1847
        %v1849 = vpop.f32.mrf.mxu0
        %v1850 = vpop.f32.mrf.mxu0
        %v1851 = vadd.f32 0.0, %v1850
        %v1852 = vpop.f32.mrf.mxu0
        %1853 = vmatprep.mubr.bf16.mxu0 %v1532
        %1854 = vmatmul.mubr.bf16.gmra.mxu0 %v1531
        %v1855 = vpop.f32.mrf.mxu0
        %v1856 = vadd.f32 0.0, %v1855
        %v1857 = vpop.f32.mrf.mxu0
        %v1858 = vpop.f32.mrf.mxu0
        %v1859 = vadd.f32 0.0, %v1858
        %v1860 = vpop.f32.mrf.mxu0
        %1861 = vmatprep.mubr.bf16.mxu0 %v1535
        %1862 = vmatmul.mubr.bf16.gmra.mxu0 %v1534
        %v1863 = vpop.f32.mrf.mxu0
        %v1864 = vadd.f32 0.0, %v1863
        %v1865 = vpop.f32.mrf.mxu0
        %v1866 = vpop.f32.mrf.mxu0
        %v1867 = vadd.f32 0.0, %v1866
        %v1868 = vpop.f32.mrf.mxu0
        %1869 = vmatprep.mubr.bf16.mxu0 %v1538
        %1870 = vmatmul.mubr.bf16.gmra.mxu0 %v1537
        %v1871 = vpop.f32.mrf.mxu0
        %v1872 = vadd.f32 0.0, %v1871
        %v1873 = vpop.f32.mrf.mxu0
        %v1874 = vpop.f32.mrf.mxu0
        %v1875 = vadd.f32 0.0, %v1874
        %v1876 = vpop.f32.mrf.mxu0
        %1877 = vmatprep.mubr.bf16.mxu0 %v1541
        %1878 = vmatmul.mubr.bf16.gmra.mxu0 %v1540
        %v1879 = vpop.f32.mrf.mxu0
        %v1880 = vadd.f32 0.0, %v1879
        %v1881 = vpop.f32.mrf.mxu0
        %v1882 = vpop.f32.mrf.mxu0
        %v1883 = vadd.f32 0.0, %v1882
        %v1884 = vpop.f32.mrf.mxu0
        %1885 = vmatprep.mubr.bf16.mxu0 %v1544
        %1886 = vmatmul.mubr.bf16.gmra.mxu0 %v1543
        %v1887 = vpop.f32.mrf.mxu0
        %v1888 = vadd.f32 0.0, %v1887
        %v1889 = vpop.f32.mrf.mxu0
        %v1890 = vpop.f32.mrf.mxu0
        %v1891 = vadd.f32 0.0, %v1890
        %v1892 = vpop.f32.mrf.mxu0
        %1893 = vmatprep.mubr.bf16.mxu0 %v1547
        %1894 = vmatmul.mubr.bf16.gmra.mxu0 %v1546
        %v1895 = vpop.f32.mrf.mxu0
        %v1896 = vadd.f32 0.0, %v1895
        %v1897 = vpop.f32.mrf.mxu0
        %v1898 = vpop.f32.mrf.mxu0
        %v1899 = vadd.f32 0.0, %v1898
        %v1900 = vpop.f32.mrf.mxu0
        %1901 = vdwg.mxu0
        %1902 = vmatprep.subr.bf16.mxu0 0
        %1903 = vmatpush1.bf16.msra.mxu0 %v1716
        %1904 = vmatprep.subr.bf16.mxu0 0
        %1905 = vmatpush1.bf16.msra.mxu0 %v1715
        %1906 = vmatprep.subr.bf16.mxu0 0
        %1907 = vmatpush1.bf16.msra.mxu0 %v1714
        %1908 = vmatprep.subr.bf16.mxu0 0
        %1909 = vmatpush1.bf16.msra.mxu0 %v1713
        %1910 = vmatprep.subr.bf16.mxu0 0
        %1911 = vmatpush1.bf16.msra.mxu0 %v1712
        %1912 = vmatprep.subr.bf16.mxu0 0
        %1913 = vmatpush1.bf16.msra.mxu0 %v1711
        %1914 = vmatprep.subr.bf16.mxu0 0
        %1915 = vmatpush1.bf16.msra.mxu0 %v1710
        %1916 = vmatprep.subr.bf16.mxu0 0
        %1917 = vmatpush1.bf16.msra.mxu0 %v1709
        %1918 = vmatprep.subr.bf16.mxu0 0
        %1919 = vmatpush2.bf16.msra.mxu0 0
        %1920 = vmatprep.subr.bf16.mxu0 0
        %1921 = vmatpush2.bf16.msra.mxu0 0
        %1922 = vmatprep.subr.bf16.mxu0 0
        %1923 = vmatpush2.bf16.msra.mxu0 0
        %1924 = vmatprep.subr.bf16.mxu0 0
        %1925 = vmatpush2.bf16.msra.mxu0 0
        %1926 = vmatprep.subr.bf16.mxu0 0
        %1927 = vmatpush2.bf16.msra.mxu0 0
        %1928 = vmatprep.subr.bf16.mxu0 0
        %1929 = vmatpush2.bf16.msra.mxu0 0
        %1930 = vmatprep.subr.bf16.mxu0 0
        %1931 = vmatpush2.bf16.msra.mxu0 0
        %1932 = vmatprep.subr.bf16.mxu0 0
        %1933 = vmatpush2.bf16.msra.mxu0 0
        %1934 = vmatprep.mubr.bf16.mxu0 0
        %1935 = vmatmul.mubr.bf16.gmra.mxu0 %v1503
        %v1936 = vpop.f32.mrf.mxu0
        %v1937 = vadd.f32 %v1776, %v1936
        %v1938 = vpop.f32.mrf.mxu0
        %v1939 = vpop.f32.mrf.mxu0
        %v1940 = vadd.f32 %v1779, %v1939
        %v1941 = vpop.f32.mrf.mxu0
        %1942 = vmatprep.mubr.bf16.mxu0 0
        %1943 = vmatmul.mubr.bf16.gmra.mxu0 %v1506
        %v1944 = vpop.f32.mrf.mxu0
        %v1945 = vadd.f32 %v1784, %v1944
        %v1946 = vpop.f32.mrf.mxu0
        %v1947 = vpop.f32.mrf.mxu0
        %v1948 = vadd.f32 %v1787, %v1947
        %v1949 = vpop.f32.mrf.mxu0
        %1950 = vmatprep.mubr.bf16.mxu0 0
        %1951 = vmatmul.mubr.bf16.gmra.mxu0 %v1509
        %v1952 = vpop.f32.mrf.mxu0
        %v1953 = vadd.f32 %v1792, %v1952
        %v1954 = vpop.f32.mrf.mxu0
        %v1955 = vpop.f32.mrf.mxu0
        %v1956 = vadd.f32 %v1795, %v1955
        %v1957 = vpop.f32.mrf.mxu0
        %1958 = vmatprep.mubr.bf16.mxu0 0
        %1959 = vmatmul.mubr.bf16.gmra.mxu0 %v1512
        %v1960 = vpop.f32.mrf.mxu0
        %v1961 = vadd.f32 %v1800, %v1960
        %v1962 = vpop.f32.mrf.mxu0
        %v1963 = vpop.f32.mrf.mxu0
        %v1964 = vadd.f32 %v1803, %v1963
        %v1965 = vpop.f32.mrf.mxu0
        %1966 = vmatprep.mubr.bf16.mxu0 0
        %1967 = vmatmul.mubr.bf16.gmra.mxu0 %v1515
        %v1968 = vpop.f32.mrf.mxu0
        %v1969 = vadd.f32 %v1808, %v1968
        %v1970 = vpop.f32.mrf.mxu0
        %v1971 = vpop.f32.mrf.mxu0
        %v1972 = vadd.f32 %v1811, %v1971
        %v1973 = vpop.f32.mrf.mxu0
        %1974 = vmatprep.mubr.bf16.mxu0 0
        %1975 = vmatmul.mubr.bf16.gmra.mxu0 %v1518
        %v1976 = vpop.f32.mrf.mxu0
        %v1977 = vadd.f32 %v1816, %v1976
        %v1978 = vpop.f32.mrf.mxu0
        %v1979 = vpop.f32.mrf.mxu0
        %v1980 = vadd.f32 %v1819, %v1979
        %v1981 = vpop.f32.mrf.mxu0
        %1982 = vmatprep.mubr.bf16.mxu0 0
        %1983 = vmatmul.mubr.bf16.gmra.mxu0 %v1521
        %v1984 = vpop.f32.mrf.mxu0
        %v1985 = vadd.f32 %v1824, %v1984
        %v1986 = vpop.f32.mrf.mxu0
        %v1987 = vpop.f32.mrf.mxu0
        %v1988 = vadd.f32 %v1827, %v1987
        %v1989 = vpop.f32.mrf.mxu0
        %1990 = vmatprep.mubr.bf16.mxu0 0
        %1991 = vmatmul.mubr.bf16.gmra.mxu0 %v1524
        %v1992 = vpop.f32.mrf.mxu0
        %v1993 = vadd.f32 %v1832, %v1992
        %v1994 = vpop.f32.mrf.mxu0
        %v1995 = vpop.f32.mrf.mxu0
        %v1996 = vadd.f32 %v1835, %v1995
        %v1997 = vpop.f32.mrf.mxu0
        %1998 = vmatprep.mubr.bf16.mxu0 0
        %1999 = vmatmul.mubr.bf16.gmra.mxu0 %v1527
        %v2000 = vpop.f32.mrf.mxu0
        %v2001 = vadd.f32 %v1840, %v2000
        %v2002 = vpop.f32.mrf.mxu0
        %v2003 = vpop.f32.mrf.mxu0
        %v2004 = vadd.f32 %v1843, %v2003
        %v2005 = vpop.f32.mrf.mxu0
        %2006 = vmatprep.mubr.bf16.mxu0 0
        %2007 = vmatmul.mubr.bf16.gmra.mxu0 %v1530
        %v2008 = vpop.f32.mrf.mxu0
        %v2009 = vadd.f32 %v1848, %v2008
        %v2010 = vpop.f32.mrf.mxu0
        %v2011 = vpop.f32.mrf.mxu0
        %v2012 = vadd.f32 %v1851, %v2011
        %v2013 = vpop.f32.mrf.mxu0
        %2014 = vmatprep.mubr.bf16.mxu0 0
        %2015 = vmatmul.mubr.bf16.gmra.mxu0 %v1533
        %v2016 = vpop.f32.mrf.mxu0
        %v2017 = vadd.f32 %v1856, %v2016
        %v2018 = vpop.f32.mrf.mxu0
        %v2019 = vpop.f32.mrf.mxu0
        %v2020 = vadd.f32 %v1859, %v2019
        %v2021 = vpop.f32.mrf.mxu0
        %2022 = vmatprep.mubr.bf16.mxu0 0
        %2023 = vmatmul.mubr.bf16.gmra.mxu0 %v1536
        %v2024 = vpop.f32.mrf.mxu0
        %v2025 = vadd.f32 %v1864, %v2024
        %v2026 = vpop.f32.mrf.mxu0
        %v2027 = vpop.f32.mrf.mxu0
        %v2028 = vadd.f32 %v1867, %v2027
        %v2029 = vpop.f32.mrf.mxu0
        %2030 = vmatprep.mubr.bf16.mxu0 0
        %2031 = vmatmul.mubr.bf16.gmra.mxu0 %v1539
        %v2032 = vpop.f32.mrf.mxu0
        %v2033 = vadd.f32 %v1872, %v2032
        %v2034 = vpop.f32.mrf.mxu0
        %v2035 = vpop.f32.mrf.mxu0
        %v2036 = vadd.f32 %v1875, %v2035
        %v2037 = vpop.f32.mrf.mxu0
        %2038 = vmatprep.mubr.bf16.mxu0 0
        %2039 = vmatmul.mubr.bf16.gmra.mxu0 %v1542
        %v2040 = vpop.f32.mrf.mxu0
        %v2041 = vadd.f32 %v1880, %v2040
        %v2042 = vpop.f32.mrf.mxu0
        %v2043 = vpop.f32.mrf.mxu0
        %v2044 = vadd.f32 %v1883, %v2043
        %v2045 = vpop.f32.mrf.mxu0
        %2046 = vmatprep.mubr.bf16.mxu0 0
        %2047 = vmatmul.mubr.bf16.gmra.mxu0 %v1545
        %v2048 = vpop.f32.mrf.mxu0
        %v2049 = vadd.f32 %v1888, %v2048
        %v2050 = vpop.f32.mrf.mxu0
        %v2051 = vpop.f32.mrf.mxu0
        %v2052 = vadd.f32 %v1891, %v2051
        %v2053 = vpop.f32.mrf.mxu0
        %2054 = vmatprep.mubr.bf16.mxu0 0
        %2055 = vmatmul.mubr.bf16.gmra.mxu0 %v1548
        %v2056 = vpop.f32.mrf.mxu0
        %v2057 = vadd.f32 %v1896, %v2056
        %v2058 = vpop.f32.mrf.mxu0
        %v2059 = vpop.f32.mrf.mxu0
        %v2060 = vadd.f32 %v1899, %v2059
        %v2061 = vpop.f32.mrf.mxu0
        %2062 = vdwg.mxu0
        %v2127 = vunpack.c.l.b16 %v1116
        %v2128 = vunpack.c.h.b16 %v1116
        %v2129 = vunpack.c.l.b16 %v1117
        %v2130 = vunpack.c.l.b16 %v1118
        %v2131 = vunpack.c.h.b16 %v1118
        %v2132 = vunpack.c.l.b16 %v1119
        %v2133 = vunpack.c.l.b16 %v1120
        %v2134 = vunpack.c.h.b16 %v1120
        %v2135 = vunpack.c.l.b16 %v1121
        %v2136 = vunpack.c.l.b16 %v1122
        %v2137 = vunpack.c.h.b16 %v1122
        %v2138 = vunpack.c.l.b16 %v1123
        %v2139 = vunpack.c.l.b16 %v1124
        %v2140 = vunpack.c.h.b16 %v1124
        %v2141 = vunpack.c.l.b16 %v1125
        %v2142 = vunpack.c.l.b16 %v1126
        %v2143 = vunpack.c.h.b16 %v1126
        %v2144 = vunpack.c.l.b16 %v1127
        %v2145 = vunpack.c.l.b16 %v1128
        %v2146 = vunpack.c.h.b16 %v1128
        %v2147 = vunpack.c.l.b16 %v1129
        %v2148 = vunpack.c.l.b16 %v1130
        %v2149 = vunpack.c.h.b16 %v1130
        %v2150 = vunpack.c.l.b16 %v1131
        %v2151 = vunpack.c.l.b16 %v1132
        %v2152 = vunpack.c.h.b16 %v1132
        %v2153 = vunpack.c.l.b16 %v1133
        %v2154 = vunpack.c.l.b16 %v1134
        %v2155 = vunpack.c.h.b16 %v1134
        %v2156 = vunpack.c.l.b16 %v1135
        %v2157 = vunpack.c.l.b16 %v1136
        %v2158 = vunpack.c.h.b16 %v1136
        %v2159 = vunpack.c.l.b16 %v1137
        %v2160 = vunpack.c.l.b16 %v1138
        %v2161 = vunpack.c.h.b16 %v1138
        %v2162 = vunpack.c.l.b16 %v1139
        %v2163 = vunpack.c.l.b16 %v1140
        %v2164 = vunpack.c.h.b16 %v1140
        %v2165 = vunpack.c.l.b16 %v1141
        %v2166 = vunpack.c.l.b16 %v1142
        %v2167 = vunpack.c.h.b16 %v1142
        %v2168 = vunpack.c.l.b16 %v1143
        %v2169 = vunpack.c.l.b16 %v1144
        %v2170 = vunpack.c.h.b16 %v1144
        %v2171 = vunpack.c.l.b16 %v1145
        %v2172 = vunpack.c.l.b16 %v1146
        %v2173 = vunpack.c.h.b16 %v1146
        %v2174 = vunpack.c.l.b16 %v1147
        %v2175 = vunpack.c.l.b16 %v1148
        %v2176 = vunpack.c.h.b16 %v1148
        %v2177 = vunpack.c.l.b16 %v1149
        %v2178 = vunpack.c.l.b16 %v1150
        %v2179 = vunpack.c.h.b16 %v1150
        %v2180 = vunpack.c.l.b16 %v1151
        %v2181 = vunpack.c.l.b16 %v1152
        %v2182 = vunpack.c.h.b16 %v1152
        %v2183 = vunpack.c.l.b16 %v1153
        %v2184 = vunpack.c.l.b16 %v1154
        %v2185 = vunpack.c.h.b16 %v1154
        %v2186 = vunpack.c.l.b16 %v1155
        %v2187 = vunpack.c.l.b16 %v1156
        %v2188 = vunpack.c.h.b16 %v1156
        %v2189 = vunpack.c.l.b16 %v1157
        %v2190 = vunpack.c.l.b16 %v1158
        %v2191 = vunpack.c.h.b16 %v1158
        %v2192 = vunpack.c.l.b16 %v1159
        %v2193 = vunpack.c.l.b16 %v1160
        %v2194 = vunpack.c.h.b16 %v1160
        %v2195 = vunpack.c.l.b16 %v1161
        %v2196 = vunpack.c.l.b16 %v1162
        %v2197 = vunpack.c.h.b16 %v1162
        %v2198 = vunpack.c.l.b16 %v1163
        %v2199 = vunpack.c.l.b16 %v1164
        %v2200 = vunpack.c.h.b16 %v1164
        %v2201 = vunpack.c.l.b16 %v1165
        %v2202 = vunpack.c.l.b16 %v1166
        %v2203 = vunpack.c.h.b16 %v1166
        %v2204 = vunpack.c.l.b16 %v1167
        %v2205 = vunpack.c.l.b16 %v1168
        %v2206 = vunpack.c.h.b16 %v1168
        %v2207 = vunpack.c.l.b16 %v1169
        %v2208 = vunpack.c.l.b16 %v1170
        %v2209 = vunpack.c.h.b16 %v1170
        %v2210 = vunpack.c.l.b16 %v1171
        %v2211 = vunpack.c.l.b16 %v1172
        %v2212 = vunpack.c.h.b16 %v1172
        %v2213 = vunpack.c.l.b16 %v1173
        %v2214 = vunpack.c.l.b16 %v1174
        %v2215 = vunpack.c.h.b16 %v1174
        %v2216 = vunpack.c.l.b16 %v1175
        %v2217 = vunpack.c.l.b16 %v1176
        %v2218 = vunpack.c.h.b16 %v1176
        %v2219 = vunpack.c.l.b16 %v1177
        %v2220 = vunpack.c.l.b16 %v1178
        %v2221 = vunpack.c.h.b16 %v1178
        %v2222 = vunpack.c.l.b16 %v1179
        %v2223 = vpack.c.b16 %v2130, %v2127
        %v2224 = vpack.c.b16 %v2131, %v2128
        %v2225 = vpack.c.b16 %v2132, %v2129
        %v2226 = vpack.c.b16 %v2136, %v2133
        %v2227 = vpack.c.b16 %v2137, %v2134
        %v2228 = vpack.c.b16 %v2138, %v2135
        %v2229 = vpack.c.b16 %v2142, %v2139
        %v2230 = vpack.c.b16 %v2143, %v2140
        %v2231 = vpack.c.b16 %v2144, %v2141
        %v2232 = vpack.c.b16 %v2148, %v2145
        %v2233 = vpack.c.b16 %v2149, %v2146
        %v2234 = vpack.c.b16 %v2150, %v2147
        %v2235 = vpack.c.b16 %v2154, %v2151
        %v2236 = vpack.c.b16 %v2155, %v2152
        %v2237 = vpack.c.b16 %v2156, %v2153
        %v2238 = vpack.c.b16 %v2160, %v2157
        %v2239 = vpack.c.b16 %v2161, %v2158
        %v2240 = vpack.c.b16 %v2162, %v2159
        %v2241 = vpack.c.b16 %v2166, %v2163
        %v2242 = vpack.c.b16 %v2167, %v2164
        %v2243 = vpack.c.b16 %v2168, %v2165
        %v2244 = vpack.c.b16 %v2172, %v2169
        %v2245 = vpack.c.b16 %v2173, %v2170
        %v2246 = vpack.c.b16 %v2174, %v2171
        %v2247 = vpack.c.b16 %v2178, %v2175
        %v2248 = vpack.c.b16 %v2179, %v2176
        %v2249 = vpack.c.b16 %v2180, %v2177
        %v2250 = vpack.c.b16 %v2184, %v2181
        %v2251 = vpack.c.b16 %v2185, %v2182
        %v2252 = vpack.c.b16 %v2186, %v2183
        %v2253 = vpack.c.b16 %v2190, %v2187
        %v2254 = vpack.c.b16 %v2191, %v2188
        %v2255 = vpack.c.b16 %v2192, %v2189
        %v2256 = vpack.c.b16 %v2196, %v2193
        %v2257 = vpack.c.b16 %v2197, %v2194
        %v2258 = vpack.c.b16 %v2198, %v2195
        %v2259 = vpack.c.b16 %v2202, %v2199
        %v2260 = vpack.c.b16 %v2203, %v2200
        %v2261 = vpack.c.b16 %v2204, %v2201
        %v2262 = vpack.c.b16 %v2208, %v2205
        %v2263 = vpack.c.b16 %v2209, %v2206
        %v2264 = vpack.c.b16 %v2210, %v2207
        %v2265 = vpack.c.b16 %v2214, %v2211
        %v2266 = vpack.c.b16 %v2215, %v2212
        %v2267 = vpack.c.b16 %v2216, %v2213
        %v2268 = vpack.c.b16 %v2220, %v2217
        %v2269 = vpack.c.b16 %v2221, %v2218
        %v2270 = vpack.c.b16 %v2222, %v2219
        %v2367 = vunpack.c.l.b16 %v1180
        %v2368 = vunpack.c.l.b16 %v1181
        %v2369 = vunpack.c.l.b16 %v1182
        %v2370 = vunpack.c.l.b16 %v1183
        %v2371 = vunpack.c.l.b16 %v1184
        %v2372 = vunpack.c.l.b16 %v1185
        %v2373 = vunpack.c.l.b16 %v1186
        %v2374 = vunpack.c.l.b16 %v1187
        %v2375 = vunpack.c.l.b16 %v1188
        %v2376 = vunpack.c.l.b16 %v1189
        %v2377 = vunpack.c.l.b16 %v1190
        %v2378 = vunpack.c.l.b16 %v1191
        %v2379 = vunpack.c.l.b16 %v1192
        %v2380 = vunpack.c.l.b16 %v1193
        %v2381 = vunpack.c.l.b16 %v1194
        %v2382 = vunpack.c.l.b16 %v1195
        %v2383 = vunpack.c.l.b16 %v1196
        %v2384 = vunpack.c.l.b16 %v1197
        %v2385 = vunpack.c.l.b16 %v1198
        %v2386 = vunpack.c.l.b16 %v1199
        %v2387 = vunpack.c.l.b16 %v1200
        %v2388 = vunpack.c.l.b16 %v1201
        %v2389 = vunpack.c.l.b16 %v1202
        %v2390 = vunpack.c.l.b16 %v1203
        %v2391 = vunpack.c.l.b16 %v1204
        %v2392 = vunpack.c.l.b16 %v1205
        %v2393 = vunpack.c.l.b16 %v1206
        %v2394 = vunpack.c.l.b16 %v1207
        %v2395 = vunpack.c.l.b16 %v1208
        %v2396 = vunpack.c.l.b16 %v1209
        %v2397 = vunpack.c.l.b16 %v1210
        %v2398 = vunpack.c.l.b16 %v1211
        %v2399 = vunpack.c.l.b16 %v1212
        %v2400 = vunpack.c.l.b16 %v1213
        %v2401 = vunpack.c.l.b16 %v1214
        %v2402 = vunpack.c.l.b16 %v1215
        %v2403 = vunpack.c.l.b16 %v1216
        %v2404 = vunpack.c.l.b16 %v1217
        %v2405 = vunpack.c.l.b16 %v1218
        %v2406 = vunpack.c.l.b16 %v1219
        %v2407 = vunpack.c.l.b16 %v1220
        %v2408 = vunpack.c.l.b16 %v1221
        %v2409 = vunpack.c.l.b16 %v1222
        %v2410 = vunpack.c.l.b16 %v1223
        %v2411 = vunpack.c.l.b16 %v1224
        %v2412 = vunpack.c.l.b16 %v1225
        %v2413 = vunpack.c.l.b16 %v1226
        %v2414 = vunpack.c.l.b16 %v1227
        %v2415 = vpack.c.b16 %v2368, %v2367
        %v2416 = vpack.c.b16 %v2370, %v2369
        %v2417 = vpack.c.b16 %v2372, %v2371
        %v2418 = vpack.c.b16 %v2374, %v2373
        %v2419 = vpack.c.b16 %v2376, %v2375
        %v2420 = vpack.c.b16 %v2378, %v2377
        %v2421 = vpack.c.b16 %v2380, %v2379
        %v2422 = vpack.c.b16 %v2382, %v2381
        %v2423 = vpack.c.b16 %v2384, %v2383
        %v2424 = vpack.c.b16 %v2386, %v2385
        %v2425 = vpack.c.b16 %v2388, %v2387
        %v2426 = vpack.c.b16 %v2390, %v2389
        %v2427 = vpack.c.b16 %v2392, %v2391
        %v2428 = vpack.c.b16 %v2394, %v2393
        %v2429 = vpack.c.b16 %v2396, %v2395
        %v2430 = vpack.c.b16 %v2398, %v2397
        %v2431 = vpack.c.b16 %v2400, %v2399
        %v2432 = vpack.c.b16 %v2402, %v2401
        %v2433 = vpack.c.b16 %v2404, %v2403
        %v2434 = vpack.c.b16 %v2406, %v2405
        %v2435 = vpack.c.b16 %v2408, %v2407
        %v2436 = vpack.c.b16 %v2410, %v2409
        %v2437 = vpack.c.b16 %v2412, %v2411
        %v2438 = vpack.c.b16 %v2414, %v2413
        %2463 = vmatprep.subr.bf16.mxu0 0
        %2464 = vmatpush1.bf16.msra.mxu0 %v2422
        %2465 = vmatprep.subr.bf16.mxu0 0
        %2466 = vmatpush1.bf16.msra.mxu0 %v2421
        %2467 = vmatprep.subr.bf16.mxu0 0
        %2468 = vmatpush1.bf16.msra.mxu0 %v2420
        %2469 = vmatprep.subr.bf16.mxu0 0
        %2470 = vmatpush1.bf16.msra.mxu0 %v2419
        %2471 = vmatprep.subr.bf16.mxu0 0
        %2472 = vmatpush1.bf16.msra.mxu0 %v2418
        %2473 = vmatprep.subr.bf16.mxu0 0
        %2474 = vmatpush1.bf16.msra.mxu0 %v2417
        %2475 = vmatprep.subr.bf16.mxu0 0
        %2476 = vmatpush1.bf16.msra.mxu0 %v2416
        %2477 = vmatprep.subr.bf16.mxu0 0
        %2478 = vmatpush1.bf16.msra.mxu0 %v2415
        %2479 = vmatprep.subr.bf16.mxu0 0
        %2480 = vmatpush2.bf16.msra.mxu0 %v2430
        %2481 = vmatprep.subr.bf16.mxu0 0
        %2482 = vmatpush2.bf16.msra.mxu0 %v2429
        %2483 = vmatprep.subr.bf16.mxu0 0
        %2484 = vmatpush2.bf16.msra.mxu0 %v2428
        %2485 = vmatprep.subr.bf16.mxu0 0
        %2486 = vmatpush2.bf16.msra.mxu0 %v2427
        %2487 = vmatprep.subr.bf16.mxu0 0
        %2488 = vmatpush2.bf16.msra.mxu0 %v2426
        %2489 = vmatprep.subr.bf16.mxu0 0
        %2490 = vmatpush2.bf16.msra.mxu0 %v2425
        %2491 = vmatprep.subr.bf16.mxu0 0
        %2492 = vmatpush2.bf16.msra.mxu0 %v2424
        %2493 = vmatprep.subr.bf16.mxu0 0
        %2494 = vmatpush2.bf16.msra.mxu0 %v2423
        %2495 = vmatprep.mubr.bf16.mxu0 %v2224
        %2496 = vmatmul.mubr.bf16.gmra.mxu0 %v2223
        %v2497 = vpop.f32.mrf.mxu0
        %v2498 = vadd.f32 %v1937, %v2497
        %v2499 = vpop.f32.mrf.mxu0
        %v2500 = vpop.f32.mrf.mxu0
        %v2501 = vadd.f32 %v1940, %v2500
        %v2502 = vpop.f32.mrf.mxu0
        %2503 = vmatprep.mubr.bf16.mxu0 %v2227
        %2504 = vmatmul.mubr.bf16.gmra.mxu0 %v2226
        %v2505 = vpop.f32.mrf.mxu0
        %v2506 = vadd.f32 %v1945, %v2505
        %v2507 = vpop.f32.mrf.mxu0
        %v2508 = vpop.f32.mrf.mxu0
        %v2509 = vadd.f32 %v1948, %v2508
        %v2510 = vpop.f32.mrf.mxu0
        %2511 = vmatprep.mubr.bf16.mxu0 %v2230
        %2512 = vmatmul.mubr.bf16.gmra.mxu0 %v2229
        %v2513 = vpop.f32.mrf.mxu0
        %v2514 = vadd.f32 %v1953, %v2513
        %v2515 = vpop.f32.mrf.mxu0
        %v2516 = vpop.f32.mrf.mxu0
        %v2517 = vadd.f32 %v1956, %v2516
        %v2518 = vpop.f32.mrf.mxu0
        %2519 = vmatprep.mubr.bf16.mxu0 %v2233
        %2520 = vmatmul.mubr.bf16.gmra.mxu0 %v2232
        %v2521 = vpop.f32.mrf.mxu0
        %v2522 = vadd.f32 %v1961, %v2521
        %v2523 = vpop.f32.mrf.mxu0
        %v2524 = vpop.f32.mrf.mxu0
        %v2525 = vadd.f32 %v1964, %v2524
        %v2526 = vpop.f32.mrf.mxu0
        %2527 = vmatprep.mubr.bf16.mxu0 %v2236
        %2528 = vmatmul.mubr.bf16.gmra.mxu0 %v2235
        %v2529 = vpop.f32.mrf.mxu0
        %v2530 = vadd.f32 %v1969, %v2529
        %v2531 = vpop.f32.mrf.mxu0
        %v2532 = vpop.f32.mrf.mxu0
        %v2533 = vadd.f32 %v1972, %v2532
        %v2534 = vpop.f32.mrf.mxu0
        %2535 = vmatprep.mubr.bf16.mxu0 %v2239
        %2536 = vmatmul.mubr.bf16.gmra.mxu0 %v2238
        %v2537 = vpop.f32.mrf.mxu0
        %v2538 = vadd.f32 %v1977, %v2537
        %v2539 = vpop.f32.mrf.mxu0
        %v2540 = vpop.f32.mrf.mxu0
        %v2541 = vadd.f32 %v1980, %v2540
        %v2542 = vpop.f32.mrf.mxu0
        %2543 = vmatprep.mubr.bf16.mxu0 %v2242
        %2544 = vmatmul.mubr.bf16.gmra.mxu0 %v2241
        %v2545 = vpop.f32.mrf.mxu0
        %v2546 = vadd.f32 %v1985, %v2545
        %v2547 = vpop.f32.mrf.mxu0
        %v2548 = vpop.f32.mrf.mxu0
        %v2549 = vadd.f32 %v1988, %v2548
        %v2550 = vpop.f32.mrf.mxu0
        %2551 = vmatprep.mubr.bf16.mxu0 %v2245
        %2552 = vmatmul.mubr.bf16.gmra.mxu0 %v2244
        %v2553 = vpop.f32.mrf.mxu0
        %v2554 = vadd.f32 %v1993, %v2553
        %v2555 = vpop.f32.mrf.mxu0
        %v2556 = vpop.f32.mrf.mxu0
        %v2557 = vadd.f32 %v1996, %v2556
        %v2558 = vpop.f32.mrf.mxu0
        %2559 = vmatprep.mubr.bf16.mxu0 %v2248
        %2560 = vmatmul.mubr.bf16.gmra.mxu0 %v2247
        %v2561 = vpop.f32.mrf.mxu0
        %v2562 = vadd.f32 %v2001, %v2561
        %v2563 = vpop.f32.mrf.mxu0
        %v2564 = vpop.f32.mrf.mxu0
        %v2565 = vadd.f32 %v2004, %v2564
        %v2566 = vpop.f32.mrf.mxu0
        %2567 = vmatprep.mubr.bf16.mxu0 %v2251
        %2568 = vmatmul.mubr.bf16.gmra.mxu0 %v2250
        %v2569 = vpop.f32.mrf.mxu0
        %v2570 = vadd.f32 %v2009, %v2569
        %v2571 = vpop.f32.mrf.mxu0
        %v2572 = vpop.f32.mrf.mxu0
        %v2573 = vadd.f32 %v2012, %v2572
        %v2574 = vpop.f32.mrf.mxu0
        %2575 = vmatprep.mubr.bf16.mxu0 %v2254
        %2576 = vmatmul.mubr.bf16.gmra.mxu0 %v2253
        %v2577 = vpop.f32.mrf.mxu0
        %v2578 = vadd.f32 %v2017, %v2577
        %v2579 = vpop.f32.mrf.mxu0
        %v2580 = vpop.f32.mrf.mxu0
        %v2581 = vadd.f32 %v2020, %v2580
        %v2582 = vpop.f32.mrf.mxu0
        %2583 = vmatprep.mubr.bf16.mxu0 %v2257
        %2584 = vmatmul.mubr.bf16.gmra.mxu0 %v2256
        %v2585 = vpop.f32.mrf.mxu0
        %v2586 = vadd.f32 %v2025, %v2585
        %v2587 = vpop.f32.mrf.mxu0
        %v2588 = vpop.f32.mrf.mxu0
        %v2589 = vadd.f32 %v2028, %v2588
        %v2590 = vpop.f32.mrf.mxu0
        %2591 = vmatprep.mubr.bf16.mxu0 %v2260
        %2592 = vmatmul.mubr.bf16.gmra.mxu0 %v2259
        %v2593 = vpop.f32.mrf.mxu0
        %v2594 = vadd.f32 %v2033, %v2593
        %v2595 = vpop.f32.mrf.mxu0
        %v2596 = vpop.f32.mrf.mxu0
        %v2597 = vadd.f32 %v2036, %v2596
        %v2598 = vpop.f32.mrf.mxu0
        %2599 = vmatprep.mubr.bf16.mxu0 %v2263
        %2600 = vmatmul.mubr.bf16.gmra.mxu0 %v2262
        %v2601 = vpop.f32.mrf.mxu0
        %v2602 = vadd.f32 %v2041, %v2601
        %v2603 = vpop.f32.mrf.mxu0
        %v2604 = vpop.f32.mrf.mxu0
        %v2605 = vadd.f32 %v2044, %v2604
        %v2606 = vpop.f32.mrf.mxu0
        %2607 = vmatprep.mubr.bf16.mxu0 %v2266
        %2608 = vmatmul.mubr.bf16.gmra.mxu0 %v2265
        %v2609 = vpop.f32.mrf.mxu0
        %v2610 = vadd.f32 %v2049, %v2609
        %v2611 = vpop.f32.mrf.mxu0
        %v2612 = vpop.f32.mrf.mxu0
        %v2613 = vadd.f32 %v2052, %v2612
        %v2614 = vpop.f32.mrf.mxu0
        %2615 = vmatprep.mubr.bf16.mxu0 %v2269
        %2616 = vmatmul.mubr.bf16.gmra.mxu0 %v2268
        %v2617 = vpop.f32.mrf.mxu0
        %v2618 = vadd.f32 %v2057, %v2617
        %v2619 = vpop.f32.mrf.mxu0
        %v2620 = vpop.f32.mrf.mxu0
        %v2621 = vadd.f32 %v2060, %v2620
        %v2622 = vpop.f32.mrf.mxu0
        %2623 = vdwg.mxu0
        %2624 = vmatprep.subr.bf16.mxu0 0
        %2625 = vmatpush1.bf16.msra.mxu0 %v2438
        %2626 = vmatprep.subr.bf16.mxu0 0
        %2627 = vmatpush1.bf16.msra.mxu0 %v2437
        %2628 = vmatprep.subr.bf16.mxu0 0
        %2629 = vmatpush1.bf16.msra.mxu0 %v2436
        %2630 = vmatprep.subr.bf16.mxu0 0
        %2631 = vmatpush1.bf16.msra.mxu0 %v2435
        %2632 = vmatprep.subr.bf16.mxu0 0
        %2633 = vmatpush1.bf16.msra.mxu0 %v2434
        %2634 = vmatprep.subr.bf16.mxu0 0
        %2635 = vmatpush1.bf16.msra.mxu0 %v2433
        %2636 = vmatprep.subr.bf16.mxu0 0
        %2637 = vmatpush1.bf16.msra.mxu0 %v2432
        %2638 = vmatprep.subr.bf16.mxu0 0
        %2639 = vmatpush1.bf16.msra.mxu0 %v2431
        %2640 = vmatprep.subr.bf16.mxu0 0
        %2641 = vmatpush2.bf16.msra.mxu0 0
        %2642 = vmatprep.subr.bf16.mxu0 0
        %2643 = vmatpush2.bf16.msra.mxu0 0
        %2644 = vmatprep.subr.bf16.mxu0 0
        %2645 = vmatpush2.bf16.msra.mxu0 0
        %2646 = vmatprep.subr.bf16.mxu0 0
        %2647 = vmatpush2.bf16.msra.mxu0 0
        %2648 = vmatprep.subr.bf16.mxu0 0
        %2649 = vmatpush2.bf16.msra.mxu0 0
        %2650 = vmatprep.subr.bf16.mxu0 0
        %2651 = vmatpush2.bf16.msra.mxu0 0
        %2652 = vmatprep.subr.bf16.mxu0 0
        %2653 = vmatpush2.bf16.msra.mxu0 0
        %2654 = vmatprep.subr.bf16.mxu0 0
        %2655 = vmatpush2.bf16.msra.mxu0 0
        %2656 = vmatprep.mubr.bf16.mxu0 0
        %2657 = vmatmul.mubr.bf16.gmra.mxu0 %v2225
        %v2658 = vpop.f32.mrf.mxu0
        %v2659 = vadd.f32 %v2498, %v2658
        %v2660 = vpop.f32.mrf.mxu0
        %v2661 = vpop.f32.mrf.mxu0
        %v2662 = vadd.f32 %v2501, %v2661
        %v2663 = vpop.f32.mrf.mxu0
        %2664 = vmatprep.mubr.bf16.mxu0 0
        %2665 = vmatmul.mubr.bf16.gmra.mxu0 %v2228
        %v2666 = vpop.f32.mrf.mxu0
        %v2667 = vadd.f32 %v2506, %v2666
        %v2668 = vpop.f32.mrf.mxu0
        %v2669 = vpop.f32.mrf.mxu0
        %v2670 = vadd.f32 %v2509, %v2669
        %v2671 = vpop.f32.mrf.mxu0
        %2672 = vmatprep.mubr.bf16.mxu0 0
        %2673 = vmatmul.mubr.bf16.gmra.mxu0 %v2231
        %v2674 = vpop.f32.mrf.mxu0
        %v2675 = vadd.f32 %v2514, %v2674
        %v2676 = vpop.f32.mrf.mxu0
        %v2677 = vpop.f32.mrf.mxu0
        %v2678 = vadd.f32 %v2517, %v2677
        %v2679 = vpop.f32.mrf.mxu0
        %2680 = vmatprep.mubr.bf16.mxu0 0
        %2681 = vmatmul.mubr.bf16.gmra.mxu0 %v2234
        %v2682 = vpop.f32.mrf.mxu0
        %v2683 = vadd.f32 %v2522, %v2682
        %v2684 = vpop.f32.mrf.mxu0
        %v2685 = vpop.f32.mrf.mxu0
        %v2686 = vadd.f32 %v2525, %v2685
        %v2687 = vpop.f32.mrf.mxu0
        %2688 = vmatprep.mubr.bf16.mxu0 0
        %2689 = vmatmul.mubr.bf16.gmra.mxu0 %v2237
        %v2690 = vpop.f32.mrf.mxu0
        %v2691 = vadd.f32 %v2530, %v2690
        %v2692 = vpop.f32.mrf.mxu0
        %v2693 = vpop.f32.mrf.mxu0
        %v2694 = vadd.f32 %v2533, %v2693
        %v2695 = vpop.f32.mrf.mxu0
        %2696 = vmatprep.mubr.bf16.mxu0 0
        %2697 = vmatmul.mubr.bf16.gmra.mxu0 %v2240
        %v2698 = vpop.f32.mrf.mxu0
        %v2699 = vadd.f32 %v2538, %v2698
        %v2700 = vpop.f32.mrf.mxu0
        %v2701 = vpop.f32.mrf.mxu0
        %v2702 = vadd.f32 %v2541, %v2701
        %v2703 = vpop.f32.mrf.mxu0
        %2704 = vmatprep.mubr.bf16.mxu0 0
        %2705 = vmatmul.mubr.bf16.gmra.mxu0 %v2243
        %v2706 = vpop.f32.mrf.mxu0
        %v2707 = vadd.f32 %v2546, %v2706
        %v2708 = vpop.f32.mrf.mxu0
        %v2709 = vpop.f32.mrf.mxu0
        %v2710 = vadd.f32 %v2549, %v2709
        %v2711 = vpop.f32.mrf.mxu0
        %2712 = vmatprep.mubr.bf16.mxu0 0
        %2713 = vmatmul.mubr.bf16.gmra.mxu0 %v2246
        %v2714 = vpop.f32.mrf.mxu0
        %v2715 = vadd.f32 %v2554, %v2714
        %v2716 = vpop.f32.mrf.mxu0
        %v2717 = vpop.f32.mrf.mxu0
        %v2718 = vadd.f32 %v2557, %v2717
        %v2719 = vpop.f32.mrf.mxu0
        %2720 = vmatprep.mubr.bf16.mxu0 0
        %2721 = vmatmul.mubr.bf16.gmra.mxu0 %v2249
        %v2722 = vpop.f32.mrf.mxu0
        %v2723 = vadd.f32 %v2562, %v2722
        %v2724 = vpop.f32.mrf.mxu0
        %v2725 = vpop.f32.mrf.mxu0
        %v2726 = vadd.f32 %v2565, %v2725
        %v2727 = vpop.f32.mrf.mxu0
        %2728 = vmatprep.mubr.bf16.mxu0 0
        %2729 = vmatmul.mubr.bf16.gmra.mxu0 %v2252
        %v2730 = vpop.f32.mrf.mxu0
        %v2731 = vadd.f32 %v2570, %v2730
        %v2732 = vpop.f32.mrf.mxu0
        %v2733 = vpop.f32.mrf.mxu0
        %v2734 = vadd.f32 %v2573, %v2733
        %v2735 = vpop.f32.mrf.mxu0
        %2736 = vmatprep.mubr.bf16.mxu0 0
        %2737 = vmatmul.mubr.bf16.gmra.mxu0 %v2255
        %v2738 = vpop.f32.mrf.mxu0
        %v2739 = vadd.f32 %v2578, %v2738
        %v2740 = vpop.f32.mrf.mxu0
        %v2741 = vpop.f32.mrf.mxu0
        %v2742 = vadd.f32 %v2581, %v2741
        %v2743 = vpop.f32.mrf.mxu0
        %2744 = vmatprep.mubr.bf16.mxu0 0
        %2745 = vmatmul.mubr.bf16.gmra.mxu0 %v2258
        %v2746 = vpop.f32.mrf.mxu0
        %v2747 = vadd.f32 %v2586, %v2746
        %v2748 = vpop.f32.mrf.mxu0
        %v2749 = vpop.f32.mrf.mxu0
        %v2750 = vadd.f32 %v2589, %v2749
        %v2751 = vpop.f32.mrf.mxu0
        %2752 = vmatprep.mubr.bf16.mxu0 0
        %2753 = vmatmul.mubr.bf16.gmra.mxu0 %v2261
        %v2754 = vpop.f32.mrf.mxu0
        %v2755 = vadd.f32 %v2594, %v2754
        %v2756 = vpop.f32.mrf.mxu0
        %v2757 = vpop.f32.mrf.mxu0
        %v2758 = vadd.f32 %v2597, %v2757
        %v2759 = vpop.f32.mrf.mxu0
        %2760 = vmatprep.mubr.bf16.mxu0 0
        %2761 = vmatmul.mubr.bf16.gmra.mxu0 %v2264
        %v2762 = vpop.f32.mrf.mxu0
        %v2763 = vadd.f32 %v2602, %v2762
        %v2764 = vpop.f32.mrf.mxu0
        %v2765 = vpop.f32.mrf.mxu0
        %v2766 = vadd.f32 %v2605, %v2765
        %v2767 = vpop.f32.mrf.mxu0
        %2768 = vmatprep.mubr.bf16.mxu0 0
        %2769 = vmatmul.mubr.bf16.gmra.mxu0 %v2267
        %v2770 = vpop.f32.mrf.mxu0
        %v2771 = vadd.f32 %v2610, %v2770
        %v2772 = vpop.f32.mrf.mxu0
        %v2773 = vpop.f32.mrf.mxu0
        %v2774 = vadd.f32 %v2613, %v2773
        %v2775 = vpop.f32.mrf.mxu0
        %2776 = vmatprep.mubr.bf16.mxu0 0
        %2777 = vmatmul.mubr.bf16.gmra.mxu0 %v2270
        %v2778 = vpop.f32.mrf.mxu0
        %v2779 = vadd.f32 %v2618, %v2778
        %v2780 = vpop.f32.mrf.mxu0
        %v2781 = vpop.f32.mrf.mxu0
        %v2782 = vadd.f32 %v2621, %v2781
        %v2783 = vpop.f32.mrf.mxu0
        %2784 = vdwg.mxu0
        %s2785 = scalar_lea.vmem [#allocation2], 48
        %v2786 = vld [vmem:[%s2785] sm:$0xff]
        %v2787 = vld [vmem:[%s2785 + $0x8] sm:$0xf]
        %v2788 = vld [vmem:[%s2785 + $0xc] sm:$0xff]
        %v2789 = vld [vmem:[%s2785 + $0x14] sm:$0xf]
        %v2790 = vld [vmem:[%s2785 + $0x18] sm:$0xff]
        %v2791 = vld [vmem:[%s2785 + $0x20] sm:$0xf]
        %v2792 = vld [vmem:[%s2785 + $0x24] sm:$0xff]
        %v2793 = vld [vmem:[%s2785 + $0x2c] sm:$0xf]
        %v2794 = vld [vmem:[%s2785 + $0x30] sm:$0xff]
        %v2795 = vld [vmem:[%s2785 + $0x38] sm:$0xf]
        %v2796 = vld [vmem:[%s2785 + $0x3c] sm:$0xff]
        %v2797 = vld [vmem:[%s2785 + $0x44] sm:$0xf]
        %v2798 = vld [vmem:[%s2785 + $0x48] sm:$0xff]
        %v2799 = vld [vmem:[%s2785 + $0x50] sm:$0xf]
        %v2800 = vld [vmem:[%s2785 + $0x54] sm:$0xff]
        %v2801 = vld [vmem:[%s2785 + $0x5c] sm:$0xf]
        %v2802 = vld [vmem:[%s2785 + $0x60] sm:$0xff]
        %v2803 = vld [vmem:[%s2785 + $0x68] sm:$0xf]
        %v2804 = vld [vmem:[%s2785 + $0x6c] sm:$0xff]
        %v2805 = vld [vmem:[%s2785 + $0x74] sm:$0xf]
        %v2806 = vld [vmem:[%s2785 + $0x78] sm:$0xff]
        %v2807 = vld [vmem:[%s2785 + $0x80] sm:$0xf]
        %v2808 = vld [vmem:[%s2785 + $0x84] sm:$0xff]
        %v2809 = vld [vmem:[%s2785 + $0x8c] sm:$0xf]
        %v2810 = vld [vmem:[%s2785 + $0x90] sm:$0xff]
        %v2811 = vld [vmem:[%s2785 + $0x98] sm:$0xf]
        %v2812 = vld [vmem:[%s2785 + $0x9c] sm:$0xff]
        %v2813 = vld [vmem:[%s2785 + $0xa4] sm:$0xf]
        %v2814 = vld [vmem:[%s2785 + $0xa8] sm:$0xff]
        %v2815 = vld [vmem:[%s2785 + $0xb0] sm:$0xf]
        %v2816 = vld [vmem:[%s2785 + $0xb4] sm:$0xff]
        %v2817 = vld [vmem:[%s2785 + $0xbc] sm:$0xf]
        %v2818 = vld [vmem:[%s2785 + $0xc0] sm:$0xff]
        %v2819 = vld [vmem:[%s2785 + $0xc8] sm:$0xf]
        %v2820 = vld [vmem:[%s2785 + $0xcc] sm:$0xff]
        %v2821 = vld [vmem:[%s2785 + $0xd4] sm:$0xf]
        %v2822 = vld [vmem:[%s2785 + $0xd8] sm:$0xff]
        %v2823 = vld [vmem:[%s2785 + $0xe0] sm:$0xf]
        %v2824 = vld [vmem:[%s2785 + $0xe4] sm:$0xff]
        %v2825 = vld [vmem:[%s2785 + $0xec] sm:$0xf]
        %v2826 = vld [vmem:[%s2785 + $0xf0] sm:$0xff]
        %v2827 = vld [vmem:[%s2785 + $0xf8] sm:$0xf]
        %v2828 = vld [vmem:[%s2785 + $0xfc] sm:$0xff]
        %v2829 = vld [vmem:[%s2785 + $0x104] sm:$0xf]
        %v2830 = vld [vmem:[%s2785 + $0x108] sm:$0xff]
        %v2831 = vld [vmem:[%s2785 + $0x110] sm:$0xf]
        %v2832 = vld [vmem:[%s2785 + $0x114] sm:$0xff]
        %v2833 = vld [vmem:[%s2785 + $0x11c] sm:$0xf]
        %v2834 = vld [vmem:[%s2785 + $0x120] sm:$0xff]
        %v2835 = vld [vmem:[%s2785 + $0x128] sm:$0xf]
        %v2836 = vld [vmem:[%s2785 + $0x12c] sm:$0xff]
        %v2837 = vld [vmem:[%s2785 + $0x134] sm:$0xf]
        %v2838 = vld [vmem:[%s2785 + $0x138] sm:$0xff]
        %v2839 = vld [vmem:[%s2785 + $0x140] sm:$0xf]
        %v2840 = vld [vmem:[%s2785 + $0x144] sm:$0xff]
        %v2841 = vld [vmem:[%s2785 + $0x14c] sm:$0xf]
        %v2842 = vld [vmem:[%s2785 + $0x150] sm:$0xff]
        %v2843 = vld [vmem:[%s2785 + $0x158] sm:$0xf]
        %v2844 = vld [vmem:[%s2785 + $0x15c] sm:$0xff]
        %v2845 = vld [vmem:[%s2785 + $0x164] sm:$0xf]
        %v2846 = vld [vmem:[%s2785 + $0x168] sm:$0xff]
        %v2847 = vld [vmem:[%s2785 + $0x170] sm:$0xf]
        %v2848 = vld [vmem:[%s2785 + $0x174] sm:$0xff]
        %v2849 = vld [vmem:[%s2785 + $0x17c] sm:$0xf]
        %s2850 = scalar_lea.vmem [#allocation6], 384
        %v2851 = vld [vmem:[%s2850] sm:$0xf]
        %v2852 = vld [vmem:[%s2850 + $0x4] sm:$0xf]
        %v2853 = vld [vmem:[%s2850 + $0x8] sm:$0xf]
        %v2854 = vld [vmem:[%s2850 + $0xc] sm:$0xf]
        %v2855 = vld [vmem:[%s2850 + $0x10] sm:$0xf]
        %v2856 = vld [vmem:[%s2850 + $0x14] sm:$0xf]
        %v2857 = vld [vmem:[%s2850 + $0x18] sm:$0xf]
        %v2858 = vld [vmem:[%s2850 + $0x1c] sm:$0xf]
        %v2859 = vld [vmem:[%s2850 + $0x20] sm:$0xf]
        %v2860 = vld [vmem:[%s2850 + $0x24] sm:$0xf]
        %v2861 = vld [vmem:[%s2850 + $0x28] sm:$0xf]
        %v2862 = vld [vmem:[%s2850 + $0x2c] sm:$0xf]
        %v2863 = vld [vmem:[%s2850 + $0x30] sm:$0xf]
        %v2864 = vld [vmem:[%s2850 + $0x34] sm:$0xf]
        %v2865 = vld [vmem:[%s2850 + $0x38] sm:$0xf]
        %v2866 = vld [vmem:[%s2850 + $0x3c] sm:$0xf]
        %v2867 = vld [vmem:[%s2850 + $0x40] sm:$0xf]
        %v2868 = vld [vmem:[%s2850 + $0x44] sm:$0xf]
        %v2869 = vld [vmem:[%s2850 + $0x48] sm:$0xf]
        %v2870 = vld [vmem:[%s2850 + $0x4c] sm:$0xf]
        %v2871 = vld [vmem:[%s2850 + $0x50] sm:$0xf]
        %v2872 = vld [vmem:[%s2850 + $0x54] sm:$0xf]
        %v2873 = vld [vmem:[%s2850 + $0x58] sm:$0xf]
        %v2874 = vld [vmem:[%s2850 + $0x5c] sm:$0xf]
        %v2875 = vld [vmem:[%s2850 + $0x60] sm:$0xf]
        %v2876 = vld [vmem:[%s2850 + $0x64] sm:$0xf]
        %v2877 = vld [vmem:[%s2850 + $0x68] sm:$0xf]
        %v2878 = vld [vmem:[%s2850 + $0x6c] sm:$0xf]
        %v2879 = vld [vmem:[%s2850 + $0x70] sm:$0xf]
        %v2880 = vld [vmem:[%s2850 + $0x74] sm:$0xf]
        %v2881 = vld [vmem:[%s2850 + $0x78] sm:$0xf]
        %v2882 = vld [vmem:[%s2850 + $0x7c] sm:$0xf]
        %v2883 = vld [vmem:[%s2850 + $0x80] sm:$0xf]
        %v2884 = vld [vmem:[%s2850 + $0x84] sm:$0xf]
        %v2885 = vld [vmem:[%s2850 + $0x88] sm:$0xf]
        %v2886 = vld [vmem:[%s2850 + $0x8c] sm:$0xf]
        %v2887 = vld [vmem:[%s2850 + $0x90] sm:$0xf]
        %v2888 = vld [vmem:[%s2850 + $0x94] sm:$0xf]
        %v2889 = vld [vmem:[%s2850 + $0x98] sm:$0xf]
        %v2890 = vld [vmem:[%s2850 + $0x9c] sm:$0xf]
        %v2891 = vld [vmem:[%s2850 + $0xa0] sm:$0xf]
        %v2892 = vld [vmem:[%s2850 + $0xa4] sm:$0xf]
        %v2893 = vld [vmem:[%s2850 + $0xa8] sm:$0xf]
        %v2894 = vld [vmem:[%s2850 + $0xac] sm:$0xf]
        %v2895 = vld [vmem:[%s2850 + $0xb0] sm:$0xf]
        %v2896 = vld [vmem:[%s2850 + $0xb4] sm:$0xf]
        %v2897 = vld [vmem:[%s2850 + $0xb8] sm:$0xf]
        %v2898 = vld [vmem:[%s2850 + $0xbc] sm:$0xf]
        %v2963 = vunpack.c.l.b16 %v2786
        %v2964 = vunpack.c.h.b16 %v2786
        %v2965 = vunpack.c.l.b16 %v2787
        %v2966 = vunpack.c.l.b16 %v2788
        %v2967 = vunpack.c.h.b16 %v2788
        %v2968 = vunpack.c.l.b16 %v2789
        %v2969 = vunpack.c.l.b16 %v2790
        %v2970 = vunpack.c.h.b16 %v2790
        %v2971 = vunpack.c.l.b16 %v2791
        %v2972 = vunpack.c.l.b16 %v2792
        %v2973 = vunpack.c.h.b16 %v2792
        %v2974 = vunpack.c.l.b16 %v2793
        %v2975 = vunpack.c.l.b16 %v2794
        %v2976 = vunpack.c.h.b16 %v2794
        %v2977 = vunpack.c.l.b16 %v2795
        %v2978 = vunpack.c.l.b16 %v2796
        %v2979 = vunpack.c.h.b16 %v2796
        %v2980 = vunpack.c.l.b16 %v2797
        %v2981 = vunpack.c.l.b16 %v2798
        %v2982 = vunpack.c.h.b16 %v2798
        %v2983 = vunpack.c.l.b16 %v2799
        %v2984 = vunpack.c.l.b16 %v2800
        %v2985 = vunpack.c.h.b16 %v2800
        %v2986 = vunpack.c.l.b16 %v2801
        %v2987 = vunpack.c.l.b16 %v2802
        %v2988 = vunpack.c.h.b16 %v2802
        %v2989 = vunpack.c.l.b16 %v2803
        %v2990 = vunpack.c.l.b16 %v2804
        %v2991 = vunpack.c.h.b16 %v2804
        %v2992 = vunpack.c.l.b16 %v2805
        %v2993 = vunpack.c.l.b16 %v2806
        %v2994 = vunpack.c.h.b16 %v2806
        %v2995 = vunpack.c.l.b16 %v2807
        %v2996 = vunpack.c.l.b16 %v2808
        %v2997 = vunpack.c.h.b16 %v2808
        %v2998 = vunpack.c.l.b16 %v2809
        %v2999 = vunpack.c.l.b16 %v2810
        %v3000 = vunpack.c.h.b16 %v2810
        %v3001 = vunpack.c.l.b16 %v2811
        %v3002 = vunpack.c.l.b16 %v2812
        %v3003 = vunpack.c.h.b16 %v2812
        %v3004 = vunpack.c.l.b16 %v2813
        %v3005 = vunpack.c.l.b16 %v2814
        %v3006 = vunpack.c.h.b16 %v2814
        %v3007 = vunpack.c.l.b16 %v2815
        %v3008 = vunpack.c.l.b16 %v2816
        %v3009 = vunpack.c.h.b16 %v2816
        %v3010 = vunpack.c.l.b16 %v2817
        %v3011 = vunpack.c.l.b16 %v2818
        %v3012 = vunpack.c.h.b16 %v2818
        %v3013 = vunpack.c.l.b16 %v2819
        %v3014 = vunpack.c.l.b16 %v2820
        %v3015 = vunpack.c.h.b16 %v2820
        %v3016 = vunpack.c.l.b16 %v2821
        %v3017 = vunpack.c.l.b16 %v2822
        %v3018 = vunpack.c.h.b16 %v2822
        %v3019 = vunpack.c.l.b16 %v2823
        %v3020 = vunpack.c.l.b16 %v2824
        %v3021 = vunpack.c.h.b16 %v2824
        %v3022 = vunpack.c.l.b16 %v2825
        %v3023 = vunpack.c.l.b16 %v2826
        %v3024 = vunpack.c.h.b16 %v2826
        %v3025 = vunpack.c.l.b16 %v2827
        %v3026 = vunpack.c.l.b16 %v2828
        %v3027 = vunpack.c.h.b16 %v2828
        %v3028 = vunpack.c.l.b16 %v2829
        %v3029 = vunpack.c.l.b16 %v2830
        %v3030 = vunpack.c.h.b16 %v2830
        %v3031 = vunpack.c.l.b16 %v2831
        %v3032 = vunpack.c.l.b16 %v2832
        %v3033 = vunpack.c.h.b16 %v2832
        %v3034 = vunpack.c.l.b16 %v2833
        %v3035 = vunpack.c.l.b16 %v2834
        %v3036 = vunpack.c.h.b16 %v2834
        %v3037 = vunpack.c.l.b16 %v2835
        %v3038 = vunpack.c.l.b16 %v2836
        %v3039 = vunpack.c.h.b16 %v2836
        %v3040 = vunpack.c.l.b16 %v2837
        %v3041 = vunpack.c.l.b16 %v2838
        %v3042 = vunpack.c.h.b16 %v2838
        %v3043 = vunpack.c.l.b16 %v2839
        %v3044 = vunpack.c.l.b16 %v2840
        %v3045 = vunpack.c.h.b16 %v2840
        %v3046 = vunpack.c.l.b16 %v2841
        %v3047 = vunpack.c.l.b16 %v2842
        %v3048 = vunpack.c.h.b16 %v2842
        %v3049 = vunpack.c.l.b16 %v2843
        %v3050 = vunpack.c.l.b16 %v2844
        %v3051 = vunpack.c.h.b16 %v2844
        %v3052 = vunpack.c.l.b16 %v2845
        %v3053 = vunpack.c.l.b16 %v2846
        %v3054 = vunpack.c.h.b16 %v2846
        %v3055 = vunpack.c.l.b16 %v2847
        %v3056 = vunpack.c.l.b16 %v2848
        %v3057 = vunpack.c.h.b16 %v2848
        %v3058 = vunpack.c.l.b16 %v2849
        %v3059 = vpack.c.b16 %v2966, %v2963
        %v3060 = vpack.c.b16 %v2967, %v2964
        %v3061 = vpack.c.b16 %v2968, %v2965
        %v3062 = vpack.c.b16 %v2972, %v2969
        %v3063 = vpack.c.b16 %v2973, %v2970
        %v3064 = vpack.c.b16 %v2974, %v2971
        %v3065 = vpack.c.b16 %v2978, %v2975
        %v3066 = vpack.c.b16 %v2979, %v2976
        %v3067 = vpack.c.b16 %v2980, %v2977
        %v3068 = vpack.c.b16 %v2984, %v2981
        %v3069 = vpack.c.b16 %v2985, %v2982
        %v3070 = vpack.c.b16 %v2986, %v2983
        %v3071 = vpack.c.b16 %v2990, %v2987
        %v3072 = vpack.c.b16 %v2991, %v2988
        %v3073 = vpack.c.b16 %v2992, %v2989
        %v3074 = vpack.c.b16 %v2996, %v2993
        %v3075 = vpack.c.b16 %v2997, %v2994
        %v3076 = vpack.c.b16 %v2998, %v2995
        %v3077 = vpack.c.b16 %v3002, %v2999
        %v3078 = vpack.c.b16 %v3003, %v3000
        %v3079 = vpack.c.b16 %v3004, %v3001
        %v3080 = vpack.c.b16 %v3008, %v3005
        %v3081 = vpack.c.b16 %v3009, %v3006
        %v3082 = vpack.c.b16 %v3010, %v3007
        %v3083 = vpack.c.b16 %v3014, %v3011
        %v3084 = vpack.c.b16 %v3015, %v3012
        %v3085 = vpack.c.b16 %v3016, %v3013
        %v3086 = vpack.c.b16 %v3020, %v3017
        %v3087 = vpack.c.b16 %v3021, %v3018
        %v3088 = vpack.c.b16 %v3022, %v3019
        %v3089 = vpack.c.b16 %v3026, %v3023
        %v3090 = vpack.c.b16 %v3027, %v3024
        %v3091 = vpack.c.b16 %v3028, %v3025
        %v3092 = vpack.c.b16 %v3032, %v3029
        %v3093 = vpack.c.b16 %v3033, %v3030
        %v3094 = vpack.c.b16 %v3034, %v3031
        %v3095 = vpack.c.b16 %v3038, %v3035
        %v3096 = vpack.c.b16 %v3039, %v3036
        %v3097 = vpack.c.b16 %v3040, %v3037
        %v3098 = vpack.c.b16 %v3044, %v3041
        %v3099 = vpack.c.b16 %v3045, %v3042
        %v3100 = vpack.c.b16 %v3046, %v3043
        %v3101 = vpack.c.b16 %v3050, %v3047
        %v3102 = vpack.c.b16 %v3051, %v3048
        %v3103 = vpack.c.b16 %v3052, %v3049
        %v3104 = vpack.c.b16 %v3056, %v3053
        %v3105 = vpack.c.b16 %v3057, %v3054
        %v3106 = vpack.c.b16 %v3058, %v3055
        %v3203 = vunpack.c.l.b16 %v2851
        %v3204 = vunpack.c.l.b16 %v2852
        %v3205 = vunpack.c.l.b16 %v2853
        %v3206 = vunpack.c.l.b16 %v2854
        %v3207 = vunpack.c.l.b16 %v2855
        %v3208 = vunpack.c.l.b16 %v2856
        %v3209 = vunpack.c.l.b16 %v2857
        %v3210 = vunpack.c.l.b16 %v2858
        %v3211 = vunpack.c.l.b16 %v2859
        %v3212 = vunpack.c.l.b16 %v2860
        %v3213 = vunpack.c.l.b16 %v2861
        %v3214 = vunpack.c.l.b16 %v2862
        %v3215 = vunpack.c.l.b16 %v2863
        %v3216 = vunpack.c.l.b16 %v2864
        %v3217 = vunpack.c.l.b16 %v2865
        %v3218 = vunpack.c.l.b16 %v2866
        %v3219 = vunpack.c.l.b16 %v2867
        %v3220 = vunpack.c.l.b16 %v2868
        %v3221 = vunpack.c.l.b16 %v2869
        %v3222 = vunpack.c.l.b16 %v2870
        %v3223 = vunpack.c.l.b16 %v2871
        %v3224 = vunpack.c.l.b16 %v2872
        %v3225 = vunpack.c.l.b16 %v2873
        %v3226 = vunpack.c.l.b16 %v2874
        %v3227 = vunpack.c.l.b16 %v2875
        %v3228 = vunpack.c.l.b16 %v2876
        %v3229 = vunpack.c.l.b16 %v2877
        %v3230 = vunpack.c.l.b16 %v2878
        %v3231 = vunpack.c.l.b16 %v2879
        %v3232 = vunpack.c.l.b16 %v2880
        %v3233 = vunpack.c.l.b16 %v2881
        %v3234 = vunpack.c.l.b16 %v2882
        %v3235 = vunpack.c.l.b16 %v2883
        %v3236 = vunpack.c.l.b16 %v2884
        %v3237 = vunpack.c.l.b16 %v2885
        %v3238 = vunpack.c.l.b16 %v2886
        %v3239 = vunpack.c.l.b16 %v2887
        %v3240 = vunpack.c.l.b16 %v2888
        %v3241 = vunpack.c.l.b16 %v2889
        %v3242 = vunpack.c.l.b16 %v2890
        %v3243 = vunpack.c.l.b16 %v2891
        %v3244 = vunpack.c.l.b16 %v2892
        %v3245 = vunpack.c.l.b16 %v2893
        %v3246 = vunpack.c.l.b16 %v2894
        %v3247 = vunpack.c.l.b16 %v2895
        %v3248 = vunpack.c.l.b16 %v2896
        %v3249 = vunpack.c.l.b16 %v2897
        %v3250 = vunpack.c.l.b16 %v2898
        %v3251 = vpack.c.b16 %v3204, %v3203
        %v3252 = vpack.c.b16 %v3206, %v3205
        %v3253 = vpack.c.b16 %v3208, %v3207
        %v3254 = vpack.c.b16 %v3210, %v3209
        %v3255 = vpack.c.b16 %v3212, %v3211
        %v3256 = vpack.c.b16 %v3214, %v3213
        %v3257 = vpack.c.b16 %v3216, %v3215
        %v3258 = vpack.c.b16 %v3218, %v3217
        %v3259 = vpack.c.b16 %v3220, %v3219
        %v3260 = vpack.c.b16 %v3222, %v3221
        %v3261 = vpack.c.b16 %v3224, %v3223
        %v3262 = vpack.c.b16 %v3226, %v3225
        %v3263 = vpack.c.b16 %v3228, %v3227
        %v3264 = vpack.c.b16 %v3230, %v3229
        %v3265 = vpack.c.b16 %v3232, %v3231
        %v3266 = vpack.c.b16 %v3234, %v3233
        %v3267 = vpack.c.b16 %v3236, %v3235
        %v3268 = vpack.c.b16 %v3238, %v3237
        %v3269 = vpack.c.b16 %v3240, %v3239
        %v3270 = vpack.c.b16 %v3242, %v3241
        %v3271 = vpack.c.b16 %v3244, %v3243
        %v3272 = vpack.c.b16 %v3246, %v3245
        %v3273 = vpack.c.b16 %v3248, %v3247
        %v3274 = vpack.c.b16 %v3250, %v3249
        %3299 = vmatprep.subr.bf16.mxu0 0
        %3300 = vmatpush1.bf16.msra.mxu0 %v3258
        %3301 = vmatprep.subr.bf16.mxu0 0
        %3302 = vmatpush1.bf16.msra.mxu0 %v3257
        %3303 = vmatprep.subr.bf16.mxu0 0
        %3304 = vmatpush1.bf16.msra.mxu0 %v3256
        %3305 = vmatprep.subr.bf16.mxu0 0
        %3306 = vmatpush1.bf16.msra.mxu0 %v3255
        %3307 = vmatprep.subr.bf16.mxu0 0
        %3308 = vmatpush1.bf16.msra.mxu0 %v3254
        %3309 = vmatprep.subr.bf16.mxu0 0
        %3310 = vmatpush1.bf16.msra.mxu0 %v3253
        %3311 = vmatprep.subr.bf16.mxu0 0
        %3312 = vmatpush1.bf16.msra.mxu0 %v3252
        %3313 = vmatprep.subr.bf16.mxu0 0
        %3314 = vmatpush1.bf16.msra.mxu0 %v3251
        %3315 = vmatprep.subr.bf16.mxu0 0
        %3316 = vmatpush2.bf16.msra.mxu0 %v3266
        %3317 = vmatprep.subr.bf16.mxu0 0
        %3318 = vmatpush2.bf16.msra.mxu0 %v3265
        %3319 = vmatprep.subr.bf16.mxu0 0
        %3320 = vmatpush2.bf16.msra.mxu0 %v3264
        %3321 = vmatprep.subr.bf16.mxu0 0
        %3322 = vmatpush2.bf16.msra.mxu0 %v3263
        %3323 = vmatprep.subr.bf16.mxu0 0
        %3324 = vmatpush2.bf16.msra.mxu0 %v3262
        %3325 = vmatprep.subr.bf16.mxu0 0
        %3326 = vmatpush2.bf16.msra.mxu0 %v3261
        %3327 = vmatprep.subr.bf16.mxu0 0
        %3328 = vmatpush2.bf16.msra.mxu0 %v3260
        %3329 = vmatprep.subr.bf16.mxu0 0
        %3330 = vmatpush2.bf16.msra.mxu0 %v3259
        %3331 = vmatprep.mubr.bf16.mxu0 %v3060
        %3332 = vmatmul.mubr.bf16.gmra.mxu0 %v3059
        %v3333 = vpop.f32.mrf.mxu0
        %v3334 = vadd.f32 0.0, %v3333
        %v3335 = vpop.f32.mrf.mxu0
        %v3336 = vpop.f32.mrf.mxu0
        %v3337 = vadd.f32 0.0, %v3336
        %v3338 = vpop.f32.mrf.mxu0
        %3339 = vmatprep.mubr.bf16.mxu0 %v3063
        %3340 = vmatmul.mubr.bf16.gmra.mxu0 %v3062
        %v3341 = vpop.f32.mrf.mxu0
        %v3342 = vadd.f32 0.0, %v3341
        %v3343 = vpop.f32.mrf.mxu0
        %v3344 = vpop.f32.mrf.mxu0
        %v3345 = vadd.f32 0.0, %v3344
        %v3346 = vpop.f32.mrf.mxu0
        %3347 = vmatprep.mubr.bf16.mxu0 %v3066
        %3348 = vmatmul.mubr.bf16.gmra.mxu0 %v3065
        %v3349 = vpop.f32.mrf.mxu0
        %v3350 = vadd.f32 0.0, %v3349
        %v3351 = vpop.f32.mrf.mxu0
        %v3352 = vpop.f32.mrf.mxu0
        %v3353 = vadd.f32 0.0, %v3352
        %v3354 = vpop.f32.mrf.mxu0
        %3355 = vmatprep.mubr.bf16.mxu0 %v3069
        %3356 = vmatmul.mubr.bf16.gmra.mxu0 %v3068
        %v3357 = vpop.f32.mrf.mxu0
        %v3358 = vadd.f32 0.0, %v3357
        %v3359 = vpop.f32.mrf.mxu0
        %v3360 = vpop.f32.mrf.mxu0
        %v3361 = vadd.f32 0.0, %v3360
        %v3362 = vpop.f32.mrf.mxu0
        %3363 = vmatprep.mubr.bf16.mxu0 %v3072
        %3364 = vmatmul.mubr.bf16.gmra.mxu0 %v3071
        %v3365 = vpop.f32.mrf.mxu0
        %v3366 = vadd.f32 0.0, %v3365
        %v3367 = vpop.f32.mrf.mxu0
        %v3368 = vpop.f32.mrf.mxu0
        %v3369 = vadd.f32 0.0, %v3368
        %v3370 = vpop.f32.mrf.mxu0
        %3371 = vmatprep.mubr.bf16.mxu0 %v3075
        %3372 = vmatmul.mubr.bf16.gmra.mxu0 %v3074
        %v3373 = vpop.f32.mrf.mxu0
        %v3374 = vadd.f32 0.0, %v3373
        %v3375 = vpop.f32.mrf.mxu0
        %v3376 = vpop.f32.mrf.mxu0
        %v3377 = vadd.f32 0.0, %v3376
        %v3378 = vpop.f32.mrf.mxu0
        %3379 = vmatprep.mubr.bf16.mxu0 %v3078
        %3380 = vmatmul.mubr.bf16.gmra.mxu0 %v3077
        %v3381 = vpop.f32.mrf.mxu0
        %v3382 = vadd.f32 0.0, %v3381
        %v3383 = vpop.f32.mrf.mxu0
        %v3384 = vpop.f32.mrf.mxu0
        %v3385 = vadd.f32 0.0, %v3384
        %v3386 = vpop.f32.mrf.mxu0
        %3387 = vmatprep.mubr.bf16.mxu0 %v3081
        %3388 = vmatmul.mubr.bf16.gmra.mxu0 %v3080
        %v3389 = vpop.f32.mrf.mxu0
        %v3390 = vadd.f32 0.0, %v3389
        %v3391 = vpop.f32.mrf.mxu0
        %v3392 = vpop.f32.mrf.mxu0
        %v3393 = vadd.f32 0.0, %v3392
        %v3394 = vpop.f32.mrf.mxu0
        %3395 = vmatprep.mubr.bf16.mxu0 %v3084
        %3396 = vmatmul.mubr.bf16.gmra.mxu0 %v3083
        %v3397 = vpop.f32.mrf.mxu0
        %v3398 = vadd.f32 0.0, %v3397
        %v3399 = vpop.f32.mrf.mxu0
        %v3400 = vpop.f32.mrf.mxu0
        %v3401 = vadd.f32 0.0, %v3400
        %v3402 = vpop.f32.mrf.mxu0
        %3403 = vmatprep.mubr.bf16.mxu0 %v3087
        %3404 = vmatmul.mubr.bf16.gmra.mxu0 %v3086
        %v3405 = vpop.f32.mrf.mxu0
        %v3406 = vadd.f32 0.0, %v3405
        %v3407 = vpop.f32.mrf.mxu0
        %v3408 = vpop.f32.mrf.mxu0
        %v3409 = vadd.f32 0.0, %v3408
        %v3410 = vpop.f32.mrf.mxu0
        %3411 = vmatprep.mubr.bf16.mxu0 %v3090
        %3412 = vmatmul.mubr.bf16.gmra.mxu0 %v3089
        %v3413 = vpop.f32.mrf.mxu0
        %v3414 = vadd.f32 0.0, %v3413
        %v3415 = vpop.f32.mrf.mxu0
        %v3416 = vpop.f32.mrf.mxu0
        %v3417 = vadd.f32 0.0, %v3416
        %v3418 = vpop.f32.mrf.mxu0
        %3419 = vmatprep.mubr.bf16.mxu0 %v3093
        %3420 = vmatmul.mubr.bf16.gmra.mxu0 %v3092
        %v3421 = vpop.f32.mrf.mxu0
        %v3422 = vadd.f32 0.0, %v3421
        %v3423 = vpop.f32.mrf.mxu0
        %v3424 = vpop.f32.mrf.mxu0
        %v3425 = vadd.f32 0.0, %v3424
        %v3426 = vpop.f32.mrf.mxu0
        %3427 = vmatprep.mubr.bf16.mxu0 %v3096
        %3428 = vmatmul.mubr.bf16.gmra.mxu0 %v3095
        %v3429 = vpop.f32.mrf.mxu0
        %v3430 = vadd.f32 0.0, %v3429
        %v3431 = vpop.f32.mrf.mxu0
        %v3432 = vpop.f32.mrf.mxu0
        %v3433 = vadd.f32 0.0, %v3432
        %v3434 = vpop.f32.mrf.mxu0
        %3435 = vmatprep.mubr.bf16.mxu0 %v3099
        %3436 = vmatmul.mubr.bf16.gmra.mxu0 %v3098
        %v3437 = vpop.f32.mrf.mxu0
        %v3438 = vadd.f32 0.0, %v3437
        %v3439 = vpop.f32.mrf.mxu0
        %v3440 = vpop.f32.mrf.mxu0
        %v3441 = vadd.f32 0.0, %v3440
        %v3442 = vpop.f32.mrf.mxu0
        %3443 = vmatprep.mubr.bf16.mxu0 %v3102
        %3444 = vmatmul.mubr.bf16.gmra.mxu0 %v3101
        %v3445 = vpop.f32.mrf.mxu0
        %v3446 = vadd.f32 0.0, %v3445
        %v3447 = vpop.f32.mrf.mxu0
        %v3448 = vpop.f32.mrf.mxu0
        %v3449 = vadd.f32 0.0, %v3448
        %v3450 = vpop.f32.mrf.mxu0
        %3451 = vmatprep.mubr.bf16.mxu0 %v3105
        %3452 = vmatmul.mubr.bf16.gmra.mxu0 %v3104
        %v3453 = vpop.f32.mrf.mxu0
        %v3454 = vadd.f32 0.0, %v3453
        %v3455 = vpop.f32.mrf.mxu0
        %v3456 = vpop.f32.mrf.mxu0
        %v3457 = vadd.f32 0.0, %v3456
        %v3458 = vpop.f32.mrf.mxu0
        %3459 = vdwg.mxu0
        %3460 = vmatprep.subr.bf16.mxu0 0
        %3461 = vmatpush1.bf16.msra.mxu0 %v3274
        %3462 = vmatprep.subr.bf16.mxu0 0
        %3463 = vmatpush1.bf16.msra.mxu0 %v3273
        %3464 = vmatprep.subr.bf16.mxu0 0
        %3465 = vmatpush1.bf16.msra.mxu0 %v3272
        %3466 = vmatprep.subr.bf16.mxu0 0
        %3467 = vmatpush1.bf16.msra.mxu0 %v3271
        %3468 = vmatprep.subr.bf16.mxu0 0
        %3469 = vmatpush1.bf16.msra.mxu0 %v3270
        %3470 = vmatprep.subr.bf16.mxu0 0
        %3471 = vmatpush1.bf16.msra.mxu0 %v3269
        %3472 = vmatprep.subr.bf16.mxu0 0
        %3473 = vmatpush1.bf16.msra.mxu0 %v3268
        %3474 = vmatprep.subr.bf16.mxu0 0
        %3475 = vmatpush1.bf16.msra.mxu0 %v3267
        %3476 = vmatprep.subr.bf16.mxu0 0
        %3477 = vmatpush2.bf16.msra.mxu0 0
        %3478 = vmatprep.subr.bf16.mxu0 0
        %3479 = vmatpush2.bf16.msra.mxu0 0
        %3480 = vmatprep.subr.bf16.mxu0 0
        %3481 = vmatpush2.bf16.msra.mxu0 0
        %3482 = vmatprep.subr.bf16.mxu0 0
        %3483 = vmatpush2.bf16.msra.mxu0 0
        %3484 = vmatprep.subr.bf16.mxu0 0
        %3485 = vmatpush2.bf16.msra.mxu0 0
        %3486 = vmatprep.subr.bf16.mxu0 0
        %3487 = vmatpush2.bf16.msra.mxu0 0
        %3488 = vmatprep.subr.bf16.mxu0 0
        %3489 = vmatpush2.bf16.msra.mxu0 0
        %3490 = vmatprep.subr.bf16.mxu0 0
        %3491 = vmatpush2.bf16.msra.mxu0 0
        %3492 = vmatprep.mubr.bf16.mxu0 0
        %3493 = vmatmul.mubr.bf16.gmra.mxu0 %v3061
        %v3494 = vpop.f32.mrf.mxu0
        %v3495 = vadd.f32 %v3334, %v3494
        %v3496 = vpop.f32.mrf.mxu0
        %v3497 = vpop.f32.mrf.mxu0
        %v3498 = vadd.f32 %v3337, %v3497
        %v3499 = vpop.f32.mrf.mxu0
        %3500 = vmatprep.mubr.bf16.mxu0 0
        %3501 = vmatmul.mubr.bf16.gmra.mxu0 %v3064
        %v3502 = vpop.f32.mrf.mxu0
        %v3503 = vadd.f32 %v3342, %v3502
        %v3504 = vpop.f32.mrf.mxu0
        %v3505 = vpop.f32.mrf.mxu0
        %v3506 = vadd.f32 %v3345, %v3505
        %v3507 = vpop.f32.mrf.mxu0
        %3508 = vmatprep.mubr.bf16.mxu0 0
        %3509 = vmatmul.mubr.bf16.gmra.mxu0 %v3067
        %v3510 = vpop.f32.mrf.mxu0
        %v3511 = vadd.f32 %v3350, %v3510
        %v3512 = vpop.f32.mrf.mxu0
        %v3513 = vpop.f32.mrf.mxu0
        %v3514 = vadd.f32 %v3353, %v3513
        %v3515 = vpop.f32.mrf.mxu0
        %3516 = vmatprep.mubr.bf16.mxu0 0
        %3517 = vmatmul.mubr.bf16.gmra.mxu0 %v3070
        %v3518 = vpop.f32.mrf.mxu0
        %v3519 = vadd.f32 %v3358, %v3518
        %v3520 = vpop.f32.mrf.mxu0
        %v3521 = vpop.f32.mrf.mxu0
        %v3522 = vadd.f32 %v3361, %v3521
        %v3523 = vpop.f32.mrf.mxu0
        %3524 = vmatprep.mubr.bf16.mxu0 0
        %3525 = vmatmul.mubr.bf16.gmra.mxu0 %v3073
        %v3526 = vpop.f32.mrf.mxu0
        %v3527 = vadd.f32 %v3366, %v3526
        %v3528 = vpop.f32.mrf.mxu0
        %v3529 = vpop.f32.mrf.mxu0
        %v3530 = vadd.f32 %v3369, %v3529
        %v3531 = vpop.f32.mrf.mxu0
        %3532 = vmatprep.mubr.bf16.mxu0 0
        %3533 = vmatmul.mubr.bf16.gmra.mxu0 %v3076
        %v3534 = vpop.f32.mrf.mxu0
        %v3535 = vadd.f32 %v3374, %v3534
        %v3536 = vpop.f32.mrf.mxu0
        %v3537 = vpop.f32.mrf.mxu0
        %v3538 = vadd.f32 %v3377, %v3537
        %v3539 = vpop.f32.mrf.mxu0
        %3540 = vmatprep.mubr.bf16.mxu0 0
        %3541 = vmatmul.mubr.bf16.gmra.mxu0 %v3079
        %v3542 = vpop.f32.mrf.mxu0
        %v3543 = vadd.f32 %v3382, %v3542
        %v3544 = vpop.f32.mrf.mxu0
        %v3545 = vpop.f32.mrf.mxu0
        %v3546 = vadd.f32 %v3385, %v3545
        %v3547 = vpop.f32.mrf.mxu0
        %3548 = vmatprep.mubr.bf16.mxu0 0
        %3549 = vmatmul.mubr.bf16.gmra.mxu0 %v3082
        %v3550 = vpop.f32.mrf.mxu0
        %v3551 = vadd.f32 %v3390, %v3550
        %v3552 = vpop.f32.mrf.mxu0
        %v3553 = vpop.f32.mrf.mxu0
        %v3554 = vadd.f32 %v3393, %v3553
        %v3555 = vpop.f32.mrf.mxu0
        %3556 = vmatprep.mubr.bf16.mxu0 0
        %3557 = vmatmul.mubr.bf16.gmra.mxu0 %v3085
        %v3558 = vpop.f32.mrf.mxu0
        %v3559 = vadd.f32 %v3398, %v3558
        %v3560 = vpop.f32.mrf.mxu0
        %v3561 = vpop.f32.mrf.mxu0
        %v3562 = vadd.f32 %v3401, %v3561
        %v3563 = vpop.f32.mrf.mxu0
        %3564 = vmatprep.mubr.bf16.mxu0 0
        %3565 = vmatmul.mubr.bf16.gmra.mxu0 %v3088
        %v3566 = vpop.f32.mrf.mxu0
        %v3567 = vadd.f32 %v3406, %v3566
        %v3568 = vpop.f32.mrf.mxu0
        %v3569 = vpop.f32.mrf.mxu0
        %v3570 = vadd.f32 %v3409, %v3569
        %v3571 = vpop.f32.mrf.mxu0
        %3572 = vmatprep.mubr.bf16.mxu0 0
        %3573 = vmatmul.mubr.bf16.gmra.mxu0 %v3091
        %v3574 = vpop.f32.mrf.mxu0
        %v3575 = vadd.f32 %v3414, %v3574
        %v3576 = vpop.f32.mrf.mxu0
        %v3577 = vpop.f32.mrf.mxu0
        %v3578 = vadd.f32 %v3417, %v3577
        %v3579 = vpop.f32.mrf.mxu0
        %3580 = vmatprep.mubr.bf16.mxu0 0
        %3581 = vmatmul.mubr.bf16.gmra.mxu0 %v3094
        %v3582 = vpop.f32.mrf.mxu0
        %v3583 = vadd.f32 %v3422, %v3582
        %v3584 = vpop.f32.mrf.mxu0
        %v3585 = vpop.f32.mrf.mxu0
        %v3586 = vadd.f32 %v3425, %v3585
        %v3587 = vpop.f32.mrf.mxu0
        %3588 = vmatprep.mubr.bf16.mxu0 0
        %3589 = vmatmul.mubr.bf16.gmra.mxu0 %v3097
        %v3590 = vpop.f32.mrf.mxu0
        %v3591 = vadd.f32 %v3430, %v3590
        %v3592 = vpop.f32.mrf.mxu0
        %v3593 = vpop.f32.mrf.mxu0
        %v3594 = vadd.f32 %v3433, %v3593
        %v3595 = vpop.f32.mrf.mxu0
        %3596 = vmatprep.mubr.bf16.mxu0 0
        %3597 = vmatmul.mubr.bf16.gmra.mxu0 %v3100
        %v3598 = vpop.f32.mrf.mxu0
        %v3599 = vadd.f32 %v3438, %v3598
        %v3600 = vpop.f32.mrf.mxu0
        %v3601 = vpop.f32.mrf.mxu0
        %v3602 = vadd.f32 %v3441, %v3601
        %v3603 = vpop.f32.mrf.mxu0
        %3604 = vmatprep.mubr.bf16.mxu0 0
        %3605 = vmatmul.mubr.bf16.gmra.mxu0 %v3103
        %v3606 = vpop.f32.mrf.mxu0
        %v3607 = vadd.f32 %v3446, %v3606
        %v3608 = vpop.f32.mrf.mxu0
        %v3609 = vpop.f32.mrf.mxu0
        %v3610 = vadd.f32 %v3449, %v3609
        %v3611 = vpop.f32.mrf.mxu0
        %3612 = vmatprep.mubr.bf16.mxu0 0
        %3613 = vmatmul.mubr.bf16.gmra.mxu0 %v3106
        %v3614 = vpop.f32.mrf.mxu0
        %v3615 = vadd.f32 %v3454, %v3614
        %v3616 = vpop.f32.mrf.mxu0
        %v3617 = vpop.f32.mrf.mxu0
        %v3618 = vadd.f32 %v3457, %v3617
        %v3619 = vpop.f32.mrf.mxu0
        %3620 = vdwg.mxu0
        %v3621 = vadd.f32 %v2659, %v3495
        %v3622 = vadd.f32 %v2662, %v3498
        %v3623 = vadd.f32 %v2667, %v3503
        %v3624 = vadd.f32 %v2670, %v3506
        %v3625 = vadd.f32 %v2675, %v3511
        %v3626 = vadd.f32 %v2678, %v3514
        %v3627 = vadd.f32 %v2683, %v3519
        %v3628 = vadd.f32 %v2686, %v3522
        %v3629 = vadd.f32 %v2691, %v3527
        %v3630 = vadd.f32 %v2694, %v3530
        %v3631 = vadd.f32 %v2699, %v3535
        %v3632 = vadd.f32 %v2702, %v3538
        %v3633 = vadd.f32 %v2707, %v3543
        %v3634 = vadd.f32 %v2710, %v3546
        %v3635 = vadd.f32 %v2715, %v3551
        %v3636 = vadd.f32 %v2718, %v3554
        %v3637 = vadd.f32 %v2723, %v3559
        %v3638 = vadd.f32 %v2726, %v3562
        %v3639 = vadd.f32 %v2731, %v3567
        %v3640 = vadd.f32 %v2734, %v3570
        %v3641 = vadd.f32 %v2739, %v3575
        %v3642 = vadd.f32 %v2742, %v3578
        %v3643 = vadd.f32 %v2747, %v3583
        %v3644 = vadd.f32 %v2750, %v3586
        %v3645 = vadd.f32 %v2755, %v3591
        %v3646 = vadd.f32 %v2758, %v3594
        %v3647 = vadd.f32 %v2763, %v3599
        %v3648 = vadd.f32 %v2766, %v3602
        %v3649 = vadd.f32 %v2771, %v3607
        %v3650 = vadd.f32 %v2774, %v3610
        %v3651 = vadd.f32 %v2779, %v3615
        %v3652 = vadd.f32 %v2782, %v3618
        %v3653 = vld [vmem:[%s2] sm:$0x1]
        %v3655 = vlaneseq
        %v3656 = vshrl.u32 %v3655, 7
        %v3657 = vsub.s32 0, %v3656
        %v3658 = vrot.slane %v3653, %v3657
        %v3660 = vmul.f32 %v3621, %v3658
        %v3661 = vmul.f32 %v3622, %v3658
        %v3662 = vmul.f32 %v3623, %v3658
        %v3663 = vmul.f32 %v3624, %v3658
        %v3664 = vmul.f32 %v3625, %v3658
        %v3665 = vmul.f32 %v3626, %v3658
        %v3666 = vmul.f32 %v3627, %v3658
        %v3667 = vmul.f32 %v3628, %v3658
        %v3668 = vmul.f32 %v3629, %v3658
        %v3669 = vmul.f32 %v3630, %v3658
        %v3670 = vmul.f32 %v3631, %v3658
        %v3671 = vmul.f32 %v3632, %v3658
        %v3672 = vmul.f32 %v3633, %v3658
        %v3673 = vmul.f32 %v3634, %v3658
        %v3674 = vmul.f32 %v3635, %v3658
        %v3675 = vmul.f32 %v3636, %v3658
        %v3676 = vmul.f32 %v3637, %v3658
        %v3677 = vmul.f32 %v3638, %v3658
        %v3678 = vmul.f32 %v3639, %v3658
        %v3679 = vmul.f32 %v3640, %v3658
        %v3680 = vmul.f32 %v3641, %v3658
        %v3681 = vmul.f32 %v3642, %v3658
        %v3682 = vmul.f32 %v3643, %v3658
        %v3683 = vmul.f32 %v3644, %v3658
        %v3684 = vmul.f32 %v3645, %v3658
        %v3685 = vmul.f32 %v3646, %v3658
        %v3686 = vmul.f32 %v3647, %v3658
        %v3687 = vmul.f32 %v3648, %v3658
        %v3688 = vmul.f32 %v3649, %v3658
        %v3689 = vmul.f32 %v3650, %v3658
        %v3690 = vmul.f32 %v3651, %v3658
        %v3691 = vmul.f32 %v3652, %v3658
        %v3692 = vld [vmem:[%s3] sm:$0x1]
        %v3694 = vlaneseq
        %v3695 = vshrl.u32 %v3694, 7
        %v3696 = vsub.s32 0, %v3695
        %v3697 = vrot.slane %v3692, %v3696
        %v3699 = vadd.f32 %v3660, %v3697
        %v3700 = vadd.f32 %v3661, %v3697
        %v3701 = vadd.f32 %v3662, %v3697
        %v3702 = vadd.f32 %v3663, %v3697
        %v3703 = vadd.f32 %v3664, %v3697
        %v3704 = vadd.f32 %v3665, %v3697
        %v3705 = vadd.f32 %v3666, %v3697
        %v3706 = vadd.f32 %v3667, %v3697
        %v3707 = vadd.f32 %v3668, %v3697
        %v3708 = vadd.f32 %v3669, %v3697
        %v3709 = vadd.f32 %v3670, %v3697
        %v3710 = vadd.f32 %v3671, %v3697
        %v3711 = vadd.f32 %v3672, %v3697
        %v3712 = vadd.f32 %v3673, %v3697
        %v3713 = vadd.f32 %v3674, %v3697
        %v3714 = vadd.f32 %v3675, %v3697
        %v3715 = vadd.f32 %v3676, %v3697
        %v3716 = vadd.f32 %v3677, %v3697
        %v3717 = vadd.f32 %v3678, %v3697
        %v3718 = vadd.f32 %v3679, %v3697
        %v3719 = vadd.f32 %v3680, %v3697
        %v3720 = vadd.f32 %v3681, %v3697
        %v3721 = vadd.f32 %v3682, %v3697
        %v3722 = vadd.f32 %v3683, %v3697
        %v3723 = vadd.f32 %v3684, %v3697
        %v3724 = vadd.f32 %v3685, %v3697
        %v3725 = vadd.f32 %v3686, %v3697
        %v3726 = vadd.f32 %v3687, %v3697
        %v3727 = vadd.f32 %v3688, %v3697
        %v3728 = vadd.f32 %v3689, %v3697
        %v3729 = vadd.f32 %v3690, %v3697
        %v3730 = vadd.f32 %v3691, %v3697
        %v3731 = vmax.f32 %v3699, 0.0
        %v3732 = vmax.f32 %v3700, 0.0
        %v3733 = vmax.f32 %v3701, 0.0
        %v3734 = vmax.f32 %v3702, 0.0
        %v3735 = vmax.f32 %v3703, 0.0
        %v3736 = vmax.f32 %v3704, 0.0
        %v3737 = vmax.f32 %v3705, 0.0
        %v3738 = vmax.f32 %v3706, 0.0
        %v3739 = vmax.f32 %v3707, 0.0
        %v3740 = vmax.f32 %v3708, 0.0
        %v3741 = vmax.f32 %v3709, 0.0
        %v3742 = vmax.f32 %v3710, 0.0
        %v3743 = vmax.f32 %v3711, 0.0
        %v3744 = vmax.f32 %v3712, 0.0
        %v3745 = vmax.f32 %v3713, 0.0
        %v3746 = vmax.f32 %v3714, 0.0
        %v3747 = vmax.f32 %v3715, 0.0
        %v3748 = vmax.f32 %v3716, 0.0
        %v3749 = vmax.f32 %v3717, 0.0
        %v3750 = vmax.f32 %v3718, 0.0
        %v3751 = vmax.f32 %v3719, 0.0
        %v3752 = vmax.f32 %v3720, 0.0
        %v3753 = vmax.f32 %v3721, 0.0
        %v3754 = vmax.f32 %v3722, 0.0
        %v3755 = vmax.f32 %v3723, 0.0
        %v3756 = vmax.f32 %v3724, 0.0
        %v3757 = vmax.f32 %v3725, 0.0
        %v3758 = vmax.f32 %v3726, 0.0
        %v3759 = vmax.f32 %v3727, 0.0
        %v3760 = vmax.f32 %v3728, 0.0
        %v3761 = vmax.f32 %v3729, 0.0
        %v3762 = vmax.f32 %v3730, 0.0
        %v3763 = vpack.c.bf16 %v3732, %v3731
        %v3764 = vpack.c.bf16 %v3734, %v3733
        %v3765 = vpack.c.bf16 %v3736, %v3735
        %v3766 = vpack.c.bf16 %v3738, %v3737
        %v3767 = vpack.c.bf16 %v3740, %v3739
        %v3768 = vpack.c.bf16 %v3742, %v3741
        %v3769 = vpack.c.bf16 %v3744, %v3743
        %v3770 = vpack.c.bf16 %v3746, %v3745
        %v3771 = vpack.c.bf16 %v3748, %v3747
        %v3772 = vpack.c.bf16 %v3750, %v3749
        %v3773 = vpack.c.bf16 %v3752, %v3751
        %v3774 = vpack.c.bf16 %v3754, %v3753
        %v3775 = vpack.c.bf16 %v3756, %v3755
        %v3776 = vpack.c.bf16 %v3758, %v3757
        %v3777 = vpack.c.bf16 %v3760, %v3759
        %v3778 = vpack.c.bf16 %v3762, %v3761
        %v3795 = vunpack.c.l.b16 %v3763
        %v3796 = vunpack.c.h.b16 %v3763
        %v3797 = vunpack.c.l.b16 %v3764
        %v3798 = vunpack.c.h.b16 %v3764
        %v3799 = vunpack.c.l.b16 %v3765
        %v3800 = vunpack.c.h.b16 %v3765
        %v3801 = vunpack.c.l.b16 %v3766
        %v3802 = vunpack.c.h.b16 %v3766
        %v3803 = vunpack.c.l.b16 %v3767
        %v3804 = vunpack.c.h.b16 %v3767
        %v3805 = vunpack.c.l.b16 %v3768
        %v3806 = vunpack.c.h.b16 %v3768
        %v3807 = vunpack.c.l.b16 %v3769
        %v3808 = vunpack.c.h.b16 %v3769
        %v3809 = vunpack.c.l.b16 %v3770
        %v3810 = vunpack.c.h.b16 %v3770
        %v3811 = vunpack.c.l.b16 %v3771
        %v3812 = vunpack.c.h.b16 %v3771
        %v3813 = vunpack.c.l.b16 %v3772
        %v3814 = vunpack.c.h.b16 %v3772
        %v3815 = vunpack.c.l.b16 %v3773
        %v3816 = vunpack.c.h.b16 %v3773
        %v3817 = vunpack.c.l.b16 %v3774
        %v3818 = vunpack.c.h.b16 %v3774
        %v3819 = vunpack.c.l.b16 %v3775
        %v3820 = vunpack.c.h.b16 %v3775
        %v3821 = vunpack.c.l.b16 %v3776
        %v3822 = vunpack.c.h.b16 %v3776
        %v3823 = vunpack.c.l.b16 %v3777
        %v3824 = vunpack.c.h.b16 %v3777
        %v3825 = vunpack.c.l.b16 %v3778
        %v3826 = vunpack.c.h.b16 %v3778
        %v3827 = vpack.c.b16 %v3795, %v3795
        %v3828 = vpack.c.b16 %v3796, %v3796
        %v3829 = vpack.c.b16 %v3797, %v3797
        %v3830 = vpack.c.b16 %v3798, %v3798
        %v3831 = vpack.c.b16 %v3799, %v3799
        %v3832 = vpack.c.b16 %v3800, %v3800
        %v3833 = vpack.c.b16 %v3801, %v3801
        %v3834 = vpack.c.b16 %v3802, %v3802
        %v3835 = vpack.c.b16 %v3803, %v3803
        %v3836 = vpack.c.b16 %v3804, %v3804
        %v3837 = vpack.c.b16 %v3805, %v3805
        %v3838 = vpack.c.b16 %v3806, %v3806
        %v3839 = vpack.c.b16 %v3807, %v3807
        %v3840 = vpack.c.b16 %v3808, %v3808
        %v3841 = vpack.c.b16 %v3809, %v3809
        %v3842 = vpack.c.b16 %v3810, %v3810
        %v3843 = vpack.c.b16 %v3811, %v3811
        %v3844 = vpack.c.b16 %v3812, %v3812
        %v3845 = vpack.c.b16 %v3813, %v3813
        %v3846 = vpack.c.b16 %v3814, %v3814
        %v3847 = vpack.c.b16 %v3815, %v3815
        %v3848 = vpack.c.b16 %v3816, %v3816
        %v3849 = vpack.c.b16 %v3817, %v3817
        %v3850 = vpack.c.b16 %v3818, %v3818
        %v3851 = vpack.c.b16 %v3819, %v3819
        %v3852 = vpack.c.b16 %v3820, %v3820
        %v3853 = vpack.c.b16 %v3821, %v3821
        %v3854 = vpack.c.b16 %v3822, %v3822
        %v3855 = vpack.c.b16 %v3823, %v3823
        %v3856 = vpack.c.b16 %v3824, %v3824
        %v3857 = vpack.c.b16 %v3825, %v3825
        %v3858 = vpack.c.b16 %v3826, %v3826
        %3891 = vst [vmem:[%s359 + $0x4] sm:$0xf] %v3827
        %3892 = vst [vmem:[%s359 + $0x10] sm:$0xf] %v3828
        %3893 = vst [vmem:[%s359 + $0x1c] sm:$0xf] %v3829
        %3894 = vst [vmem:[%s359 + $0x28] sm:$0xf] %v3830
        %3895 = vst [vmem:[%s359 + $0x34] sm:$0xf] %v3831
        %3896 = vst [vmem:[%s359 + $0x40] sm:$0xf] %v3832
        %3897 = vst [vmem:[%s359 + $0x4c] sm:$0xf] %v3833
        %3898 = vst [vmem:[%s359 + $0x58] sm:$0xf] %v3834
        %3899 = vst [vmem:[%s359 + $0x64] sm:$0xf] %v3835
        %3900 = vst [vmem:[%s359 + $0x70] sm:$0xf] %v3836
        %3901 = vst [vmem:[%s359 + $0x7c] sm:$0xf] %v3837
        %3902 = vst [vmem:[%s359 + $0x88] sm:$0xf] %v3838
        %3903 = vst [vmem:[%s359 + $0x94] sm:$0xf] %v3839
        %3904 = vst [vmem:[%s359 + $0xa0] sm:$0xf] %v3840
        %3905 = vst [vmem:[%s359 + $0xac] sm:$0xf] %v3841
        %3906 = vst [vmem:[%s359 + $0xb8] sm:$0xf] %v3842
        %3907 = vst [vmem:[%s359 + $0xc4] sm:$0xf] %v3843
        %3908 = vst [vmem:[%s359 + $0xd0] sm:$0xf] %v3844
        %3909 = vst [vmem:[%s359 + $0xdc] sm:$0xf] %v3845
        %3910 = vst [vmem:[%s359 + $0xe8] sm:$0xf] %v3846
        %3911 = vst [vmem:[%s359 + $0xf4] sm:$0xf] %v3847
        %3912 = vst [vmem:[%s359 + $0x100] sm:$0xf] %v3848
        %3913 = vst [vmem:[%s359 + $0x10c] sm:$0xf] %v3849
        %3914 = vst [vmem:[%s359 + $0x118] sm:$0xf] %v3850
        %3915 = vst [vmem:[%s359 + $0x124] sm:$0xf] %v3851
        %3916 = vst [vmem:[%s359 + $0x130] sm:$0xf] %v3852
        %3917 = vst [vmem:[%s359 + $0x13c] sm:$0xf] %v3853
        %3918 = vst [vmem:[%s359 + $0x148] sm:$0xf] %v3854
        %3919 = vst [vmem:[%s359 + $0x154] sm:$0xf] %v3855
        %3920 = vst [vmem:[%s359 + $0x160] sm:$0xf] %v3856
        %3921 = vst [vmem:[%s359 + $0x16c] sm:$0xf] %v3857
        %3922 = vst [vmem:[%s359 + $0x178] sm:$0xf] %v3858
        %v3924 = vshrl.u32 %v3827, 16
        %v3926 = vrot.slane %v3924, 7
        %v3927 = vshll.u32 %v3827, 16
        %v3929 = vor.u32 %v3926, %v3927
        %v3930 = vrot.slane %v3926, 4
        %v3932 = vshrl.u32 %v3828, 16
        %v3934 = vrot.slane %v3932, 7
        %v3935 = vshll.u32 %v3828, 16
        %v3937 = vor.u32 %v3934, %v3935
        %v3938 = vsel %vm394, %v3930, %v3937
        %v3940 = vshrl.u32 %v3829, 16
        %v3942 = vrot.slane %v3940, 7
        %v3943 = vshll.u32 %v3829, 16
        %v3945 = vor.u32 %v3942, %v3943
        %v3946 = vrot.slane %v3942, 4
        %v3948 = vshrl.u32 %v3830, 16
        %v3950 = vrot.slane %v3948, 7
        %v3951 = vshll.u32 %v3830, 16
        %v3953 = vor.u32 %v3950, %v3951
        %v3954 = vsel %vm394, %v3946, %v3953
        %v3956 = vshrl.u32 %v3831, 16
        %v3958 = vrot.slane %v3956, 7
        %v3959 = vshll.u32 %v3831, 16
        %v3961 = vor.u32 %v3958, %v3959
        %v3962 = vrot.slane %v3958, 4
        %v3964 = vshrl.u32 %v3832, 16
        %v3966 = vrot.slane %v3964, 7
        %v3967 = vshll.u32 %v3832, 16
        %v3969 = vor.u32 %v3966, %v3967
        %v3970 = vsel %vm394, %v3962, %v3969
        %v3972 = vshrl.u32 %v3833, 16
        %v3974 = vrot.slane %v3972, 7
        %v3975 = vshll.u32 %v3833, 16
        %v3977 = vor.u32 %v3974, %v3975
        %v3978 = vrot.slane %v3974, 4
        %v3980 = vshrl.u32 %v3834, 16
        %v3982 = vrot.slane %v3980, 7
        %v3983 = vshll.u32 %v3834, 16
        %v3985 = vor.u32 %v3982, %v3983
        %v3986 = vsel %vm394, %v3978, %v3985
        %v3988 = vshrl.u32 %v3835, 16
        %v3990 = vrot.slane %v3988, 7
        %v3991 = vshll.u32 %v3835, 16
        %v3993 = vor.u32 %v3990, %v3991
        %v3994 = vrot.slane %v3990, 4
        %v3996 = vshrl.u32 %v3836, 16
        %v3998 = vrot.slane %v3996, 7
        %v3999 = vshll.u32 %v3836, 16
        %v4001 = vor.u32 %v3998, %v3999
        %v4002 = vsel %vm394, %v3994, %v4001
        %v4004 = vshrl.u32 %v3837, 16
        %v4006 = vrot.slane %v4004, 7
        %v4007 = vshll.u32 %v3837, 16
        %v4009 = vor.u32 %v4006, %v4007
        %v4010 = vrot.slane %v4006, 4
        %v4012 = vshrl.u32 %v3838, 16
        %v4014 = vrot.slane %v4012, 7
        %v4015 = vshll.u32 %v3838, 16
        %v4017 = vor.u32 %v4014, %v4015
        %v4018 = vsel %vm394, %v4010, %v4017
        %v4020 = vshrl.u32 %v3839, 16
        %v4022 = vrot.slane %v4020, 7
        %v4023 = vshll.u32 %v3839, 16
        %v4025 = vor.u32 %v4022, %v4023
        %v4026 = vrot.slane %v4022, 4
        %v4028 = vshrl.u32 %v3840, 16
        %v4030 = vrot.slane %v4028, 7
        %v4031 = vshll.u32 %v3840, 16
        %v4033 = vor.u32 %v4030, %v4031
        %v4034 = vsel %vm394, %v4026, %v4033
        %v4036 = vshrl.u32 %v3841, 16
        %v4038 = vrot.slane %v4036, 7
        %v4039 = vshll.u32 %v3841, 16
        %v4041 = vor.u32 %v4038, %v4039
        %v4042 = vrot.slane %v4038, 4
        %v4044 = vshrl.u32 %v3842, 16
        %v4046 = vrot.slane %v4044, 7
        %v4047 = vshll.u32 %v3842, 16
        %v4049 = vor.u32 %v4046, %v4047
        %v4050 = vsel %vm394, %v4042, %v4049
        %v4052 = vshrl.u32 %v3843, 16
        %v4054 = vrot.slane %v4052, 7
        %v4055 = vshll.u32 %v3843, 16
        %v4057 = vor.u32 %v4054, %v4055
        %v4058 = vrot.slane %v4054, 4
        %v4060 = vshrl.u32 %v3844, 16
        %v4062 = vrot.slane %v4060, 7
        %v4063 = vshll.u32 %v3844, 16
        %v4065 = vor.u32 %v4062, %v4063
        %v4066 = vsel %vm394, %v4058, %v4065
        %v4068 = vshrl.u32 %v3845, 16
        %v4070 = vrot.slane %v4068, 7
        %v4071 = vshll.u32 %v3845, 16
        %v4073 = vor.u32 %v4070, %v4071
        %v4074 = vrot.slane %v4070, 4
        %v4076 = vshrl.u32 %v3846, 16
        %v4078 = vrot.slane %v4076, 7
        %v4079 = vshll.u32 %v3846, 16
        %v4081 = vor.u32 %v4078, %v4079
        %v4082 = vsel %vm394, %v4074, %v4081
        %v4084 = vshrl.u32 %v3847, 16
        %v4086 = vrot.slane %v4084, 7
        %v4087 = vshll.u32 %v3847, 16
        %v4089 = vor.u32 %v4086, %v4087
        %v4090 = vrot.slane %v4086, 4
        %v4092 = vshrl.u32 %v3848, 16
        %v4094 = vrot.slane %v4092, 7
        %v4095 = vshll.u32 %v3848, 16
        %v4097 = vor.u32 %v4094, %v4095
        %v4098 = vsel %vm394, %v4090, %v4097
        %v4100 = vshrl.u32 %v3849, 16
        %v4102 = vrot.slane %v4100, 7
        %v4103 = vshll.u32 %v3849, 16
        %v4105 = vor.u32 %v4102, %v4103
        %v4106 = vrot.slane %v4102, 4
        %v4108 = vshrl.u32 %v3850, 16
        %v4110 = vrot.slane %v4108, 7
        %v4111 = vshll.u32 %v3850, 16
        %v4113 = vor.u32 %v4110, %v4111
        %v4114 = vsel %vm394, %v4106, %v4113
        %v4116 = vshrl.u32 %v3851, 16
        %v4118 = vrot.slane %v4116, 7
        %v4119 = vshll.u32 %v3851, 16
        %v4121 = vor.u32 %v4118, %v4119
        %v4122 = vrot.slane %v4118, 4
        %v4124 = vshrl.u32 %v3852, 16
        %v4126 = vrot.slane %v4124, 7
        %v4127 = vshll.u32 %v3852, 16
        %v4129 = vor.u32 %v4126, %v4127
        %v4130 = vsel %vm394, %v4122, %v4129
        %v4132 = vshrl.u32 %v3853, 16
        %v4134 = vrot.slane %v4132, 7
        %v4135 = vshll.u32 %v3853, 16
        %v4137 = vor.u32 %v4134, %v4135
        %v4138 = vrot.slane %v4134, 4
        %v4140 = vshrl.u32 %v3854, 16
        %v4142 = vrot.slane %v4140, 7
        %v4143 = vshll.u32 %v3854, 16
        %v4145 = vor.u32 %v4142, %v4143
        %v4146 = vsel %vm394, %v4138, %v4145
        %v4148 = vshrl.u32 %v3855, 16
        %v4150 = vrot.slane %v4148, 7
        %v4151 = vshll.u32 %v3855, 16
        %v4153 = vor.u32 %v4150, %v4151
        %v4154 = vrot.slane %v4150, 4
        %v4156 = vshrl.u32 %v3856, 16
        %v4158 = vrot.slane %v4156, 7
        %v4159 = vshll.u32 %v3856, 16
        %v4161 = vor.u32 %v4158, %v4159
        %v4162 = vsel %vm394, %v4154, %v4161
        %v4164 = vshrl.u32 %v3857, 16
        %v4166 = vrot.slane %v4164, 7
        %v4167 = vshll.u32 %v3857, 16
        %v4169 = vor.u32 %v4166, %v4167
        %v4170 = vrot.slane %v4166, 4
        %v4172 = vshrl.u32 %v3858, 16
        %v4174 = vrot.slane %v4172, 7
        %v4175 = vshll.u32 %v3858, 16
        %v4177 = vor.u32 %v4174, %v4175
        %v4178 = vsel %vm394, %v4170, %v4177
        %v4211 = vld [vmem:[%s359] sm:$0xf]
        %v4212 = vsel %vm685, %v3929, %v4211
        %4213 = vst [vmem:[%s359] sm:$0xf] %v4212
        %4214 = vst [vmem:[%s359 + $0xc] sm:$0xf] %v3938
        %v4215 = vld [vmem:[%s359 + $0x18] sm:$0xf]
        %v4216 = vsel %vm685, %v3945, %v4215
        %4217 = vst [vmem:[%s359 + $0x18] sm:$0xf] %v4216
        %4218 = vst [vmem:[%s359 + $0x24] sm:$0xf] %v3954
        %v4219 = vld [vmem:[%s359 + $0x30] sm:$0xf]
        %v4220 = vsel %vm685, %v3961, %v4219
        %4221 = vst [vmem:[%s359 + $0x30] sm:$0xf] %v4220
        %4222 = vst [vmem:[%s359 + $0x3c] sm:$0xf] %v3970
        %v4223 = vld [vmem:[%s359 + $0x48] sm:$0xf]
        %v4224 = vsel %vm685, %v3977, %v4223
        %4225 = vst [vmem:[%s359 + $0x48] sm:$0xf] %v4224
        %4226 = vst [vmem:[%s359 + $0x54] sm:$0xf] %v3986
        %v4227 = vld [vmem:[%s359 + $0x60] sm:$0xf]
        %v4228 = vsel %vm685, %v3993, %v4227
        %4229 = vst [vmem:[%s359 + $0x60] sm:$0xf] %v4228
        %4230 = vst [vmem:[%s359 + $0x6c] sm:$0xf] %v4002
        %v4231 = vld [vmem:[%s359 + $0x78] sm:$0xf]
        %v4232 = vsel %vm685, %v4009, %v4231
        %4233 = vst [vmem:[%s359 + $0x78] sm:$0xf] %v4232
        %4234 = vst [vmem:[%s359 + $0x84] sm:$0xf] %v4018
        %v4235 = vld [vmem:[%s359 + $0x90] sm:$0xf]
        %v4236 = vsel %vm685, %v4025, %v4235
        %4237 = vst [vmem:[%s359 + $0x90] sm:$0xf] %v4236
        %4238 = vst [vmem:[%s359 + $0x9c] sm:$0xf] %v4034
        %v4239 = vld [vmem:[%s359 + $0xa8] sm:$0xf]
        %v4240 = vsel %vm685, %v4041, %v4239
        %4241 = vst [vmem:[%s359 + $0xa8] sm:$0xf] %v4240
        %4242 = vst [vmem:[%s359 + $0xb4] sm:$0xf] %v4050
        %v4243 = vld [vmem:[%s359 + $0xc0] sm:$0xf]
        %v4244 = vsel %vm685, %v4057, %v4243
        %4245 = vst [vmem:[%s359 + $0xc0] sm:$0xf] %v4244
        %4246 = vst [vmem:[%s359 + $0xcc] sm:$0xf] %v4066
        %v4247 = vld [vmem:[%s359 + $0xd8] sm:$0xf]
        %v4248 = vsel %vm685, %v4073, %v4247
        %4249 = vst [vmem:[%s359 + $0xd8] sm:$0xf] %v4248
        %4250 = vst [vmem:[%s359 + $0xe4] sm:$0xf] %v4082
        %v4251 = vld [vmem:[%s359 + $0xf0] sm:$0xf]
        %v4252 = vsel %vm685, %v4089, %v4251
        %4253 = vst [vmem:[%s359 + $0xf0] sm:$0xf] %v4252
        %4254 = vst [vmem:[%s359 + $0xfc] sm:$0xf] %v4098
        %v4255 = vld [vmem:[%s359 + $0x108] sm:$0xf]
        %v4256 = vsel %vm685, %v4105, %v4255
        %4257 = vst [vmem:[%s359 + $0x108] sm:$0xf] %v4256
        %4258 = vst [vmem:[%s359 + $0x114] sm:$0xf] %v4114
        %v4259 = vld [vmem:[%s359 + $0x120] sm:$0xf]
        %v4260 = vsel %vm685, %v4121, %v4259
        %4261 = vst [vmem:[%s359 + $0x120] sm:$0xf] %v4260
        %4262 = vst [vmem:[%s359 + $0x12c] sm:$0xf] %v4130
        %v4263 = vld [vmem:[%s359 + $0x138] sm:$0xf]
        %v4264 = vsel %vm685, %v4137, %v4263
        %4265 = vst [vmem:[%s359 + $0x138] sm:$0xf] %v4264
        %4266 = vst [vmem:[%s359 + $0x144] sm:$0xf] %v4146
        %v4267 = vld [vmem:[%s359 + $0x150] sm:$0xf]
        %v4268 = vsel %vm685, %v4153, %v4267
        %4269 = vst [vmem:[%s359 + $0x150] sm:$0xf] %v4268
        %4270 = vst [vmem:[%s359 + $0x15c] sm:$0xf] %v4162
        %v4271 = vld [vmem:[%s359 + $0x168] sm:$0xf]
        %v4272 = vsel %vm685, %v4169, %v4271
        %4273 = vst [vmem:[%s359 + $0x168] sm:$0xf] %v4272
        %4274 = vst [vmem:[%s359 + $0x174] sm:$0xf] %v4178
        %v4275 = vrot.slane %v3924, 4
        %v4276 = vrot.slane %v3927, 5
        %v4277 = vor.u32 %v4275, %v4276
        %v4278 = vrot.slane %v4277, 4
        %v4279 = vrot.slane %v3935, 5
        %v4280 = vsel %vm752, %v4278, %v4279
        %v4281 = vrot.slane %v3932, 4
        %v4282 = vor.u32 %v4281, %v4279
        %v4283 = vrot.slane %v4282, 4
        %v4284 = vrot.slane %v3940, 4
        %v4285 = vrot.slane %v3943, 5
        %v4286 = vor.u32 %v4284, %v4285
        %v4287 = vrot.slane %v4286, 4
        %v4288 = vrot.slane %v3951, 5
        %v4289 = vsel %vm752, %v4287, %v4288
        %v4290 = vrot.slane %v3948, 4
        %v4291 = vor.u32 %v4290, %v4288
        %v4292 = vrot.slane %v4291, 4
        %v4293 = vrot.slane %v3956, 4
        %v4294 = vrot.slane %v3959, 5
        %v4295 = vor.u32 %v4293, %v4294
        %v4296 = vrot.slane %v4295, 4
        %v4297 = vrot.slane %v3967, 5
        %v4298 = vsel %vm752, %v4296, %v4297
        %v4299 = vrot.slane %v3964, 4
        %v4300 = vor.u32 %v4299, %v4297
        %v4301 = vrot.slane %v4300, 4
        %v4302 = vrot.slane %v3972, 4
        %v4303 = vrot.slane %v3975, 5
        %v4304 = vor.u32 %v4302, %v4303
        %v4305 = vrot.slane %v4304, 4
        %v4306 = vrot.slane %v3983, 5
        %v4307 = vsel %vm752, %v4305, %v4306
        %v4308 = vrot.slane %v3980, 4
        %v4309 = vor.u32 %v4308, %v4306
        %v4310 = vrot.slane %v4309, 4
        %v4311 = vrot.slane %v3988, 4
        %v4312 = vrot.slane %v3991, 5
        %v4313 = vor.u32 %v4311, %v4312
        %v4314 = vrot.slane %v4313, 4
        %v4315 = vrot.slane %v3999, 5
        %v4316 = vsel %vm752, %v4314, %v4315
        %v4317 = vrot.slane %v3996, 4
        %v4318 = vor.u32 %v4317, %v4315
        %v4319 = vrot.slane %v4318, 4
        %v4320 = vrot.slane %v4004, 4
        %v4321 = vrot.slane %v4007, 5
        %v4322 = vor.u32 %v4320, %v4321
        %v4323 = vrot.slane %v4322, 4
        %v4324 = vrot.slane %v4015, 5
        %v4325 = vsel %vm752, %v4323, %v4324
        %v4326 = vrot.slane %v4012, 4
        %v4327 = vor.u32 %v4326, %v4324
        %v4328 = vrot.slane %v4327, 4
        %v4329 = vrot.slane %v4020, 4
        %v4330 = vrot.slane %v4023, 5
        %v4331 = vor.u32 %v4329, %v4330
        %v4332 = vrot.slane %v4331, 4
        %v4333 = vrot.slane %v4031, 5
        %v4334 = vsel %vm752, %v4332, %v4333
        %v4335 = vrot.slane %v4028, 4
        %v4336 = vor.u32 %v4335, %v4333
        %v4337 = vrot.slane %v4336, 4
        %v4338 = vrot.slane %v4036, 4
        %v4339 = vrot.slane %v4039, 5
        %v4340 = vor.u32 %v4338, %v4339
        %v4341 = vrot.slane %v4340, 4
        %v4342 = vrot.slane %v4047, 5
        %v4343 = vsel %vm752, %v4341, %v4342
        %v4344 = vrot.slane %v4044, 4
        %v4345 = vor.u32 %v4344, %v4342
        %v4346 = vrot.slane %v4345, 4
        %v4347 = vrot.slane %v4052, 4
        %v4348 = vrot.slane %v4055, 5
        %v4349 = vor.u32 %v4347, %v4348
        %v4350 = vrot.slane %v4349, 4
        %v4351 = vrot.slane %v4063, 5
        %v4352 = vsel %vm752, %v4350, %v4351
        %v4353 = vrot.slane %v4060, 4
        %v4354 = vor.u32 %v4353, %v4351
        %v4355 = vrot.slane %v4354, 4
        %v4356 = vrot.slane %v4068, 4
        %v4357 = vrot.slane %v4071, 5
        %v4358 = vor.u32 %v4356, %v4357
        %v4359 = vrot.slane %v4358, 4
        %v4360 = vrot.slane %v4079, 5
        %v4361 = vsel %vm752, %v4359, %v4360
        %v4362 = vrot.slane %v4076, 4
        %v4363 = vor.u32 %v4362, %v4360
        %v4364 = vrot.slane %v4363, 4
        %v4365 = vrot.slane %v4084, 4
        %v4366 = vrot.slane %v4087, 5
        %v4367 = vor.u32 %v4365, %v4366
        %v4368 = vrot.slane %v4367, 4
        %v4369 = vrot.slane %v4095, 5
        %v4370 = vsel %vm752, %v4368, %v4369
        %v4371 = vrot.slane %v4092, 4
        %v4372 = vor.u32 %v4371, %v4369
        %v4373 = vrot.slane %v4372, 4
        %v4374 = vrot.slane %v4100, 4
        %v4375 = vrot.slane %v4103, 5
        %v4376 = vor.u32 %v4374, %v4375
        %v4377 = vrot.slane %v4376, 4
        %v4378 = vrot.slane %v4111, 5
        %v4379 = vsel %vm752, %v4377, %v4378
        %v4380 = vrot.slane %v4108, 4
        %v4381 = vor.u32 %v4380, %v4378
        %v4382 = vrot.slane %v4381, 4
        %v4383 = vrot.slane %v4116, 4
        %v4384 = vrot.slane %v4119, 5
        %v4385 = vor.u32 %v4383, %v4384
        %v4386 = vrot.slane %v4385, 4
        %v4387 = vrot.slane %v4127, 5
        %v4388 = vsel %vm752, %v4386, %v4387
        %v4389 = vrot.slane %v4124, 4
        %v4390 = vor.u32 %v4389, %v4387
        %v4391 = vrot.slane %v4390, 4
        %v4392 = vrot.slane %v4132, 4
        %v4393 = vrot.slane %v4135, 5
        %v4394 = vor.u32 %v4392, %v4393
        %v4395 = vrot.slane %v4394, 4
        %v4396 = vrot.slane %v4143, 5
        %v4397 = vsel %vm752, %v4395, %v4396
        %v4398 = vrot.slane %v4140, 4
        %v4399 = vor.u32 %v4398, %v4396
        %v4400 = vrot.slane %v4399, 4
        %v4401 = vrot.slane %v4148, 4
        %v4402 = vrot.slane %v4151, 5
        %v4403 = vor.u32 %v4401, %v4402
        %v4404 = vrot.slane %v4403, 4
        %v4405 = vrot.slane %v4159, 5
        %v4406 = vsel %vm752, %v4404, %v4405
        %v4407 = vrot.slane %v4156, 4
        %v4408 = vor.u32 %v4407, %v4405
        %v4409 = vrot.slane %v4408, 4
        %v4410 = vrot.slane %v4164, 4
        %v4411 = vrot.slane %v4167, 5
        %v4412 = vor.u32 %v4410, %v4411
        %v4413 = vrot.slane %v4412, 4
        %v4414 = vrot.slane %v4175, 5
        %v4415 = vsel %vm752, %v4413, %v4414
        %v4416 = vrot.slane %v4172, 4
        %v4417 = vor.u32 %v4416, %v4414
        %v4418 = vrot.slane %v4417, 4
        %4451 = vst [vmem:[%s359 + $0x8] sm:$0xf] %v4280
        %v4452 = vld [vmem:[%s359 + $0x14] sm:$0xf]
        %v4453 = vsel %vm930, %v4283, %v4452
        %4454 = vst [vmem:[%s359 + $0x14] sm:$0xf] %v4453
        %4455 = vst [vmem:[%s359 + $0x20] sm:$0xf] %v4289
        %v4456 = vld [vmem:[%s359 + $0x2c] sm:$0xf]
        %v4457 = vsel %vm930, %v4292, %v4456
        %4458 = vst [vmem:[%s359 + $0x2c] sm:$0xf] %v4457
        %4459 = vst [vmem:[%s359 + $0x38] sm:$0xf] %v4298
        %v4460 = vld [vmem:[%s359 + $0x44] sm:$0xf]
        %v4461 = vsel %vm930, %v4301, %v4460
        %4462 = vst [vmem:[%s359 + $0x44] sm:$0xf] %v4461
        %4463 = vst [vmem:[%s359 + $0x50] sm:$0xf] %v4307
        %v4464 = vld [vmem:[%s359 + $0x5c] sm:$0xf]
        %v4465 = vsel %vm930, %v4310, %v4464
        %4466 = vst [vmem:[%s359 + $0x5c] sm:$0xf] %v4465
        %4467 = vst [vmem:[%s359 + $0x68] sm:$0xf] %v4316
        %v4468 = vld [vmem:[%s359 + $0x74] sm:$0xf]
        %v4469 = vsel %vm930, %v4319, %v4468
        %4470 = vst [vmem:[%s359 + $0x74] sm:$0xf] %v4469
        %4471 = vst [vmem:[%s359 + $0x80] sm:$0xf] %v4325
        %v4472 = vld [vmem:[%s359 + $0x8c] sm:$0xf]
        %v4473 = vsel %vm930, %v4328, %v4472
        %4474 = vst [vmem:[%s359 + $0x8c] sm:$0xf] %v4473
        %4475 = vst [vmem:[%s359 + $0x98] sm:$0xf] %v4334
        %v4476 = vld [vmem:[%s359 + $0xa4] sm:$0xf]
        %v4477 = vsel %vm930, %v4337, %v4476
        %4478 = vst [vmem:[%s359 + $0xa4] sm:$0xf] %v4477
        %4479 = vst [vmem:[%s359 + $0xb0] sm:$0xf] %v4343
        %v4480 = vld [vmem:[%s359 + $0xbc] sm:$0xf]
        %v4481 = vsel %vm930, %v4346, %v4480
        %4482 = vst [vmem:[%s359 + $0xbc] sm:$0xf] %v4481
        %4483 = vst [vmem:[%s359 + $0xc8] sm:$0xf] %v4352
        %v4484 = vld [vmem:[%s359 + $0xd4] sm:$0xf]
        %v4485 = vsel %vm930, %v4355, %v4484
        %4486 = vst [vmem:[%s359 + $0xd4] sm:$0xf] %v4485
        %4487 = vst [vmem:[%s359 + $0xe0] sm:$0xf] %v4361
        %v4488 = vld [vmem:[%s359 + $0xec] sm:$0xf]
        %v4489 = vsel %vm930, %v4364, %v4488
        %4490 = vst [vmem:[%s359 + $0xec] sm:$0xf] %v4489
        %4491 = vst [vmem:[%s359 + $0xf8] sm:$0xf] %v4370
        %v4492 = vld [vmem:[%s359 + $0x104] sm:$0xf]
        %v4493 = vsel %vm930, %v4373, %v4492
        %4494 = vst [vmem:[%s359 + $0x104] sm:$0xf] %v4493
        %4495 = vst [vmem:[%s359 + $0x110] sm:$0xf] %v4379
        %v4496 = vld [vmem:[%s359 + $0x11c] sm:$0xf]
        %v4497 = vsel %vm930, %v4382, %v4496
        %4498 = vst [vmem:[%s359 + $0x11c] sm:$0xf] %v4497
        %4499 = vst [vmem:[%s359 + $0x128] sm:$0xf] %v4388
        %v4500 = vld [vmem:[%s359 + $0x134] sm:$0xf]
        %v4501 = vsel %vm930, %v4391, %v4500
        %4502 = vst [vmem:[%s359 + $0x134] sm:$0xf] %v4501
        %4503 = vst [vmem:[%s359 + $0x140] sm:$0xf] %v4397
        %v4504 = vld [vmem:[%s359 + $0x14c] sm:$0xf]
        %v4505 = vsel %vm930, %v4400, %v4504
        %4506 = vst [vmem:[%s359 + $0x14c] sm:$0xf] %v4505
        %4507 = vst [vmem:[%s359 + $0x158] sm:$0xf] %v4406
        %v4508 = vld [vmem:[%s359 + $0x164] sm:$0xf]
        %v4509 = vsel %vm930, %v4409, %v4508
        %4510 = vst [vmem:[%s359 + $0x164] sm:$0xf] %v4509
        %4511 = vst [vmem:[%s359 + $0x170] sm:$0xf] %v4415
        %v4512 = vld [vmem:[%s359 + $0x17c] sm:$0xf]
        %v4513 = vsel %vm930, %v4418, %v4512
        %4514 = vst [vmem:[%s359 + $0x17c] sm:$0xf] %v4513
        %4515 = vst [vmem:[#allocation2] sm:$0xff] 0
        %4516 = vst [vmem:[#allocation2 + $0x8] sm:$0xf] 0
        %4517 = vst [vmem:[#allocation2 + $0xc] sm:$0xff] 0
        %4518 = vst [vmem:[#allocation2 + $0x14] sm:$0xf] 0
        %4519 = vst [vmem:[%s998] sm:$0xff] 0
        %4520 = vst [vmem:[%s998 + $0x8] sm:$0xf] 0
        %4521 = vst [vmem:[%s998 + $0xc] sm:$0xff] 0
        %4522 = vst [vmem:[%s998 + $0x14] sm:$0xf] 0
        %v4523 = vld [vmem:[#allocation2] sm:$0x1]
        %v4524 = vsel %vm1004, 0, %v4523
        %4525 = vst [vmem:[#allocation2] sm:$0x1] %v4524
        %v4526 = vld [vmem:[#allocation2 + $0x18] sm:$0x1]
        %v4527 = vsel %vm1004, 0, %v4526
        %4528 = vst [vmem:[#allocation2 + $0x18] sm:$0x1] %v4527
        %v4529 = vld [vmem:[#allocation2 + $0x30] sm:$0x1]
        %v4530 = vsel %vm1004, 0, %v4529
        %4531 = vst [vmem:[#allocation2 + $0x30] sm:$0x1] %v4530
        %v4532 = vld [vmem:[#allocation2 + $0x48] sm:$0x1]
        %v4533 = vsel %vm1004, 0, %v4532
        %4534 = vst [vmem:[#allocation2 + $0x48] sm:$0x1] %v4533
        %v4535 = vld [vmem:[#allocation2 + $0x60] sm:$0x1]
        %v4536 = vsel %vm1004, 0, %v4535
        %4537 = vst [vmem:[#allocation2 + $0x60] sm:$0x1] %v4536
        %v4538 = vld [vmem:[#allocation2 + $0x78] sm:$0x1]
        %v4539 = vsel %vm1004, 0, %v4538
        %4540 = vst [vmem:[#allocation2 + $0x78] sm:$0x1] %v4539
        %v4541 = vld [vmem:[#allocation2 + $0x90] sm:$0x1]
        %v4542 = vsel %vm1004, 0, %v4541
        %4543 = vst [vmem:[#allocation2 + $0x90] sm:$0x1] %v4542
        %v4544 = vld [vmem:[#allocation2 + $0xa8] sm:$0x1]
        %v4545 = vsel %vm1004, 0, %v4544
        %4546 = vst [vmem:[#allocation2 + $0xa8] sm:$0x1] %v4545
        %v4547 = vld [vmem:[#allocation2 + $0xc0] sm:$0x1]
        %v4548 = vsel %vm1004, 0, %v4547
        %4549 = vst [vmem:[#allocation2 + $0xc0] sm:$0x1] %v4548
        %v4550 = vld [vmem:[#allocation2 + $0xd8] sm:$0x1]
        %v4551 = vsel %vm1004, 0, %v4550
        %4552 = vst [vmem:[#allocation2 + $0xd8] sm:$0x1] %v4551
        %v4553 = vld [vmem:[#allocation2 + $0xf0] sm:$0x1]
        %v4554 = vsel %vm1004, 0, %v4553
        %4555 = vst [vmem:[#allocation2 + $0xf0] sm:$0x1] %v4554
        %v4556 = vld [vmem:[#allocation2 + $0x108] sm:$0x1]
        %v4557 = vsel %vm1004, 0, %v4556
        %4558 = vst [vmem:[#allocation2 + $0x108] sm:$0x1] %v4557
        %v4559 = vld [vmem:[#allocation2 + $0x120] sm:$0x1]
        %v4560 = vsel %vm1004, 0, %v4559
        %4561 = vst [vmem:[#allocation2 + $0x120] sm:$0x1] %v4560
        %v4562 = vld [vmem:[#allocation2 + $0x138] sm:$0x1]
        %v4563 = vsel %vm1004, 0, %v4562
        %4564 = vst [vmem:[#allocation2 + $0x138] sm:$0x1] %v4563
        %v4565 = vld [vmem:[#allocation2 + $0x150] sm:$0x1]
        %v4566 = vsel %vm1004, 0, %v4565
        %4567 = vst [vmem:[#allocation2 + $0x150] sm:$0x1] %v4566
        %v4568 = vld [vmem:[#allocation2 + $0x168] sm:$0x1]
        %v4569 = vsel %vm1004, 0, %v4568
        %4570 = vst [vmem:[#allocation2 + $0x168] sm:$0x1] %v4569
        %v4571 = vld [vmem:[#allocation2 + $0x180] sm:$0x1]
        %v4572 = vsel %vm1004, 0, %v4571
        %4573 = vst [vmem:[#allocation2 + $0x180] sm:$0x1] %v4572
        %v4574 = vld [vmem:[#allocation2 + $0x198] sm:$0x1]
        %v4575 = vsel %vm1004, 0, %v4574
        %4576 = vst [vmem:[#allocation2 + $0x198] sm:$0x1] %v4575
        %v4577 = vld [vmem:[#allocation2 + $0x14] sm:$0x8]
        %v4578 = vsel %vm1061, 0, %v4577
        %4579 = vst [vmem:[#allocation2 + $0x14] sm:$0x8] %v4578
        %v4580 = vld [vmem:[#allocation2 + $0x2c] sm:$0x8]
        %v4581 = vsel %vm1061, 0, %v4580
        %4582 = vst [vmem:[#allocation2 + $0x2c] sm:$0x8] %v4581
        %v4583 = vld [vmem:[#allocation2 + $0x44] sm:$0x8]
        %v4584 = vsel %vm1061, 0, %v4583
        %4585 = vst [vmem:[#allocation2 + $0x44] sm:$0x8] %v4584
        %v4586 = vld [vmem:[#allocation2 + $0x5c] sm:$0x8]
        %v4587 = vsel %vm1061, 0, %v4586
        %4588 = vst [vmem:[#allocation2 + $0x5c] sm:$0x8] %v4587
        %v4589 = vld [vmem:[#allocation2 + $0x74] sm:$0x8]
        %v4590 = vsel %vm1061, 0, %v4589
        %4591 = vst [vmem:[#allocation2 + $0x74] sm:$0x8] %v4590
        %v4592 = vld [vmem:[#allocation2 + $0x8c] sm:$0x8]
        %v4593 = vsel %vm1061, 0, %v4592
        %4594 = vst [vmem:[#allocation2 + $0x8c] sm:$0x8] %v4593
        %v4595 = vld [vmem:[#allocation2 + $0xa4] sm:$0x8]
        %v4596 = vsel %vm1061, 0, %v4595
        %4597 = vst [vmem:[#allocation2 + $0xa4] sm:$0x8] %v4596
        %v4598 = vld [vmem:[#allocation2 + $0xbc] sm:$0x8]
        %v4599 = vsel %vm1061, 0, %v4598
        %4600 = vst [vmem:[#allocation2 + $0xbc] sm:$0x8] %v4599
        %v4601 = vld [vmem:[#allocation2 + $0xd4] sm:$0x8]
        %v4602 = vsel %vm1061, 0, %v4601
        %4603 = vst [vmem:[#allocation2 + $0xd4] sm:$0x8] %v4602
        %v4604 = vld [vmem:[#allocation2 + $0xec] sm:$0x8]
        %v4605 = vsel %vm1061, 0, %v4604
        %4606 = vst [vmem:[#allocation2 + $0xec] sm:$0x8] %v4605
        %v4607 = vld [vmem:[#allocation2 + $0x104] sm:$0x8]
        %v4608 = vsel %vm1061, 0, %v4607
        %4609 = vst [vmem:[#allocation2 + $0x104] sm:$0x8] %v4608
        %v4610 = vld [vmem:[#allocation2 + $0x11c] sm:$0x8]
        %v4611 = vsel %vm1061, 0, %v4610
        %4612 = vst [vmem:[#allocation2 + $0x11c] sm:$0x8] %v4611
        %v4613 = vld [vmem:[#allocation2 + $0x134] sm:$0x8]
        %v4614 = vsel %vm1061, 0, %v4613
        %4615 = vst [vmem:[#allocation2 + $0x134] sm:$0x8] %v4614
        %v4616 = vld [vmem:[#allocation2 + $0x14c] sm:$0x8]
        %v4617 = vsel %vm1061, 0, %v4616
        %4618 = vst [vmem:[#allocation2 + $0x14c] sm:$0x8] %v4617
        %v4619 = vld [vmem:[#allocation2 + $0x164] sm:$0x8]
        %v4620 = vsel %vm1061, 0, %v4619
        %4621 = vst [vmem:[#allocation2 + $0x164] sm:$0x8] %v4620
        %v4622 = vld [vmem:[#allocation2 + $0x17c] sm:$0x8]
        %v4623 = vsel %vm1061, 0, %v4622
        %4624 = vst [vmem:[#allocation2 + $0x17c] sm:$0x8] %v4623
        %v4625 = vld [vmem:[#allocation2 + $0x194] sm:$0x8]
        %v4626 = vsel %vm1061, 0, %v4625
        %4627 = vst [vmem:[#allocation2 + $0x194] sm:$0x8] %v4626
        %v4628 = vld [vmem:[#allocation2 + $0x1ac] sm:$0x8]
        %v4629 = vsel %vm1061, 0, %v4628
        %4630 = vst [vmem:[#allocation2 + $0x1ac] sm:$0x8] %v4629
        %v4631 = vld [vmem:[#allocation2] sm:$0xff]
        %v4632 = vld [vmem:[#allocation2 + $0x8] sm:$0xf]
        %v4633 = vld [vmem:[#allocation2 + $0xc] sm:$0xff]
        %v4634 = vld [vmem:[#allocation2 + $0x14] sm:$0xf]
        %v4635 = vld [vmem:[#allocation2 + $0x18] sm:$0xff]
        %v4636 = vld [vmem:[#allocation2 + $0x20] sm:$0xf]
        %v4637 = vld [vmem:[#allocation2 + $0x24] sm:$0xff]
        %v4638 = vld [vmem:[#allocation2 + $0x2c] sm:$0xf]
        %v4639 = vld [vmem:[#allocation2 + $0x30] sm:$0xff]
        %v4640 = vld [vmem:[#allocation2 + $0x38] sm:$0xf]
        %v4641 = vld [vmem:[#allocation2 + $0x3c] sm:$0xff]
        %v4642 = vld [vmem:[#allocation2 + $0x44] sm:$0xf]
        %v4643 = vld [vmem:[#allocation2 + $0x48] sm:$0xff]
        %v4644 = vld [vmem:[#allocation2 + $0x50] sm:$0xf]
        %v4645 = vld [vmem:[#allocation2 + $0x54] sm:$0xff]
        %v4646 = vld [vmem:[#allocation2 + $0x5c] sm:$0xf]
        %v4647 = vld [vmem:[#allocation2 + $0x60] sm:$0xff]
        %v4648 = vld [vmem:[#allocation2 + $0x68] sm:$0xf]
        %v4649 = vld [vmem:[#allocation2 + $0x6c] sm:$0xff]
        %v4650 = vld [vmem:[#allocation2 + $0x74] sm:$0xf]
        %v4651 = vld [vmem:[#allocation2 + $0x78] sm:$0xff]
        %v4652 = vld [vmem:[#allocation2 + $0x80] sm:$0xf]
        %v4653 = vld [vmem:[#allocation2 + $0x84] sm:$0xff]
        %v4654 = vld [vmem:[#allocation2 + $0x8c] sm:$0xf]
        %v4655 = vld [vmem:[#allocation2 + $0x90] sm:$0xff]
        %v4656 = vld [vmem:[#allocation2 + $0x98] sm:$0xf]
        %v4657 = vld [vmem:[#allocation2 + $0x9c] sm:$0xff]
        %v4658 = vld [vmem:[#allocation2 + $0xa4] sm:$0xf]
        %v4659 = vld [vmem:[#allocation2 + $0xa8] sm:$0xff]
        %v4660 = vld [vmem:[#allocation2 + $0xb0] sm:$0xf]
        %v4661 = vld [vmem:[#allocation2 + $0xb4] sm:$0xff]
        %v4662 = vld [vmem:[#allocation2 + $0xbc] sm:$0xf]
        %v4663 = vld [vmem:[#allocation2 + $0xc0] sm:$0xff]
        %v4664 = vld [vmem:[#allocation2 + $0xc8] sm:$0xf]
        %v4665 = vld [vmem:[#allocation2 + $0xcc] sm:$0xff]
        %v4666 = vld [vmem:[#allocation2 + $0xd4] sm:$0xf]
        %v4667 = vld [vmem:[#allocation2 + $0xd8] sm:$0xff]
        %v4668 = vld [vmem:[#allocation2 + $0xe0] sm:$0xf]
        %v4669 = vld [vmem:[#allocation2 + $0xe4] sm:$0xff]
        %v4670 = vld [vmem:[#allocation2 + $0xec] sm:$0xf]
        %v4671 = vld [vmem:[#allocation2 + $0xf0] sm:$0xff]
        %v4672 = vld [vmem:[#allocation2 + $0xf8] sm:$0xf]
        %v4673 = vld [vmem:[#allocation2 + $0xfc] sm:$0xff]
        %v4674 = vld [vmem:[#allocation2 + $0x104] sm:$0xf]
        %v4675 = vld [vmem:[#allocation2 + $0x108] sm:$0xff]
        %v4676 = vld [vmem:[#allocation2 + $0x110] sm:$0xf]
        %v4677 = vld [vmem:[#allocation2 + $0x114] sm:$0xff]
        %v4678 = vld [vmem:[#allocation2 + $0x11c] sm:$0xf]
        %v4679 = vld [vmem:[#allocation2 + $0x120] sm:$0xff]
        %v4680 = vld [vmem:[#allocation2 + $0x128] sm:$0xf]
        %v4681 = vld [vmem:[#allocation2 + $0x12c] sm:$0xff]
        %v4682 = vld [vmem:[#allocation2 + $0x134] sm:$0xf]
        %v4683 = vld [vmem:[#allocation2 + $0x138] sm:$0xff]
        %v4684 = vld [vmem:[#allocation2 + $0x140] sm:$0xf]
        %v4685 = vld [vmem:[#allocation2 + $0x144] sm:$0xff]
        %v4686 = vld [vmem:[#allocation2 + $0x14c] sm:$0xf]
        %v4687 = vld [vmem:[#allocation2 + $0x150] sm:$0xff]
        %v4688 = vld [vmem:[#allocation2 + $0x158] sm:$0xf]
        %v4689 = vld [vmem:[#allocation2 + $0x15c] sm:$0xff]
        %v4690 = vld [vmem:[#allocation2 + $0x164] sm:$0xf]
        %v4691 = vld [vmem:[#allocation2 + $0x168] sm:$0xff]
        %v4692 = vld [vmem:[#allocation2 + $0x170] sm:$0xf]
        %v4693 = vld [vmem:[#allocation2 + $0x174] sm:$0xff]
        %v4694 = vld [vmem:[#allocation2 + $0x17c] sm:$0xf]
        %v4695 = vld [vmem:[#allocation8] sm:$0xf]
        %v4696 = vld [vmem:[#allocation8 + $0x4] sm:$0xf]
        %v4697 = vld [vmem:[#allocation8 + $0x8] sm:$0xf]
        %v4698 = vld [vmem:[#allocation8 + $0xc] sm:$0xf]
        %v4699 = vld [vmem:[#allocation8 + $0x10] sm:$0xf]
        %v4700 = vld [vmem:[#allocation8 + $0x14] sm:$0xf]
        %v4701 = vld [vmem:[#allocation8 + $0x18] sm:$0xf]
        %v4702 = vld [vmem:[#allocation8 + $0x1c] sm:$0xf]
        %v4703 = vld [vmem:[#allocation8 + $0x20] sm:$0xf]
        %v4704 = vld [vmem:[#allocation8 + $0x24] sm:$0xf]
        %v4705 = vld [vmem:[#allocation8 + $0x28] sm:$0xf]
        %v4706 = vld [vmem:[#allocation8 + $0x2c] sm:$0xf]
        %v4707 = vld [vmem:[#allocation8 + $0x30] sm:$0xf]
        %v4708 = vld [vmem:[#allocation8 + $0x34] sm:$0xf]
        %v4709 = vld [vmem:[#allocation8 + $0x38] sm:$0xf]
        %v4710 = vld [vmem:[#allocation8 + $0x3c] sm:$0xf]
        %v4711 = vld [vmem:[#allocation8 + $0x40] sm:$0xf]
        %v4712 = vld [vmem:[#allocation8 + $0x44] sm:$0xf]
        %v4713 = vld [vmem:[#allocation8 + $0x48] sm:$0xf]
        %v4714 = vld [vmem:[#allocation8 + $0x4c] sm:$0xf]
        %v4715 = vld [vmem:[#allocation8 + $0x50] sm:$0xf]
        %v4716 = vld [vmem:[#allocation8 + $0x54] sm:$0xf]
        %v4717 = vld [vmem:[#allocation8 + $0x58] sm:$0xf]
        %v4718 = vld [vmem:[#allocation8 + $0x5c] sm:$0xf]
        %v4719 = vld [vmem:[#allocation8 + $0x60] sm:$0xf]
        %v4720 = vld [vmem:[#allocation8 + $0x64] sm:$0xf]
        %v4721 = vld [vmem:[#allocation8 + $0x68] sm:$0xf]
        %v4722 = vld [vmem:[#allocation8 + $0x6c] sm:$0xf]
        %v4723 = vld [vmem:[#allocation8 + $0x70] sm:$0xf]
        %v4724 = vld [vmem:[#allocation8 + $0x74] sm:$0xf]
        %v4725 = vld [vmem:[#allocation8 + $0x78] sm:$0xf]
        %v4726 = vld [vmem:[#allocation8 + $0x7c] sm:$0xf]
        %v4727 = vld [vmem:[#allocation8 + $0x80] sm:$0xf]
        %v4728 = vld [vmem:[#allocation8 + $0x84] sm:$0xf]
        %v4729 = vld [vmem:[#allocation8 + $0x88] sm:$0xf]
        %v4730 = vld [vmem:[#allocation8 + $0x8c] sm:$0xf]
        %v4731 = vld [vmem:[#allocation8 + $0x90] sm:$0xf]
        %v4732 = vld [vmem:[#allocation8 + $0x94] sm:$0xf]
        %v4733 = vld [vmem:[#allocation8 + $0x98] sm:$0xf]
        %v4734 = vld [vmem:[#allocation8 + $0x9c] sm:$0xf]
        %v4735 = vld [vmem:[#allocation8 + $0xa0] sm:$0xf]
        %v4736 = vld [vmem:[#allocation8 + $0xa4] sm:$0xf]
        %v4737 = vld [vmem:[#allocation8 + $0xa8] sm:$0xf]
        %v4738 = vld [vmem:[#allocation8 + $0xac] sm:$0xf]
        %v4739 = vld [vmem:[#allocation8 + $0xb0] sm:$0xf]
        %v4740 = vld [vmem:[#allocation8 + $0xb4] sm:$0xf]
        %v4741 = vld [vmem:[#allocation8 + $0xb8] sm:$0xf]
        %v4742 = vld [vmem:[#allocation8 + $0xbc] sm:$0xf]
        %v4743 = vld [vmem:[%s359] sm:$0xff]
        %v4744 = vld [vmem:[%s359 + $0x8] sm:$0xf]
        %v4745 = vld [vmem:[%s359 + $0xc] sm:$0xff]
        %v4746 = vld [vmem:[%s359 + $0x14] sm:$0xf]
        %v4747 = vld [vmem:[%s359 + $0x18] sm:$0xff]
        %v4748 = vld [vmem:[%s359 + $0x20] sm:$0xf]
        %v4749 = vld [vmem:[%s359 + $0x24] sm:$0xff]
        %v4750 = vld [vmem:[%s359 + $0x2c] sm:$0xf]
        %v4751 = vld [vmem:[%s359 + $0x30] sm:$0xff]
        %v4752 = vld [vmem:[%s359 + $0x38] sm:$0xf]
        %v4753 = vld [vmem:[%s359 + $0x3c] sm:$0xff]
        %v4754 = vld [vmem:[%s359 + $0x44] sm:$0xf]
        %v4755 = vld [vmem:[%s359 + $0x48] sm:$0xff]
        %v4756 = vld [vmem:[%s359 + $0x50] sm:$0xf]
        %v4757 = vld [vmem:[%s359 + $0x54] sm:$0xff]
        %v4758 = vld [vmem:[%s359 + $0x5c] sm:$0xf]
        %v4759 = vld [vmem:[%s359 + $0x60] sm:$0xff]
        %v4760 = vld [vmem:[%s359 + $0x68] sm:$0xf]
        %v4761 = vld [vmem:[%s359 + $0x6c] sm:$0xff]
        %v4762 = vld [vmem:[%s359 + $0x74] sm:$0xf]
        %v4763 = vld [vmem:[%s359 + $0x78] sm:$0xff]
        %v4764 = vld [vmem:[%s359 + $0x80] sm:$0xf]
        %v4765 = vld [vmem:[%s359 + $0x84] sm:$0xff]
        %v4766 = vld [vmem:[%s359 + $0x8c] sm:$0xf]
        %v4767 = vld [vmem:[%s359 + $0x90] sm:$0xff]
        %v4768 = vld [vmem:[%s359 + $0x98] sm:$0xf]
        %v4769 = vld [vmem:[%s359 + $0x9c] sm:$0xff]
        %v4770 = vld [vmem:[%s359 + $0xa4] sm:$0xf]
        %v4771 = vld [vmem:[%s359 + $0xa8] sm:$0xff]
        %v4772 = vld [vmem:[%s359 + $0xb0] sm:$0xf]
        %v4773 = vld [vmem:[%s359 + $0xb4] sm:$0xff]
        %v4774 = vld [vmem:[%s359 + $0xbc] sm:$0xf]
        %v4775 = vld [vmem:[%s359 + $0xc0] sm:$0xff]
        %v4776 = vld [vmem:[%s359 + $0xc8] sm:$0xf]
        %v4777 = vld [vmem:[%s359 + $0xcc] sm:$0xff]
        %v4778 = vld [vmem:[%s359 + $0xd4] sm:$0xf]
        %v4779 = vld [vmem:[%s359 + $0xd8] sm:$0xff]
        %v4780 = vld [vmem:[%s359 + $0xe0] sm:$0xf]
        %v4781 = vld [vmem:[%s359 + $0xe4] sm:$0xff]
        %v4782 = vld [vmem:[%s359 + $0xec] sm:$0xf]
        %v4783 = vld [vmem:[%s359 + $0xf0] sm:$0xff]
        %v4784 = vld [vmem:[%s359 + $0xf8] sm:$0xf]
        %v4785 = vld [vmem:[%s359 + $0xfc] sm:$0xff]
        %v4786 = vld [vmem:[%s359 + $0x104] sm:$0xf]
        %v4787 = vld [vmem:[%s359 + $0x108] sm:$0xff]
        %v4788 = vld [vmem:[%s359 + $0x110] sm:$0xf]
        %v4789 = vld [vmem:[%s359 + $0x114] sm:$0xff]
        %v4790 = vld [vmem:[%s359 + $0x11c] sm:$0xf]
        %v4791 = vld [vmem:[%s359 + $0x120] sm:$0xff]
        %v4792 = vld [vmem:[%s359 + $0x128] sm:$0xf]
        %v4793 = vld [vmem:[%s359 + $0x12c] sm:$0xff]
        %v4794 = vld [vmem:[%s359 + $0x134] sm:$0xf]
        %v4795 = vld [vmem:[%s359 + $0x138] sm:$0xff]
        %v4796 = vld [vmem:[%s359 + $0x140] sm:$0xf]
        %v4797 = vld [vmem:[%s359 + $0x144] sm:$0xff]
        %v4798 = vld [vmem:[%s359 + $0x14c] sm:$0xf]
        %v4799 = vld [vmem:[%s359 + $0x150] sm:$0xff]
        %v4800 = vld [vmem:[%s359 + $0x158] sm:$0xf]
        %v4801 = vld [vmem:[%s359 + $0x15c] sm:$0xff]
        %v4802 = vld [vmem:[%s359 + $0x164] sm:$0xf]
        %v4803 = vld [vmem:[%s359 + $0x168] sm:$0xff]
        %v4804 = vld [vmem:[%s359 + $0x170] sm:$0xf]
        %v4805 = vld [vmem:[%s359 + $0x174] sm:$0xff]
        %v4806 = vld [vmem:[%s359 + $0x17c] sm:$0xf]
        %s4807 = scalar_lea.vmem [#allocation8], 192
        %v4808 = vld [vmem:[%s4807] sm:$0xf]
        %v4809 = vld [vmem:[%s4807 + $0x4] sm:$0xf]
        %v4810 = vld [vmem:[%s4807 + $0x8] sm:$0xf]
        %v4811 = vld [vmem:[%s4807 + $0xc] sm:$0xf]
        %v4812 = vld [vmem:[%s4807 + $0x10] sm:$0xf]
        %v4813 = vld [vmem:[%s4807 + $0x14] sm:$0xf]
        %v4814 = vld [vmem:[%s4807 + $0x18] sm:$0xf]
        %v4815 = vld [vmem:[%s4807 + $0x1c] sm:$0xf]
        %v4816 = vld [vmem:[%s4807 + $0x20] sm:$0xf]
        %v4817 = vld [vmem:[%s4807 + $0x24] sm:$0xf]
        %v4818 = vld [vmem:[%s4807 + $0x28] sm:$0xf]
        %v4819 = vld [vmem:[%s4807 + $0x2c] sm:$0xf]
        %v4820 = vld [vmem:[%s4807 + $0x30] sm:$0xf]
        %v4821 = vld [vmem:[%s4807 + $0x34] sm:$0xf]
        %v4822 = vld [vmem:[%s4807 + $0x38] sm:$0xf]
        %v4823 = vld [vmem:[%s4807 + $0x3c] sm:$0xf]
        %v4824 = vld [vmem:[%s4807 + $0x40] sm:$0xf]
        %v4825 = vld [vmem:[%s4807 + $0x44] sm:$0xf]
        %v4826 = vld [vmem:[%s4807 + $0x48] sm:$0xf]
        %v4827 = vld [vmem:[%s4807 + $0x4c] sm:$0xf]
        %v4828 = vld [vmem:[%s4807 + $0x50] sm:$0xf]
        %v4829 = vld [vmem:[%s4807 + $0x54] sm:$0xf]
        %v4830 = vld [vmem:[%s4807 + $0x58] sm:$0xf]
        %v4831 = vld [vmem:[%s4807 + $0x5c] sm:$0xf]
        %v4832 = vld [vmem:[%s4807 + $0x60] sm:$0xf]
        %v4833 = vld [vmem:[%s4807 + $0x64] sm:$0xf]
        %v4834 = vld [vmem:[%s4807 + $0x68] sm:$0xf]
        %v4835 = vld [vmem:[%s4807 + $0x6c] sm:$0xf]
        %v4836 = vld [vmem:[%s4807 + $0x70] sm:$0xf]
        %v4837 = vld [vmem:[%s4807 + $0x74] sm:$0xf]
        %v4838 = vld [vmem:[%s4807 + $0x78] sm:$0xf]
        %v4839 = vld [vmem:[%s4807 + $0x7c] sm:$0xf]
        %v4840 = vld [vmem:[%s4807 + $0x80] sm:$0xf]
        %v4841 = vld [vmem:[%s4807 + $0x84] sm:$0xf]
        %v4842 = vld [vmem:[%s4807 + $0x88] sm:$0xf]
        %v4843 = vld [vmem:[%s4807 + $0x8c] sm:$0xf]
        %v4844 = vld [vmem:[%s4807 + $0x90] sm:$0xf]
        %v4845 = vld [vmem:[%s4807 + $0x94] sm:$0xf]
        %v4846 = vld [vmem:[%s4807 + $0x98] sm:$0xf]
        %v4847 = vld [vmem:[%s4807 + $0x9c] sm:$0xf]
        %v4848 = vld [vmem:[%s4807 + $0xa0] sm:$0xf]
        %v4849 = vld [vmem:[%s4807 + $0xa4] sm:$0xf]
        %v4850 = vld [vmem:[%s4807 + $0xa8] sm:$0xf]
        %v4851 = vld [vmem:[%s4807 + $0xac] sm:$0xf]
        %v4852 = vld [vmem:[%s4807 + $0xb0] sm:$0xf]
        %v4853 = vld [vmem:[%s4807 + $0xb4] sm:$0xf]
        %v4854 = vld [vmem:[%s4807 + $0xb8] sm:$0xf]
        %v4855 = vld [vmem:[%s4807 + $0xbc] sm:$0xf]
        %v4920 = vunpack.c.l.b16 %v4743
        %v4921 = vunpack.c.h.b16 %v4743
        %v4922 = vunpack.c.l.b16 %v4744
        %v4923 = vunpack.c.l.b16 %v4745
        %v4924 = vunpack.c.h.b16 %v4745
        %v4925 = vunpack.c.l.b16 %v4746
        %v4926 = vunpack.c.l.b16 %v4747
        %v4927 = vunpack.c.h.b16 %v4747
        %v4928 = vunpack.c.l.b16 %v4748
        %v4929 = vunpack.c.l.b16 %v4749
        %v4930 = vunpack.c.h.b16 %v4749
        %v4931 = vunpack.c.l.b16 %v4750
        %v4932 = vunpack.c.l.b16 %v4751
        %v4933 = vunpack.c.h.b16 %v4751
        %v4934 = vunpack.c.l.b16 %v4752
        %v4935 = vunpack.c.l.b16 %v4753
        %v4936 = vunpack.c.h.b16 %v4753
        %v4937 = vunpack.c.l.b16 %v4754
        %v4938 = vunpack.c.l.b16 %v4755
        %v4939 = vunpack.c.h.b16 %v4755
        %v4940 = vunpack.c.l.b16 %v4756
        %v4941 = vunpack.c.l.b16 %v4757
        %v4942 = vunpack.c.h.b16 %v4757
        %v4943 = vunpack.c.l.b16 %v4758
        %v4944 = vunpack.c.l.b16 %v4759
        %v4945 = vunpack.c.h.b16 %v4759
        %v4946 = vunpack.c.l.b16 %v4760
        %v4947 = vunpack.c.l.b16 %v4761
        %v4948 = vunpack.c.h.b16 %v4761
        %v4949 = vunpack.c.l.b16 %v4762
        %v4950 = vunpack.c.l.b16 %v4763
        %v4951 = vunpack.c.h.b16 %v4763
        %v4952 = vunpack.c.l.b16 %v4764
        %v4953 = vunpack.c.l.b16 %v4765
        %v4954 = vunpack.c.h.b16 %v4765
        %v4955 = vunpack.c.l.b16 %v4766
        %v4956 = vunpack.c.l.b16 %v4767
        %v4957 = vunpack.c.h.b16 %v4767
        %v4958 = vunpack.c.l.b16 %v4768
        %v4959 = vunpack.c.l.b16 %v4769
        %v4960 = vunpack.c.h.b16 %v4769
        %v4961 = vunpack.c.l.b16 %v4770
        %v4962 = vunpack.c.l.b16 %v4771
        %v4963 = vunpack.c.h.b16 %v4771
        %v4964 = vunpack.c.l.b16 %v4772
        %v4965 = vunpack.c.l.b16 %v4773
        %v4966 = vunpack.c.h.b16 %v4773
        %v4967 = vunpack.c.l.b16 %v4774
        %v4968 = vunpack.c.l.b16 %v4775
        %v4969 = vunpack.c.h.b16 %v4775
        %v4970 = vunpack.c.l.b16 %v4776
        %v4971 = vunpack.c.l.b16 %v4777
        %v4972 = vunpack.c.h.b16 %v4777
        %v4973 = vunpack.c.l.b16 %v4778
        %v4974 = vunpack.c.l.b16 %v4779
        %v4975 = vunpack.c.h.b16 %v4779
        %v4976 = vunpack.c.l.b16 %v4780
        %v4977 = vunpack.c.l.b16 %v4781
        %v4978 = vunpack.c.h.b16 %v4781
        %v4979 = vunpack.c.l.b16 %v4782
        %v4980 = vunpack.c.l.b16 %v4783
        %v4981 = vunpack.c.h.b16 %v4783
        %v4982 = vunpack.c.l.b16 %v4784
        %v4983 = vunpack.c.l.b16 %v4785
        %v4984 = vunpack.c.h.b16 %v4785
        %v4985 = vunpack.c.l.b16 %v4786
        %v4986 = vunpack.c.l.b16 %v4787
        %v4987 = vunpack.c.h.b16 %v4787
        %v4988 = vunpack.c.l.b16 %v4788
        %v4989 = vunpack.c.l.b16 %v4789
        %v4990 = vunpack.c.h.b16 %v4789
        %v4991 = vunpack.c.l.b16 %v4790
        %v4992 = vunpack.c.l.b16 %v4791
        %v4993 = vunpack.c.h.b16 %v4791
        %v4994 = vunpack.c.l.b16 %v4792
        %v4995 = vunpack.c.l.b16 %v4793
        %v4996 = vunpack.c.h.b16 %v4793
        %v4997 = vunpack.c.l.b16 %v4794
        %v4998 = vunpack.c.l.b16 %v4795
        %v4999 = vunpack.c.h.b16 %v4795
        %v5000 = vunpack.c.l.b16 %v4796
        %v5001 = vunpack.c.l.b16 %v4797
        %v5002 = vunpack.c.h.b16 %v4797
        %v5003 = vunpack.c.l.b16 %v4798
        %v5004 = vunpack.c.l.b16 %v4799
        %v5005 = vunpack.c.h.b16 %v4799
        %v5006 = vunpack.c.l.b16 %v4800
        %v5007 = vunpack.c.l.b16 %v4801
        %v5008 = vunpack.c.h.b16 %v4801
        %v5009 = vunpack.c.l.b16 %v4802
        %v5010 = vunpack.c.l.b16 %v4803
        %v5011 = vunpack.c.h.b16 %v4803
        %v5012 = vunpack.c.l.b16 %v4804
        %v5013 = vunpack.c.l.b16 %v4805
        %v5014 = vunpack.c.h.b16 %v4805
        %v5015 = vunpack.c.l.b16 %v4806
        %v5016 = vpack.c.b16 %v4923, %v4920
        %v5017 = vpack.c.b16 %v4924, %v4921
        %v5018 = vpack.c.b16 %v4925, %v4922
        %v5019 = vpack.c.b16 %v4929, %v4926
        %v5020 = vpack.c.b16 %v4930, %v4927
        %v5021 = vpack.c.b16 %v4931, %v4928
        %v5022 = vpack.c.b16 %v4935, %v4932
        %v5023 = vpack.c.b16 %v4936, %v4933
        %v5024 = vpack.c.b16 %v4937, %v4934
        %v5025 = vpack.c.b16 %v4941, %v4938
        %v5026 = vpack.c.b16 %v4942, %v4939
        %v5027 = vpack.c.b16 %v4943, %v4940
        %v5028 = vpack.c.b16 %v4947, %v4944
        %v5029 = vpack.c.b16 %v4948, %v4945
        %v5030 = vpack.c.b16 %v4949, %v4946
        %v5031 = vpack.c.b16 %v4953, %v4950
        %v5032 = vpack.c.b16 %v4954, %v4951
        %v5033 = vpack.c.b16 %v4955, %v4952
        %v5034 = vpack.c.b16 %v4959, %v4956
        %v5035 = vpack.c.b16 %v4960, %v4957
        %v5036 = vpack.c.b16 %v4961, %v4958
        %v5037 = vpack.c.b16 %v4965, %v4962
        %v5038 = vpack.c.b16 %v4966, %v4963
        %v5039 = vpack.c.b16 %v4967, %v4964
        %v5040 = vpack.c.b16 %v4971, %v4968
        %v5041 = vpack.c.b16 %v4972, %v4969
        %v5042 = vpack.c.b16 %v4973, %v4970
        %v5043 = vpack.c.b16 %v4977, %v4974
        %v5044 = vpack.c.b16 %v4978, %v4975
        %v5045 = vpack.c.b16 %v4979, %v4976
        %v5046 = vpack.c.b16 %v4983, %v4980
        %v5047 = vpack.c.b16 %v4984, %v4981
        %v5048 = vpack.c.b16 %v4985, %v4982
        %v5049 = vpack.c.b16 %v4989, %v4986
        %v5050 = vpack.c.b16 %v4990, %v4987
        %v5051 = vpack.c.b16 %v4991, %v4988
        %v5052 = vpack.c.b16 %v4995, %v4992
        %v5053 = vpack.c.b16 %v4996, %v4993
        %v5054 = vpack.c.b16 %v4997, %v4994
        %v5055 = vpack.c.b16 %v5001, %v4998
        %v5056 = vpack.c.b16 %v5002, %v4999
        %v5057 = vpack.c.b16 %v5003, %v5000
        %v5058 = vpack.c.b16 %v5007, %v5004
        %v5059 = vpack.c.b16 %v5008, %v5005
        %v5060 = vpack.c.b16 %v5009, %v5006
        %v5061 = vpack.c.b16 %v5013, %v5010
        %v5062 = vpack.c.b16 %v5014, %v5011
        %v5063 = vpack.c.b16 %v5015, %v5012
        %v5160 = vunpack.c.l.b16 %v4808
        %v5161 = vunpack.c.l.b16 %v4809
        %v5162 = vunpack.c.l.b16 %v4810
        %v5163 = vunpack.c.l.b16 %v4811
        %v5164 = vunpack.c.l.b16 %v4812
        %v5165 = vunpack.c.l.b16 %v4813
        %v5166 = vunpack.c.l.b16 %v4814
        %v5167 = vunpack.c.l.b16 %v4815
        %v5168 = vunpack.c.l.b16 %v4816
        %v5169 = vunpack.c.l.b16 %v4817
        %v5170 = vunpack.c.l.b16 %v4818
        %v5171 = vunpack.c.l.b16 %v4819
        %v5172 = vunpack.c.l.b16 %v4820
        %v5173 = vunpack.c.l.b16 %v4821
        %v5174 = vunpack.c.l.b16 %v4822
        %v5175 = vunpack.c.l.b16 %v4823
        %v5176 = vunpack.c.l.b16 %v4824
        %v5177 = vunpack.c.l.b16 %v4825
        %v5178 = vunpack.c.l.b16 %v4826
        %v5179 = vunpack.c.l.b16 %v4827
        %v5180 = vunpack.c.l.b16 %v4828
        %v5181 = vunpack.c.l.b16 %v4829
        %v5182 = vunpack.c.l.b16 %v4830
        %v5183 = vunpack.c.l.b16 %v4831
        %v5184 = vunpack.c.l.b16 %v4832
        %v5185 = vunpack.c.l.b16 %v4833
        %v5186 = vunpack.c.l.b16 %v4834
        %v5187 = vunpack.c.l.b16 %v4835
        %v5188 = vunpack.c.l.b16 %v4836
        %v5189 = vunpack.c.l.b16 %v4837
        %v5190 = vunpack.c.l.b16 %v4838
        %v5191 = vunpack.c.l.b16 %v4839
        %v5192 = vunpack.c.l.b16 %v4840
        %v5193 = vunpack.c.l.b16 %v4841
        %v5194 = vunpack.c.l.b16 %v4842
        %v5195 = vunpack.c.l.b16 %v4843
        %v5196 = vunpack.c.l.b16 %v4844
        %v5197 = vunpack.c.l.b16 %v4845
        %v5198 = vunpack.c.l.b16 %v4846
        %v5199 = vunpack.c.l.b16 %v4847
        %v5200 = vunpack.c.l.b16 %v4848
        %v5201 = vunpack.c.l.b16 %v4849
        %v5202 = vunpack.c.l.b16 %v4850
        %v5203 = vunpack.c.l.b16 %v4851
        %v5204 = vunpack.c.l.b16 %v4852
        %v5205 = vunpack.c.l.b16 %v4853
        %v5206 = vunpack.c.l.b16 %v4854
        %v5207 = vunpack.c.l.b16 %v4855
        %v5208 = vpack.c.b16 %v5161, %v5160
        %v5209 = vpack.c.b16 %v5163, %v5162
        %v5210 = vpack.c.b16 %v5165, %v5164
        %v5211 = vpack.c.b16 %v5167, %v5166
        %v5212 = vpack.c.b16 %v5169, %v5168
        %v5213 = vpack.c.b16 %v5171, %v5170
        %v5214 = vpack.c.b16 %v5173, %v5172
        %v5215 = vpack.c.b16 %v5175, %v5174
        %v5216 = vpack.c.b16 %v5177, %v5176
        %v5217 = vpack.c.b16 %v5179, %v5178
        %v5218 = vpack.c.b16 %v5181, %v5180
        %v5219 = vpack.c.b16 %v5183, %v5182
        %v5220 = vpack.c.b16 %v5185, %v5184
        %v5221 = vpack.c.b16 %v5187, %v5186
        %v5222 = vpack.c.b16 %v5189, %v5188
        %v5223 = vpack.c.b16 %v5191, %v5190
        %v5224 = vpack.c.b16 %v5193, %v5192
        %v5225 = vpack.c.b16 %v5195, %v5194
        %v5226 = vpack.c.b16 %v5197, %v5196
        %v5227 = vpack.c.b16 %v5199, %v5198
        %v5228 = vpack.c.b16 %v5201, %v5200
        %v5229 = vpack.c.b16 %v5203, %v5202
        %v5230 = vpack.c.b16 %v5205, %v5204
        %v5231 = vpack.c.b16 %v5207, %v5206
        %5256 = vmatprep.subr.bf16.mxu0 0
        %5257 = vmatpush1.bf16.msra.mxu0 %v5215
        %5258 = vmatprep.subr.bf16.mxu0 0
        %5259 = vmatpush1.bf16.msra.mxu0 %v5214
        %5260 = vmatprep.subr.bf16.mxu0 0
        %5261 = vmatpush1.bf16.msra.mxu0 %v5213
        %5262 = vmatprep.subr.bf16.mxu0 0
        %5263 = vmatpush1.bf16.msra.mxu0 %v5212
        %5264 = vmatprep.subr.bf16.mxu0 0
        %5265 = vmatpush1.bf16.msra.mxu0 %v5211
        %5266 = vmatprep.subr.bf16.mxu0 0
        %5267 = vmatpush1.bf16.msra.mxu0 %v5210
        %5268 = vmatprep.subr.bf16.mxu0 0
        %5269 = vmatpush1.bf16.msra.mxu0 %v5209
        %5270 = vmatprep.subr.bf16.mxu0 0
        %5271 = vmatpush1.bf16.msra.mxu0 %v5208
        %5272 = vmatprep.subr.bf16.mxu0 0
        %5273 = vmatpush2.bf16.msra.mxu0 %v5223
        %5274 = vmatprep.subr.bf16.mxu0 0
        %5275 = vmatpush2.bf16.msra.mxu0 %v5222
        %5276 = vmatprep.subr.bf16.mxu0 0
        %5277 = vmatpush2.bf16.msra.mxu0 %v5221
        %5278 = vmatprep.subr.bf16.mxu0 0
        %5279 = vmatpush2.bf16.msra.mxu0 %v5220
        %5280 = vmatprep.subr.bf16.mxu0 0
        %5281 = vmatpush2.bf16.msra.mxu0 %v5219
        %5282 = vmatprep.subr.bf16.mxu0 0
        %5283 = vmatpush2.bf16.msra.mxu0 %v5218
        %5284 = vmatprep.subr.bf16.mxu0 0
        %5285 = vmatpush2.bf16.msra.mxu0 %v5217
        %5286 = vmatprep.subr.bf16.mxu0 0
        %5287 = vmatpush2.bf16.msra.mxu0 %v5216
        %5288 = vmatprep.mubr.bf16.mxu0 %v5017
        %5289 = vmatmul.mubr.bf16.gmra.mxu0 %v5016
        %v5290 = vpop.f32.mrf.mxu0
        %v5291 = vadd.f32 0.0, %v5290
        %v5292 = vpop.f32.mrf.mxu0
        %v5293 = vpop.f32.mrf.mxu0
        %v5294 = vadd.f32 0.0, %v5293
        %v5295 = vpop.f32.mrf.mxu0
        %5296 = vmatprep.mubr.bf16.mxu0 %v5020
        %5297 = vmatmul.mubr.bf16.gmra.mxu0 %v5019
        %v5298 = vpop.f32.mrf.mxu0
        %v5299 = vadd.f32 0.0, %v5298
        %v5300 = vpop.f32.mrf.mxu0
        %v5301 = vpop.f32.mrf.mxu0
        %v5302 = vadd.f32 0.0, %v5301
        %v5303 = vpop.f32.mrf.mxu0
        %5304 = vmatprep.mubr.bf16.mxu0 %v5023
        %5305 = vmatmul.mubr.bf16.gmra.mxu0 %v5022
        %v5306 = vpop.f32.mrf.mxu0
        %v5307 = vadd.f32 0.0, %v5306
        %v5308 = vpop.f32.mrf.mxu0
        %v5309 = vpop.f32.mrf.mxu0
        %v5310 = vadd.f32 0.0, %v5309
        %v5311 = vpop.f32.mrf.mxu0
        %5312 = vmatprep.mubr.bf16.mxu0 %v5026
        %5313 = vmatmul.mubr.bf16.gmra.mxu0 %v5025
        %v5314 = vpop.f32.mrf.mxu0
        %v5315 = vadd.f32 0.0, %v5314
        %v5316 = vpop.f32.mrf.mxu0
        %v5317 = vpop.f32.mrf.mxu0
        %v5318 = vadd.f32 0.0, %v5317
        %v5319 = vpop.f32.mrf.mxu0
        %5320 = vmatprep.mubr.bf16.mxu0 %v5029
        %5321 = vmatmul.mubr.bf16.gmra.mxu0 %v5028
        %v5322 = vpop.f32.mrf.mxu0
        %v5323 = vadd.f32 0.0, %v5322
        %v5324 = vpop.f32.mrf.mxu0
        %v5325 = vpop.f32.mrf.mxu0
        %v5326 = vadd.f32 0.0, %v5325
        %v5327 = vpop.f32.mrf.mxu0
        %5328 = vmatprep.mubr.bf16.mxu0 %v5032
        %5329 = vmatmul.mubr.bf16.gmra.mxu0 %v5031
        %v5330 = vpop.f32.mrf.mxu0
        %v5331 = vadd.f32 0.0, %v5330
        %v5332 = vpop.f32.mrf.mxu0
        %v5333 = vpop.f32.mrf.mxu0
        %v5334 = vadd.f32 0.0, %v5333
        %v5335 = vpop.f32.mrf.mxu0
        %5336 = vmatprep.mubr.bf16.mxu0 %v5035
        %5337 = vmatmul.mubr.bf16.gmra.mxu0 %v5034
        %v5338 = vpop.f32.mrf.mxu0
        %v5339 = vadd.f32 0.0, %v5338
        %v5340 = vpop.f32.mrf.mxu0
        %v5341 = vpop.f32.mrf.mxu0
        %v5342 = vadd.f32 0.0, %v5341
        %v5343 = vpop.f32.mrf.mxu0
        %5344 = vmatprep.mubr.bf16.mxu0 %v5038
        %5345 = vmatmul.mubr.bf16.gmra.mxu0 %v5037
        %v5346 = vpop.f32.mrf.mxu0
        %v5347 = vadd.f32 0.0, %v5346
        %v5348 = vpop.f32.mrf.mxu0
        %v5349 = vpop.f32.mrf.mxu0
        %v5350 = vadd.f32 0.0, %v5349
        %v5351 = vpop.f32.mrf.mxu0
        %5352 = vmatprep.mubr.bf16.mxu0 %v5041
        %5353 = vmatmul.mubr.bf16.gmra.mxu0 %v5040
        %v5354 = vpop.f32.mrf.mxu0
        %v5355 = vadd.f32 0.0, %v5354
        %v5356 = vpop.f32.mrf.mxu0
        %v5357 = vpop.f32.mrf.mxu0
        %v5358 = vadd.f32 0.0, %v5357
        %v5359 = vpop.f32.mrf.mxu0
        %5360 = vmatprep.mubr.bf16.mxu0 %v5044
        %5361 = vmatmul.mubr.bf16.gmra.mxu0 %v5043
        %v5362 = vpop.f32.mrf.mxu0
        %v5363 = vadd.f32 0.0, %v5362
        %v5364 = vpop.f32.mrf.mxu0
        %v5365 = vpop.f32.mrf.mxu0
        %v5366 = vadd.f32 0.0, %v5365
        %v5367 = vpop.f32.mrf.mxu0
        %5368 = vmatprep.mubr.bf16.mxu0 %v5047
        %5369 = vmatmul.mubr.bf16.gmra.mxu0 %v5046
        %v5370 = vpop.f32.mrf.mxu0
        %v5371 = vadd.f32 0.0, %v5370
        %v5372 = vpop.f32.mrf.mxu0
        %v5373 = vpop.f32.mrf.mxu0
        %v5374 = vadd.f32 0.0, %v5373
        %v5375 = vpop.f32.mrf.mxu0
        %5376 = vmatprep.mubr.bf16.mxu0 %v5050
        %5377 = vmatmul.mubr.bf16.gmra.mxu0 %v5049
        %v5378 = vpop.f32.mrf.mxu0
        %v5379 = vadd.f32 0.0, %v5378
        %v5380 = vpop.f32.mrf.mxu0
        %v5381 = vpop.f32.mrf.mxu0
        %v5382 = vadd.f32 0.0, %v5381
        %v5383 = vpop.f32.mrf.mxu0
        %5384 = vmatprep.mubr.bf16.mxu0 %v5053
        %5385 = vmatmul.mubr.bf16.gmra.mxu0 %v5052
        %v5386 = vpop.f32.mrf.mxu0
        %v5387 = vadd.f32 0.0, %v5386
        %v5388 = vpop.f32.mrf.mxu0
        %v5389 = vpop.f32.mrf.mxu0
        %v5390 = vadd.f32 0.0, %v5389
        %v5391 = vpop.f32.mrf.mxu0
        %5392 = vmatprep.mubr.bf16.mxu0 %v5056
        %5393 = vmatmul.mubr.bf16.gmra.mxu0 %v5055
        %v5394 = vpop.f32.mrf.mxu0
        %v5395 = vadd.f32 0.0, %v5394
        %v5396 = vpop.f32.mrf.mxu0
        %v5397 = vpop.f32.mrf.mxu0
        %v5398 = vadd.f32 0.0, %v5397
        %v5399 = vpop.f32.mrf.mxu0
        %5400 = vmatprep.mubr.bf16.mxu0 %v5059
        %5401 = vmatmul.mubr.bf16.gmra.mxu0 %v5058
        %v5402 = vpop.f32.mrf.mxu0
        %v5403 = vadd.f32 0.0, %v5402
        %v5404 = vpop.f32.mrf.mxu0
        %v5405 = vpop.f32.mrf.mxu0
        %v5406 = vadd.f32 0.0, %v5405
        %v5407 = vpop.f32.mrf.mxu0
        %5408 = vmatprep.mubr.bf16.mxu0 %v5062
        %5409 = vmatmul.mubr.bf16.gmra.mxu0 %v5061
        %v5410 = vpop.f32.mrf.mxu0
        %v5411 = vadd.f32 0.0, %v5410
        %v5412 = vpop.f32.mrf.mxu0
        %v5413 = vpop.f32.mrf.mxu0
        %v5414 = vadd.f32 0.0, %v5413
        %v5415 = vpop.f32.mrf.mxu0
        %5416 = vdwg.mxu0
        %5417 = vmatprep.subr.bf16.mxu0 0
        %5418 = vmatpush1.bf16.msra.mxu0 %v5231
        %5419 = vmatprep.subr.bf16.mxu0 0
        %5420 = vmatpush1.bf16.msra.mxu0 %v5230
        %5421 = vmatprep.subr.bf16.mxu0 0
        %5422 = vmatpush1.bf16.msra.mxu0 %v5229
        %5423 = vmatprep.subr.bf16.mxu0 0
        %5424 = vmatpush1.bf16.msra.mxu0 %v5228
        %5425 = vmatprep.subr.bf16.mxu0 0
        %5426 = vmatpush1.bf16.msra.mxu0 %v5227
        %5427 = vmatprep.subr.bf16.mxu0 0
        %5428 = vmatpush1.bf16.msra.mxu0 %v5226
        %5429 = vmatprep.subr.bf16.mxu0 0
        %5430 = vmatpush1.bf16.msra.mxu0 %v5225
        %5431 = vmatprep.subr.bf16.mxu0 0
        %5432 = vmatpush1.bf16.msra.mxu0 %v5224
        %5433 = vmatprep.subr.bf16.mxu0 0
        %5434 = vmatpush2.bf16.msra.mxu0 0
        %5435 = vmatprep.subr.bf16.mxu0 0
        %5436 = vmatpush2.bf16.msra.mxu0 0
        %5437 = vmatprep.subr.bf16.mxu0 0
        %5438 = vmatpush2.bf16.msra.mxu0 0
        %5439 = vmatprep.subr.bf16.mxu0 0
        %5440 = vmatpush2.bf16.msra.mxu0 0
        %5441 = vmatprep.subr.bf16.mxu0 0
        %5442 = vmatpush2.bf16.msra.mxu0 0
        %5443 = vmatprep.subr.bf16.mxu0 0
        %5444 = vmatpush2.bf16.msra.mxu0 0
        %5445 = vmatprep.subr.bf16.mxu0 0
        %5446 = vmatpush2.bf16.msra.mxu0 0
        %5447 = vmatprep.subr.bf16.mxu0 0
        %5448 = vmatpush2.bf16.msra.mxu0 0
        %5449 = vmatprep.mubr.bf16.mxu0 0
        %5450 = vmatmul.mubr.bf16.gmra.mxu0 %v5018
        %v5451 = vpop.f32.mrf.mxu0
        %v5452 = vadd.f32 %v5291, %v5451
        %v5453 = vpop.f32.mrf.mxu0
        %v5454 = vpop.f32.mrf.mxu0
        %v5455 = vadd.f32 %v5294, %v5454
        %v5456 = vpop.f32.mrf.mxu0
        %5457 = vmatprep.mubr.bf16.mxu0 0
        %5458 = vmatmul.mubr.bf16.gmra.mxu0 %v5021
        %v5459 = vpop.f32.mrf.mxu0
        %v5460 = vadd.f32 %v5299, %v5459
        %v5461 = vpop.f32.mrf.mxu0
        %v5462 = vpop.f32.mrf.mxu0
        %v5463 = vadd.f32 %v5302, %v5462
        %v5464 = vpop.f32.mrf.mxu0
        %5465 = vmatprep.mubr.bf16.mxu0 0
        %5466 = vmatmul.mubr.bf16.gmra.mxu0 %v5024
        %v5467 = vpop.f32.mrf.mxu0
        %v5468 = vadd.f32 %v5307, %v5467
        %v5469 = vpop.f32.mrf.mxu0
        %v5470 = vpop.f32.mrf.mxu0
        %v5471 = vadd.f32 %v5310, %v5470
        %v5472 = vpop.f32.mrf.mxu0
        %5473 = vmatprep.mubr.bf16.mxu0 0
        %5474 = vmatmul.mubr.bf16.gmra.mxu0 %v5027
        %v5475 = vpop.f32.mrf.mxu0
        %v5476 = vadd.f32 %v5315, %v5475
        %v5477 = vpop.f32.mrf.mxu0
        %v5478 = vpop.f32.mrf.mxu0
        %v5479 = vadd.f32 %v5318, %v5478
        %v5480 = vpop.f32.mrf.mxu0
        %5481 = vmatprep.mubr.bf16.mxu0 0
        %5482 = vmatmul.mubr.bf16.gmra.mxu0 %v5030
        %v5483 = vpop.f32.mrf.mxu0
        %v5484 = vadd.f32 %v5323, %v5483
        %v5485 = vpop.f32.mrf.mxu0
        %v5486 = vpop.f32.mrf.mxu0
        %v5487 = vadd.f32 %v5326, %v5486
        %v5488 = vpop.f32.mrf.mxu0
        %5489 = vmatprep.mubr.bf16.mxu0 0
        %5490 = vmatmul.mubr.bf16.gmra.mxu0 %v5033
        %v5491 = vpop.f32.mrf.mxu0
        %v5492 = vadd.f32 %v5331, %v5491
        %v5493 = vpop.f32.mrf.mxu0
        %v5494 = vpop.f32.mrf.mxu0
        %v5495 = vadd.f32 %v5334, %v5494
        %v5496 = vpop.f32.mrf.mxu0
        %5497 = vmatprep.mubr.bf16.mxu0 0
        %5498 = vmatmul.mubr.bf16.gmra.mxu0 %v5036
        %v5499 = vpop.f32.mrf.mxu0
        %v5500 = vadd.f32 %v5339, %v5499
        %v5501 = vpop.f32.mrf.mxu0
        %v5502 = vpop.f32.mrf.mxu0
        %v5503 = vadd.f32 %v5342, %v5502
        %v5504 = vpop.f32.mrf.mxu0
        %5505 = vmatprep.mubr.bf16.mxu0 0
        %5506 = vmatmul.mubr.bf16.gmra.mxu0 %v5039
        %v5507 = vpop.f32.mrf.mxu0
        %v5508 = vadd.f32 %v5347, %v5507
        %v5509 = vpop.f32.mrf.mxu0
        %v5510 = vpop.f32.mrf.mxu0
        %v5511 = vadd.f32 %v5350, %v5510
        %v5512 = vpop.f32.mrf.mxu0
        %5513 = vmatprep.mubr.bf16.mxu0 0
        %5514 = vmatmul.mubr.bf16.gmra.mxu0 %v5042
        %v5515 = vpop.f32.mrf.mxu0
        %v5516 = vadd.f32 %v5355, %v5515
        %v5517 = vpop.f32.mrf.mxu0
        %v5518 = vpop.f32.mrf.mxu0
        %v5519 = vadd.f32 %v5358, %v5518
        %v5520 = vpop.f32.mrf.mxu0
        %5521 = vmatprep.mubr.bf16.mxu0 0
        %5522 = vmatmul.mubr.bf16.gmra.mxu0 %v5045
        %v5523 = vpop.f32.mrf.mxu0
        %v5524 = vadd.f32 %v5363, %v5523
        %v5525 = vpop.f32.mrf.mxu0
        %v5526 = vpop.f32.mrf.mxu0
        %v5527 = vadd.f32 %v5366, %v5526
        %v5528 = vpop.f32.mrf.mxu0
        %5529 = vmatprep.mubr.bf16.mxu0 0
        %5530 = vmatmul.mubr.bf16.gmra.mxu0 %v5048
        %v5531 = vpop.f32.mrf.mxu0
        %v5532 = vadd.f32 %v5371, %v5531
        %v5533 = vpop.f32.mrf.mxu0
        %v5534 = vpop.f32.mrf.mxu0
        %v5535 = vadd.f32 %v5374, %v5534
        %v5536 = vpop.f32.mrf.mxu0
        %5537 = vmatprep.mubr.bf16.mxu0 0
        %5538 = vmatmul.mubr.bf16.gmra.mxu0 %v5051
        %v5539 = vpop.f32.mrf.mxu0
        %v5540 = vadd.f32 %v5379, %v5539
        %v5541 = vpop.f32.mrf.mxu0
        %v5542 = vpop.f32.mrf.mxu0
        %v5543 = vadd.f32 %v5382, %v5542
        %v5544 = vpop.f32.mrf.mxu0
        %5545 = vmatprep.mubr.bf16.mxu0 0
        %5546 = vmatmul.mubr.bf16.gmra.mxu0 %v5054
        %v5547 = vpop.f32.mrf.mxu0
        %v5548 = vadd.f32 %v5387, %v5547
        %v5549 = vpop.f32.mrf.mxu0
        %v5550 = vpop.f32.mrf.mxu0
        %v5551 = vadd.f32 %v5390, %v5550
        %v5552 = vpop.f32.mrf.mxu0
        %5553 = vmatprep.mubr.bf16.mxu0 0
        %5554 = vmatmul.mubr.bf16.gmra.mxu0 %v5057
        %v5555 = vpop.f32.mrf.mxu0
        %v5556 = vadd.f32 %v5395, %v5555
        %v5557 = vpop.f32.mrf.mxu0
        %v5558 = vpop.f32.mrf.mxu0
        %v5559 = vadd.f32 %v5398, %v5558
        %v5560 = vpop.f32.mrf.mxu0
        %5561 = vmatprep.mubr.bf16.mxu0 0
        %5562 = vmatmul.mubr.bf16.gmra.mxu0 %v5060
        %v5563 = vpop.f32.mrf.mxu0
        %v5564 = vadd.f32 %v5403, %v5563
        %v5565 = vpop.f32.mrf.mxu0
        %v5566 = vpop.f32.mrf.mxu0
        %v5567 = vadd.f32 %v5406, %v5566
        %v5568 = vpop.f32.mrf.mxu0
        %5569 = vmatprep.mubr.bf16.mxu0 0
        %5570 = vmatmul.mubr.bf16.gmra.mxu0 %v5063
        %v5571 = vpop.f32.mrf.mxu0
        %v5572 = vadd.f32 %v5411, %v5571
        %v5573 = vpop.f32.mrf.mxu0
        %v5574 = vpop.f32.mrf.mxu0
        %v5575 = vadd.f32 %v5414, %v5574
        %v5576 = vpop.f32.mrf.mxu0
        %5577 = vdwg.mxu0
        %v5642 = vunpack.c.l.b16 %v4631
        %v5643 = vunpack.c.h.b16 %v4631
        %v5644 = vunpack.c.l.b16 %v4632
        %v5645 = vunpack.c.l.b16 %v4633
        %v5646 = vunpack.c.h.b16 %v4633
        %v5647 = vunpack.c.l.b16 %v4634
        %v5648 = vunpack.c.l.b16 %v4635
        %v5649 = vunpack.c.h.b16 %v4635
        %v5650 = vunpack.c.l.b16 %v4636
        %v5651 = vunpack.c.l.b16 %v4637
        %v5652 = vunpack.c.h.b16 %v4637
        %v5653 = vunpack.c.l.b16 %v4638
        %v5654 = vunpack.c.l.b16 %v4639
        %v5655 = vunpack.c.h.b16 %v4639
        %v5656 = vunpack.c.l.b16 %v4640
        %v5657 = vunpack.c.l.b16 %v4641
        %v5658 = vunpack.c.h.b16 %v4641
        %v5659 = vunpack.c.l.b16 %v4642
        %v5660 = vunpack.c.l.b16 %v4643
        %v5661 = vunpack.c.h.b16 %v4643
        %v5662 = vunpack.c.l.b16 %v4644
        %v5663 = vunpack.c.l.b16 %v4645
        %v5664 = vunpack.c.h.b16 %v4645
        %v5665 = vunpack.c.l.b16 %v4646
        %v5666 = vunpack.c.l.b16 %v4647
        %v5667 = vunpack.c.h.b16 %v4647
        %v5668 = vunpack.c.l.b16 %v4648
        %v5669 = vunpack.c.l.b16 %v4649
        %v5670 = vunpack.c.h.b16 %v4649
        %v5671 = vunpack.c.l.b16 %v4650
        %v5672 = vunpack.c.l.b16 %v4651
        %v5673 = vunpack.c.h.b16 %v4651
        %v5674 = vunpack.c.l.b16 %v4652
        %v5675 = vunpack.c.l.b16 %v4653
        %v5676 = vunpack.c.h.b16 %v4653
        %v5677 = vunpack.c.l.b16 %v4654
        %v5678 = vunpack.c.l.b16 %v4655
        %v5679 = vunpack.c.h.b16 %v4655
        %v5680 = vunpack.c.l.b16 %v4656
        %v5681 = vunpack.c.l.b16 %v4657
        %v5682 = vunpack.c.h.b16 %v4657
        %v5683 = vunpack.c.l.b16 %v4658
        %v5684 = vunpack.c.l.b16 %v4659
        %v5685 = vunpack.c.h.b16 %v4659
        %v5686 = vunpack.c.l.b16 %v4660
        %v5687 = vunpack.c.l.b16 %v4661
        %v5688 = vunpack.c.h.b16 %v4661
        %v5689 = vunpack.c.l.b16 %v4662
        %v5690 = vunpack.c.l.b16 %v4663
        %v5691 = vunpack.c.h.b16 %v4663
        %v5692 = vunpack.c.l.b16 %v4664
        %v5693 = vunpack.c.l.b16 %v4665
        %v5694 = vunpack.c.h.b16 %v4665
        %v5695 = vunpack.c.l.b16 %v4666
        %v5696 = vunpack.c.l.b16 %v4667
        %v5697 = vunpack.c.h.b16 %v4667
        %v5698 = vunpack.c.l.b16 %v4668
        %v5699 = vunpack.c.l.b16 %v4669
        %v5700 = vunpack.c.h.b16 %v4669
        %v5701 = vunpack.c.l.b16 %v4670
        %v5702 = vunpack.c.l.b16 %v4671
        %v5703 = vunpack.c.h.b16 %v4671
        %v5704 = vunpack.c.l.b16 %v4672
        %v5705 = vunpack.c.l.b16 %v4673
        %v5706 = vunpack.c.h.b16 %v4673
        %v5707 = vunpack.c.l.b16 %v4674
        %v5708 = vunpack.c.l.b16 %v4675
        %v5709 = vunpack.c.h.b16 %v4675
        %v5710 = vunpack.c.l.b16 %v4676
        %v5711 = vunpack.c.l.b16 %v4677
        %v5712 = vunpack.c.h.b16 %v4677
        %v5713 = vunpack.c.l.b16 %v4678
        %v5714 = vunpack.c.l.b16 %v4679
        %v5715 = vunpack.c.h.b16 %v4679
        %v5716 = vunpack.c.l.b16 %v4680
        %v5717 = vunpack.c.l.b16 %v4681
        %v5718 = vunpack.c.h.b16 %v4681
        %v5719 = vunpack.c.l.b16 %v4682
        %v5720 = vunpack.c.l.b16 %v4683
        %v5721 = vunpack.c.h.b16 %v4683
        %v5722 = vunpack.c.l.b16 %v4684
        %v5723 = vunpack.c.l.b16 %v4685
        %v5724 = vunpack.c.h.b16 %v4685
        %v5725 = vunpack.c.l.b16 %v4686
        %v5726 = vunpack.c.l.b16 %v4687
        %v5727 = vunpack.c.h.b16 %v4687
        %v5728 = vunpack.c.l.b16 %v4688
        %v5729 = vunpack.c.l.b16 %v4689
        %v5730 = vunpack.c.h.b16 %v4689
        %v5731 = vunpack.c.l.b16 %v4690
        %v5732 = vunpack.c.l.b16 %v4691
        %v5733 = vunpack.c.h.b16 %v4691
        %v5734 = vunpack.c.l.b16 %v4692
        %v5735 = vunpack.c.l.b16 %v4693
        %v5736 = vunpack.c.h.b16 %v4693
        %v5737 = vunpack.c.l.b16 %v4694
        %v5738 = vpack.c.b16 %v5645, %v5642
        %v5739 = vpack.c.b16 %v5646, %v5643
        %v5740 = vpack.c.b16 %v5647, %v5644
        %v5741 = vpack.c.b16 %v5651, %v5648
        %v5742 = vpack.c.b16 %v5652, %v5649
        %v5743 = vpack.c.b16 %v5653, %v5650
        %v5744 = vpack.c.b16 %v5657, %v5654
        %v5745 = vpack.c.b16 %v5658, %v5655
        %v5746 = vpack.c.b16 %v5659, %v5656
        %v5747 = vpack.c.b16 %v5663, %v5660
        %v5748 = vpack.c.b16 %v5664, %v5661
        %v5749 = vpack.c.b16 %v5665, %v5662
        %v5750 = vpack.c.b16 %v5669, %v5666
        %v5751 = vpack.c.b16 %v5670, %v5667
        %v5752 = vpack.c.b16 %v5671, %v5668
        %v5753 = vpack.c.b16 %v5675, %v5672
        %v5754 = vpack.c.b16 %v5676, %v5673
        %v5755 = vpack.c.b16 %v5677, %v5674
        %v5756 = vpack.c.b16 %v5681, %v5678
        %v5757 = vpack.c.b16 %v5682, %v5679
        %v5758 = vpack.c.b16 %v5683, %v5680
        %v5759 = vpack.c.b16 %v5687, %v5684
        %v5760 = vpack.c.b16 %v5688, %v5685
        %v5761 = vpack.c.b16 %v5689, %v5686
        %v5762 = vpack.c.b16 %v5693, %v5690
        %v5763 = vpack.c.b16 %v5694, %v5691
        %v5764 = vpack.c.b16 %v5695, %v5692
        %v5765 = vpack.c.b16 %v5699, %v5696
        %v5766 = vpack.c.b16 %v5700, %v5697
        %v5767 = vpack.c.b16 %v5701, %v5698
        %v5768 = vpack.c.b16 %v5705, %v5702
        %v5769 = vpack.c.b16 %v5706, %v5703
        %v5770 = vpack.c.b16 %v5707, %v5704
        %v5771 = vpack.c.b16 %v5711, %v5708
        %v5772 = vpack.c.b16 %v5712, %v5709
        %v5773 = vpack.c.b16 %v5713, %v5710
        %v5774 = vpack.c.b16 %v5717, %v5714
        %v5775 = vpack.c.b16 %v5718, %v5715
        %v5776 = vpack.c.b16 %v5719, %v5716
        %v5777 = vpack.c.b16 %v5723, %v5720
        %v5778 = vpack.c.b16 %v5724, %v5721
        %v5779 = vpack.c.b16 %v5725, %v5722
        %v5780 = vpack.c.b16 %v5729, %v5726
        %v5781 = vpack.c.b16 %v5730, %v5727
        %v5782 = vpack.c.b16 %v5731, %v5728
        %v5783 = vpack.c.b16 %v5735, %v5732
        %v5784 = vpack.c.b16 %v5736, %v5733
        %v5785 = vpack.c.b16 %v5737, %v5734
        %v5882 = vunpack.c.l.b16 %v4695
        %v5883 = vunpack.c.l.b16 %v4696
        %v5884 = vunpack.c.l.b16 %v4697
        %v5885 = vunpack.c.l.b16 %v4698
        %v5886 = vunpack.c.l.b16 %v4699
        %v5887 = vunpack.c.l.b16 %v4700
        %v5888 = vunpack.c.l.b16 %v4701
        %v5889 = vunpack.c.l.b16 %v4702
        %v5890 = vunpack.c.l.b16 %v4703
        %v5891 = vunpack.c.l.b16 %v4704
        %v5892 = vunpack.c.l.b16 %v4705
        %v5893 = vunpack.c.l.b16 %v4706
        %v5894 = vunpack.c.l.b16 %v4707
        %v5895 = vunpack.c.l.b16 %v4708
        %v5896 = vunpack.c.l.b16 %v4709
        %v5897 = vunpack.c.l.b16 %v4710
        %v5898 = vunpack.c.l.b16 %v4711
        %v5899 = vunpack.c.l.b16 %v4712
        %v5900 = vunpack.c.l.b16 %v4713
        %v5901 = vunpack.c.l.b16 %v4714
        %v5902 = vunpack.c.l.b16 %v4715
        %v5903 = vunpack.c.l.b16 %v4716
        %v5904 = vunpack.c.l.b16 %v4717
        %v5905 = vunpack.c.l.b16 %v4718
        %v5906 = vunpack.c.l.b16 %v4719
        %v5907 = vunpack.c.l.b16 %v4720
        %v5908 = vunpack.c.l.b16 %v4721
        %v5909 = vunpack.c.l.b16 %v4722
        %v5910 = vunpack.c.l.b16 %v4723
        %v5911 = vunpack.c.l.b16 %v4724
        %v5912 = vunpack.c.l.b16 %v4725
        %v5913 = vunpack.c.l.b16 %v4726
        %v5914 = vunpack.c.l.b16 %v4727
        %v5915 = vunpack.c.l.b16 %v4728
        %v5916 = vunpack.c.l.b16 %v4729
        %v5917 = vunpack.c.l.b16 %v4730
        %v5918 = vunpack.c.l.b16 %v4731
        %v5919 = vunpack.c.l.b16 %v4732
        %v5920 = vunpack.c.l.b16 %v4733
        %v5921 = vunpack.c.l.b16 %v4734
        %v5922 = vunpack.c.l.b16 %v4735
        %v5923 = vunpack.c.l.b16 %v4736
        %v5924 = vunpack.c.l.b16 %v4737
        %v5925 = vunpack.c.l.b16 %v4738
        %v5926 = vunpack.c.l.b16 %v4739
        %v5927 = vunpack.c.l.b16 %v4740
        %v5928 = vunpack.c.l.b16 %v4741
        %v5929 = vunpack.c.l.b16 %v4742
        %v5930 = vpack.c.b16 %v5883, %v5882
        %v5931 = vpack.c.b16 %v5885, %v5884
        %v5932 = vpack.c.b16 %v5887, %v5886
        %v5933 = vpack.c.b16 %v5889, %v5888
        %v5934 = vpack.c.b16 %v5891, %v5890
        %v5935 = vpack.c.b16 %v5893, %v5892
        %v5936 = vpack.c.b16 %v5895, %v5894
        %v5937 = vpack.c.b16 %v5897, %v5896
        %v5938 = vpack.c.b16 %v5899, %v5898
        %v5939 = vpack.c.b16 %v5901, %v5900
        %v5940 = vpack.c.b16 %v5903, %v5902
        %v5941 = vpack.c.b16 %v5905, %v5904
        %v5942 = vpack.c.b16 %v5907, %v5906
        %v5943 = vpack.c.b16 %v5909, %v5908
        %v5944 = vpack.c.b16 %v5911, %v5910
        %v5945 = vpack.c.b16 %v5913, %v5912
        %v5946 = vpack.c.b16 %v5915, %v5914
        %v5947 = vpack.c.b16 %v5917, %v5916
        %v5948 = vpack.c.b16 %v5919, %v5918
        %v5949 = vpack.c.b16 %v5921, %v5920
        %v5950 = vpack.c.b16 %v5923, %v5922
        %v5951 = vpack.c.b16 %v5925, %v5924
        %v5952 = vpack.c.b16 %v5927, %v5926
        %v5953 = vpack.c.b16 %v5929, %v5928
        %5978 = vmatprep.subr.bf16.mxu0 0
        %5979 = vmatpush1.bf16.msra.mxu0 %v5937
        %5980 = vmatprep.subr.bf16.mxu0 0
        %5981 = vmatpush1.bf16.msra.mxu0 %v5936
        %5982 = vmatprep.subr.bf16.mxu0 0
        %5983 = vmatpush1.bf16.msra.mxu0 %v5935
        %5984 = vmatprep.subr.bf16.mxu0 0
        %5985 = vmatpush1.bf16.msra.mxu0 %v5934
        %5986 = vmatprep.subr.bf16.mxu0 0
        %5987 = vmatpush1.bf16.msra.mxu0 %v5933
        %5988 = vmatprep.subr.bf16.mxu0 0
        %5989 = vmatpush1.bf16.msra.mxu0 %v5932
        %5990 = vmatprep.subr.bf16.mxu0 0
        %5991 = vmatpush1.bf16.msra.mxu0 %v5931
        %5992 = vmatprep.subr.bf16.mxu0 0
        %5993 = vmatpush1.bf16.msra.mxu0 %v5930
        %5994 = vmatprep.subr.bf16.mxu0 0
        %5995 = vmatpush2.bf16.msra.mxu0 %v5945
        %5996 = vmatprep.subr.bf16.mxu0 0
        %5997 = vmatpush2.bf16.msra.mxu0 %v5944
        %5998 = vmatprep.subr.bf16.mxu0 0
        %5999 = vmatpush2.bf16.msra.mxu0 %v5943
        %6000 = vmatprep.subr.bf16.mxu0 0
        %6001 = vmatpush2.bf16.msra.mxu0 %v5942
        %6002 = vmatprep.subr.bf16.mxu0 0
        %6003 = vmatpush2.bf16.msra.mxu0 %v5941
        %6004 = vmatprep.subr.bf16.mxu0 0
        %6005 = vmatpush2.bf16.msra.mxu0 %v5940
        %6006 = vmatprep.subr.bf16.mxu0 0
        %6007 = vmatpush2.bf16.msra.mxu0 %v5939
        %6008 = vmatprep.subr.bf16.mxu0 0
        %6009 = vmatpush2.bf16.msra.mxu0 %v5938
        %6010 = vmatprep.mubr.bf16.mxu0 %v5739
        %6011 = vmatmul.mubr.bf16.gmra.mxu0 %v5738
        %v6012 = vpop.f32.mrf.mxu0
        %v6013 = vadd.f32 %v5452, %v6012
        %v6014 = vpop.f32.mrf.mxu0
        %v6015 = vpop.f32.mrf.mxu0
        %v6016 = vadd.f32 %v5455, %v6015
        %v6017 = vpop.f32.mrf.mxu0
        %6018 = vmatprep.mubr.bf16.mxu0 %v5742
        %6019 = vmatmul.mubr.bf16.gmra.mxu0 %v5741
        %v6020 = vpop.f32.mrf.mxu0
        %v6021 = vadd.f32 %v5460, %v6020
        %v6022 = vpop.f32.mrf.mxu0
        %v6023 = vpop.f32.mrf.mxu0
        %v6024 = vadd.f32 %v5463, %v6023
        %v6025 = vpop.f32.mrf.mxu0
        %6026 = vmatprep.mubr.bf16.mxu0 %v5745
        %6027 = vmatmul.mubr.bf16.gmra.mxu0 %v5744
        %v6028 = vpop.f32.mrf.mxu0
        %v6029 = vadd.f32 %v5468, %v6028
        %v6030 = vpop.f32.mrf.mxu0
        %v6031 = vpop.f32.mrf.mxu0
        %v6032 = vadd.f32 %v5471, %v6031
        %v6033 = vpop.f32.mrf.mxu0
        %6034 = vmatprep.mubr.bf16.mxu0 %v5748
        %6035 = vmatmul.mubr.bf16.gmra.mxu0 %v5747
        %v6036 = vpop.f32.mrf.mxu0
        %v6037 = vadd.f32 %v5476, %v6036
        %v6038 = vpop.f32.mrf.mxu0
        %v6039 = vpop.f32.mrf.mxu0
        %v6040 = vadd.f32 %v5479, %v6039
        %v6041 = vpop.f32.mrf.mxu0
        %6042 = vmatprep.mubr.bf16.mxu0 %v5751
        %6043 = vmatmul.mubr.bf16.gmra.mxu0 %v5750
        %v6044 = vpop.f32.mrf.mxu0
        %v6045 = vadd.f32 %v5484, %v6044
        %v6046 = vpop.f32.mrf.mxu0
        %v6047 = vpop.f32.mrf.mxu0
        %v6048 = vadd.f32 %v5487, %v6047
        %v6049 = vpop.f32.mrf.mxu0
        %6050 = vmatprep.mubr.bf16.mxu0 %v5754
        %6051 = vmatmul.mubr.bf16.gmra.mxu0 %v5753
        %v6052 = vpop.f32.mrf.mxu0
        %v6053 = vadd.f32 %v5492, %v6052
        %v6054 = vpop.f32.mrf.mxu0
        %v6055 = vpop.f32.mrf.mxu0
        %v6056 = vadd.f32 %v5495, %v6055
        %v6057 = vpop.f32.mrf.mxu0
        %6058 = vmatprep.mubr.bf16.mxu0 %v5757
        %6059 = vmatmul.mubr.bf16.gmra.mxu0 %v5756
        %v6060 = vpop.f32.mrf.mxu0
        %v6061 = vadd.f32 %v5500, %v6060
        %v6062 = vpop.f32.mrf.mxu0
        %v6063 = vpop.f32.mrf.mxu0
        %v6064 = vadd.f32 %v5503, %v6063
        %v6065 = vpop.f32.mrf.mxu0
        %6066 = vmatprep.mubr.bf16.mxu0 %v5760
        %6067 = vmatmul.mubr.bf16.gmra.mxu0 %v5759
        %v6068 = vpop.f32.mrf.mxu0
        %v6069 = vadd.f32 %v5508, %v6068
        %v6070 = vpop.f32.mrf.mxu0
        %v6071 = vpop.f32.mrf.mxu0
        %v6072 = vadd.f32 %v5511, %v6071
        %v6073 = vpop.f32.mrf.mxu0
        %6074 = vmatprep.mubr.bf16.mxu0 %v5763
        %6075 = vmatmul.mubr.bf16.gmra.mxu0 %v5762
        %v6076 = vpop.f32.mrf.mxu0
        %v6077 = vadd.f32 %v5516, %v6076
        %v6078 = vpop.f32.mrf.mxu0
        %v6079 = vpop.f32.mrf.mxu0
        %v6080 = vadd.f32 %v5519, %v6079
        %v6081 = vpop.f32.mrf.mxu0
        %6082 = vmatprep.mubr.bf16.mxu0 %v5766
        %6083 = vmatmul.mubr.bf16.gmra.mxu0 %v5765
        %v6084 = vpop.f32.mrf.mxu0
        %v6085 = vadd.f32 %v5524, %v6084
        %v6086 = vpop.f32.mrf.mxu0
        %v6087 = vpop.f32.mrf.mxu0
        %v6088 = vadd.f32 %v5527, %v6087
        %v6089 = vpop.f32.mrf.mxu0
        %6090 = vmatprep.mubr.bf16.mxu0 %v5769
        %6091 = vmatmul.mubr.bf16.gmra.mxu0 %v5768
        %v6092 = vpop.f32.mrf.mxu0
        %v6093 = vadd.f32 %v5532, %v6092
        %v6094 = vpop.f32.mrf.mxu0
        %v6095 = vpop.f32.mrf.mxu0
        %v6096 = vadd.f32 %v5535, %v6095
        %v6097 = vpop.f32.mrf.mxu0
        %6098 = vmatprep.mubr.bf16.mxu0 %v5772
        %6099 = vmatmul.mubr.bf16.gmra.mxu0 %v5771
        %v6100 = vpop.f32.mrf.mxu0
        %v6101 = vadd.f32 %v5540, %v6100
        %v6102 = vpop.f32.mrf.mxu0
        %v6103 = vpop.f32.mrf.mxu0
        %v6104 = vadd.f32 %v5543, %v6103
        %v6105 = vpop.f32.mrf.mxu0
        %6106 = vmatprep.mubr.bf16.mxu0 %v5775
        %6107 = vmatmul.mubr.bf16.gmra.mxu0 %v5774
        %v6108 = vpop.f32.mrf.mxu0
        %v6109 = vadd.f32 %v5548, %v6108
        %v6110 = vpop.f32.mrf.mxu0
        %v6111 = vpop.f32.mrf.mxu0
        %v6112 = vadd.f32 %v5551, %v6111
        %v6113 = vpop.f32.mrf.mxu0
        %6114 = vmatprep.mubr.bf16.mxu0 %v5778
        %6115 = vmatmul.mubr.bf16.gmra.mxu0 %v5777
        %v6116 = vpop.f32.mrf.mxu0
        %v6117 = vadd.f32 %v5556, %v6116
        %v6118 = vpop.f32.mrf.mxu0
        %v6119 = vpop.f32.mrf.mxu0
        %v6120 = vadd.f32 %v5559, %v6119
        %v6121 = vpop.f32.mrf.mxu0
        %6122 = vmatprep.mubr.bf16.mxu0 %v5781
        %6123 = vmatmul.mubr.bf16.gmra.mxu0 %v5780
        %v6124 = vpop.f32.mrf.mxu0
        %v6125 = vadd.f32 %v5564, %v6124
        %v6126 = vpop.f32.mrf.mxu0
        %v6127 = vpop.f32.mrf.mxu0
        %v6128 = vadd.f32 %v5567, %v6127
        %v6129 = vpop.f32.mrf.mxu0
        %6130 = vmatprep.mubr.bf16.mxu0 %v5784
        %6131 = vmatmul.mubr.bf16.gmra.mxu0 %v5783
        %v6132 = vpop.f32.mrf.mxu0
        %v6133 = vadd.f32 %v5572, %v6132
        %v6134 = vpop.f32.mrf.mxu0
        %v6135 = vpop.f32.mrf.mxu0
        %v6136 = vadd.f32 %v5575, %v6135
        %v6137 = vpop.f32.mrf.mxu0
        %6138 = vdwg.mxu0
        %6139 = vmatprep.subr.bf16.mxu0 0
        %6140 = vmatpush1.bf16.msra.mxu0 %v5953
        %6141 = vmatprep.subr.bf16.mxu0 0
        %6142 = vmatpush1.bf16.msra.mxu0 %v5952
        %6143 = vmatprep.subr.bf16.mxu0 0
        %6144 = vmatpush1.bf16.msra.mxu0 %v5951
        %6145 = vmatprep.subr.bf16.mxu0 0
        %6146 = vmatpush1.bf16.msra.mxu0 %v5950
        %6147 = vmatprep.subr.bf16.mxu0 0
        %6148 = vmatpush1.bf16.msra.mxu0 %v5949
        %6149 = vmatprep.subr.bf16.mxu0 0
        %6150 = vmatpush1.bf16.msra.mxu0 %v5948
        %6151 = vmatprep.subr.bf16.mxu0 0
        %6152 = vmatpush1.bf16.msra.mxu0 %v5947
        %6153 = vmatprep.subr.bf16.mxu0 0
        %6154 = vmatpush1.bf16.msra.mxu0 %v5946
        %6155 = vmatprep.subr.bf16.mxu0 0
        %6156 = vmatpush2.bf16.msra.mxu0 0
        %6157 = vmatprep.subr.bf16.mxu0 0
        %6158 = vmatpush2.bf16.msra.mxu0 0
        %6159 = vmatprep.subr.bf16.mxu0 0
        %6160 = vmatpush2.bf16.msra.mxu0 0
        %6161 = vmatprep.subr.bf16.mxu0 0
        %6162 = vmatpush2.bf16.msra.mxu0 0
        %6163 = vmatprep.subr.bf16.mxu0 0
        %6164 = vmatpush2.bf16.msra.mxu0 0
        %6165 = vmatprep.subr.bf16.mxu0 0
        %6166 = vmatpush2.bf16.msra.mxu0 0
        %6167 = vmatprep.subr.bf16.mxu0 0
        %6168 = vmatpush2.bf16.msra.mxu0 0
        %6169 = vmatprep.subr.bf16.mxu0 0
        %6170 = vmatpush2.bf16.msra.mxu0 0
        %6171 = vmatprep.mubr.bf16.mxu0 0
        %6172 = vmatmul.mubr.bf16.gmra.mxu0 %v5740
        %v6173 = vpop.f32.mrf.mxu0
        %v6174 = vadd.f32 %v6013, %v6173
        %v6175 = vpop.f32.mrf.mxu0
        %v6176 = vpop.f32.mrf.mxu0
        %v6177 = vadd.f32 %v6016, %v6176
        %v6178 = vpop.f32.mrf.mxu0
        %6179 = vmatprep.mubr.bf16.mxu0 0
        %6180 = vmatmul.mubr.bf16.gmra.mxu0 %v5743
        %v6181 = vpop.f32.mrf.mxu0
        %v6182 = vadd.f32 %v6021, %v6181
        %v6183 = vpop.f32.mrf.mxu0
        %v6184 = vpop.f32.mrf.mxu0
        %v6185 = vadd.f32 %v6024, %v6184
        %v6186 = vpop.f32.mrf.mxu0
        %6187 = vmatprep.mubr.bf16.mxu0 0
        %6188 = vmatmul.mubr.bf16.gmra.mxu0 %v5746
        %v6189 = vpop.f32.mrf.mxu0
        %v6190 = vadd.f32 %v6029, %v6189
        %v6191 = vpop.f32.mrf.mxu0
        %v6192 = vpop.f32.mrf.mxu0
        %v6193 = vadd.f32 %v6032, %v6192
        %v6194 = vpop.f32.mrf.mxu0
        %6195 = vmatprep.mubr.bf16.mxu0 0
        %6196 = vmatmul.mubr.bf16.gmra.mxu0 %v5749
        %v6197 = vpop.f32.mrf.mxu0
        %v6198 = vadd.f32 %v6037, %v6197
        %v6199 = vpop.f32.mrf.mxu0
        %v6200 = vpop.f32.mrf.mxu0
        %v6201 = vadd.f32 %v6040, %v6200
        %v6202 = vpop.f32.mrf.mxu0
        %6203 = vmatprep.mubr.bf16.mxu0 0
        %6204 = vmatmul.mubr.bf16.gmra.mxu0 %v5752
        %v6205 = vpop.f32.mrf.mxu0
        %v6206 = vadd.f32 %v6045, %v6205
        %v6207 = vpop.f32.mrf.mxu0
        %v6208 = vpop.f32.mrf.mxu0
        %v6209 = vadd.f32 %v6048, %v6208
        %v6210 = vpop.f32.mrf.mxu0
        %6211 = vmatprep.mubr.bf16.mxu0 0
        %6212 = vmatmul.mubr.bf16.gmra.mxu0 %v5755
        %v6213 = vpop.f32.mrf.mxu0
        %v6214 = vadd.f32 %v6053, %v6213
        %v6215 = vpop.f32.mrf.mxu0
        %v6216 = vpop.f32.mrf.mxu0
        %v6217 = vadd.f32 %v6056, %v6216
        %v6218 = vpop.f32.mrf.mxu0
        %6219 = vmatprep.mubr.bf16.mxu0 0
        %6220 = vmatmul.mubr.bf16.gmra.mxu0 %v5758
        %v6221 = vpop.f32.mrf.mxu0
        %v6222 = vadd.f32 %v6061, %v6221
        %v6223 = vpop.f32.mrf.mxu0
        %v6224 = vpop.f32.mrf.mxu0
        %v6225 = vadd.f32 %v6064, %v6224
        %v6226 = vpop.f32.mrf.mxu0
        %6227 = vmatprep.mubr.bf16.mxu0 0
        %6228 = vmatmul.mubr.bf16.gmra.mxu0 %v5761
        %v6229 = vpop.f32.mrf.mxu0
        %v6230 = vadd.f32 %v6069, %v6229
        %v6231 = vpop.f32.mrf.mxu0
        %v6232 = vpop.f32.mrf.mxu0
        %v6233 = vadd.f32 %v6072, %v6232
        %v6234 = vpop.f32.mrf.mxu0
        %6235 = vmatprep.mubr.bf16.mxu0 0
        %6236 = vmatmul.mubr.bf16.gmra.mxu0 %v5764
        %v6237 = vpop.f32.mrf.mxu0
        %v6238 = vadd.f32 %v6077, %v6237
        %v6239 = vpop.f32.mrf.mxu0
        %v6240 = vpop.f32.mrf.mxu0
        %v6241 = vadd.f32 %v6080, %v6240
        %v6242 = vpop.f32.mrf.mxu0
        %6243 = vmatprep.mubr.bf16.mxu0 0
        %6244 = vmatmul.mubr.bf16.gmra.mxu0 %v5767
        %v6245 = vpop.f32.mrf.mxu0
        %v6246 = vadd.f32 %v6085, %v6245
        %v6247 = vpop.f32.mrf.mxu0
        %v6248 = vpop.f32.mrf.mxu0
        %v6249 = vadd.f32 %v6088, %v6248
        %v6250 = vpop.f32.mrf.mxu0
        %6251 = vmatprep.mubr.bf16.mxu0 0
        %6252 = vmatmul.mubr.bf16.gmra.mxu0 %v5770
        %v6253 = vpop.f32.mrf.mxu0
        %v6254 = vadd.f32 %v6093, %v6253
        %v6255 = vpop.f32.mrf.mxu0
        %v6256 = vpop.f32.mrf.mxu0
        %v6257 = vadd.f32 %v6096, %v6256
        %v6258 = vpop.f32.mrf.mxu0
        %6259 = vmatprep.mubr.bf16.mxu0 0
        %6260 = vmatmul.mubr.bf16.gmra.mxu0 %v5773
        %v6261 = vpop.f32.mrf.mxu0
        %v6262 = vadd.f32 %v6101, %v6261
        %v6263 = vpop.f32.mrf.mxu0
        %v6264 = vpop.f32.mrf.mxu0
        %v6265 = vadd.f32 %v6104, %v6264
        %v6266 = vpop.f32.mrf.mxu0
        %6267 = vmatprep.mubr.bf16.mxu0 0
        %6268 = vmatmul.mubr.bf16.gmra.mxu0 %v5776
        %v6269 = vpop.f32.mrf.mxu0
        %v6270 = vadd.f32 %v6109, %v6269
        %v6271 = vpop.f32.mrf.mxu0
        %v6272 = vpop.f32.mrf.mxu0
        %v6273 = vadd.f32 %v6112, %v6272
        %v6274 = vpop.f32.mrf.mxu0
        %6275 = vmatprep.mubr.bf16.mxu0 0
        %6276 = vmatmul.mubr.bf16.gmra.mxu0 %v5779
        %v6277 = vpop.f32.mrf.mxu0
        %v6278 = vadd.f32 %v6117, %v6277
        %v6279 = vpop.f32.mrf.mxu0
        %v6280 = vpop.f32.mrf.mxu0
        %v6281 = vadd.f32 %v6120, %v6280
        %v6282 = vpop.f32.mrf.mxu0
        %6283 = vmatprep.mubr.bf16.mxu0 0
        %6284 = vmatmul.mubr.bf16.gmra.mxu0 %v5782
        %v6285 = vpop.f32.mrf.mxu0
        %v6286 = vadd.f32 %v6125, %v6285
        %v6287 = vpop.f32.mrf.mxu0
        %v6288 = vpop.f32.mrf.mxu0
        %v6289 = vadd.f32 %v6128, %v6288
        %v6290 = vpop.f32.mrf.mxu0
        %6291 = vmatprep.mubr.bf16.mxu0 0
        %6292 = vmatmul.mubr.bf16.gmra.mxu0 %v5785
        %v6293 = vpop.f32.mrf.mxu0
        %v6294 = vadd.f32 %v6133, %v6293
        %v6295 = vpop.f32.mrf.mxu0
        %v6296 = vpop.f32.mrf.mxu0
        %v6297 = vadd.f32 %v6136, %v6296
        %v6298 = vpop.f32.mrf.mxu0
        %6299 = vdwg.mxu0
        %v6300 = vld [vmem:[%s2785] sm:$0xff]
        %v6301 = vld [vmem:[%s2785 + $0x8] sm:$0xf]
        %v6302 = vld [vmem:[%s2785 + $0xc] sm:$0xff]
        %v6303 = vld [vmem:[%s2785 + $0x14] sm:$0xf]
        %v6304 = vld [vmem:[%s2785 + $0x18] sm:$0xff]
        %v6305 = vld [vmem:[%s2785 + $0x20] sm:$0xf]
        %v6306 = vld [vmem:[%s2785 + $0x24] sm:$0xff]
        %v6307 = vld [vmem:[%s2785 + $0x2c] sm:$0xf]
        %v6308 = vld [vmem:[%s2785 + $0x30] sm:$0xff]
        %v6309 = vld [vmem:[%s2785 + $0x38] sm:$0xf]
        %v6310 = vld [vmem:[%s2785 + $0x3c] sm:$0xff]
        %v6311 = vld [vmem:[%s2785 + $0x44] sm:$0xf]
        %v6312 = vld [vmem:[%s2785 + $0x48] sm:$0xff]
        %v6313 = vld [vmem:[%s2785 + $0x50] sm:$0xf]
        %v6314 = vld [vmem:[%s2785 + $0x54] sm:$0xff]
        %v6315 = vld [vmem:[%s2785 + $0x5c] sm:$0xf]
        %v6316 = vld [vmem:[%s2785 + $0x60] sm:$0xff]
        %v6317 = vld [vmem:[%s2785 + $0x68] sm:$0xf]
        %v6318 = vld [vmem:[%s2785 + $0x6c] sm:$0xff]
        %v6319 = vld [vmem:[%s2785 + $0x74] sm:$0xf]
        %v6320 = vld [vmem:[%s2785 + $0x78] sm:$0xff]
        %v6321 = vld [vmem:[%s2785 + $0x80] sm:$0xf]
        %v6322 = vld [vmem:[%s2785 + $0x84] sm:$0xff]
        %v6323 = vld [vmem:[%s2785 + $0x8c] sm:$0xf]
        %v6324 = vld [vmem:[%s2785 + $0x90] sm:$0xff]
        %v6325 = vld [vmem:[%s2785 + $0x98] sm:$0xf]
        %v6326 = vld [vmem:[%s2785 + $0x9c] sm:$0xff]
        %v6327 = vld [vmem:[%s2785 + $0xa4] sm:$0xf]
        %v6328 = vld [vmem:[%s2785 + $0xa8] sm:$0xff]
        %v6329 = vld [vmem:[%s2785 + $0xb0] sm:$0xf]
        %v6330 = vld [vmem:[%s2785 + $0xb4] sm:$0xff]
        %v6331 = vld [vmem:[%s2785 + $0xbc] sm:$0xf]
        %v6332 = vld [vmem:[%s2785 + $0xc0] sm:$0xff]
        %v6333 = vld [vmem:[%s2785 + $0xc8] sm:$0xf]
        %v6334 = vld [vmem:[%s2785 + $0xcc] sm:$0xff]
        %v6335 = vld [vmem:[%s2785 + $0xd4] sm:$0xf]
        %v6336 = vld [vmem:[%s2785 + $0xd8] sm:$0xff]
        %v6337 = vld [vmem:[%s2785 + $0xe0] sm:$0xf]
        %v6338 = vld [vmem:[%s2785 + $0xe4] sm:$0xff]
        %v6339 = vld [vmem:[%s2785 + $0xec] sm:$0xf]
        %v6340 = vld [vmem:[%s2785 + $0xf0] sm:$0xff]
        %v6341 = vld [vmem:[%s2785 + $0xf8] sm:$0xf]
        %v6342 = vld [vmem:[%s2785 + $0xfc] sm:$0xff]
        %v6343 = vld [vmem:[%s2785 + $0x104] sm:$0xf]
        %v6344 = vld [vmem:[%s2785 + $0x108] sm:$0xff]
        %v6345 = vld [vmem:[%s2785 + $0x110] sm:$0xf]
        %v6346 = vld [vmem:[%s2785 + $0x114] sm:$0xff]
        %v6347 = vld [vmem:[%s2785 + $0x11c] sm:$0xf]
        %v6348 = vld [vmem:[%s2785 + $0x120] sm:$0xff]
        %v6349 = vld [vmem:[%s2785 + $0x128] sm:$0xf]
        %v6350 = vld [vmem:[%s2785 + $0x12c] sm:$0xff]
        %v6351 = vld [vmem:[%s2785 + $0x134] sm:$0xf]
        %v6352 = vld [vmem:[%s2785 + $0x138] sm:$0xff]
        %v6353 = vld [vmem:[%s2785 + $0x140] sm:$0xf]
        %v6354 = vld [vmem:[%s2785 + $0x144] sm:$0xff]
        %v6355 = vld [vmem:[%s2785 + $0x14c] sm:$0xf]
        %v6356 = vld [vmem:[%s2785 + $0x150] sm:$0xff]
        %v6357 = vld [vmem:[%s2785 + $0x158] sm:$0xf]
        %v6358 = vld [vmem:[%s2785 + $0x15c] sm:$0xff]
        %v6359 = vld [vmem:[%s2785 + $0x164] sm:$0xf]
        %v6360 = vld [vmem:[%s2785 + $0x168] sm:$0xff]
        %v6361 = vld [vmem:[%s2785 + $0x170] sm:$0xf]
        %v6362 = vld [vmem:[%s2785 + $0x174] sm:$0xff]
        %v6363 = vld [vmem:[%s2785 + $0x17c] sm:$0xf]
        %s6364 = scalar_lea.vmem [#allocation8], 384
        %v6365 = vld [vmem:[%s6364] sm:$0xf]
        %v6366 = vld [vmem:[%s6364 + $0x4] sm:$0xf]
        %v6367 = vld [vmem:[%s6364 + $0x8] sm:$0xf]
        %v6368 = vld [vmem:[%s6364 + $0xc] sm:$0xf]
        %v6369 = vld [vmem:[%s6364 + $0x10] sm:$0xf]
        %v6370 = vld [vmem:[%s6364 + $0x14] sm:$0xf]
        %v6371 = vld [vmem:[%s6364 + $0x18] sm:$0xf]
        %v6372 = vld [vmem:[%s6364 + $0x1c] sm:$0xf]
        %v6373 = vld [vmem:[%s6364 + $0x20] sm:$0xf]
        %v6374 = vld [vmem:[%s6364 + $0x24] sm:$0xf]
        %v6375 = vld [vmem:[%s6364 + $0x28] sm:$0xf]
        %v6376 = vld [vmem:[%s6364 + $0x2c] sm:$0xf]
        %v6377 = vld [vmem:[%s6364 + $0x30] sm:$0xf]
        %v6378 = vld [vmem:[%s6364 + $0x34] sm:$0xf]
        %v6379 = vld [vmem:[%s6364 + $0x38] sm:$0xf]
        %v6380 = vld [vmem:[%s6364 + $0x3c] sm:$0xf]
        %v6381 = vld [vmem:[%s6364 + $0x40] sm:$0xf]
        %v6382 = vld [vmem:[%s6364 + $0x44] sm:$0xf]
        %v6383 = vld [vmem:[%s6364 + $0x48] sm:$0xf]
        %v6384 = vld [vmem:[%s6364 + $0x4c] sm:$0xf]
        %v6385 = vld [vmem:[%s6364 + $0x50] sm:$0xf]
        %v6386 = vld [vmem:[%s6364 + $0x54] sm:$0xf]
        %v6387 = vld [vmem:[%s6364 + $0x58] sm:$0xf]
        %v6388 = vld [vmem:[%s6364 + $0x5c] sm:$0xf]
        %v6389 = vld [vmem:[%s6364 + $0x60] sm:$0xf]
        %v6390 = vld [vmem:[%s6364 + $0x64] sm:$0xf]
        %v6391 = vld [vmem:[%s6364 + $0x68] sm:$0xf]
        %v6392 = vld [vmem:[%s6364 + $0x6c] sm:$0xf]
        %v6393 = vld [vmem:[%s6364 + $0x70] sm:$0xf]
        %v6394 = vld [vmem:[%s6364 + $0x74] sm:$0xf]
        %v6395 = vld [vmem:[%s6364 + $0x78] sm:$0xf]
        %v6396 = vld [vmem:[%s6364 + $0x7c] sm:$0xf]
        %v6397 = vld [vmem:[%s6364 + $0x80] sm:$0xf]
        %v6398 = vld [vmem:[%s6364 + $0x84] sm:$0xf]
        %v6399 = vld [vmem:[%s6364 + $0x88] sm:$0xf]
        %v6400 = vld [vmem:[%s6364 + $0x8c] sm:$0xf]
        %v6401 = vld [vmem:[%s6364 + $0x90] sm:$0xf]
        %v6402 = vld [vmem:[%s6364 + $0x94] sm:$0xf]
        %v6403 = vld [vmem:[%s6364 + $0x98] sm:$0xf]
        %v6404 = vld [vmem:[%s6364 + $0x9c] sm:$0xf]
        %v6405 = vld [vmem:[%s6364 + $0xa0] sm:$0xf]
        %v6406 = vld [vmem:[%s6364 + $0xa4] sm:$0xf]
        %v6407 = vld [vmem:[%s6364 + $0xa8] sm:$0xf]
        %v6408 = vld [vmem:[%s6364 + $0xac] sm:$0xf]
        %v6409 = vld [vmem:[%s6364 + $0xb0] sm:$0xf]
        %v6410 = vld [vmem:[%s6364 + $0xb4] sm:$0xf]
        %v6411 = vld [vmem:[%s6364 + $0xb8] sm:$0xf]
        %v6412 = vld [vmem:[%s6364 + $0xbc] sm:$0xf]
        %v6477 = vunpack.c.l.b16 %v6300
        %v6478 = vunpack.c.h.b16 %v6300
        %v6479 = vunpack.c.l.b16 %v6301
        %v6480 = vunpack.c.l.b16 %v6302
        %v6481 = vunpack.c.h.b16 %v6302
        %v6482 = vunpack.c.l.b16 %v6303
        %v6483 = vunpack.c.l.b16 %v6304
        %v6484 = vunpack.c.h.b16 %v6304
        %v6485 = vunpack.c.l.b16 %v6305
        %v6486 = vunpack.c.l.b16 %v6306
        %v6487 = vunpack.c.h.b16 %v6306
        %v6488 = vunpack.c.l.b16 %v6307
        %v6489 = vunpack.c.l.b16 %v6308
        %v6490 = vunpack.c.h.b16 %v6308
        %v6491 = vunpack.c.l.b16 %v6309
        %v6492 = vunpack.c.l.b16 %v6310
        %v6493 = vunpack.c.h.b16 %v6310
        %v6494 = vunpack.c.l.b16 %v6311
        %v6495 = vunpack.c.l.b16 %v6312
        %v6496 = vunpack.c.h.b16 %v6312
        %v6497 = vunpack.c.l.b16 %v6313
        %v6498 = vunpack.c.l.b16 %v6314
        %v6499 = vunpack.c.h.b16 %v6314
        %v6500 = vunpack.c.l.b16 %v6315
        %v6501 = vunpack.c.l.b16 %v6316
        %v6502 = vunpack.c.h.b16 %v6316
        %v6503 = vunpack.c.l.b16 %v6317
        %v6504 = vunpack.c.l.b16 %v6318
        %v6505 = vunpack.c.h.b16 %v6318
        %v6506 = vunpack.c.l.b16 %v6319
        %v6507 = vunpack.c.l.b16 %v6320
        %v6508 = vunpack.c.h.b16 %v6320
        %v6509 = vunpack.c.l.b16 %v6321
        %v6510 = vunpack.c.l.b16 %v6322
        %v6511 = vunpack.c.h.b16 %v6322
        %v6512 = vunpack.c.l.b16 %v6323
        %v6513 = vunpack.c.l.b16 %v6324
        %v6514 = vunpack.c.h.b16 %v6324
        %v6515 = vunpack.c.l.b16 %v6325
        %v6516 = vunpack.c.l.b16 %v6326
        %v6517 = vunpack.c.h.b16 %v6326
        %v6518 = vunpack.c.l.b16 %v6327
        %v6519 = vunpack.c.l.b16 %v6328
        %v6520 = vunpack.c.h.b16 %v6328
        %v6521 = vunpack.c.l.b16 %v6329
        %v6522 = vunpack.c.l.b16 %v6330
        %v6523 = vunpack.c.h.b16 %v6330
        %v6524 = vunpack.c.l.b16 %v6331
        %v6525 = vunpack.c.l.b16 %v6332
        %v6526 = vunpack.c.h.b16 %v6332
        %v6527 = vunpack.c.l.b16 %v6333
        %v6528 = vunpack.c.l.b16 %v6334
        %v6529 = vunpack.c.h.b16 %v6334
        %v6530 = vunpack.c.l.b16 %v6335
        %v6531 = vunpack.c.l.b16 %v6336
        %v6532 = vunpack.c.h.b16 %v6336
        %v6533 = vunpack.c.l.b16 %v6337
        %v6534 = vunpack.c.l.b16 %v6338
        %v6535 = vunpack.c.h.b16 %v6338
        %v6536 = vunpack.c.l.b16 %v6339
        %v6537 = vunpack.c.l.b16 %v6340
        %v6538 = vunpack.c.h.b16 %v6340
        %v6539 = vunpack.c.l.b16 %v6341
        %v6540 = vunpack.c.l.b16 %v6342
        %v6541 = vunpack.c.h.b16 %v6342
        %v6542 = vunpack.c.l.b16 %v6343
        %v6543 = vunpack.c.l.b16 %v6344
        %v6544 = vunpack.c.h.b16 %v6344
        %v6545 = vunpack.c.l.b16 %v6345
        %v6546 = vunpack.c.l.b16 %v6346
        %v6547 = vunpack.c.h.b16 %v6346
        %v6548 = vunpack.c.l.b16 %v6347
        %v6549 = vunpack.c.l.b16 %v6348
        %v6550 = vunpack.c.h.b16 %v6348
        %v6551 = vunpack.c.l.b16 %v6349
        %v6552 = vunpack.c.l.b16 %v6350
        %v6553 = vunpack.c.h.b16 %v6350
        %v6554 = vunpack.c.l.b16 %v6351
        %v6555 = vunpack.c.l.b16 %v6352
        %v6556 = vunpack.c.h.b16 %v6352
        %v6557 = vunpack.c.l.b16 %v6353
        %v6558 = vunpack.c.l.b16 %v6354
        %v6559 = vunpack.c.h.b16 %v6354
        %v6560 = vunpack.c.l.b16 %v6355
        %v6561 = vunpack.c.l.b16 %v6356
        %v6562 = vunpack.c.h.b16 %v6356
        %v6563 = vunpack.c.l.b16 %v6357
        %v6564 = vunpack.c.l.b16 %v6358
        %v6565 = vunpack.c.h.b16 %v6358
        %v6566 = vunpack.c.l.b16 %v6359
        %v6567 = vunpack.c.l.b16 %v6360
        %v6568 = vunpack.c.h.b16 %v6360
        %v6569 = vunpack.c.l.b16 %v6361
        %v6570 = vunpack.c.l.b16 %v6362
        %v6571 = vunpack.c.h.b16 %v6362
        %v6572 = vunpack.c.l.b16 %v6363
        %v6573 = vpack.c.b16 %v6480, %v6477
        %v6574 = vpack.c.b16 %v6481, %v6478
        %v6575 = vpack.c.b16 %v6482, %v6479
        %v6576 = vpack.c.b16 %v6486, %v6483
        %v6577 = vpack.c.b16 %v6487, %v6484
        %v6578 = vpack.c.b16 %v6488, %v6485
        %v6579 = vpack.c.b16 %v6492, %v6489
        %v6580 = vpack.c.b16 %v6493, %v6490
        %v6581 = vpack.c.b16 %v6494, %v6491
        %v6582 = vpack.c.b16 %v6498, %v6495
        %v6583 = vpack.c.b16 %v6499, %v6496
        %v6584 = vpack.c.b16 %v6500, %v6497
        %v6585 = vpack.c.b16 %v6504, %v6501
        %v6586 = vpack.c.b16 %v6505, %v6502
        %v6587 = vpack.c.b16 %v6506, %v6503
        %v6588 = vpack.c.b16 %v6510, %v6507
        %v6589 = vpack.c.b16 %v6511, %v6508
        %v6590 = vpack.c.b16 %v6512, %v6509
        %v6591 = vpack.c.b16 %v6516, %v6513
        %v6592 = vpack.c.b16 %v6517, %v6514
        %v6593 = vpack.c.b16 %v6518, %v6515
        %v6594 = vpack.c.b16 %v6522, %v6519
        %v6595 = vpack.c.b16 %v6523, %v6520
        %v6596 = vpack.c.b16 %v6524, %v6521
        %v6597 = vpack.c.b16 %v6528, %v6525
        %v6598 = vpack.c.b16 %v6529, %v6526
        %v6599 = vpack.c.b16 %v6530, %v6527
        %v6600 = vpack.c.b16 %v6534, %v6531
        %v6601 = vpack.c.b16 %v6535, %v6532
        %v6602 = vpack.c.b16 %v6536, %v6533
        %v6603 = vpack.c.b16 %v6540, %v6537
        %v6604 = vpack.c.b16 %v6541, %v6538
        %v6605 = vpack.c.b16 %v6542, %v6539
        %v6606 = vpack.c.b16 %v6546, %v6543
        %v6607 = vpack.c.b16 %v6547, %v6544
        %v6608 = vpack.c.b16 %v6548, %v6545
        %v6609 = vpack.c.b16 %v6552, %v6549
        %v6610 = vpack.c.b16 %v6553, %v6550
        %v6611 = vpack.c.b16 %v6554, %v6551
        %v6612 = vpack.c.b16 %v6558, %v6555
        %v6613 = vpack.c.b16 %v6559, %v6556
        %v6614 = vpack.c.b16 %v6560, %v6557
        %v6615 = vpack.c.b16 %v6564, %v6561
        %v6616 = vpack.c.b16 %v6565, %v6562
        %v6617 = vpack.c.b16 %v6566, %v6563
        %v6618 = vpack.c.b16 %v6570, %v6567
        %v6619 = vpack.c.b16 %v6571, %v6568
        %v6620 = vpack.c.b16 %v6572, %v6569
        %v6717 = vunpack.c.l.b16 %v6365
        %v6718 = vunpack.c.l.b16 %v6366
        %v6719 = vunpack.c.l.b16 %v6367
        %v6720 = vunpack.c.l.b16 %v6368
        %v6721 = vunpack.c.l.b16 %v6369
        %v6722 = vunpack.c.l.b16 %v6370
        %v6723 = vunpack.c.l.b16 %v6371
        %v6724 = vunpack.c.l.b16 %v6372
        %v6725 = vunpack.c.l.b16 %v6373
        %v6726 = vunpack.c.l.b16 %v6374
        %v6727 = vunpack.c.l.b16 %v6375
        %v6728 = vunpack.c.l.b16 %v6376
        %v6729 = vunpack.c.l.b16 %v6377
        %v6730 = vunpack.c.l.b16 %v6378
        %v6731 = vunpack.c.l.b16 %v6379
        %v6732 = vunpack.c.l.b16 %v6380
        %v6733 = vunpack.c.l.b16 %v6381
        %v6734 = vunpack.c.l.b16 %v6382
        %v6735 = vunpack.c.l.b16 %v6383
        %v6736 = vunpack.c.l.b16 %v6384
        %v6737 = vunpack.c.l.b16 %v6385
        %v6738 = vunpack.c.l.b16 %v6386
        %v6739 = vunpack.c.l.b16 %v6387
        %v6740 = vunpack.c.l.b16 %v6388
        %v6741 = vunpack.c.l.b16 %v6389
        %v6742 = vunpack.c.l.b16 %v6390
        %v6743 = vunpack.c.l.b16 %v6391
        %v6744 = vunpack.c.l.b16 %v6392
        %v6745 = vunpack.c.l.b16 %v6393
        %v6746 = vunpack.c.l.b16 %v6394
        %v6747 = vunpack.c.l.b16 %v6395
        %v6748 = vunpack.c.l.b16 %v6396
        %v6749 = vunpack.c.l.b16 %v6397
        %v6750 = vunpack.c.l.b16 %v6398
        %v6751 = vunpack.c.l.b16 %v6399
        %v6752 = vunpack.c.l.b16 %v6400
        %v6753 = vunpack.c.l.b16 %v6401
        %v6754 = vunpack.c.l.b16 %v6402
        %v6755 = vunpack.c.l.b16 %v6403
        %v6756 = vunpack.c.l.b16 %v6404
        %v6757 = vunpack.c.l.b16 %v6405
        %v6758 = vunpack.c.l.b16 %v6406
        %v6759 = vunpack.c.l.b16 %v6407
        %v6760 = vunpack.c.l.b16 %v6408
        %v6761 = vunpack.c.l.b16 %v6409
        %v6762 = vunpack.c.l.b16 %v6410
        %v6763 = vunpack.c.l.b16 %v6411
        %v6764 = vunpack.c.l.b16 %v6412
        %v6765 = vpack.c.b16 %v6718, %v6717
        %v6766 = vpack.c.b16 %v6720, %v6719
        %v6767 = vpack.c.b16 %v6722, %v6721
        %v6768 = vpack.c.b16 %v6724, %v6723
        %v6769 = vpack.c.b16 %v6726, %v6725
        %v6770 = vpack.c.b16 %v6728, %v6727
        %v6771 = vpack.c.b16 %v6730, %v6729
        %v6772 = vpack.c.b16 %v6732, %v6731
        %v6773 = vpack.c.b16 %v6734, %v6733
        %v6774 = vpack.c.b16 %v6736, %v6735
        %v6775 = vpack.c.b16 %v6738, %v6737
        %v6776 = vpack.c.b16 %v6740, %v6739
        %v6777 = vpack.c.b16 %v6742, %v6741
        %v6778 = vpack.c.b16 %v6744, %v6743
        %v6779 = vpack.c.b16 %v6746, %v6745
        %v6780 = vpack.c.b16 %v6748, %v6747
        %v6781 = vpack.c.b16 %v6750, %v6749
        %v6782 = vpack.c.b16 %v6752, %v6751
        %v6783 = vpack.c.b16 %v6754, %v6753
        %v6784 = vpack.c.b16 %v6756, %v6755
        %v6785 = vpack.c.b16 %v6758, %v6757
        %v6786 = vpack.c.b16 %v6760, %v6759
        %v6787 = vpack.c.b16 %v6762, %v6761
        %v6788 = vpack.c.b16 %v6764, %v6763
        %6813 = vmatprep.subr.bf16.mxu0 0
        %6814 = vmatpush1.bf16.msra.mxu0 %v6772
        %6815 = vmatprep.subr.bf16.mxu0 0
        %6816 = vmatpush1.bf16.msra.mxu0 %v6771
        %6817 = vmatprep.subr.bf16.mxu0 0
        %6818 = vmatpush1.bf16.msra.mxu0 %v6770
        %6819 = vmatprep.subr.bf16.mxu0 0
        %6820 = vmatpush1.bf16.msra.mxu0 %v6769
        %6821 = vmatprep.subr.bf16.mxu0 0
        %6822 = vmatpush1.bf16.msra.mxu0 %v6768
        %6823 = vmatprep.subr.bf16.mxu0 0
        %6824 = vmatpush1.bf16.msra.mxu0 %v6767
        %6825 = vmatprep.subr.bf16.mxu0 0
        %6826 = vmatpush1.bf16.msra.mxu0 %v6766
        %6827 = vmatprep.subr.bf16.mxu0 0
        %6828 = vmatpush1.bf16.msra.mxu0 %v6765
        %6829 = vmatprep.subr.bf16.mxu0 0
        %6830 = vmatpush2.bf16.msra.mxu0 %v6780
        %6831 = vmatprep.subr.bf16.mxu0 0
        %6832 = vmatpush2.bf16.msra.mxu0 %v6779
        %6833 = vmatprep.subr.bf16.mxu0 0
        %6834 = vmatpush2.bf16.msra.mxu0 %v6778
        %6835 = vmatprep.subr.bf16.mxu0 0
        %6836 = vmatpush2.bf16.msra.mxu0 %v6777
        %6837 = vmatprep.subr.bf16.mxu0 0
        %6838 = vmatpush2.bf16.msra.mxu0 %v6776
        %6839 = vmatprep.subr.bf16.mxu0 0
        %6840 = vmatpush2.bf16.msra.mxu0 %v6775
        %6841 = vmatprep.subr.bf16.mxu0 0
        %6842 = vmatpush2.bf16.msra.mxu0 %v6774
        %6843 = vmatprep.subr.bf16.mxu0 0
        %6844 = vmatpush2.bf16.msra.mxu0 %v6773
        %6845 = vmatprep.mubr.bf16.mxu0 %v6574
        %6846 = vmatmul.mubr.bf16.gmra.mxu0 %v6573
        %v6847 = vpop.f32.mrf.mxu0
        %v6848 = vadd.f32 0.0, %v6847
        %v6849 = vpop.f32.mrf.mxu0
        %v6850 = vpop.f32.mrf.mxu0
        %v6851 = vadd.f32 0.0, %v6850
        %v6852 = vpop.f32.mrf.mxu0
        %6853 = vmatprep.mubr.bf16.mxu0 %v6577
        %6854 = vmatmul.mubr.bf16.gmra.mxu0 %v6576
        %v6855 = vpop.f32.mrf.mxu0
        %v6856 = vadd.f32 0.0, %v6855
        %v6857 = vpop.f32.mrf.mxu0
        %v6858 = vpop.f32.mrf.mxu0
        %v6859 = vadd.f32 0.0, %v6858
        %v6860 = vpop.f32.mrf.mxu0
        %6861 = vmatprep.mubr.bf16.mxu0 %v6580
        %6862 = vmatmul.mubr.bf16.gmra.mxu0 %v6579
        %v6863 = vpop.f32.mrf.mxu0
        %v6864 = vadd.f32 0.0, %v6863
        %v6865 = vpop.f32.mrf.mxu0
        %v6866 = vpop.f32.mrf.mxu0
        %v6867 = vadd.f32 0.0, %v6866
        %v6868 = vpop.f32.mrf.mxu0
        %6869 = vmatprep.mubr.bf16.mxu0 %v6583
        %6870 = vmatmul.mubr.bf16.gmra.mxu0 %v6582
        %v6871 = vpop.f32.mrf.mxu0
        %v6872 = vadd.f32 0.0, %v6871
        %v6873 = vpop.f32.mrf.mxu0
        %v6874 = vpop.f32.mrf.mxu0
        %v6875 = vadd.f32 0.0, %v6874
        %v6876 = vpop.f32.mrf.mxu0
        %6877 = vmatprep.mubr.bf16.mxu0 %v6586
        %6878 = vmatmul.mubr.bf16.gmra.mxu0 %v6585
        %v6879 = vpop.f32.mrf.mxu0
        %v6880 = vadd.f32 0.0, %v6879
        %v6881 = vpop.f32.mrf.mxu0
        %v6882 = vpop.f32.mrf.mxu0
        %v6883 = vadd.f32 0.0, %v6882
        %v6884 = vpop.f32.mrf.mxu0
        %6885 = vmatprep.mubr.bf16.mxu0 %v6589
        %6886 = vmatmul.mubr.bf16.gmra.mxu0 %v6588
        %v6887 = vpop.f32.mrf.mxu0
        %v6888 = vadd.f32 0.0, %v6887
        %v6889 = vpop.f32.mrf.mxu0
        %v6890 = vpop.f32.mrf.mxu0
        %v6891 = vadd.f32 0.0, %v6890
        %v6892 = vpop.f32.mrf.mxu0
        %6893 = vmatprep.mubr.bf16.mxu0 %v6592
        %6894 = vmatmul.mubr.bf16.gmra.mxu0 %v6591
        %v6895 = vpop.f32.mrf.mxu0
        %v6896 = vadd.f32 0.0, %v6895
        %v6897 = vpop.f32.mrf.mxu0
        %v6898 = vpop.f32.mrf.mxu0
        %v6899 = vadd.f32 0.0, %v6898
        %v6900 = vpop.f32.mrf.mxu0
        %6901 = vmatprep.mubr.bf16.mxu0 %v6595
        %6902 = vmatmul.mubr.bf16.gmra.mxu0 %v6594
        %v6903 = vpop.f32.mrf.mxu0
        %v6904 = vadd.f32 0.0, %v6903
        %v6905 = vpop.f32.mrf.mxu0
        %v6906 = vpop.f32.mrf.mxu0
        %v6907 = vadd.f32 0.0, %v6906
        %v6908 = vpop.f32.mrf.mxu0
        %6909 = vmatprep.mubr.bf16.mxu0 %v6598
        %6910 = vmatmul.mubr.bf16.gmra.mxu0 %v6597
        %v6911 = vpop.f32.mrf.mxu0
        %v6912 = vadd.f32 0.0, %v6911
        %v6913 = vpop.f32.mrf.mxu0
        %v6914 = vpop.f32.mrf.mxu0
        %v6915 = vadd.f32 0.0, %v6914
        %v6916 = vpop.f32.mrf.mxu0
        %6917 = vmatprep.mubr.bf16.mxu0 %v6601
        %6918 = vmatmul.mubr.bf16.gmra.mxu0 %v6600
        %v6919 = vpop.f32.mrf.mxu0
        %v6920 = vadd.f32 0.0, %v6919
        %v6921 = vpop.f32.mrf.mxu0
        %v6922 = vpop.f32.mrf.mxu0
        %v6923 = vadd.f32 0.0, %v6922
        %v6924 = vpop.f32.mrf.mxu0
        %6925 = vmatprep.mubr.bf16.mxu0 %v6604
        %6926 = vmatmul.mubr.bf16.gmra.mxu0 %v6603
        %v6927 = vpop.f32.mrf.mxu0
        %v6928 = vadd.f32 0.0, %v6927
        %v6929 = vpop.f32.mrf.mxu0
        %v6930 = vpop.f32.mrf.mxu0
        %v6931 = vadd.f32 0.0, %v6930
        %v6932 = vpop.f32.mrf.mxu0
        %6933 = vmatprep.mubr.bf16.mxu0 %v6607
        %6934 = vmatmul.mubr.bf16.gmra.mxu0 %v6606
        %v6935 = vpop.f32.mrf.mxu0
        %v6936 = vadd.f32 0.0, %v6935
        %v6937 = vpop.f32.mrf.mxu0
        %v6938 = vpop.f32.mrf.mxu0
        %v6939 = vadd.f32 0.0, %v6938
        %v6940 = vpop.f32.mrf.mxu0
        %6941 = vmatprep.mubr.bf16.mxu0 %v6610
        %6942 = vmatmul.mubr.bf16.gmra.mxu0 %v6609
        %v6943 = vpop.f32.mrf.mxu0
        %v6944 = vadd.f32 0.0, %v6943
        %v6945 = vpop.f32.mrf.mxu0
        %v6946 = vpop.f32.mrf.mxu0
        %v6947 = vadd.f32 0.0, %v6946
        %v6948 = vpop.f32.mrf.mxu0
        %6949 = vmatprep.mubr.bf16.mxu0 %v6613
        %6950 = vmatmul.mubr.bf16.gmra.mxu0 %v6612
        %v6951 = vpop.f32.mrf.mxu0
        %v6952 = vadd.f32 0.0, %v6951
        %v6953 = vpop.f32.mrf.mxu0
        %v6954 = vpop.f32.mrf.mxu0
        %v6955 = vadd.f32 0.0, %v6954
        %v6956 = vpop.f32.mrf.mxu0
        %6957 = vmatprep.mubr.bf16.mxu0 %v6616
        %6958 = vmatmul.mubr.bf16.gmra.mxu0 %v6615
        %v6959 = vpop.f32.mrf.mxu0
        %v6960 = vadd.f32 0.0, %v6959
        %v6961 = vpop.f32.mrf.mxu0
        %v6962 = vpop.f32.mrf.mxu0
        %v6963 = vadd.f32 0.0, %v6962
        %v6964 = vpop.f32.mrf.mxu0
        %6965 = vmatprep.mubr.bf16.mxu0 %v6619
        %6966 = vmatmul.mubr.bf16.gmra.mxu0 %v6618
        %v6967 = vpop.f32.mrf.mxu0
        %v6968 = vadd.f32 0.0, %v6967
        %v6969 = vpop.f32.mrf.mxu0
        %v6970 = vpop.f32.mrf.mxu0
        %v6971 = vadd.f32 0.0, %v6970
        %v6972 = vpop.f32.mrf.mxu0
        %6973 = vdwg.mxu0
        %6974 = vmatprep.subr.bf16.mxu0 0
        %6975 = vmatpush1.bf16.msra.mxu0 %v6788
        %6976 = vmatprep.subr.bf16.mxu0 0
        %6977 = vmatpush1.bf16.msra.mxu0 %v6787
        %6978 = vmatprep.subr.bf16.mxu0 0
        %6979 = vmatpush1.bf16.msra.mxu0 %v6786
        %6980 = vmatprep.subr.bf16.mxu0 0
        %6981 = vmatpush1.bf16.msra.mxu0 %v6785
        %6982 = vmatprep.subr.bf16.mxu0 0
        %6983 = vmatpush1.bf16.msra.mxu0 %v6784
        %6984 = vmatprep.subr.bf16.mxu0 0
        %6985 = vmatpush1.bf16.msra.mxu0 %v6783
        %6986 = vmatprep.subr.bf16.mxu0 0
        %6987 = vmatpush1.bf16.msra.mxu0 %v6782
        %6988 = vmatprep.subr.bf16.mxu0 0
        %6989 = vmatpush1.bf16.msra.mxu0 %v6781
        %6990 = vmatprep.subr.bf16.mxu0 0
        %6991 = vmatpush2.bf16.msra.mxu0 0
        %6992 = vmatprep.subr.bf16.mxu0 0
        %6993 = vmatpush2.bf16.msra.mxu0 0
        %6994 = vmatprep.subr.bf16.mxu0 0
        %6995 = vmatpush2.bf16.msra.mxu0 0
        %6996 = vmatprep.subr.bf16.mxu0 0
        %6997 = vmatpush2.bf16.msra.mxu0 0
        %6998 = vmatprep.subr.bf16.mxu0 0
        %6999 = vmatpush2.bf16.msra.mxu0 0
        %7000 = vmatprep.subr.bf16.mxu0 0
        %7001 = vmatpush2.bf16.msra.mxu0 0
        %7002 = vmatprep.subr.bf16.mxu0 0
        %7003 = vmatpush2.bf16.msra.mxu0 0
        %7004 = vmatprep.subr.bf16.mxu0 0
        %7005 = vmatpush2.bf16.msra.mxu0 0
        %7006 = vmatprep.mubr.bf16.mxu0 0
        %7007 = vmatmul.mubr.bf16.gmra.mxu0 %v6575
        %v7008 = vpop.f32.mrf.mxu0
        %v7009 = vadd.f32 %v6848, %v7008
        %v7010 = vpop.f32.mrf.mxu0
        %v7011 = vpop.f32.mrf.mxu0
        %v7012 = vadd.f32 %v6851, %v7011
        %v7013 = vpop.f32.mrf.mxu0
        %7014 = vmatprep.mubr.bf16.mxu0 0
        %7015 = vmatmul.mubr.bf16.gmra.mxu0 %v6578
        %v7016 = vpop.f32.mrf.mxu0
        %v7017 = vadd.f32 %v6856, %v7016
        %v7018 = vpop.f32.mrf.mxu0
        %v7019 = vpop.f32.mrf.mxu0
        %v7020 = vadd.f32 %v6859, %v7019
        %v7021 = vpop.f32.mrf.mxu0
        %7022 = vmatprep.mubr.bf16.mxu0 0
        %7023 = vmatmul.mubr.bf16.gmra.mxu0 %v6581
        %v7024 = vpop.f32.mrf.mxu0
        %v7025 = vadd.f32 %v6864, %v7024
        %v7026 = vpop.f32.mrf.mxu0
        %v7027 = vpop.f32.mrf.mxu0
        %v7028 = vadd.f32 %v6867, %v7027
        %v7029 = vpop.f32.mrf.mxu0
        %7030 = vmatprep.mubr.bf16.mxu0 0
        %7031 = vmatmul.mubr.bf16.gmra.mxu0 %v6584
        %v7032 = vpop.f32.mrf.mxu0
        %v7033 = vadd.f32 %v6872, %v7032
        %v7034 = vpop.f32.mrf.mxu0
        %v7035 = vpop.f32.mrf.mxu0
        %v7036 = vadd.f32 %v6875, %v7035
        %v7037 = vpop.f32.mrf.mxu0
        %7038 = vmatprep.mubr.bf16.mxu0 0
        %7039 = vmatmul.mubr.bf16.gmra.mxu0 %v6587
        %v7040 = vpop.f32.mrf.mxu0
        %v7041 = vadd.f32 %v6880, %v7040
        %v7042 = vpop.f32.mrf.mxu0
        %v7043 = vpop.f32.mrf.mxu0
        %v7044 = vadd.f32 %v6883, %v7043
        %v7045 = vpop.f32.mrf.mxu0
        %7046 = vmatprep.mubr.bf16.mxu0 0
        %7047 = vmatmul.mubr.bf16.gmra.mxu0 %v6590
        %v7048 = vpop.f32.mrf.mxu0
        %v7049 = vadd.f32 %v6888, %v7048
        %v7050 = vpop.f32.mrf.mxu0
        %v7051 = vpop.f32.mrf.mxu0
        %v7052 = vadd.f32 %v6891, %v7051
        %v7053 = vpop.f32.mrf.mxu0
        %7054 = vmatprep.mubr.bf16.mxu0 0
        %7055 = vmatmul.mubr.bf16.gmra.mxu0 %v6593
        %v7056 = vpop.f32.mrf.mxu0
        %v7057 = vadd.f32 %v6896, %v7056
        %v7058 = vpop.f32.mrf.mxu0
        %v7059 = vpop.f32.mrf.mxu0
        %v7060 = vadd.f32 %v6899, %v7059
        %v7061 = vpop.f32.mrf.mxu0
        %7062 = vmatprep.mubr.bf16.mxu0 0
        %7063 = vmatmul.mubr.bf16.gmra.mxu0 %v6596
        %v7064 = vpop.f32.mrf.mxu0
        %v7065 = vadd.f32 %v6904, %v7064
        %v7066 = vpop.f32.mrf.mxu0
        %v7067 = vpop.f32.mrf.mxu0
        %v7068 = vadd.f32 %v6907, %v7067
        %v7069 = vpop.f32.mrf.mxu0
        %7070 = vmatprep.mubr.bf16.mxu0 0
        %7071 = vmatmul.mubr.bf16.gmra.mxu0 %v6599
        %v7072 = vpop.f32.mrf.mxu0
        %v7073 = vadd.f32 %v6912, %v7072
        %v7074 = vpop.f32.mrf.mxu0
        %v7075 = vpop.f32.mrf.mxu0
        %v7076 = vadd.f32 %v6915, %v7075
        %v7077 = vpop.f32.mrf.mxu0
        %7078 = vmatprep.mubr.bf16.mxu0 0
        %7079 = vmatmul.mubr.bf16.gmra.mxu0 %v6602
        %v7080 = vpop.f32.mrf.mxu0
        %v7081 = vadd.f32 %v6920, %v7080
        %v7082 = vpop.f32.mrf.mxu0
        %v7083 = vpop.f32.mrf.mxu0
        %v7084 = vadd.f32 %v6923, %v7083
        %v7085 = vpop.f32.mrf.mxu0
        %7086 = vmatprep.mubr.bf16.mxu0 0
        %7087 = vmatmul.mubr.bf16.gmra.mxu0 %v6605
        %v7088 = vpop.f32.mrf.mxu0
        %v7089 = vadd.f32 %v6928, %v7088
        %v7090 = vpop.f32.mrf.mxu0
        %v7091 = vpop.f32.mrf.mxu0
        %v7092 = vadd.f32 %v6931, %v7091
        %v7093 = vpop.f32.mrf.mxu0
        %7094 = vmatprep.mubr.bf16.mxu0 0
        %7095 = vmatmul.mubr.bf16.gmra.mxu0 %v6608
        %v7096 = vpop.f32.mrf.mxu0
        %v7097 = vadd.f32 %v6936, %v7096
        %v7098 = vpop.f32.mrf.mxu0
        %v7099 = vpop.f32.mrf.mxu0
        %v7100 = vadd.f32 %v6939, %v7099
        %v7101 = vpop.f32.mrf.mxu0
        %7102 = vmatprep.mubr.bf16.mxu0 0
        %7103 = vmatmul.mubr.bf16.gmra.mxu0 %v6611
        %v7104 = vpop.f32.mrf.mxu0
        %v7105 = vadd.f32 %v6944, %v7104
        %v7106 = vpop.f32.mrf.mxu0
        %v7107 = vpop.f32.mrf.mxu0
        %v7108 = vadd.f32 %v6947, %v7107
        %v7109 = vpop.f32.mrf.mxu0
        %7110 = vmatprep.mubr.bf16.mxu0 0
        %7111 = vmatmul.mubr.bf16.gmra.mxu0 %v6614
        %v7112 = vpop.f32.mrf.mxu0
        %v7113 = vadd.f32 %v6952, %v7112
        %v7114 = vpop.f32.mrf.mxu0
        %v7115 = vpop.f32.mrf.mxu0
        %v7116 = vadd.f32 %v6955, %v7115
        %v7117 = vpop.f32.mrf.mxu0
        %7118 = vmatprep.mubr.bf16.mxu0 0
        %7119 = vmatmul.mubr.bf16.gmra.mxu0 %v6617
        %v7120 = vpop.f32.mrf.mxu0
        %v7121 = vadd.f32 %v6960, %v7120
        %v7122 = vpop.f32.mrf.mxu0
        %v7123 = vpop.f32.mrf.mxu0
        %v7124 = vadd.f32 %v6963, %v7123
        %v7125 = vpop.f32.mrf.mxu0
        %7126 = vmatprep.mubr.bf16.mxu0 0
        %7127 = vmatmul.mubr.bf16.gmra.mxu0 %v6620
        %v7128 = vpop.f32.mrf.mxu0
        %v7129 = vadd.f32 %v6968, %v7128
        %v7130 = vpop.f32.mrf.mxu0
        %v7131 = vpop.f32.mrf.mxu0
        %v7132 = vadd.f32 %v6971, %v7131
        %v7133 = vpop.f32.mrf.mxu0
        %7134 = vdwg.mxu0
        %v7135 = vadd.f32 %v6174, %v7009
        %v7136 = vadd.f32 %v6177, %v7012
        %v7137 = vadd.f32 %v6182, %v7017
        %v7138 = vadd.f32 %v6185, %v7020
        %v7139 = vadd.f32 %v6190, %v7025
        %v7140 = vadd.f32 %v6193, %v7028
        %v7141 = vadd.f32 %v6198, %v7033
        %v7142 = vadd.f32 %v6201, %v7036
        %v7143 = vadd.f32 %v6206, %v7041
        %v7144 = vadd.f32 %v6209, %v7044
        %v7145 = vadd.f32 %v6214, %v7049
        %v7146 = vadd.f32 %v6217, %v7052
        %v7147 = vadd.f32 %v6222, %v7057
        %v7148 = vadd.f32 %v6225, %v7060
        %v7149 = vadd.f32 %v6230, %v7065
        %v7150 = vadd.f32 %v6233, %v7068
        %v7151 = vadd.f32 %v6238, %v7073
        %v7152 = vadd.f32 %v6241, %v7076
        %v7153 = vadd.f32 %v6246, %v7081
        %v7154 = vadd.f32 %v6249, %v7084
        %v7155 = vadd.f32 %v6254, %v7089
        %v7156 = vadd.f32 %v6257, %v7092
        %v7157 = vadd.f32 %v6262, %v7097
        %v7158 = vadd.f32 %v6265, %v7100
        %v7159 = vadd.f32 %v6270, %v7105
        %v7160 = vadd.f32 %v6273, %v7108
        %v7161 = vadd.f32 %v6278, %v7113
        %v7162 = vadd.f32 %v6281, %v7116
        %v7163 = vadd.f32 %v6286, %v7121
        %v7164 = vadd.f32 %v6289, %v7124
        %v7165 = vadd.f32 %v6294, %v7129
        %v7166 = vadd.f32 %v6297, %v7132
        %v7167 = vld [vmem:[%s5] sm:$0x1]
        %v7169 = vlaneseq
        %v7170 = vshrl.u32 %v7169, 7
        %v7171 = vsub.s32 0, %v7170
        %v7172 = vrot.slane %v7167, %v7171
        %v7174 = vmul.f32 %v7135, %v7172
        %v7175 = vmul.f32 %v7136, %v7172
        %v7176 = vmul.f32 %v7137, %v7172
        %v7177 = vmul.f32 %v7138, %v7172
        %v7178 = vmul.f32 %v7139, %v7172
        %v7179 = vmul.f32 %v7140, %v7172
        %v7180 = vmul.f32 %v7141, %v7172
        %v7181 = vmul.f32 %v7142, %v7172
        %v7182 = vmul.f32 %v7143, %v7172
        %v7183 = vmul.f32 %v7144, %v7172
        %v7184 = vmul.f32 %v7145, %v7172
        %v7185 = vmul.f32 %v7146, %v7172
        %v7186 = vmul.f32 %v7147, %v7172
        %v7187 = vmul.f32 %v7148, %v7172
        %v7188 = vmul.f32 %v7149, %v7172
        %v7189 = vmul.f32 %v7150, %v7172
        %v7190 = vmul.f32 %v7151, %v7172
        %v7191 = vmul.f32 %v7152, %v7172
        %v7192 = vmul.f32 %v7153, %v7172
        %v7193 = vmul.f32 %v7154, %v7172
        %v7194 = vmul.f32 %v7155, %v7172
        %v7195 = vmul.f32 %v7156, %v7172
        %v7196 = vmul.f32 %v7157, %v7172
        %v7197 = vmul.f32 %v7158, %v7172
        %v7198 = vmul.f32 %v7159, %v7172
        %v7199 = vmul.f32 %v7160, %v7172
        %v7200 = vmul.f32 %v7161, %v7172
        %v7201 = vmul.f32 %v7162, %v7172
        %v7202 = vmul.f32 %v7163, %v7172
        %v7203 = vmul.f32 %v7164, %v7172
        %v7204 = vmul.f32 %v7165, %v7172
        %v7205 = vmul.f32 %v7166, %v7172
        %v7206 = vld [vmem:[%s6] sm:$0x1]
        %v7208 = vlaneseq
        %v7209 = vshrl.u32 %v7208, 7
        %v7210 = vsub.s32 0, %v7209
        %v7211 = vrot.slane %v7206, %v7210
        %v7213 = vadd.f32 %v7174, %v7211
        %v7214 = vadd.f32 %v7175, %v7211
        %v7215 = vadd.f32 %v7176, %v7211
        %v7216 = vadd.f32 %v7177, %v7211
        %v7217 = vadd.f32 %v7178, %v7211
        %v7218 = vadd.f32 %v7179, %v7211
        %v7219 = vadd.f32 %v7180, %v7211
        %v7220 = vadd.f32 %v7181, %v7211
        %v7221 = vadd.f32 %v7182, %v7211
        %v7222 = vadd.f32 %v7183, %v7211
        %v7223 = vadd.f32 %v7184, %v7211
        %v7224 = vadd.f32 %v7185, %v7211
        %v7225 = vadd.f32 %v7186, %v7211
        %v7226 = vadd.f32 %v7187, %v7211
        %v7227 = vadd.f32 %v7188, %v7211
        %v7228 = vadd.f32 %v7189, %v7211
        %v7229 = vadd.f32 %v7190, %v7211
        %v7230 = vadd.f32 %v7191, %v7211
        %v7231 = vadd.f32 %v7192, %v7211
        %v7232 = vadd.f32 %v7193, %v7211
        %v7233 = vadd.f32 %v7194, %v7211
        %v7234 = vadd.f32 %v7195, %v7211
        %v7235 = vadd.f32 %v7196, %v7211
        %v7236 = vadd.f32 %v7197, %v7211
        %v7237 = vadd.f32 %v7198, %v7211
        %v7238 = vadd.f32 %v7199, %v7211
        %v7239 = vadd.f32 %v7200, %v7211
        %v7240 = vadd.f32 %v7201, %v7211
        %v7241 = vadd.f32 %v7202, %v7211
        %v7242 = vadd.f32 %v7203, %v7211
        %v7243 = vadd.f32 %v7204, %v7211
        %v7244 = vadd.f32 %v7205, %v7211
        %v7245 = vunpack.c.l.bf16 %v327
        %v7246 = vunpack.c.l.bf16 %v328
        %v7247 = vunpack.c.l.bf16 %v329
        %v7248 = vunpack.c.l.bf16 %v330
        %v7249 = vunpack.c.l.bf16 %v331
        %v7250 = vunpack.c.l.bf16 %v332
        %v7251 = vunpack.c.l.bf16 %v333
        %v7252 = vunpack.c.l.bf16 %v334
        %v7253 = vunpack.c.l.bf16 %v335
        %v7254 = vunpack.c.l.bf16 %v336
        %v7255 = vunpack.c.l.bf16 %v337
        %v7256 = vunpack.c.l.bf16 %v338
        %v7257 = vunpack.c.l.bf16 %v339
        %v7258 = vunpack.c.l.bf16 %v340
        %v7259 = vunpack.c.l.bf16 %v341
        %v7260 = vunpack.c.l.bf16 %v342
        %v7261 = vunpack.c.l.bf16 %v343
        %v7262 = vunpack.c.l.bf16 %v344
        %v7263 = vunpack.c.l.bf16 %v345
        %v7264 = vunpack.c.l.bf16 %v346
        %v7265 = vunpack.c.l.bf16 %v347
        %v7266 = vunpack.c.l.bf16 %v348
        %v7267 = vunpack.c.l.bf16 %v349
        %v7268 = vunpack.c.l.bf16 %v350
        %v7269 = vunpack.c.l.bf16 %v351
        %v7270 = vunpack.c.l.bf16 %v352
        %v7271 = vunpack.c.l.bf16 %v353
        %v7272 = vunpack.c.l.bf16 %v354
        %v7273 = vunpack.c.l.bf16 %v355
        %v7274 = vunpack.c.l.bf16 %v356
        %v7275 = vunpack.c.l.bf16 %v357
        %v7276 = vunpack.c.l.bf16 %v358
        %v7277 = vadd.f32 %v7213, %v7245
        %v7278 = vadd.f32 %v7214, %v7246
        %v7279 = vadd.f32 %v7215, %v7247
        %v7280 = vadd.f32 %v7216, %v7248
        %v7281 = vadd.f32 %v7217, %v7249
        %v7282 = vadd.f32 %v7218, %v7250
        %v7283 = vadd.f32 %v7219, %v7251
        %v7284 = vadd.f32 %v7220, %v7252
        %v7285 = vadd.f32 %v7221, %v7253
        %v7286 = vadd.f32 %v7222, %v7254
        %v7287 = vadd.f32 %v7223, %v7255
        %v7288 = vadd.f32 %v7224, %v7256
        %v7289 = vadd.f32 %v7225, %v7257
        %v7290 = vadd.f32 %v7226, %v7258
        %v7291 = vadd.f32 %v7227, %v7259
        %v7292 = vadd.f32 %v7228, %v7260
        %v7293 = vadd.f32 %v7229, %v7261
        %v7294 = vadd.f32 %v7230, %v7262
        %v7295 = vadd.f32 %v7231, %v7263
        %v7296 = vadd.f32 %v7232, %v7264
        %v7297 = vadd.f32 %v7233, %v7265
        %v7298 = vadd.f32 %v7234, %v7266
        %v7299 = vadd.f32 %v7235, %v7267
        %v7300 = vadd.f32 %v7236, %v7268
        %v7301 = vadd.f32 %v7237, %v7269
        %v7302 = vadd.f32 %v7238, %v7270
        %v7303 = vadd.f32 %v7239, %v7271
        %v7304 = vadd.f32 %v7240, %v7272
        %v7305 = vadd.f32 %v7241, %v7273
        %v7306 = vadd.f32 %v7242, %v7274
        %v7307 = vadd.f32 %v7243, %v7275
        %v7308 = vadd.f32 %v7244, %v7276
        %v7309 = vmax.f32 %v7277, 0.0
        %v7310 = vmax.f32 %v7278, 0.0
        %v7311 = vmax.f32 %v7279, 0.0
        %v7312 = vmax.f32 %v7280, 0.0
        %v7313 = vmax.f32 %v7281, 0.0
        %v7314 = vmax.f32 %v7282, 0.0
        %v7315 = vmax.f32 %v7283, 0.0
        %v7316 = vmax.f32 %v7284, 0.0
        %v7317 = vmax.f32 %v7285, 0.0
        %v7318 = vmax.f32 %v7286, 0.0
        %v7319 = vmax.f32 %v7287, 0.0
        %v7320 = vmax.f32 %v7288, 0.0
        %v7321 = vmax.f32 %v7289, 0.0
        %v7322 = vmax.f32 %v7290, 0.0
        %v7323 = vmax.f32 %v7291, 0.0
        %v7324 = vmax.f32 %v7292, 0.0
        %v7325 = vmax.f32 %v7293, 0.0
        %v7326 = vmax.f32 %v7294, 0.0
        %v7327 = vmax.f32 %v7295, 0.0
        %v7328 = vmax.f32 %v7296, 0.0
        %v7329 = vmax.f32 %v7297, 0.0
        %v7330 = vmax.f32 %v7298, 0.0
        %v7331 = vmax.f32 %v7299, 0.0
        %v7332 = vmax.f32 %v7300, 0.0
        %v7333 = vmax.f32 %v7301, 0.0
        %v7334 = vmax.f32 %v7302, 0.0
        %v7335 = vmax.f32 %v7303, 0.0
        %v7336 = vmax.f32 %v7304, 0.0
        %v7337 = vmax.f32 %v7305, 0.0
        %v7338 = vmax.f32 %v7306, 0.0
        %v7339 = vmax.f32 %v7307, 0.0
        %v7340 = vmax.f32 %v7308, 0.0
        %v7341 = vpack.c.bf16 %v7310, %v7309
        %v7342 = vpack.c.bf16 %v7312, %v7311
        %v7343 = vpack.c.bf16 %v7314, %v7313
        %v7344 = vpack.c.bf16 %v7316, %v7315
        %v7345 = vpack.c.bf16 %v7318, %v7317
        %v7346 = vpack.c.bf16 %v7320, %v7319
        %v7347 = vpack.c.bf16 %v7322, %v7321
        %v7348 = vpack.c.bf16 %v7324, %v7323
        %v7349 = vpack.c.bf16 %v7326, %v7325
        %v7350 = vpack.c.bf16 %v7328, %v7327
        %v7351 = vpack.c.bf16 %v7330, %v7329
        %v7352 = vpack.c.bf16 %v7332, %v7331
        %v7353 = vpack.c.bf16 %v7334, %v7333
        %v7354 = vpack.c.bf16 %v7336, %v7335
        %v7355 = vpack.c.bf16 %v7338, %v7337
        %v7356 = vpack.c.bf16 %v7340, %v7339
        %v7373 = vunpack.c.l.b16 %v7341
        %v7374 = vunpack.c.h.b16 %v7341
        %v7375 = vunpack.c.l.b16 %v7342
        %v7376 = vunpack.c.h.b16 %v7342
        %v7377 = vunpack.c.l.b16 %v7343
        %v7378 = vunpack.c.h.b16 %v7343
        %v7379 = vunpack.c.l.b16 %v7344
        %v7380 = vunpack.c.h.b16 %v7344
        %v7381 = vunpack.c.l.b16 %v7345
        %v7382 = vunpack.c.h.b16 %v7345
        %v7383 = vunpack.c.l.b16 %v7346
        %v7384 = vunpack.c.h.b16 %v7346
        %v7385 = vunpack.c.l.b16 %v7347
        %v7386 = vunpack.c.h.b16 %v7347
        %v7387 = vunpack.c.l.b16 %v7348
        %v7388 = vunpack.c.h.b16 %v7348
        %v7389 = vunpack.c.l.b16 %v7349
        %v7390 = vunpack.c.h.b16 %v7349
        %v7391 = vunpack.c.l.b16 %v7350
        %v7392 = vunpack.c.h.b16 %v7350
        %v7393 = vunpack.c.l.b16 %v7351
        %v7394 = vunpack.c.h.b16 %v7351
        %v7395 = vunpack.c.l.b16 %v7352
        %v7396 = vunpack.c.h.b16 %v7352
        %v7397 = vunpack.c.l.b16 %v7353
        %v7398 = vunpack.c.h.b16 %v7353
        %v7399 = vunpack.c.l.b16 %v7354
        %v7400 = vunpack.c.h.b16 %v7354
        %v7401 = vunpack.c.l.b16 %v7355
        %v7402 = vunpack.c.h.b16 %v7355
        %v7403 = vunpack.c.l.b16 %v7356
        %v7404 = vunpack.c.h.b16 %v7356
        %v7405 = vpack.c.b16 %v7373, %v7373
        %v7406 = vpack.c.b16 %v7374, %v7374
        %v7407 = vpack.c.b16 %v7375, %v7375
        %v7408 = vpack.c.b16 %v7376, %v7376
        %v7409 = vpack.c.b16 %v7377, %v7377
        %v7410 = vpack.c.b16 %v7378, %v7378
        %v7411 = vpack.c.b16 %v7379, %v7379
        %v7412 = vpack.c.b16 %v7380, %v7380
        %v7413 = vpack.c.b16 %v7381, %v7381
        %v7414 = vpack.c.b16 %v7382, %v7382
        %v7415 = vpack.c.b16 %v7383, %v7383
        %v7416 = vpack.c.b16 %v7384, %v7384
        %v7417 = vpack.c.b16 %v7385, %v7385
        %v7418 = vpack.c.b16 %v7386, %v7386
        %v7419 = vpack.c.b16 %v7387, %v7387
        %v7420 = vpack.c.b16 %v7388, %v7388
        %v7421 = vpack.c.b16 %v7389, %v7389
        %v7422 = vpack.c.b16 %v7390, %v7390
        %v7423 = vpack.c.b16 %v7391, %v7391
        %v7424 = vpack.c.b16 %v7392, %v7392
        %v7425 = vpack.c.b16 %v7393, %v7393
        %v7426 = vpack.c.b16 %v7394, %v7394
        %v7427 = vpack.c.b16 %v7395, %v7395
        %v7428 = vpack.c.b16 %v7396, %v7396
        %v7429 = vpack.c.b16 %v7397, %v7397
        %v7430 = vpack.c.b16 %v7398, %v7398
        %v7431 = vpack.c.b16 %v7399, %v7399
        %v7432 = vpack.c.b16 %v7400, %v7400
        %v7433 = vpack.c.b16 %v7401, %v7401
        %v7434 = vpack.c.b16 %v7402, %v7402
        %v7435 = vpack.c.b16 %v7403, %v7403
        %v7436 = vpack.c.b16 %v7404, %v7404
        %7469 = vst [vmem:[%s325] sm:$0xf] %v7405
        %7470 = vst [vmem:[%s325 + $0x4] sm:$0xf] %v7406
        %7471 = vst [vmem:[%s325 + $0x8] sm:$0xf] %v7407
        %7472 = vst [vmem:[%s325 + $0xc] sm:$0xf] %v7408
        %7473 = vst [vmem:[%s325 + $0x10] sm:$0xf] %v7409
        %7474 = vst [vmem:[%s325 + $0x14] sm:$0xf] %v7410
        %7475 = vst [vmem:[%s325 + $0x18] sm:$0xf] %v7411
        %7476 = vst [vmem:[%s325 + $0x1c] sm:$0xf] %v7412
        %7477 = vst [vmem:[%s325 + $0x20] sm:$0xf] %v7413
        %7478 = vst [vmem:[%s325 + $0x24] sm:$0xf] %v7414
        %7479 = vst [vmem:[%s325 + $0x28] sm:$0xf] %v7415
        %7480 = vst [vmem:[%s325 + $0x2c] sm:$0xf] %v7416
        %7481 = vst [vmem:[%s325 + $0x30] sm:$0xf] %v7417
        %7482 = vst [vmem:[%s325 + $0x34] sm:$0xf] %v7418
        %7483 = vst [vmem:[%s325 + $0x38] sm:$0xf] %v7419
        %7484 = vst [vmem:[%s325 + $0x3c] sm:$0xf] %v7420
        %7485 = vst [vmem:[%s325 + $0x40] sm:$0xf] %v7421
        %7486 = vst [vmem:[%s325 + $0x44] sm:$0xf] %v7422
        %7487 = vst [vmem:[%s325 + $0x48] sm:$0xf] %v7423
        %7488 = vst [vmem:[%s325 + $0x4c] sm:$0xf] %v7424
        %7489 = vst [vmem:[%s325 + $0x50] sm:$0xf] %v7425
        %7490 = vst [vmem:[%s325 + $0x54] sm:$0xf] %v7426
        %7491 = vst [vmem:[%s325 + $0x58] sm:$0xf] %v7427
        %7492 = vst [vmem:[%s325 + $0x5c] sm:$0xf] %v7428
        %7493 = vst [vmem:[%s325 + $0x60] sm:$0xf] %v7429
        %7494 = vst [vmem:[%s325 + $0x64] sm:$0xf] %v7430
        %7495 = vst [vmem:[%s325 + $0x68] sm:$0xf] %v7431
        %7496 = vst [vmem:[%s325 + $0x6c] sm:$0xf] %v7432
        %7497 = vst [vmem:[%s325 + $0x70] sm:$0xf] %v7433
        %7498 = vst [vmem:[%s325 + $0x74] sm:$0xf] %v7434
        %7499 = vst [vmem:[%s325 + $0x78] sm:$0xf] %v7435
        %7500 = vst [vmem:[%s325 + $0x7c] sm:$0xf] %v7436
        %s7501 = sand.u32 %s185, 1
        %s7502 = scalar_lea.sflag [#allocation5], %s7501
        %s7503 = sand.u32 %s185, 1
        %s7504 = smul.addr %s7503, 128
        %s7505 = scalar_lea.vmem [#allocation9], %s7504
        // Predicated region
        $region61: #{tpu_custom_call.1} parent=47 // pred_check
          %p7506 = pneg %p195
        $region62: #{tpu_custom_call.1} parent=47 // pred_check_branch
          %7508 = sbr.rel (%p7506) target = $region64
        $region63: #{tpu_custom_call.1} parent=47 // pred_region
          %s7510 = ssub.s32 2048, 2048
          %7511 = vsyncadd %s7502, %s7510
          %s7512 = smul.addr %s25, 32
          %s7513 = smul.addr %s7512, 64
          %s7514 = scalar_lea.hbm %s7, %s7513
          %s7515 = sshll.u32 %s7505, 4
          %s7516 = int_to_ptr.vmem [resolvable:$true] %s7515
          %7521 = dma.vmem_to_hbm [thread:$0]  %s7516, 2048, %s7514, %s7502, 64, 64, 4
        $region64: #{tpu_custom_call.1} parent=47 // pred_fallthru
          _
      $region48: #{tpu_custom_call.1} parent=5 // pred_fallthru
        _
      %p7522 = scmp.le.s32.totalorder 2, %s20
      // Predicated region
      $region65: #{tpu_custom_call.1} parent=5 // pred_check
        %p7523 = pneg %p7522
      $region66: #{tpu_custom_call.1} parent=5 // pred_check_branch
        %7525 = sbr.rel (%p7523) target = $region68
      $region67: #{tpu_custom_call.1} parent=5 // pred_region
        %s7526 = ssub.s32 %s20, 2
        // Predicated region
        $region69: #{tpu_custom_call.1} parent=67 // pred_check
          %p7527 = pneg %p201
        $region70: #{tpu_custom_call.1} parent=67 // pred_check_branch
          %7529 = sbr.rel (%p7527) target = $region72
        $region71: #{tpu_custom_call.1} parent=67 // pred_region
          %s7530 = sand.u32 %s186, 1
          %s7531 = scalar_lea.sflag [#allocation5], %s7530
          %s7532 = sand.u32 %s186, 1
          %s7533 = smul.addr %s7532, 128
          %s7534 = scalar_lea.vmem [#allocation9], %s7533
          %7535 = dma.done %s7531, 2048
        $region72: #{tpu_custom_call.1} parent=67 // pred_fallthru
          _
      $region68: #{tpu_custom_call.1} parent=5 // pred_fallthru
        _
    $region6: #{tpu_custom_call.1} parent=1 // loop_footer
      %s24 = sadd.s32 1, %s20
    $region7: #{tpu_custom_call.1} parent=1 // loop_footer_branch
      %19 = sbr.rel target = $region3
    $region8: #{tpu_custom_call.1} parent=1 // loop_exit
      _
    %7536 = vsyncpa [#allocation4], 1
    %s7537 = scalar_lea.sflag [#allocation4], 1
    %7538 = vsyncpa %s7537, 1
    %7539 = vsyncpa [#allocation7], 1
    %7540 = vsyncpa [#allocation5], 1
    %s7541 = scalar_lea.sflag [#allocation5], 1
    %7542 = vsyncpa %s7541, 1

</llo_original>
